<compile_context>
chip_gen: v7x
topology: tpu7x:2x2x1
jax: 0.10.0
libtpu: 0.0.40
codegen_flags: <defaults>
</compile_context>

<pallas_src>
import functools

import jax
import jax.numpy as jnp
from jax.experimental import pallas as pl
from jax.experimental.pallas import tpu as pltpu


def _round_up(x, m):
    return ((x + m - 1) // m) * m


def _vmem_budget_bytes(default=48 * 1024 * 1024):
    """Scoped-VMEM budget: ~3/4 of physical VMEM, capped at 100 MiB.

    v5e/v6e (128 MiB physical) -> 96 MiB; v7x (64 MiB physical) -> 48 MiB.
    """
    try:
        cap = getattr(pltpu.get_tpu_info(), "vmem_capacity_bytes", None)
        if not cap:
            return default
        return min((int(cap) * 3) // 4, 100 * 1024 * 1024)
    except Exception:
        return default


def _choose_block_b(batch, l_pad, e_pad, d, a_pad, mx_itemsize, vmem_budget):
    """Largest batch tile (multiple of 8) whose working set fits the VMEM budget,
    then shrunk so the grid has >= 2 steps (keeps both v7x TensorCores busy)."""
    weights = (e_pad + d) * a_pad * mx_itemsize + 2 * a_pad * 4   # single-buffered
    bt = 8
    for cand in (8, 16, 32, 64, 128, 256):
        feat_blk = cand * l_pad * e_pad * mx_itemsize
        hid_blk = cand * d * mx_itemsize
        out_blk = cand * (l_pad + e_pad) * 4
        interm = cand * l_pad * (2 * a_pad + e_pad) * 4   # tanh + weighted-sum temps (f32)
        total = 2 * (feat_blk + hid_blk + out_blk) + weights + interm
        if total <= vmem_budget:
            bt = cand
        else:
            break
    while bt > 8 and (batch + bt - 1) // bt < 2:
        bt //= 2
    return bt


def attention_kernel(num_regions,             # static: real L before lane padding
                     feat_ref, hid_ref,       # (BT, Lp, Ep), (BT, D)
                     u_w_ref, w_w_ref,        # (Ep, Ap), (D, Ap)  (bf16 or f32)
                     b_ref, a_w_ref,          # (1, Ap) fused bias, (1, Ap) score weights (f32)
                     alpha_ref, aw_ref):      # (BT, Lp), (BT, Ep) f32, lane-dense
    bt, lp, ep = feat_ref.shape
    ap = u_w_ref.shape[1]

    feat = feat_ref[...]                               # (BT, Lp, Ep)
    # Lp/Ep are lane/sublane aligned, so this flatten is a free re-tiling and
    # gives the MXU an M dimension of BT*Lp.
    feat_m = feat.reshape(bt * lp, ep)

    # u_hs = image_features @ U   (u bias folded into b_ref); f32 accumulation.
    u_hs = jnp.dot(feat_m, u_w_ref[...],
                   preferred_element_type=jnp.float32).reshape(bt, lp, ap)

    # w_ah = hidden @ W + (u_b + w_b): one (BT, D)@(D, Ap) matmul for the whole tile.
    w_ah = jnp.dot(hid_ref[...], w_w_ref[...],
                   preferred_element_type=jnp.float32) + b_ref[...]

    combined = jnp.tanh(u_hs + w_ah[:, None, :])       # (BT, Lp, Ap) f32 (safe on v5e)

    # Score head: VPU multiply + lane reduce (avoids an N=1 MXU matmul).
    # The torch `a` bias is a per-row constant -> cancels in the softmax -> dropped.
    score = jnp.sum(combined * a_w_ref[...], axis=-1)  # (BT, Lp)

    if lp != num_regions:   # mask padded region columns so the softmax ignores them
        col = jax.lax.broadcasted_iota(jnp.int32, (bt, lp), 1)
        score = jnp.where(col < num_regions, score, jnp.finfo(score.dtype).min)

    # Lane-dense softmax over regions (Lp on lanes).
    m = jnp.max(score, axis=-1, keepdims=True)
    e = jnp.exp(score - m)
    denom = jnp.sum(e, axis=-1, keepdims=True)
    alpha = e * pl.reciprocal(denom, approx=True)      # (BT, Lp)

    # Weighted feature sum on VPU + sublane reduce: an M=1 per-batch matmul would
    # waste MXU rows and contend with the dominant feat@U matmul.
    aw = jnp.sum(alpha[:, :, None] * feat.astype(jnp.float32), axis=1)   # (BT, Ep)

    alpha_ref[...] = alpha
    aw_ref[...] = aw.astype(aw_ref.dtype)


def attention_forward(image_features, hidden_state, params, *,
                      block_b=None, use_bf16_matmul=True):
    B, L, E = image_features.shape
    D = hidden_state.shape[1]
    A = params["u_w"].shape[1]
    f32 = jnp.float32

    # --- lane/MXU-friendly zero padding.  Padded region columns are masked in-kernel,
    #     padded E/A columns multiply against zero weights, padded batch rows are
    #     sliced off after the call (they never feed back into the model).
    LANE = 128
    L_pad = _round_up(L, LANE)   # lane-dense alpha stores + free (BT*L, E) flatten
    E_pad = _round_up(E, LANE)   # lane-dense attention_weights stores, full MXU K depth
    A_pad = _round_up(A, LANE)   # full MXU N columns

    mx_dtype = jnp.bfloat16 if use_bf16_matmul else f32   # MXU natively consumes bf16
    itemsize = jnp.dtype(mx_dtype).itemsize

    vmem_budget = _vmem_budget_bytes()
    BT = block_b if block_b is not None else _choose_block_b(
        B, L_pad, E_pad, D, A_pad, itemsize, vmem_budget)
    B_pad = _round_up(max(B, BT), BT)

    feat = jnp.zeros((B_pad, L_pad, E_pad), mx_dtype)
    feat = feat.at[:B, :L, :E].set(image_features.astype(mx_dtype))
    hid = jnp.zeros((B_pad, D), mx_dtype).at[:B].set(hidden_state.astype(mx_dtype))
    u_w = jnp.zeros((E_pad, A_pad), mx_dtype).at[:E, :A].set(params["u_w"].astype(mx_dtype))
    w_w = jnp.zeros((D, A_pad), mx_dtype).at[:, :A].set(params["w_w"].astype(mx_dtype))
    bias = jnp.zeros((1, A_pad), f32).at[:, :A].set(params["u_b"] + params["w_b"])
    a_w = jnp.zeros((1, A_pad), f32).at[:, :A].set(params["a_w"].reshape(1, A))
    # params["a_b"] shifts every score by the same constant -> cancels in softmax,
    # so it is not passed to the kernel (outputs are unchanged).

    grid = (B_pad // BT,)
    kernel = functools.partial(attention_kernel, L)
    out_shape = (jax.ShapeDtypeStruct((B_pad, L_pad), f32),
                 jax.ShapeDtypeStruct((B_pad, E_pad), f32))

    # NOTE: for very large E on v7x (64 MiB VMEM), add a K-reduction ("arbitrary")
    # grid axis over E with an f32 accumulator instead of loading (BT, L, E) whole.

    def build_call(constant_pipeline_mode):
        def const_spec(shape):
            if constant_pipeline_mode is None:
                return pl.BlockSpec(shape, lambda b: (0,) * len(shape))
            return pl.BlockSpec(shape, lambda b: (0,) * len(shape),
                                pipeline_mode=constant_pipeline_mode)

        grid_spec = pltpu.PrefetchScalarGridSpec(
            num_scalar_prefetch=0,
            grid=grid,
            in_specs=[
                pl.BlockSpec((BT, L_pad, E_pad), lambda b: (b, 0, 0)),   # image_features
                pl.BlockSpec((BT, D), lambda b: (b, 0)),                 # hidden_state
                const_spec((E_pad, A_pad)),                              # u_w
                const_spec((D, A_pad)),                                  # w_w
                const_spec((1, A_pad)),                                  # u_b + w_b (fused)
                const_spec((1, A_pad)),                                  # a_w (row layout)
            ],
            out_specs=[
                pl.BlockSpec((BT, L_pad), lambda b: (b, 0)),             # alpha
                pl.BlockSpec((BT, E_pad), lambda b: (b, 0)),             # attention_weights
            ],
        )
        return pl.pallas_call(
            kernel,
            out_shape=out_shape,
            grid_spec=grid_spec,
            compiler_params=pltpu.CompilerParams(
                dimension_semantics=("parallel",),
                vmem_limit_bytes=vmem_budget),
        )

    args = (feat, hid, u_w, w_w, bias, a_w)
    try:
        # Grid-invariant weights: single buffer (double-buffering them is pure VMEM waste).
        alpha, attn_w = build_call(pl.Buffered(buffer_count=1))(*args)
    except Exception:
        # Fallback for JAX versions without pipeline_mode support on pallas_call.
        alpha, attn_w = build_call(None)(*args)

    return alpha[:B, :L], attn_w[:B, :E]


def init_params(key, encoder_dim, decoder_dim, attention_dim):
    k1, k2, k3, k4, k5, k6 = jax.random.split(key, 6)
    scale = 0.1
    return {
        # stored as (in, out) so the kernel does x @ W directly (== torch x @ W.T)
        "w_w": scale * jax.random.normal(k1, (decoder_dim, attention_dim), jnp.float32),
        "w_b": scale * jax.random.normal(k2, (1, attention_dim), jnp.float32),
        "u_w": scale * jax.random.normal(k3, (encoder_dim, attention_dim), jnp.float32),
        "u_b": scale * jax.random.normal(k4, (1, attention_dim), jnp.float32),
        "a_w": scale * jax.random.normal(k5, (attention_dim, 1), jnp.float32),
        "a_b": scale * jax.random.normal(k6, (1, 1), jnp.float32),
    }


def reference_forward(image_features, hidden_state, p):
    u_hs = image_features @ p["u_w"] + p["u_b"][0]             # (B, L, A)
    w_ah = hidden_state @ p["w_w"] + p["w_b"][0]               # (B, A)
    combined = jnp.tanh(u_hs + w_ah[:, None, :])               # (B, L, A)
    score = (combined @ p["a_w"])[..., 0] + p["a_b"][0, 0]     # (B, L)
    alpha = jax.nn.softmax(score, axis=1)                      # (B, L)
    attn_w = (image_features * alpha[:, :, None]).sum(axis=1)  # (B, E)
    return alpha, attn_w


if __name__ == "__main__":
    B, L = 16, 8
    encoder_dim, decoder_dim, attention_dim = 32, 16, 32

    key = jax.random.PRNGKey(0)
    kf, kh, kp = jax.random.split(key, 3)
    image_features = jax.random.normal(kf, (B, L, encoder_dim), jnp.float32)
    hidden_state = jax.random.normal(kh, (B, decoder_dim), jnp.float32)
    params = init_params(kp, encoder_dim, decoder_dim, attention_dim)

    alpha, attn_w = attention_forward(image_features, hidden_state, params)
    jax.block_until_ready((alpha, attn_w))

    alpha_ref, attn_w_ref = reference_forward(image_features, hidden_state, params)
    # bf16 MXU operands + approx (EUP) reciprocal in the softmax -> loosened tolerance.
    assert alpha.shape == (B, L) and attn_w.shape == (B, encoder_dim)
    assert jnp.allclose(alpha, alpha_ref, atol=2e-2, rtol=2e-2)
    assert jnp.allclose(attn_w, attn_w_ref, atol=2e-2, rtol=2e-2)

    print("KERNEL_OK")
</pallas_src>

<mosaic_0001>
module attributes {stable_mosaic.version = 11 : i64} {
  func.func @attention_kernel(%arg0: i32, %arg1: memref<8x128x128xbf16, #tpu.memory_space<vmem>>, %arg2: memref<8x16xbf16, #tpu.memory_space<vmem>>, %arg3: memref<128x128xbf16, #tpu.memory_space<vmem>>, %arg4: memref<16x128xbf16, #tpu.memory_space<vmem>>, %arg5: memref<1x128xf32, #tpu.memory_space<vmem>>, %arg6: memref<1x128xf32, #tpu.memory_space<vmem>>, %arg7: memref<8x128xf32, #tpu.memory_space<vmem>>, %arg8: memref<8x128xf32, #tpu.memory_space<vmem>>) attributes {dimension_semantics = [#tpu.dimension_semantics<parallel>], iteration_bounds = array<i64: 2>, scalar_prefetch = 0 : i64, scratch_operands = 0 : i64, tpu.core_type = #tpu.core_type<tc>, window_params = [{transform_indices = @transform_0, window_bounds = array<i64: 8, 128, 128>}, {transform_indices = @transform_1, window_bounds = array<i64: 8, 16>}, {pipeline_mode = #tpu.pipeline_mode<synchronous>, transform_indices = @transform_2, window_bounds = array<i64: 128, 128>}, {pipeline_mode = #tpu.pipeline_mode<synchronous>, transform_indices = @transform_3, window_bounds = array<i64: 16, 128>}, {pipeline_mode = #tpu.pipeline_mode<synchronous>, transform_indices = @transform_4, window_bounds = array<i64: 1, 128>}, {pipeline_mode = #tpu.pipeline_mode<synchronous>, transform_indices = @transform_5, window_bounds = array<i64: 1, 128>}, {transform_indices = @transform_6, window_bounds = array<i64: 8, 128>}, {transform_indices = @transform_7, window_bounds = array<i64: 8, 128>}]} {
    %c0 = arith.constant 0 : index
    %c0_0 = arith.constant 0 : index
    %c0_1 = arith.constant 0 : index
    %0 = vector.load %arg1[%c0, %c0_0, %c0_1] : memref<8x128x128xbf16, #tpu.memory_space<vmem>>, vector<8x128x128xbf16>
    %1 = vector.shape_cast %0 : vector<8x128x128xbf16> to vector<1024x128xbf16>
    %c0_2 = arith.constant 0 : index
    %c0_3 = arith.constant 0 : index
    %2 = vector.load %arg3[%c0_2, %c0_3] : memref<128x128xbf16, #tpu.memory_space<vmem>>, vector<128x128xbf16>
    %cst = arith.constant dense<0.000000e+00> : vector<1024x128xf32>
    %3 = tpu.matmul %1, %2, %cst {dimension_numbers = #tpu.dot_dimension_numbers<[1], [0], [0], [1], [0, 0, 1, 1], [], []>} : vector<1024x128xbf16>, vector<128x128xbf16>, vector<1024x128xf32> -> vector<1024x128xf32>
    %4 = vector.shape_cast %3 : vector<1024x128xf32> to vector<8x128x128xf32>
    %c0_4 = arith.constant 0 : index
    %c0_5 = arith.constant 0 : index
    %5 = vector.load %arg2[%c0_4, %c0_5] : memref<8x16xbf16, #tpu.memory_space<vmem>>, vector<8x16xbf16>
    %c0_6 = arith.constant 0 : index
    %c0_7 = arith.constant 0 : index
    %6 = vector.load %arg4[%c0_6, %c0_7] : memref<16x128xbf16, #tpu.memory_space<vmem>>, vector<16x128xbf16>
    %cst_8 = arith.constant dense<0.000000e+00> : vector<8x128xf32>
    %7 = tpu.matmul %5, %6, %cst_8 {dimension_numbers = #tpu.dot_dimension_numbers<[1], [0], [0], [1], [0, 0, 1, 1], [], []>} : vector<8x16xbf16>, vector<16x128xbf16>, vector<8x128xf32> -> vector<8x128xf32>
    %c0_9 = arith.constant 0 : index
    %c0_10 = arith.constant 0 : index
    %8 = vector.load %arg5[%c0_9, %c0_10] : memref<1x128xf32, #tpu.memory_space<vmem>>, vector<1x128xf32>
    %9 = vector.broadcast %8 : vector<1x128xf32> to vector<8x128xf32>
    %10 = arith.addf %7, %9 : vector<8x128xf32>
    %11 = vector.shape_cast %10 : vector<8x128xf32> to vector<8x1x128xf32>
    %12 = vector.broadcast %11 : vector<8x1x128xf32> to vector<8x128x128xf32>
    %13 = arith.addf %4, %12 : vector<8x128x128xf32>
    %14 = math.tanh %13 : vector<8x128x128xf32>
    %c0_11 = arith.constant 0 : index
    %c0_12 = arith.constant 0 : index
    %15 = vector.load %arg6[%c0_11, %c0_12] : memref<1x128xf32, #tpu.memory_space<vmem>>, vector<1x128xf32>
    %16 = vector.shape_cast %15 : vector<1x128xf32> to vector<1x1x128xf32>
    %17 = vector.broadcast %16 : vector<1x1x128xf32> to vector<8x128x128xf32>
    %18 = arith.mulf %14, %17 : vector<8x128x128xf32>
    %cst_13 = arith.constant dense<0.000000e+00> : vector<8x128xf32>
    %19 = vector.multi_reduction <add>, %18, %cst_13 [2] : vector<8x128x128xf32> to vector<8x128xf32>
    %20 = tpu.iota {dimensions = array<i32: 1>} : vector<8x128xi32>
    %c8_i32 = arith.constant 8 : i32
    %21 = vector.broadcast %c8_i32 : i32 to vector<8x128xi32>
    %22 = arith.cmpi slt, %20, %21 : vector<8x128xi32>
    %cst_14 = arith.constant -3.40282347E+38 : f32
    %23 = vector.broadcast %cst_14 : f32 to vector<8x128xf32>
    %24 = arith.select %22, %19, %23 : vector<8x128xi1>, vector<8x128xf32>
    %cst_15 = arith.constant dense<0xFF800000> : vector<8xf32>
    %25 = vector.multi_reduction <maximumf>, %24, %cst_15 [1] : vector<8x128xf32> to vector<8xf32>
    %26 = vector.shape_cast %25 : vector<8xf32> to vector<8x1xf32>
    %27 = vector.broadcast %26 : vector<8x1xf32> to vector<8x128xf32>
    %28 = arith.subf %24, %27 : vector<8x128xf32>
    %29 = math.exp %28 : vector<8x128xf32>
    %cst_16 = arith.constant dense<0.000000e+00> : vector<8xf32>
    %30 = vector.multi_reduction <add>, %29, %cst_16 [1] : vector<8x128xf32> to vector<8xf32>
    %31 = vector.shape_cast %30 : vector<8xf32> to vector<8x1xf32>
    %32 = tpu.reciprocal %31 {approx = true} : vector<8x1xf32> -> vector<8x1xf32>
    %33 = vector.broadcast %32 : vector<8x1xf32> to vector<8x128xf32>
    %34 = arith.mulf %29, %33 : vector<8x128xf32>
    %35 = vector.shape_cast %34 : vector<8x128xf32> to vector<8x128x1xf32>
    %36 = arith.extf %0 : vector<8x128x128xbf16> to vector<8x128x128xf32>
    %37 = vector.broadcast %35 : vector<8x128x1xf32> to vector<8x128x128xf32>
    %38 = arith.mulf %37, %36 : vector<8x128x128xf32>
    %cst_17 = arith.constant dense<0.000000e+00> : vector<8x128xf32>
    %39 = vector.multi_reduction <add>, %38, %cst_17 [1] : vector<8x128x128xf32> to vector<8x128xf32>
    %c0_18 = arith.constant 0 : index
    %c0_19 = arith.constant 0 : index
    %40 = vector.load %arg7[%c0_18, %c0_19] : memref<8x128xf32, #tpu.memory_space<vmem>>, vector<8x128xf32>
    tpu.vector_store %arg7[%c0_18, %c0_19], %34 {strides = array<i32>} : memref<8x128xf32, #tpu.memory_space<vmem>>, vector<8x128xf32>,
    %c0_20 = arith.constant 0 : index
    %c0_21 = arith.constant 0 : index
    %41 = vector.load %arg8[%c0_20, %c0_21] : memref<8x128xf32, #tpu.memory_space<vmem>>, vector<8x128xf32>
    tpu.vector_store %arg8[%c0_20, %c0_21], %39 {strides = array<i32>} : memref<8x128xf32, #tpu.memory_space<vmem>>, vector<8x128xf32>,
    return
  }
  func.func @transform_0(%arg0: i32) -> (i32, i32, i32) {
    %c0_i32 = arith.constant 0 : i32
    %c0_i32_0 = arith.constant 0 : i32
    %c0_i32_1 = arith.constant 0 : i32
    return %arg0, %c0_i32, %c0_i32_0 : i32, i32, i32
  }
  func.func @transform_1(%arg0: i32) -> (i32, i32) {
    %c0_i32 = arith.constant 0 : i32
    %c0_i32_0 = arith.constant 0 : i32
    return %arg0, %c0_i32 : i32, i32
  }
  func.func @transform_2(%arg0: i32) -> (i32, i32) {
    %c0_i32 = arith.constant 0 : i32
    %c0_i32_0 = arith.constant 0 : i32
    %c0_i32_1 = arith.constant 0 : i32
    return %c0_i32, %c0_i32_0 : i32, i32
  }
  func.func @transform_3(%arg0: i32) -> (i32, i32) {
    %c0_i32 = arith.constant 0 : i32
    %c0_i32_0 = arith.constant 0 : i32
    %c0_i32_1 = arith.constant 0 : i32
    return %c0_i32, %c0_i32_0 : i32, i32
  }
  func.func @transform_4(%arg0: i32) -> (i32, i32) {
    %c0_i32 = arith.constant 0 : i32
    %c0_i32_0 = arith.constant 0 : i32
    %c0_i32_1 = arith.constant 0 : i32
    return %c0_i32, %c0_i32_0 : i32, i32
  }
  func.func @transform_5(%arg0: i32) -> (i32, i32) {
    %c0_i32 = arith.constant 0 : i32
    %c0_i32_0 = arith.constant 0 : i32
    %c0_i32_1 = arith.constant 0 : i32
    return %c0_i32, %c0_i32_0 : i32, i32
  }
  func.func @transform_6(%arg0: i32) -> (i32, i32) {
    %c0_i32 = arith.constant 0 : i32
    %c0_i32_0 = arith.constant 0 : i32
    return %arg0, %c0_i32 : i32, i32
  }
  func.func @transform_7(%arg0: i32) -> (i32, i32) {
    %c0_i32 = arith.constant 0 : i32
    %c0_i32_0 = arith.constant 0 : i32
    return %arg0, %c0_i32 : i32, i32
  }
}

module attributes {stable_mosaic.version = 11 : i64} {
  func.func @attention_kernel(%arg0: i32, %arg1: memref<8x128x128xbf16, #tpu.memory_space<vmem>>, %arg2: memref<8x16xbf16, #tpu.memory_space<vmem>>, %arg3: memref<128x128xbf16, #tpu.memory_space<vmem>>, %arg4: memref<16x128xbf16, #tpu.memory_space<vmem>>, %arg5: memref<1x128xf32, #tpu.memory_space<vmem>>, %arg6: memref<1x128xf32, #tpu.memory_space<vmem>>, %arg7: memref<8x128xf32, #tpu.memory_space<vmem>>, %arg8: memref<8x128xf32, #tpu.memory_space<vmem>>) attributes {dimension_semantics = [#tpu.dimension_semantics<parallel>], iteration_bounds = array<i64: 2>, scalar_prefetch = 0 : i64, scratch_operands = 0 : i64, tpu.core_type = #tpu.core_type<tc>, window_params = [{transform_indices = @transform_0, window_bounds = array<i64: 8, 128, 128>}, {transform_indices = @transform_1, window_bounds = array<i64: 8, 16>}, {pipeline_mode = #tpu.pipeline_mode<synchronous>, transform_indices = @transform_2, window_bounds = array<i64: 128, 128>}, {pipeline_mode = #tpu.pipeline_mode<synchronous>, transform_indices = @transform_3, window_bounds = array<i64: 16, 128>}, {pipeline_mode = #tpu.pipeline_mode<synchronous>, transform_indices = @transform_4, window_bounds = array<i64: 1, 128>}, {pipeline_mode = #tpu.pipeline_mode<synchronous>, transform_indices = @transform_5, window_bounds = array<i64: 1, 128>}, {transform_indices = @transform_6, window_bounds = array<i64: 8, 128>}, {transform_indices = @transform_7, window_bounds = array<i64: 8, 128>}]} {
    %c0 = arith.constant 0 : index
    %c0_0 = arith.constant 0 : index
    %c0_1 = arith.constant 0 : index
    %0 = vector.load %arg1[%c0, %c0_0, %c0_1] : memref<8x128x128xbf16, #tpu.memory_space<vmem>>, vector<8x128x128xbf16>
    %1 = vector.shape_cast %0 : vector<8x128x128xbf16> to vector<1024x128xbf16>
    %c0_2 = arith.constant 0 : index
    %c0_3 = arith.constant 0 : index
    %2 = vector.load %arg3[%c0_2, %c0_3] : memref<128x128xbf16, #tpu.memory_space<vmem>>, vector<128x128xbf16>
    %cst = arith.constant dense<0.000000e+00> : vector<1024x128xf32>
    %3 = tpu.matmul %1, %2, %cst {dimension_numbers = #tpu.dot_dimension_numbers<[1], [0], [0], [1], [0, 0, 1, 1], [], []>} : vector<1024x128xbf16>, vector<128x128xbf16>, vector<1024x128xf32> -> vector<1024x128xf32>
    %4 = vector.shape_cast %3 : vector<1024x128xf32> to vector<8x128x128xf32>
    %c0_4 = arith.constant 0 : index
    %c0_5 = arith.constant 0 : index
    %5 = vector.load %arg2[%c0_4, %c0_5] : memref<8x16xbf16, #tpu.memory_space<vmem>>, vector<8x16xbf16>
    %c0_6 = arith.constant 0 : index
    %c0_7 = arith.constant 0 : index
    %6 = vector.load %arg4[%c0_6, %c0_7] : memref<16x128xbf16, #tpu.memory_space<vmem>>, vector<16x128xbf16>
    %cst_8 = arith.constant dense<0.000000e+00> : vector<8x128xf32>
    %7 = tpu.matmul %5, %6, %cst_8 {dimension_numbers = #tpu.dot_dimension_numbers<[1], [0], [0], [1], [0, 0, 1, 1], [], []>} : vector<8x16xbf16>, vector<16x128xbf16>, vector<8x128xf32> -> vector<8x128xf32>
    %c0_9 = arith.constant 0 : index
    %c0_10 = arith.constant 0 : index
    %8 = vector.load %arg5[%c0_9, %c0_10] : memref<1x128xf32, #tpu.memory_space<vmem>>, vector<1x128xf32>
    %9 = vector.broadcast %8 : vector<1x128xf32> to vector<8x128xf32>
    %10 = arith.addf %7, %9 : vector<8x128xf32>
    %11 = vector.shape_cast %10 : vector<8x128xf32> to vector<8x1x128xf32>
    %12 = vector.broadcast %11 : vector<8x1x128xf32> to vector<8x128x128xf32>
    %13 = arith.addf %4, %12 : vector<8x128x128xf32>
    %14 = math.tanh %13 : vector<8x128x128xf32>
    %c0_11 = arith.constant 0 : index
    %c0_12 = arith.constant 0 : index
    %15 = vector.load %arg6[%c0_11, %c0_12] : memref<1x128xf32, #tpu.memory_space<vmem>>, vector<1x128xf32>
    %16 = vector.shape_cast %15 : vector<1x128xf32> to vector<1x1x128xf32>
    %17 = vector.broadcast %16 : vector<1x1x128xf32> to vector<8x128x128xf32>
    %18 = arith.mulf %14, %17 : vector<8x128x128xf32>
    %cst_13 = arith.constant dense<0.000000e+00> : vector<8x128xf32>
    %19 = vector.multi_reduction <add>, %18, %cst_13 [2] : vector<8x128x128xf32> to vector<8x128xf32>
    %20 = tpu.iota {dimensions = array<i32: 1>} : vector<8x128xi32>
    %c8_i32 = arith.constant 8 : i32
    %21 = vector.broadcast %c8_i32 : i32 to vector<8x128xi32>
    %22 = arith.cmpi slt, %20, %21 : vector<8x128xi32>
    %cst_14 = arith.constant -3.40282347E+38 : f32
    %23 = vector.broadcast %cst_14 : f32 to vector<8x128xf32>
    %24 = arith.select %22, %19, %23 : vector<8x128xi1>, vector<8x128xf32>
    %cst_15 = arith.constant dense<0xFF800000> : vector<8xf32>
    %25 = vector.multi_reduction <maximumf>, %24, %cst_15 [1] : vector<8x128xf32> to vector<8xf32>
    %26 = vector.shape_cast %25 : vector<8xf32> to vector<8x1xf32>
    %27 = vector.broadcast %26 : vector<8x1xf32> to vector<8x128xf32>
    %28 = arith.subf %24, %27 : vector<8x128xf32>
    %29 = math.exp %28 : vector<8x128xf32>
    %cst_16 = arith.constant dense<0.000000e+00> : vector<8xf32>
    %30 = vector.multi_reduction <add>, %29, %cst_16 [1] : vector<8x128xf32> to vector<8xf32>
    %31 = vector.shape_cast %30 : vector<8xf32> to vector<8x1xf32>
    %32 = tpu.reciprocal %31 {approx = true} : vector<8x1xf32> -> vector<8x1xf32>
    %33 = vector.broadcast %32 : vector<8x1xf32> to vector<8x128xf32>
    %34 = arith.mulf %29, %33 : vector<8x128xf32>
    %35 = vector.shape_cast %34 : vector<8x128xf32> to vector<8x128x1xf32>
    %36 = arith.extf %0 : vector<8x128x128xbf16> to vector<8x128x128xf32>
    %37 = vector.broadcast %35 : vector<8x128x1xf32> to vector<8x128x128xf32>
    %38 = arith.mulf %37, %36 : vector<8x128x128xf32>
    %cst_17 = arith.constant dense<0.000000e+00> : vector<8x128xf32>
    %39 = vector.multi_reduction <add>, %38, %cst_17 [1] : vector<8x128x128xf32> to vector<8x128xf32>
    %c0_18 = arith.constant 0 : index
    %c0_19 = arith.constant 0 : index
    %40 = vector.load %arg7[%c0_18, %c0_19] : memref<8x128xf32, #tpu.memory_space<vmem>>, vector<8x128xf32>
    tpu.vector_store %arg7[%c0_18, %c0_19], %34 {strides = array<i32>} : memref<8x128xf32, #tpu.memory_space<vmem>>, vector<8x128xf32>,
    %c0_20 = arith.constant 0 : index
    %c0_21 = arith.constant 0 : index
    %41 = vector.load %arg8[%c0_20, %c0_21] : memref<8x128xf32, #tpu.memory_space<vmem>>, vector<8x128xf32>
    tpu.vector_store %arg8[%c0_20, %c0_21], %39 {strides = array<i32>} : memref<8x128xf32, #tpu.memory_space<vmem>>, vector<8x128xf32>,
    return
  }
  func.func @transform_0(%arg0: i32) -> (i32, i32, i32) {
    %c0_i32 = arith.constant 0 : i32
    %c0_i32_0 = arith.constant 0 : i32
    %c0_i32_1 = arith.constant 0 : i32
    return %arg0, %c0_i32, %c0_i32_0 : i32, i32, i32
  }
  func.func @transform_1(%arg0: i32) -> (i32, i32) {
    %c0_i32 = arith.constant 0 : i32
    %c0_i32_0 = arith.constant 0 : i32
    return %arg0, %c0_i32 : i32, i32
  }
  func.func @transform_2(%arg0: i32) -> (i32, i32) {
    %c0_i32 = arith.constant 0 : i32
    %c0_i32_0 = arith.constant 0 : i32
    %c0_i32_1 = arith.constant 0 : i32
    return %c0_i32, %c0_i32_0 : i32, i32
  }
  func.func @transform_3(%arg0: i32) -> (i32, i32) {
    %c0_i32 = arith.constant 0 : i32
    %c0_i32_0 = arith.constant 0 : i32
    %c0_i32_1 = arith.constant 0 : i32
    return %c0_i32, %c0_i32_0 : i32, i32
  }
  func.func @transform_4(%arg0: i32) -> (i32, i32) {
    %c0_i32 = arith.constant 0 : i32
    %c0_i32_0 = arith.constant 0 : i32
    %c0_i32_1 = arith.constant 0 : i32
    return %c0_i32, %c0_i32_0 : i32, i32
  }
  func.func @transform_5(%arg0: i32) -> (i32, i32) {
    %c0_i32 = arith.constant 0 : i32
    %c0_i32_0 = arith.constant 0 : i32
    %c0_i32_1 = arith.constant 0 : i32
    return %c0_i32, %c0_i32_0 : i32, i32
  }
  func.func @transform_6(%arg0: i32) -> (i32, i32) {
    %c0_i32 = arith.constant 0 : i32
    %c0_i32_0 = arith.constant 0 : i32
    return %arg0, %c0_i32 : i32, i32
  }
  func.func @transform_7(%arg0: i32) -> (i32, i32) {
    %c0_i32 = arith.constant 0 : i32
    %c0_i32_0 = arith.constant 0 : i32
    return %arg0, %c0_i32 : i32, i32
  }
}

</mosaic_0001>

<llo_original>
// kernel: tpu_custom_call.1
$region0: #{tpu_custom_call.1}
  #allocation0 [shape = 'u32[]', space=smem, size = 0x4, offset = 0x4, fixed_abs, tag = 'smem constant byte address 0x4 - core index']
  #allocation1 [shape = 'u32[144,128]{1,0:T(1,128)}', space=vmem, size = 0x12000, scoped, tag = 'internal scratch']
  %s0 = inlined_call_operand.hbm [shape: bf16[16,128,128], index: 0, kind: input, shape index: {}]
  %s1 = inlined_call_operand.hbm [shape: bf16[16,16], index: 1, kind: input, shape index: {}]
  %s2 = inlined_call_operand.hbm [shape: bf16[128,128], index: 2, kind: input, shape index: {}]
  %s3 = inlined_call_operand.vmem [shape: bf16[16,128], index: 3, kind: input, shape index: {}]
  %s4 = inlined_call_operand.vmem [shape: f32[1,128], index: 4, kind: input, shape index: {}]
  %s5 = inlined_call_operand.vmem [shape: f32[1,128], index: 5, kind: input, shape index: {}]
  %s6 = inlined_call_operand.hbm [shape: f32[16,128], index: 6, kind: output, shape index: {0}]
  %s7 = inlined_call_operand.hbm [shape: f32[16,128], index: 7, kind: output, shape index: {1}]
  %8 = xla_tuple %s6, %s7
  %s9 = sld [smem:[#allocation0]]
  $region77: #{tpu_custom_call.1} parent=0
    _
  %s11 = ssub.s32 1, %s9
  %s12 = scalar_select 0, %s11, %s9
  $region1: #{tpu_custom_call.1} parent=0
    #allocation2 [shape = 'u8[524288]{0}', space=vmem, size = 0x80000, scoped, tag = 'input window, operand 0']
    #allocation3 [shape = 's32[2]{0}', space=sflag, size = 0x8, scoped, tag = 'scoped memory for tpu_custom_call.1']
    #allocation4 [shape = 's32[2]{0}', space=sflag, size = 0x8, scoped, tag = 'scoped memory for tpu_custom_call.1']
    #allocation5 [shape = 'u8[4096]{0}', space=vmem, size = 0x1000, scoped, tag = 'input window, operand 1']
    #allocation6 [shape = 's32[2]{0}', space=sflag, size = 0x8, scoped, tag = 'scoped memory for tpu_custom_call.1']
    #allocation7 [shape = 'u8[32768]{0}', space=vmem, size = 0x8000, scoped, tag = 'input window, operand 2, single buffered']
    #allocation8 [shape = 'u8[8192]{0}', space=vmem, size = 0x2000, scoped, tag = 'output window, operand 0']
    #allocation9 [shape = 'u8[8192]{0}', space=vmem, size = 0x2000, scoped, tag = 'output window, operand 1']
    #allocation10 [shape = 's32[2]{0}', space=sflag, size = 0x8, scoped, tag = 'scoped memory for tpu_custom_call.1']
    %13 = vsyncpa [#allocation3], 0
    %s14 = scalar_lea.sflag [#allocation3], 1
    %15 = vsyncpa %s14, 0
    %16 = vsyncpa [#allocation6], 0
    %s17 = scalar_lea.sflag [#allocation6], 1
    %18 = vsyncpa %s17, 0
    %19 = vsyncpa [#allocation4], 0
    %s20 = scalar_lea.sflag [#allocation4], 1
    %21 = vsyncpa %s20, 0
    %22 = vsyncpa [#allocation10], 0
    %s23 = scalar_lea.sflag [#allocation10], 1
    %24 = vsyncpa %s23, 0
    loop: start=0, step=1, limit=4
    $region2: #{tpu_custom_call.1} parent=1 // loop_pre_header
      _
    $region3: #{tpu_custom_call.1} parent=1 // loop_header
      %s26 = sphi 0, %s30
      %p27 = scmp.ge.s32.totalorder %s26, 4
      %s36 = sphi 0, %s38
      %s39 = sphi 0, %s36
      %s40 = sphi 0, %s39
      %s56 = sphi 0, %s40
      %s62 = sphi 0, %s64
      %s65 = sphi 0, %s62
      %s66 = sphi 0, %s65
      %s82 = sphi 0, %s66
      %s86 = sphi 0, %s86
      %s88 = sphi 0, %s86
      %s89 = sphi 0, %s88
      %s103 = sphi 0, %s89
      %s107 = sphi 0, %s107
      %s109 = sphi 0, %s107
      %s110 = sphi 0, %s109
      %s124 = sphi 0, %s110
      %s128 = sphi 0, %s128
      %s130 = sphi 0, %s128
      %s131 = sphi 0, %s130
      %s145 = sphi 0, %s131
      %s149 = sphi 0, %s149
      %s151 = sphi 0, %s149
      %s152 = sphi 0, %s151
      %s166 = sphi 0, %s152
      %s172 = sphi 0, %s174
      %s175 = sphi 0, %s172
      %s176 = sphi 0, %s175
      %s192 = sphi 0, %s176
      %s198 = sphi 0, %s200
      %s201 = sphi 0, %s198
      %s202 = sphi 0, %s201
      %s218 = sphi 0, %s202
    $region4: #{tpu_custom_call.1} parent=1 // loop_header_branch
      %29 = sbr.rel (%p27) target = $region8
    $region5: #{tpu_custom_call.1} parent=1 // loop_body
      %s31 = ssub.s32 %s26, 1
      %s32 = ssub.s32 %s26, 2
      %s33 = sadd.s32 %s26, 1
      %s34 = ssub.s32 %s26, %s33
      %p35 = scmp.eq.s32.totalorder %s34, 0
      %s37 = sadd.s32 %s36, 1
      %s38 = scalar_select %p35, %s36, %s37
      %p41 = pneg %p35
      %p42 = scmp.eq.s32.totalorder %s26, 1
      %p43 = por %p41, %p42
      %p44 = scmp.ne.s32.totalorder %s36, %s39
      %p45 = scmp.eq.s32.totalorder %s26, 0
      %p46 = por %p44, %p45
      %p47 = scmp.ne.s32.totalorder %s36, %s39
      %p48 = scmp.eq.s32.totalorder %s31, 1
      %p49 = por %p47, %p48
      %p50 = scmp.ne.s32.totalorder %s39, %s40
      %p51 = scmp.eq.s32.totalorder %s31, 0
      %p52 = por %p50, %p51
      %p53 = scmp.ne.s32.totalorder %s39, %s40
      %p54 = scmp.eq.s32.totalorder %s32, 1
      %p55 = por %p53, %p54
      %p57 = scmp.ne.s32.totalorder %s40, %s56
      %p58 = scmp.eq.s32.totalorder %s32, 0
      %p59 = por %p57, %p58
      %s60 = ssub.s32 %s26, %s33
      %p61 = scmp.eq.s32.totalorder %s60, 0
      %s63 = sadd.s32 %s62, 1
      %s64 = scalar_select %p61, %s62, %s63
      %p67 = pneg %p61
      %p68 = scmp.eq.s32.totalorder %s26, 1
      %p69 = por %p67, %p68
      %p70 = scmp.ne.s32.totalorder %s62, %s65
      %p71 = scmp.eq.s32.totalorder %s26, 0
      %p72 = por %p70, %p71
      %p73 = scmp.ne.s32.totalorder %s62, %s65
      %p74 = scmp.eq.s32.totalorder %s31, 1
      %p75 = por %p73, %p74
      %p76 = scmp.ne.s32.totalorder %s65, %s66
      %p77 = scmp.eq.s32.totalorder %s31, 0
      %p78 = por %p76, %p77
      %p79 = scmp.ne.s32.totalorder %s65, %s66
      %p80 = scmp.eq.s32.totalorder %s32, 1
      %p81 = por %p79, %p80
      %p83 = scmp.ne.s32.totalorder %s66, %s82
      %p84 = scmp.eq.s32.totalorder %s32, 0
      %p85 = por %p83, %p84
      %s87 = sadd.s32 %s86, 1
      %p90 = scmp.eq.s32.totalorder %s26, 1
      %p91 = scmp.ne.s32.totalorder %s86, %s88
      %p92 = scmp.eq.s32.totalorder %s26, 0
      %p93 = por %p91, %p92
      %p94 = scmp.ne.s32.totalorder %s86, %s88
      %p95 = scmp.eq.s32.totalorder %s31, 1
      %p96 = por %p94, %p95
      %p97 = scmp.ne.s32.totalorder %s88, %s89
      %p98 = scmp.eq.s32.totalorder %s31, 0
      %p99 = por %p97, %p98
      %p100 = scmp.ne.s32.totalorder %s88, %s89
      %p101 = scmp.eq.s32.totalorder %s32, 1
      %p102 = por %p100, %p101
      %p104 = scmp.ne.s32.totalorder %s89, %s103
      %p105 = scmp.eq.s32.totalorder %s32, 0
      %p106 = por %p104, %p105
      %s108 = sadd.s32 %s107, 1
      %p111 = scmp.eq.s32.totalorder %s26, 1
      %p112 = scmp.ne.s32.totalorder %s107, %s109
      %p113 = scmp.eq.s32.totalorder %s26, 0
      %p114 = por %p112, %p113
      %p115 = scmp.ne.s32.totalorder %s107, %s109
      %p116 = scmp.eq.s32.totalorder %s31, 1
      %p117 = por %p115, %p116
      %p118 = scmp.ne.s32.totalorder %s109, %s110
      %p119 = scmp.eq.s32.totalorder %s31, 0
      %p120 = por %p118, %p119
      %p121 = scmp.ne.s32.totalorder %s109, %s110
      %p122 = scmp.eq.s32.totalorder %s32, 1
      %p123 = por %p121, %p122
      %p125 = scmp.ne.s32.totalorder %s110, %s124
      %p126 = scmp.eq.s32.totalorder %s32, 0
      %p127 = por %p125, %p126
      %s129 = sadd.s32 %s128, 1
      %p132 = scmp.eq.s32.totalorder %s26, 1
      %p133 = scmp.ne.s32.totalorder %s128, %s130
      %p134 = scmp.eq.s32.totalorder %s26, 0
      %p135 = por %p133, %p134
      %p136 = scmp.ne.s32.totalorder %s128, %s130
      %p137 = scmp.eq.s32.totalorder %s31, 1
      %p138 = por %p136, %p137
      %p139 = scmp.ne.s32.totalorder %s130, %s131
      %p140 = scmp.eq.s32.totalorder %s31, 0
      %p141 = por %p139, %p140
      %p142 = scmp.ne.s32.totalorder %s130, %s131
      %p143 = scmp.eq.s32.totalorder %s32, 1
      %p144 = por %p142, %p143
      %p146 = scmp.ne.s32.totalorder %s131, %s145
      %p147 = scmp.eq.s32.totalorder %s32, 0
      %p148 = por %p146, %p147
      %s150 = sadd.s32 %s149, 1
      %p153 = scmp.eq.s32.totalorder %s26, 1
      %p154 = scmp.ne.s32.totalorder %s149, %s151
      %p155 = scmp.eq.s32.totalorder %s26, 0
      %p156 = por %p154, %p155
      %p157 = scmp.ne.s32.totalorder %s149, %s151
      %p158 = scmp.eq.s32.totalorder %s31, 1
      %p159 = por %p157, %p158
      %p160 = scmp.ne.s32.totalorder %s151, %s152
      %p161 = scmp.eq.s32.totalorder %s31, 0
      %p162 = por %p160, %p161
      %p163 = scmp.ne.s32.totalorder %s151, %s152
      %p164 = scmp.eq.s32.totalorder %s32, 1
      %p165 = por %p163, %p164
      %p167 = scmp.ne.s32.totalorder %s152, %s166
      %p168 = scmp.eq.s32.totalorder %s32, 0
      %p169 = por %p167, %p168
      %s170 = ssub.s32 %s26, %s33
      %p171 = scmp.eq.s32.totalorder %s170, 0
      %s173 = sadd.s32 %s172, 1
      %s174 = scalar_select %p171, %s172, %s173
      %p177 = pneg %p171
      %p178 = scmp.eq.s32.totalorder %s26, 1
      %p179 = por %p177, %p178
      %p180 = scmp.ne.s32.totalorder %s172, %s175
      %p181 = scmp.eq.s32.totalorder %s26, 0
      %p182 = por %p180, %p181
      %p183 = scmp.ne.s32.totalorder %s172, %s175
      %p184 = scmp.eq.s32.totalorder %s31, 1
      %p185 = por %p183, %p184
      %p186 = scmp.ne.s32.totalorder %s175, %s176
      %p187 = scmp.eq.s32.totalorder %s31, 0
      %p188 = por %p186, %p187
      %p189 = scmp.ne.s32.totalorder %s175, %s176
      %p190 = scmp.eq.s32.totalorder %s32, 1
      %p191 = por %p189, %p190
      %p193 = scmp.ne.s32.totalorder %s176, %s192
      %p194 = scmp.eq.s32.totalorder %s32, 0
      %p195 = por %p193, %p194
      %s196 = ssub.s32 %s26, %s33
      %p197 = scmp.eq.s32.totalorder %s196, 0
      %s199 = sadd.s32 %s198, 1
      %s200 = scalar_select %p197, %s198, %s199
      %p203 = pneg %p197
      %p204 = scmp.eq.s32.totalorder %s26, 1
      %p205 = por %p203, %p204
      %p206 = scmp.ne.s32.totalorder %s198, %s201
      %p207 = scmp.eq.s32.totalorder %s26, 0
      %p208 = por %p206, %p207
      %p209 = scmp.ne.s32.totalorder %s198, %s201
      %p210 = scmp.eq.s32.totalorder %s31, 1
      %p211 = por %p209, %p210
      %p212 = scmp.ne.s32.totalorder %s201, %s202
      %p213 = scmp.eq.s32.totalorder %s31, 0
      %p214 = por %p212, %p213
      %p215 = scmp.ne.s32.totalorder %s201, %s202
      %p216 = scmp.eq.s32.totalorder %s32, 1
      %p217 = por %p215, %p216
      %p219 = scmp.ne.s32.totalorder %s202, %s218
      %p220 = scmp.eq.s32.totalorder %s32, 0
      %p221 = por %p219, %p220
      %p222 = scmp.le.s32.totalorder 1, %s26
      %p223 = scmp.lt.s32.totalorder %s26, 3
      %p224 = pnand %p222, %p223
      %p225 = pneg %p224
      // Predicated region
      $region9: #{tpu_custom_call.1} parent=5 // pred_check
        _
      $region10: #{tpu_custom_call.1} parent=5 // pred_check_branch
        %227 = sbr.rel (%p224) target = $region12
      $region11: #{tpu_custom_call.1} parent=5 // pred_region
        %s228 = ssub.s32 %s26, 1
        // Predicated region
        $region13: #{tpu_custom_call.1} parent=11 // pred_check
          %p229 = pneg %p99
        $region14: #{tpu_custom_call.1} parent=11 // pred_check_branch
          %231 = sbr.rel (%p229) target = $region16
        $region15: #{tpu_custom_call.1} parent=11 // pred_region
          %s233 = ssub.s32 1024, 1024
          %234 = vsyncadd [#allocation6], %s233
          %s235 = sshll.u32 [#allocation7], 4
          %s236 = int_to_ptr.vmem [resolvable:$true] %s235
          %241 = dma.hbm_to_vmem [thread:$0]  %s2, 1024, %s236, [#allocation6], 64, 64, 4
        $region16: #{tpu_custom_call.1} parent=11 // pred_fallthru
          _
        // Predicated region
        $region17: #{tpu_custom_call.1} parent=11 // pred_check
          %p242 = pneg %p120
        $region18: #{tpu_custom_call.1} parent=11 // pred_check_branch
          %244 = sbr.rel (%p242) target = $region20
        $region19: #{tpu_custom_call.1} parent=11 // pred_region
          _
        $region20: #{tpu_custom_call.1} parent=11 // pred_fallthru
          _
        // Predicated region
        $region21: #{tpu_custom_call.1} parent=11 // pred_check
          %p245 = pneg %p141
        $region22: #{tpu_custom_call.1} parent=11 // pred_check_branch
          %247 = sbr.rel (%p245) target = $region24
        $region23: #{tpu_custom_call.1} parent=11 // pred_region
          _
        $region24: #{tpu_custom_call.1} parent=11 // pred_fallthru
          _
        // Predicated region
        $region25: #{tpu_custom_call.1} parent=11 // pred_check
          %p248 = pneg %p162
        $region26: #{tpu_custom_call.1} parent=11 // pred_check_branch
          %250 = sbr.rel (%p248) target = $region28
        $region27: #{tpu_custom_call.1} parent=11 // pred_region
          _
        $region28: #{tpu_custom_call.1} parent=11 // pred_fallthru
          _
      $region12: #{tpu_custom_call.1} parent=5 // pred_fallthru
        _
      %p251 = scmp.lt.s32.totalorder %s26, 2
      // Predicated region
      $region29: #{tpu_custom_call.1} parent=5 // pred_check
        %p252 = pneg %p251
      $region30: #{tpu_custom_call.1} parent=5 // pred_check_branch
        %254 = sbr.rel (%p252) target = $region32
      $region31: #{tpu_custom_call.1} parent=5 // pred_region
        // Predicated region
        $region33: #{tpu_custom_call.1} parent=31 // pred_check
          %p255 = pneg %p46
        $region34: #{tpu_custom_call.1} parent=31 // pred_check_branch
          %257 = sbr.rel (%p255) target = $region36
        $region35: #{tpu_custom_call.1} parent=31 // pred_region
          %s258 = sand.u32 %s36, 1
          %s259 = scalar_lea.sflag [#allocation3], %s258
          %s260 = sand.u32 %s36, 1
          %s261 = smul.addr %s260, 512
          %s262 = scalar_lea.vmem [#allocation2], %s261
          %s263 = smul.u32 8, %s26
          %s265 = ssub.s32 8192, 8192
          %266 = vsyncadd %s259, %s265
          %s267 = smul.addr %s263, 16
          %s268 = smul.addr %s267, 64
          %s269 = scalar_lea.hbm %s0, %s268
          %s270 = sshll.u32 %s262, 4
          %s271 = int_to_ptr.vmem [resolvable:$true] %s270
          %276 = dma.hbm_to_vmem [thread:$0]  %s269, 8192, %s271, %s259, 64, 64, 4
        $region36: #{tpu_custom_call.1} parent=31 // pred_fallthru
          _
        // Predicated region
        $region37: #{tpu_custom_call.1} parent=31 // pred_check
          %p277 = pneg %p72
        $region38: #{tpu_custom_call.1} parent=31 // pred_check_branch
          %279 = sbr.rel (%p277) target = $region40
        $region39: #{tpu_custom_call.1} parent=31 // pred_region
          %s280 = sand.u32 %s26, 1
          %s281 = scalar_lea.sflag [#allocation6], %s280
          %s282 = sand.u32 %s62, 1
          %s283 = smul.addr %s282, 4
          %s284 = scalar_lea.vmem [#allocation5], %s283
          %s286 = ssub.s32 64, 64
          %287 = vsyncadd %s281, %s286
          %s288 = smul.addr %s26, 64
          %s289 = scalar_lea.hbm %s1, %s288
          %s291 = sshll.u32 %s284, 4
          %s292 = int_to_ptr.vmem [resolvable:$true] %s291
          %294 = dma.hbm_to_vmem [thread:$0]  %s289, 64, %s292, %s281
        $region40: #{tpu_custom_call.1} parent=31 // pred_fallthru
          _
      $region32: #{tpu_custom_call.1} parent=5 // pred_fallthru
        _
      %p295 = scmp.le.s32.totalorder 1, %s26
      %p296 = scmp.lt.s32.totalorder %s26, 3
      %p297 = pnand %p295, %p296
      %p298 = pneg %p297
      // Predicated region
      $region41: #{tpu_custom_call.1} parent=5 // pred_check
        _
      $region42: #{tpu_custom_call.1} parent=5 // pred_check_branch
        %300 = sbr.rel (%p297) target = $region44
      $region43: #{tpu_custom_call.1} parent=5 // pred_region
        %s301 = ssub.s32 %s26, 1
        %s302 = sand.u32 %s39, 1
        %s303 = scalar_lea.sflag [#allocation3], %s302
        %s304 = sand.u32 %s39, 1
        %s305 = smul.addr %s304, 512
        %s306 = scalar_lea.vmem [#allocation2], %s305
        // Predicated region
        $region45: #{tpu_custom_call.1} parent=43 // pred_check
          %p307 = pneg %p52
        $region46: #{tpu_custom_call.1} parent=43 // pred_check_branch
          %309 = sbr.rel (%p307) target = $region48
        $region47: #{tpu_custom_call.1} parent=43 // pred_region
          %310 = dma.done %s303, 8192
        $region48: #{tpu_custom_call.1} parent=43 // pred_fallthru
          _
        %s311 = sand.u32 %s31, 1
        %s312 = scalar_lea.sflag [#allocation6], %s311
        %s313 = sand.u32 %s65, 1
        %s314 = smul.addr %s313, 4
        %s315 = scalar_lea.vmem [#allocation5], %s314
        // Predicated region
        $region49: #{tpu_custom_call.1} parent=43 // pred_check
          %p316 = pneg %p78
        $region50: #{tpu_custom_call.1} parent=43 // pred_check_branch
          %318 = sbr.rel (%p316) target = $region52
        $region51: #{tpu_custom_call.1} parent=43 // pred_region
          %319 = dma.done %s312, 64
        $region52: #{tpu_custom_call.1} parent=43 // pred_fallthru
          _
        // Predicated region
        $region53: #{tpu_custom_call.1} parent=43 // pred_check
          %p320 = pneg %p99
        $region54: #{tpu_custom_call.1} parent=43 // pred_check_branch
          %322 = sbr.rel (%p320) target = $region56
        $region55: #{tpu_custom_call.1} parent=43 // pred_region
          %323 = dma.done [#allocation6], 1024
        $region56: #{tpu_custom_call.1} parent=43 // pred_fallthru
          _
        %s324 = sand.u32 %s39, 1
        %s325 = scalar_lea.sflag [#allocation3], %s324
        %s326 = sand.u32 %s39, 1
        %s327 = smul.addr %s326, 512
        %s328 = scalar_lea.vmem [#allocation2], %s327
        %p329 = pneg %p52
        %p330 = pneg %p49
        %s331 = sand.u32 %s31, 1
        %s332 = scalar_lea.sflag [#allocation6], %s331
        %s333 = sand.u32 %s65, 1
        %s334 = smul.addr %s333, 4
        %s335 = scalar_lea.vmem [#allocation5], %s334
        %p336 = pneg %p78
        %p337 = pneg %p75
        %p338 = pneg %p99
        %p339 = pneg %p96
        %p340 = pneg %p120
        %p341 = pneg %p117
        %p342 = pneg %p141
        %p343 = pneg %p138
        %p344 = pneg %p162
        %p345 = pneg %p159
        %p346 = pneg %p188
        %p347 = pneg %p185
        %s348 = sand.u32 %s175, 1
        %s349 = scalar_lea.sflag [#allocation4], %s348
        %s350 = sand.u32 %s175, 1
        %s351 = smul.addr %s350, 8
        %s352 = scalar_lea.vmem [#allocation8], %s351
        %p353 = pneg %p214
        %p354 = pneg %p211
        %s355 = sand.u32 %s201, 1
        %s356 = scalar_lea.sflag [#allocation10], %s355
        %s357 = sand.u32 %s201, 1
        %s358 = smul.addr %s357, 8
        %s359 = scalar_lea.vmem [#allocation9], %s358
        %s360 = smul.u32 8, %s31
        %v362 = vld [vmem:[%s306] sm:$0xf]
        %v363 = vld [vmem:[%s306 + $0x4] sm:$0xf]
        %v364 = vld [vmem:[%s306 + $0x8] sm:$0xf]
        %v365 = vld [vmem:[%s306 + $0xc] sm:$0xf]
        %v366 = vld [vmem:[%s306 + $0x10] sm:$0xf]
        %v367 = vld [vmem:[%s306 + $0x14] sm:$0xf]
        %v368 = vld [vmem:[%s306 + $0x18] sm:$0xf]
        %v369 = vld [vmem:[%s306 + $0x1c] sm:$0xf]
        %v370 = vld [vmem:[%s306 + $0x20] sm:$0xf]
        %v371 = vld [vmem:[%s306 + $0x24] sm:$0xf]
        %v372 = vld [vmem:[%s306 + $0x28] sm:$0xf]
        %v373 = vld [vmem:[%s306 + $0x2c] sm:$0xf]
        %v374 = vld [vmem:[%s306 + $0x30] sm:$0xf]
        %v375 = vld [vmem:[%s306 + $0x34] sm:$0xf]
        %v376 = vld [vmem:[%s306 + $0x38] sm:$0xf]
        %v377 = vld [vmem:[%s306 + $0x3c] sm:$0xf]
        %v378 = vld [vmem:[%s306 + $0x40] sm:$0xf]
        %v379 = vld [vmem:[%s306 + $0x44] sm:$0xf]
        %v380 = vld [vmem:[%s306 + $0x48] sm:$0xf]
        %v381 = vld [vmem:[%s306 + $0x4c] sm:$0xf]
        %v382 = vld [vmem:[%s306 + $0x50] sm:$0xf]
        %v383 = vld [vmem:[%s306 + $0x54] sm:$0xf]
        %v384 = vld [vmem:[%s306 + $0x58] sm:$0xf]
        %v385 = vld [vmem:[%s306 + $0x5c] sm:$0xf]
        %v386 = vld [vmem:[%s306 + $0x60] sm:$0xf]
        %v387 = vld [vmem:[%s306 + $0x64] sm:$0xf]
        %v388 = vld [vmem:[%s306 + $0x68] sm:$0xf]
        %v389 = vld [vmem:[%s306 + $0x6c] sm:$0xf]
        %v390 = vld [vmem:[%s306 + $0x70] sm:$0xf]
        %v391 = vld [vmem:[%s306 + $0x74] sm:$0xf]
        %v392 = vld [vmem:[%s306 + $0x78] sm:$0xf]
        %v393 = vld [vmem:[%s306 + $0x7c] sm:$0xf]
        %v394 = vld [vmem:[%s306 + $0x80] sm:$0xf]
        %v395 = vld [vmem:[%s306 + $0x84] sm:$0xf]
        %v396 = vld [vmem:[%s306 + $0x88] sm:$0xf]
        %v397 = vld [vmem:[%s306 + $0x8c] sm:$0xf]
        %v398 = vld [vmem:[%s306 + $0x90] sm:$0xf]
        %v399 = vld [vmem:[%s306 + $0x94] sm:$0xf]
        %v400 = vld [vmem:[%s306 + $0x98] sm:$0xf]
        %v401 = vld [vmem:[%s306 + $0x9c] sm:$0xf]
        %v402 = vld [vmem:[%s306 + $0xa0] sm:$0xf]
        %v403 = vld [vmem:[%s306 + $0xa4] sm:$0xf]
        %v404 = vld [vmem:[%s306 + $0xa8] sm:$0xf]
        %v405 = vld [vmem:[%s306 + $0xac] sm:$0xf]
        %v406 = vld [vmem:[%s306 + $0xb0] sm:$0xf]
        %v407 = vld [vmem:[%s306 + $0xb4] sm:$0xf]
        %v408 = vld [vmem:[%s306 + $0xb8] sm:$0xf]
        %v409 = vld [vmem:[%s306 + $0xbc] sm:$0xf]
        %v410 = vld [vmem:[%s306 + $0xc0] sm:$0xf]
        %v411 = vld [vmem:[%s306 + $0xc4] sm:$0xf]
        %v412 = vld [vmem:[%s306 + $0xc8] sm:$0xf]
        %v413 = vld [vmem:[%s306 + $0xcc] sm:$0xf]
        %v414 = vld [vmem:[%s306 + $0xd0] sm:$0xf]
        %v415 = vld [vmem:[%s306 + $0xd4] sm:$0xf]
        %v416 = vld [vmem:[%s306 + $0xd8] sm:$0xf]
        %v417 = vld [vmem:[%s306 + $0xdc] sm:$0xf]
        %v418 = vld [vmem:[%s306 + $0xe0] sm:$0xf]
        %v419 = vld [vmem:[%s306 + $0xe4] sm:$0xf]
        %v420 = vld [vmem:[%s306 + $0xe8] sm:$0xf]
        %v421 = vld [vmem:[%s306 + $0xec] sm:$0xf]
        %v422 = vld [vmem:[%s306 + $0xf0] sm:$0xf]
        %v423 = vld [vmem:[%s306 + $0xf4] sm:$0xf]
        %v424 = vld [vmem:[%s306 + $0xf8] sm:$0xf]
        %v425 = vld [vmem:[%s306 + $0xfc] sm:$0xf]
        %v426 = vld [vmem:[%s306 + $0x100] sm:$0xf]
        %v427 = vld [vmem:[%s306 + $0x104] sm:$0xf]
        %v428 = vld [vmem:[%s306 + $0x108] sm:$0xf]
        %v429 = vld [vmem:[%s306 + $0x10c] sm:$0xf]
        %v430 = vld [vmem:[%s306 + $0x110] sm:$0xf]
        %v431 = vld [vmem:[%s306 + $0x114] sm:$0xf]
        %v432 = vld [vmem:[%s306 + $0x118] sm:$0xf]
        %v433 = vld [vmem:[%s306 + $0x11c] sm:$0xf]
        %v434 = vld [vmem:[%s306 + $0x120] sm:$0xf]
        %v435 = vld [vmem:[%s306 + $0x124] sm:$0xf]
        %v436 = vld [vmem:[%s306 + $0x128] sm:$0xf]
        %v437 = vld [vmem:[%s306 + $0x12c] sm:$0xf]
        %v438 = vld [vmem:[%s306 + $0x130] sm:$0xf]
        %v439 = vld [vmem:[%s306 + $0x134] sm:$0xf]
        %v440 = vld [vmem:[%s306 + $0x138] sm:$0xf]
        %v441 = vld [vmem:[%s306 + $0x13c] sm:$0xf]
        %v442 = vld [vmem:[%s306 + $0x140] sm:$0xf]
        %v443 = vld [vmem:[%s306 + $0x144] sm:$0xf]
        %v444 = vld [vmem:[%s306 + $0x148] sm:$0xf]
        %v445 = vld [vmem:[%s306 + $0x14c] sm:$0xf]
        %v446 = vld [vmem:[%s306 + $0x150] sm:$0xf]
        %v447 = vld [vmem:[%s306 + $0x154] sm:$0xf]
        %v448 = vld [vmem:[%s306 + $0x158] sm:$0xf]
        %v449 = vld [vmem:[%s306 + $0x15c] sm:$0xf]
        %v450 = vld [vmem:[%s306 + $0x160] sm:$0xf]
        %v451 = vld [vmem:[%s306 + $0x164] sm:$0xf]
        %v452 = vld [vmem:[%s306 + $0x168] sm:$0xf]
        %v453 = vld [vmem:[%s306 + $0x16c] sm:$0xf]
        %v454 = vld [vmem:[%s306 + $0x170] sm:$0xf]
        %v455 = vld [vmem:[%s306 + $0x174] sm:$0xf]
        %v456 = vld [vmem:[%s306 + $0x178] sm:$0xf]
        %v457 = vld [vmem:[%s306 + $0x17c] sm:$0xf]
        %v458 = vld [vmem:[%s306 + $0x180] sm:$0xf]
        %v459 = vld [vmem:[%s306 + $0x184] sm:$0xf]
        %v460 = vld [vmem:[%s306 + $0x188] sm:$0xf]
        %v461 = vld [vmem:[%s306 + $0x18c] sm:$0xf]
        %v462 = vld [vmem:[%s306 + $0x190] sm:$0xf]
        %v463 = vld [vmem:[%s306 + $0x194] sm:$0xf]
        %v464 = vld [vmem:[%s306 + $0x198] sm:$0xf]
        %v465 = vld [vmem:[%s306 + $0x19c] sm:$0xf]
        %v466 = vld [vmem:[%s306 + $0x1a0] sm:$0xf]
        %v467 = vld [vmem:[%s306 + $0x1a4] sm:$0xf]
        %v468 = vld [vmem:[%s306 + $0x1a8] sm:$0xf]
        %v469 = vld [vmem:[%s306 + $0x1ac] sm:$0xf]
        %v470 = vld [vmem:[%s306 + $0x1b0] sm:$0xf]
        %v471 = vld [vmem:[%s306 + $0x1b4] sm:$0xf]
        %v472 = vld [vmem:[%s306 + $0x1b8] sm:$0xf]
        %v473 = vld [vmem:[%s306 + $0x1bc] sm:$0xf]
        %v474 = vld [vmem:[%s306 + $0x1c0] sm:$0xf]
        %v475 = vld [vmem:[%s306 + $0x1c4] sm:$0xf]
        %v476 = vld [vmem:[%s306 + $0x1c8] sm:$0xf]
        %v477 = vld [vmem:[%s306 + $0x1cc] sm:$0xf]
        %v478 = vld [vmem:[%s306 + $0x1d0] sm:$0xf]
        %v479 = vld [vmem:[%s306 + $0x1d4] sm:$0xf]
        %v480 = vld [vmem:[%s306 + $0x1d8] sm:$0xf]
        %v481 = vld [vmem:[%s306 + $0x1dc] sm:$0xf]
        %v482 = vld [vmem:[%s306 + $0x1e0] sm:$0xf]
        %v483 = vld [vmem:[%s306 + $0x1e4] sm:$0xf]
        %v484 = vld [vmem:[%s306 + $0x1e8] sm:$0xf]
        %v485 = vld [vmem:[%s306 + $0x1ec] sm:$0xf]
        %v486 = vld [vmem:[%s306 + $0x1f0] sm:$0xf]
        %v487 = vld [vmem:[%s306 + $0x1f4] sm:$0xf]
        %v488 = vld [vmem:[%s306 + $0x1f8] sm:$0xf]
        %v489 = vld [vmem:[%s306 + $0x1fc] sm:$0xf]
        %v490 = vld [vmem:[#allocation7] sm:$0xf]
        %v491 = vld [vmem:[#allocation7 + $0x4] sm:$0xf]
        %v492 = vld [vmem:[#allocation7 + $0x8] sm:$0xf]
        %v493 = vld [vmem:[#allocation7 + $0xc] sm:$0xf]
        %v494 = vld [vmem:[#allocation7 + $0x10] sm:$0xf]
        %v495 = vld [vmem:[#allocation7 + $0x14] sm:$0xf]
        %v496 = vld [vmem:[#allocation7 + $0x18] sm:$0xf]
        %v497 = vld [vmem:[#allocation7 + $0x1c] sm:$0xf]
        %v498 = vld [vmem:[#allocation7 + $0x20] sm:$0xf]
        %v499 = vld [vmem:[#allocation7 + $0x24] sm:$0xf]
        %v500 = vld [vmem:[#allocation7 + $0x28] sm:$0xf]
        %v501 = vld [vmem:[#allocation7 + $0x2c] sm:$0xf]
        %v502 = vld [vmem:[#allocation7 + $0x30] sm:$0xf]
        %v503 = vld [vmem:[#allocation7 + $0x34] sm:$0xf]
        %v504 = vld [vmem:[#allocation7 + $0x38] sm:$0xf]
        %v505 = vld [vmem:[#allocation7 + $0x3c] sm:$0xf]
        %v634 = vunpack.c.l.b16 %v362
        %v635 = vunpack.c.l.b16 %v363
        %v636 = vunpack.c.l.b16 %v364
        %v637 = vunpack.c.l.b16 %v365
        %v638 = vunpack.c.l.b16 %v366
        %v639 = vunpack.c.l.b16 %v367
        %v640 = vunpack.c.l.b16 %v368
        %v641 = vunpack.c.l.b16 %v369
        %v642 = vunpack.c.l.b16 %v370
        %v643 = vunpack.c.l.b16 %v371
        %v644 = vunpack.c.l.b16 %v372
        %v645 = vunpack.c.l.b16 %v373
        %v646 = vunpack.c.l.b16 %v374
        %v647 = vunpack.c.l.b16 %v375
        %v648 = vunpack.c.l.b16 %v376
        %v649 = vunpack.c.l.b16 %v377
        %v650 = vunpack.c.l.b16 %v378
        %v651 = vunpack.c.l.b16 %v379
        %v652 = vunpack.c.l.b16 %v380
        %v653 = vunpack.c.l.b16 %v381
        %v654 = vunpack.c.l.b16 %v382
        %v655 = vunpack.c.l.b16 %v383
        %v656 = vunpack.c.l.b16 %v384
        %v657 = vunpack.c.l.b16 %v385
        %v658 = vunpack.c.l.b16 %v386
        %v659 = vunpack.c.l.b16 %v387
        %v660 = vunpack.c.l.b16 %v388
        %v661 = vunpack.c.l.b16 %v389
        %v662 = vunpack.c.l.b16 %v390
        %v663 = vunpack.c.l.b16 %v391
        %v664 = vunpack.c.l.b16 %v392
        %v665 = vunpack.c.l.b16 %v393
        %v666 = vunpack.c.l.b16 %v394
        %v667 = vunpack.c.l.b16 %v395
        %v668 = vunpack.c.l.b16 %v396
        %v669 = vunpack.c.l.b16 %v397
        %v670 = vunpack.c.l.b16 %v398
        %v671 = vunpack.c.l.b16 %v399
        %v672 = vunpack.c.l.b16 %v400
        %v673 = vunpack.c.l.b16 %v401
        %v674 = vunpack.c.l.b16 %v402
        %v675 = vunpack.c.l.b16 %v403
        %v676 = vunpack.c.l.b16 %v404
        %v677 = vunpack.c.l.b16 %v405
        %v678 = vunpack.c.l.b16 %v406
        %v679 = vunpack.c.l.b16 %v407
        %v680 = vunpack.c.l.b16 %v408
        %v681 = vunpack.c.l.b16 %v409
        %v682 = vunpack.c.l.b16 %v410
        %v683 = vunpack.c.l.b16 %v411
        %v684 = vunpack.c.l.b16 %v412
        %v685 = vunpack.c.l.b16 %v413
        %v686 = vunpack.c.l.b16 %v414
        %v687 = vunpack.c.l.b16 %v415
        %v688 = vunpack.c.l.b16 %v416
        %v689 = vunpack.c.l.b16 %v417
        %v690 = vunpack.c.l.b16 %v418
        %v691 = vunpack.c.l.b16 %v419
        %v692 = vunpack.c.l.b16 %v420
        %v693 = vunpack.c.l.b16 %v421
        %v694 = vunpack.c.l.b16 %v422
        %v695 = vunpack.c.l.b16 %v423
        %v696 = vunpack.c.l.b16 %v424
        %v697 = vunpack.c.l.b16 %v425
        %v698 = vunpack.c.l.b16 %v426
        %v699 = vunpack.c.l.b16 %v427
        %v700 = vunpack.c.l.b16 %v428
        %v701 = vunpack.c.l.b16 %v429
        %v702 = vunpack.c.l.b16 %v430
        %v703 = vunpack.c.l.b16 %v431
        %v704 = vunpack.c.l.b16 %v432
        %v705 = vunpack.c.l.b16 %v433
        %v706 = vunpack.c.l.b16 %v434
        %v707 = vunpack.c.l.b16 %v435
        %v708 = vunpack.c.l.b16 %v436
        %v709 = vunpack.c.l.b16 %v437
        %v710 = vunpack.c.l.b16 %v438
        %v711 = vunpack.c.l.b16 %v439
        %v712 = vunpack.c.l.b16 %v440
        %v713 = vunpack.c.l.b16 %v441
        %v714 = vunpack.c.l.b16 %v442
        %v715 = vunpack.c.l.b16 %v443
        %v716 = vunpack.c.l.b16 %v444
        %v717 = vunpack.c.l.b16 %v445
        %v718 = vunpack.c.l.b16 %v446
        %v719 = vunpack.c.l.b16 %v447
        %v720 = vunpack.c.l.b16 %v448
        %v721 = vunpack.c.l.b16 %v449
        %v722 = vunpack.c.l.b16 %v450
        %v723 = vunpack.c.l.b16 %v451
        %v724 = vunpack.c.l.b16 %v452
        %v725 = vunpack.c.l.b16 %v453
        %v726 = vunpack.c.l.b16 %v454
        %v727 = vunpack.c.l.b16 %v455
        %v728 = vunpack.c.l.b16 %v456
        %v729 = vunpack.c.l.b16 %v457
        %v730 = vunpack.c.l.b16 %v458
        %v731 = vunpack.c.l.b16 %v459
        %v732 = vunpack.c.l.b16 %v460
        %v733 = vunpack.c.l.b16 %v461
        %v734 = vunpack.c.l.b16 %v462
        %v735 = vunpack.c.l.b16 %v463
        %v736 = vunpack.c.l.b16 %v464
        %v737 = vunpack.c.l.b16 %v465
        %v738 = vunpack.c.l.b16 %v466
        %v739 = vunpack.c.l.b16 %v467
        %v740 = vunpack.c.l.b16 %v468
        %v741 = vunpack.c.l.b16 %v469
        %v742 = vunpack.c.l.b16 %v470
        %v743 = vunpack.c.l.b16 %v471
        %v744 = vunpack.c.l.b16 %v472
        %v745 = vunpack.c.l.b16 %v473
        %v746 = vunpack.c.l.b16 %v474
        %v747 = vunpack.c.l.b16 %v475
        %v748 = vunpack.c.l.b16 %v476
        %v749 = vunpack.c.l.b16 %v477
        %v750 = vunpack.c.l.b16 %v478
        %v751 = vunpack.c.l.b16 %v479
        %v752 = vunpack.c.l.b16 %v480
        %v753 = vunpack.c.l.b16 %v481
        %v754 = vunpack.c.l.b16 %v482
        %v755 = vunpack.c.l.b16 %v483
        %v756 = vunpack.c.l.b16 %v484
        %v757 = vunpack.c.l.b16 %v485
        %v758 = vunpack.c.l.b16 %v486
        %v759 = vunpack.c.l.b16 %v487
        %v760 = vunpack.c.l.b16 %v488
        %v761 = vunpack.c.l.b16 %v489
        %v762 = vpack.c.b16 %v635, %v634
        %v763 = vpack.c.b16 %v637, %v636
        %v764 = vpack.c.b16 %v639, %v638
        %v765 = vpack.c.b16 %v641, %v640
        %v766 = vpack.c.b16 %v643, %v642
        %v767 = vpack.c.b16 %v645, %v644
        %v768 = vpack.c.b16 %v647, %v646
        %v769 = vpack.c.b16 %v649, %v648
        %v770 = vpack.c.b16 %v651, %v650
        %v771 = vpack.c.b16 %v653, %v652
        %v772 = vpack.c.b16 %v655, %v654
        %v773 = vpack.c.b16 %v657, %v656
        %v774 = vpack.c.b16 %v659, %v658
        %v775 = vpack.c.b16 %v661, %v660
        %v776 = vpack.c.b16 %v663, %v662
        %v777 = vpack.c.b16 %v665, %v664
        %v778 = vpack.c.b16 %v667, %v666
        %v779 = vpack.c.b16 %v669, %v668
        %v780 = vpack.c.b16 %v671, %v670
        %v781 = vpack.c.b16 %v673, %v672
        %v782 = vpack.c.b16 %v675, %v674
        %v783 = vpack.c.b16 %v677, %v676
        %v784 = vpack.c.b16 %v679, %v678
        %v785 = vpack.c.b16 %v681, %v680
        %v786 = vpack.c.b16 %v683, %v682
        %v787 = vpack.c.b16 %v685, %v684
        %v788 = vpack.c.b16 %v687, %v686
        %v789 = vpack.c.b16 %v689, %v688
        %v790 = vpack.c.b16 %v691, %v690
        %v791 = vpack.c.b16 %v693, %v692
        %v792 = vpack.c.b16 %v695, %v694
        %v793 = vpack.c.b16 %v697, %v696
        %v794 = vpack.c.b16 %v699, %v698
        %v795 = vpack.c.b16 %v701, %v700
        %v796 = vpack.c.b16 %v703, %v702
        %v797 = vpack.c.b16 %v705, %v704
        %v798 = vpack.c.b16 %v707, %v706
        %v799 = vpack.c.b16 %v709, %v708
        %v800 = vpack.c.b16 %v711, %v710
        %v801 = vpack.c.b16 %v713, %v712
        %v802 = vpack.c.b16 %v715, %v714
        %v803 = vpack.c.b16 %v717, %v716
        %v804 = vpack.c.b16 %v719, %v718
        %v805 = vpack.c.b16 %v721, %v720
        %v806 = vpack.c.b16 %v723, %v722
        %v807 = vpack.c.b16 %v725, %v724
        %v808 = vpack.c.b16 %v727, %v726
        %v809 = vpack.c.b16 %v729, %v728
        %v810 = vpack.c.b16 %v731, %v730
        %v811 = vpack.c.b16 %v733, %v732
        %v812 = vpack.c.b16 %v735, %v734
        %v813 = vpack.c.b16 %v737, %v736
        %v814 = vpack.c.b16 %v739, %v738
        %v815 = vpack.c.b16 %v741, %v740
        %v816 = vpack.c.b16 %v743, %v742
        %v817 = vpack.c.b16 %v745, %v744
        %v818 = vpack.c.b16 %v747, %v746
        %v819 = vpack.c.b16 %v749, %v748
        %v820 = vpack.c.b16 %v751, %v750
        %v821 = vpack.c.b16 %v753, %v752
        %v822 = vpack.c.b16 %v755, %v754
        %v823 = vpack.c.b16 %v757, %v756
        %v824 = vpack.c.b16 %v759, %v758
        %v825 = vpack.c.b16 %v761, %v760
        %v906 = vunpack.c.l.b16 %v490
        %v907 = vunpack.c.l.b16 %v491
        %v908 = vunpack.c.l.b16 %v492
        %v909 = vunpack.c.l.b16 %v493
        %v910 = vunpack.c.l.b16 %v494
        %v911 = vunpack.c.l.b16 %v495
        %v912 = vunpack.c.l.b16 %v496
        %v913 = vunpack.c.l.b16 %v497
        %v914 = vunpack.c.l.b16 %v498
        %v915 = vunpack.c.l.b16 %v499
        %v916 = vunpack.c.l.b16 %v500
        %v917 = vunpack.c.l.b16 %v501
        %v918 = vunpack.c.l.b16 %v502
        %v919 = vunpack.c.l.b16 %v503
        %v920 = vunpack.c.l.b16 %v504
        %v921 = vunpack.c.l.b16 %v505
        %v922 = vpack.c.b16 %v907, %v906
        %v923 = vpack.c.b16 %v909, %v908
        %v924 = vpack.c.b16 %v911, %v910
        %v925 = vpack.c.b16 %v913, %v912
        %v926 = vpack.c.b16 %v915, %v914
        %v927 = vpack.c.b16 %v917, %v916
        %v928 = vpack.c.b16 %v919, %v918
        %v929 = vpack.c.b16 %v921, %v920
        %938 = vmatprep.subr.bf16.mxu0 0
        %939 = vmatpush1.bf16.msra.mxu0 %v922
        %940 = vmatprep.subr.bf16.mxu0 0
        %941 = vmatpush1.bf16.msra.mxu0 %v923
        %942 = vmatprep.subr.bf16.mxu0 0
        %943 = vmatpush1.bf16.msra.mxu0 %v924
        %944 = vmatprep.subr.bf16.mxu0 0
        %945 = vmatpush1.bf16.msra.mxu0 %v925
        %946 = vmatprep.subr.bf16.mxu0 0
        %947 = vmatpush1.bf16.msra.mxu0 %v926
        %948 = vmatprep.subr.bf16.mxu0 0
        %949 = vmatpush1.bf16.msra.mxu0 %v927
        %950 = vmatprep.subr.bf16.mxu0 0
        %951 = vmatpush1.bf16.msra.mxu0 %v928
        %952 = vmatprep.subr.bf16.mxu0 0
        %953 = vmatpush1.bf16.msra.mxu0 %v929
        %954 = vmatprep.subr.bf16.mxu0 0
        %955 = vmatpush1.bf16.msra.mxu0 0
        %956 = vmatprep.subr.bf16.mxu0 0
        %957 = vmatpush1.bf16.msra.mxu0 0
        %958 = vmatprep.subr.bf16.mxu0 0
        %959 = vmatpush1.bf16.msra.mxu0 0
        %960 = vmatprep.subr.bf16.mxu0 0
        %961 = vmatpush1.bf16.msra.mxu0 0
        %962 = vmatprep.subr.bf16.mxu0 0
        %963 = vmatpush1.bf16.msra.mxu0 0
        %964 = vmatprep.subr.bf16.mxu0 0
        %965 = vmatpush1.bf16.msra.mxu0 0
        %966 = vmatprep.subr.bf16.mxu0 0
        %967 = vmatpush1.bf16.msra.mxu0 0
        %968 = vmatprep.subr.bf16.mxu0 0
        %969 = vmatpush1.bf16.msra.mxu0 0
        %970 = vmatprep.mubr.bf16.mxu0 0
        %971 = vmatmul.mubr.bf16.gmra.mrb[0].mxu0 %v762
        %v972 = vpop.f32.mrb[0].mxu0
        %v973 = vadd.f32 0.0, %v972
        %v974 = vpop.f32.mrb[0].mxu0
        %v975 = vpop.f32.mrb[0].mxu0
        %v976 = vadd.f32 0.0, %v975
        %v977 = vpop.f32.mrb[0].mxu0
        %978 = vmatprep.mubr.bf16.mxu0 0
        %979 = vmatmul.mubr.bf16.gmra.mrb[0].mxu0 %v763
        %v980 = vpop.f32.mrb[0].mxu0
        %v981 = vadd.f32 0.0, %v980
        %v982 = vpop.f32.mrb[0].mxu0
        %v983 = vpop.f32.mrb[0].mxu0
        %v984 = vadd.f32 0.0, %v983
        %v985 = vpop.f32.mrb[0].mxu0
        %986 = vmatprep.mubr.bf16.mxu0 0
        %987 = vmatmul.mubr.bf16.gmra.mrb[0].mxu0 %v764
        %v988 = vpop.f32.mrb[0].mxu0
        %v989 = vadd.f32 0.0, %v988
        %v990 = vpop.f32.mrb[0].mxu0
        %v991 = vpop.f32.mrb[0].mxu0
        %v992 = vadd.f32 0.0, %v991
        %v993 = vpop.f32.mrb[0].mxu0
        %994 = vmatprep.mubr.bf16.mxu0 0
        %995 = vmatmul.mubr.bf16.gmra.mrb[0].mxu0 %v765
        %v996 = vpop.f32.mrb[0].mxu0
        %v997 = vadd.f32 0.0, %v996
        %v998 = vpop.f32.mrb[0].mxu0
        %v999 = vpop.f32.mrb[0].mxu0
        %v1000 = vadd.f32 0.0, %v999
        %v1001 = vpop.f32.mrb[0].mxu0
        %1002 = vmatprep.mubr.bf16.mxu0 0
        %1003 = vmatmul.mubr.bf16.gmra.mrb[0].mxu0 %v766
        %v1004 = vpop.f32.mrb[0].mxu0
        %v1005 = vadd.f32 0.0, %v1004
        %v1006 = vpop.f32.mrb[0].mxu0
        %v1007 = vpop.f32.mrb[0].mxu0
        %v1008 = vadd.f32 0.0, %v1007
        %v1009 = vpop.f32.mrb[0].mxu0
        %1010 = vmatprep.mubr.bf16.mxu0 0
        %1011 = vmatmul.mubr.bf16.gmra.mrb[0].mxu0 %v767
        %v1012 = vpop.f32.mrb[0].mxu0
        %v1013 = vadd.f32 0.0, %v1012
        %v1014 = vpop.f32.mrb[0].mxu0
        %v1015 = vpop.f32.mrb[0].mxu0
        %v1016 = vadd.f32 0.0, %v1015
        %v1017 = vpop.f32.mrb[0].mxu0
        %1018 = vmatprep.mubr.bf16.mxu0 0
        %1019 = vmatmul.mubr.bf16.gmra.mrb[0].mxu0 %v768
        %v1020 = vpop.f32.mrb[0].mxu0
        %v1021 = vadd.f32 0.0, %v1020
        %v1022 = vpop.f32.mrb[0].mxu0
        %v1023 = vpop.f32.mrb[0].mxu0
        %v1024 = vadd.f32 0.0, %v1023
        %v1025 = vpop.f32.mrb[0].mxu0
        %1026 = vmatprep.mubr.bf16.mxu0 0
        %1027 = vmatmul.mubr.bf16.gmra.mrb[0].mxu0 %v769
        %v1028 = vpop.f32.mrb[0].mxu0
        %v1029 = vadd.f32 0.0, %v1028
        %v1030 = vpop.f32.mrb[0].mxu0
        %v1031 = vpop.f32.mrb[0].mxu0
        %v1032 = vadd.f32 0.0, %v1031
        %v1033 = vpop.f32.mrb[0].mxu0
        %1034 = vmatprep.mubr.bf16.mxu0 0
        %1035 = vmatmul.mubr.bf16.gmra.mrb[0].mxu0 %v770
        %v1036 = vpop.f32.mrb[0].mxu0
        %v1037 = vadd.f32 0.0, %v1036
        %v1038 = vpop.f32.mrb[0].mxu0
        %v1039 = vpop.f32.mrb[0].mxu0
        %v1040 = vadd.f32 0.0, %v1039
        %v1041 = vpop.f32.mrb[0].mxu0
        %1042 = vmatprep.mubr.bf16.mxu0 0
        %1043 = vmatmul.mubr.bf16.gmra.mrb[0].mxu0 %v771
        %v1044 = vpop.f32.mrb[0].mxu0
        %v1045 = vadd.f32 0.0, %v1044
        %v1046 = vpop.f32.mrb[0].mxu0
        %v1047 = vpop.f32.mrb[0].mxu0
        %v1048 = vadd.f32 0.0, %v1047
        %v1049 = vpop.f32.mrb[0].mxu0
        %1050 = vmatprep.mubr.bf16.mxu0 0
        %1051 = vmatmul.mubr.bf16.gmra.mrb[0].mxu0 %v772
        %v1052 = vpop.f32.mrb[0].mxu0
        %v1053 = vadd.f32 0.0, %v1052
        %v1054 = vpop.f32.mrb[0].mxu0
        %v1055 = vpop.f32.mrb[0].mxu0
        %v1056 = vadd.f32 0.0, %v1055
        %v1057 = vpop.f32.mrb[0].mxu0
        %1058 = vmatprep.mubr.bf16.mxu0 0
        %1059 = vmatmul.mubr.bf16.gmra.mrb[0].mxu0 %v773
        %v1060 = vpop.f32.mrb[0].mxu0
        %v1061 = vadd.f32 0.0, %v1060
        %v1062 = vpop.f32.mrb[0].mxu0
        %v1063 = vpop.f32.mrb[0].mxu0
        %v1064 = vadd.f32 0.0, %v1063
        %v1065 = vpop.f32.mrb[0].mxu0
        %1066 = vmatprep.mubr.bf16.mxu0 0
        %1067 = vmatmul.mubr.bf16.gmra.mrb[0].mxu0 %v774
        %v1068 = vpop.f32.mrb[0].mxu0
        %v1069 = vadd.f32 0.0, %v1068
        %v1070 = vpop.f32.mrb[0].mxu0
        %v1071 = vpop.f32.mrb[0].mxu0
        %v1072 = vadd.f32 0.0, %v1071
        %v1073 = vpop.f32.mrb[0].mxu0
        %1074 = vmatprep.mubr.bf16.mxu0 0
        %1075 = vmatmul.mubr.bf16.gmra.mrb[0].mxu0 %v775
        %v1076 = vpop.f32.mrb[0].mxu0
        %v1077 = vadd.f32 0.0, %v1076
        %v1078 = vpop.f32.mrb[0].mxu0
        %v1079 = vpop.f32.mrb[0].mxu0
        %v1080 = vadd.f32 0.0, %v1079
        %v1081 = vpop.f32.mrb[0].mxu0
        %1082 = vmatprep.mubr.bf16.mxu0 0
        %1083 = vmatmul.mubr.bf16.gmra.mrb[0].mxu0 %v776
        %v1084 = vpop.f32.mrb[0].mxu0
        %v1085 = vadd.f32 0.0, %v1084
        %v1086 = vpop.f32.mrb[0].mxu0
        %v1087 = vpop.f32.mrb[0].mxu0
        %v1088 = vadd.f32 0.0, %v1087
        %v1089 = vpop.f32.mrb[0].mxu0
        %1090 = vmatprep.mubr.bf16.mxu0 0
        %1091 = vmatmul.mubr.bf16.gmra.mrb[0].mxu0 %v777
        %v1092 = vpop.f32.mrb[0].mxu0
        %v1093 = vadd.f32 0.0, %v1092
        %v1094 = vpop.f32.mrb[0].mxu0
        %v1095 = vpop.f32.mrb[0].mxu0
        %v1096 = vadd.f32 0.0, %v1095
        %v1097 = vpop.f32.mrb[0].mxu0
        %1098 = vmatprep.mubr.bf16.mxu0 0
        %1099 = vmatmul.mubr.bf16.gmra.mrb[0].mxu0 %v778
        %v1100 = vpop.f32.mrb[0].mxu0
        %v1101 = vadd.f32 0.0, %v1100
        %v1102 = vpop.f32.mrb[0].mxu0
        %v1103 = vpop.f32.mrb[0].mxu0
        %v1104 = vadd.f32 0.0, %v1103
        %v1105 = vpop.f32.mrb[0].mxu0
        %1106 = vmatprep.mubr.bf16.mxu0 0
        %1107 = vmatmul.mubr.bf16.gmra.mrb[0].mxu0 %v779
        %v1108 = vpop.f32.mrb[0].mxu0
        %v1109 = vadd.f32 0.0, %v1108
        %v1110 = vpop.f32.mrb[0].mxu0
        %v1111 = vpop.f32.mrb[0].mxu0
        %v1112 = vadd.f32 0.0, %v1111
        %v1113 = vpop.f32.mrb[0].mxu0
        %1114 = vmatprep.mubr.bf16.mxu0 0
        %1115 = vmatmul.mubr.bf16.gmra.mrb[0].mxu0 %v780
        %v1116 = vpop.f32.mrb[0].mxu0
        %v1117 = vadd.f32 0.0, %v1116
        %v1118 = vpop.f32.mrb[0].mxu0
        %v1119 = vpop.f32.mrb[0].mxu0
        %v1120 = vadd.f32 0.0, %v1119
        %v1121 = vpop.f32.mrb[0].mxu0
        %1122 = vmatprep.mubr.bf16.mxu0 0
        %1123 = vmatmul.mubr.bf16.gmra.mrb[0].mxu0 %v781
        %v1124 = vpop.f32.mrb[0].mxu0
        %v1125 = vadd.f32 0.0, %v1124
        %v1126 = vpop.f32.mrb[0].mxu0
        %v1127 = vpop.f32.mrb[0].mxu0
        %v1128 = vadd.f32 0.0, %v1127
        %v1129 = vpop.f32.mrb[0].mxu0
        %1130 = vmatprep.mubr.bf16.mxu0 0
        %1131 = vmatmul.mubr.bf16.gmra.mrb[0].mxu0 %v782
        %v1132 = vpop.f32.mrb[0].mxu0
        %v1133 = vadd.f32 0.0, %v1132
        %v1134 = vpop.f32.mrb[0].mxu0
        %v1135 = vpop.f32.mrb[0].mxu0
        %v1136 = vadd.f32 0.0, %v1135
        %v1137 = vpop.f32.mrb[0].mxu0
        %1138 = vmatprep.mubr.bf16.mxu0 0
        %1139 = vmatmul.mubr.bf16.gmra.mrb[0].mxu0 %v783
        %v1140 = vpop.f32.mrb[0].mxu0
        %v1141 = vadd.f32 0.0, %v1140
        %v1142 = vpop.f32.mrb[0].mxu0
        %v1143 = vpop.f32.mrb[0].mxu0
        %v1144 = vadd.f32 0.0, %v1143
        %v1145 = vpop.f32.mrb[0].mxu0
        %1146 = vmatprep.mubr.bf16.mxu0 0
        %1147 = vmatmul.mubr.bf16.gmra.mrb[0].mxu0 %v784
        %v1148 = vpop.f32.mrb[0].mxu0
        %v1149 = vadd.f32 0.0, %v1148
        %v1150 = vpop.f32.mrb[0].mxu0
        %v1151 = vpop.f32.mrb[0].mxu0
        %v1152 = vadd.f32 0.0, %v1151
        %v1153 = vpop.f32.mrb[0].mxu0
        %1154 = vmatprep.mubr.bf16.mxu0 0
        %1155 = vmatmul.mubr.bf16.gmra.mrb[0].mxu0 %v785
        %v1156 = vpop.f32.mrb[0].mxu0
        %v1157 = vadd.f32 0.0, %v1156
        %v1158 = vpop.f32.mrb[0].mxu0
        %v1159 = vpop.f32.mrb[0].mxu0
        %v1160 = vadd.f32 0.0, %v1159
        %v1161 = vpop.f32.mrb[0].mxu0
        %1162 = vmatprep.mubr.bf16.mxu0 0
        %1163 = vmatmul.mubr.bf16.gmra.mrb[0].mxu0 %v786
        %v1164 = vpop.f32.mrb[0].mxu0
        %v1165 = vadd.f32 0.0, %v1164
        %v1166 = vpop.f32.mrb[0].mxu0
        %v1167 = vpop.f32.mrb[0].mxu0
        %v1168 = vadd.f32 0.0, %v1167
        %v1169 = vpop.f32.mrb[0].mxu0
        %1170 = vmatprep.mubr.bf16.mxu0 0
        %1171 = vmatmul.mubr.bf16.gmra.mrb[0].mxu0 %v787
        %v1172 = vpop.f32.mrb[0].mxu0
        %v1173 = vadd.f32 0.0, %v1172
        %v1174 = vpop.f32.mrb[0].mxu0
        %v1175 = vpop.f32.mrb[0].mxu0
        %v1176 = vadd.f32 0.0, %v1175
        %v1177 = vpop.f32.mrb[0].mxu0
        %1178 = vmatprep.mubr.bf16.mxu0 0
        %1179 = vmatmul.mubr.bf16.gmra.mrb[0].mxu0 %v788
        %v1180 = vpop.f32.mrb[0].mxu0
        %v1181 = vadd.f32 0.0, %v1180
        %v1182 = vpop.f32.mrb[0].mxu0
        %v1183 = vpop.f32.mrb[0].mxu0
        %v1184 = vadd.f32 0.0, %v1183
        %v1185 = vpop.f32.mrb[0].mxu0
        %1186 = vmatprep.mubr.bf16.mxu0 0
        %1187 = vmatmul.mubr.bf16.gmra.mrb[0].mxu0 %v789
        %v1188 = vpop.f32.mrb[0].mxu0
        %v1189 = vadd.f32 0.0, %v1188
        %v1190 = vpop.f32.mrb[0].mxu0
        %v1191 = vpop.f32.mrb[0].mxu0
        %v1192 = vadd.f32 0.0, %v1191
        %v1193 = vpop.f32.mrb[0].mxu0
        %1194 = vmatprep.mubr.bf16.mxu0 0
        %1195 = vmatmul.mubr.bf16.gmra.mrb[0].mxu0 %v790
        %v1196 = vpop.f32.mrb[0].mxu0
        %v1197 = vadd.f32 0.0, %v1196
        %v1198 = vpop.f32.mrb[0].mxu0
        %v1199 = vpop.f32.mrb[0].mxu0
        %v1200 = vadd.f32 0.0, %v1199
        %v1201 = vpop.f32.mrb[0].mxu0
        %1202 = vmatprep.mubr.bf16.mxu0 0
        %1203 = vmatmul.mubr.bf16.gmra.mrb[0].mxu0 %v791
        %v1204 = vpop.f32.mrb[0].mxu0
        %v1205 = vadd.f32 0.0, %v1204
        %v1206 = vpop.f32.mrb[0].mxu0
        %v1207 = vpop.f32.mrb[0].mxu0
        %v1208 = vadd.f32 0.0, %v1207
        %v1209 = vpop.f32.mrb[0].mxu0
        %1210 = vmatprep.mubr.bf16.mxu0 0
        %1211 = vmatmul.mubr.bf16.gmra.mrb[0].mxu0 %v792
        %v1212 = vpop.f32.mrb[0].mxu0
        %v1213 = vadd.f32 0.0, %v1212
        %v1214 = vpop.f32.mrb[0].mxu0
        %v1215 = vpop.f32.mrb[0].mxu0
        %v1216 = vadd.f32 0.0, %v1215
        %v1217 = vpop.f32.mrb[0].mxu0
        %1218 = vmatprep.mubr.bf16.mxu0 0
        %1219 = vmatmul.mubr.bf16.gmra.mrb[0].mxu0 %v793
        %v1220 = vpop.f32.mrb[0].mxu0
        %v1221 = vadd.f32 0.0, %v1220
        %v1222 = vpop.f32.mrb[0].mxu0
        %v1223 = vpop.f32.mrb[0].mxu0
        %v1224 = vadd.f32 0.0, %v1223
        %v1225 = vpop.f32.mrb[0].mxu0
        %1226 = vmatprep.mubr.bf16.mxu0 0
        %1227 = vmatmul.mubr.bf16.gmra.mrb[0].mxu0 %v794
        %v1228 = vpop.f32.mrb[0].mxu0
        %v1229 = vadd.f32 0.0, %v1228
        %v1230 = vpop.f32.mrb[0].mxu0
        %v1231 = vpop.f32.mrb[0].mxu0
        %v1232 = vadd.f32 0.0, %v1231
        %v1233 = vpop.f32.mrb[0].mxu0
        %1234 = vmatprep.mubr.bf16.mxu0 0
        %1235 = vmatmul.mubr.bf16.gmra.mrb[0].mxu0 %v795
        %v1236 = vpop.f32.mrb[0].mxu0
        %v1237 = vadd.f32 0.0, %v1236
        %v1238 = vpop.f32.mrb[0].mxu0
        %v1239 = vpop.f32.mrb[0].mxu0
        %v1240 = vadd.f32 0.0, %v1239
        %v1241 = vpop.f32.mrb[0].mxu0
        %1242 = vmatprep.mubr.bf16.mxu0 0
        %1243 = vmatmul.mubr.bf16.gmra.mrb[0].mxu0 %v796
        %v1244 = vpop.f32.mrb[0].mxu0
        %v1245 = vadd.f32 0.0, %v1244
        %v1246 = vpop.f32.mrb[0].mxu0
        %v1247 = vpop.f32.mrb[0].mxu0
        %v1248 = vadd.f32 0.0, %v1247
        %v1249 = vpop.f32.mrb[0].mxu0
        %1250 = vmatprep.mubr.bf16.mxu0 0
        %1251 = vmatmul.mubr.bf16.gmra.mrb[0].mxu0 %v797
        %v1252 = vpop.f32.mrb[0].mxu0
        %v1253 = vadd.f32 0.0, %v1252
        %v1254 = vpop.f32.mrb[0].mxu0
        %v1255 = vpop.f32.mrb[0].mxu0
        %v1256 = vadd.f32 0.0, %v1255
        %v1257 = vpop.f32.mrb[0].mxu0
        %1258 = vmatprep.mubr.bf16.mxu0 0
        %1259 = vmatmul.mubr.bf16.gmra.mrb[0].mxu0 %v798
        %v1260 = vpop.f32.mrb[0].mxu0
        %v1261 = vadd.f32 0.0, %v1260
        %v1262 = vpop.f32.mrb[0].mxu0
        %v1263 = vpop.f32.mrb[0].mxu0
        %v1264 = vadd.f32 0.0, %v1263
        %v1265 = vpop.f32.mrb[0].mxu0
        %1266 = vmatprep.mubr.bf16.mxu0 0
        %1267 = vmatmul.mubr.bf16.gmra.mrb[0].mxu0 %v799
        %v1268 = vpop.f32.mrb[0].mxu0
        %v1269 = vadd.f32 0.0, %v1268
        %v1270 = vpop.f32.mrb[0].mxu0
        %v1271 = vpop.f32.mrb[0].mxu0
        %v1272 = vadd.f32 0.0, %v1271
        %v1273 = vpop.f32.mrb[0].mxu0
        %1274 = vmatprep.mubr.bf16.mxu0 0
        %1275 = vmatmul.mubr.bf16.gmra.mrb[0].mxu0 %v800
        %v1276 = vpop.f32.mrb[0].mxu0
        %v1277 = vadd.f32 0.0, %v1276
        %v1278 = vpop.f32.mrb[0].mxu0
        %v1279 = vpop.f32.mrb[0].mxu0
        %v1280 = vadd.f32 0.0, %v1279
        %v1281 = vpop.f32.mrb[0].mxu0
        %1282 = vmatprep.mubr.bf16.mxu0 0
        %1283 = vmatmul.mubr.bf16.gmra.mrb[0].mxu0 %v801
        %v1284 = vpop.f32.mrb[0].mxu0
        %v1285 = vadd.f32 0.0, %v1284
        %v1286 = vpop.f32.mrb[0].mxu0
        %v1287 = vpop.f32.mrb[0].mxu0
        %v1288 = vadd.f32 0.0, %v1287
        %v1289 = vpop.f32.mrb[0].mxu0
        %1290 = vmatprep.mubr.bf16.mxu0 0
        %1291 = vmatmul.mubr.bf16.gmra.mrb[0].mxu0 %v802
        %v1292 = vpop.f32.mrb[0].mxu0
        %v1293 = vadd.f32 0.0, %v1292
        %v1294 = vpop.f32.mrb[0].mxu0
        %v1295 = vpop.f32.mrb[0].mxu0
        %v1296 = vadd.f32 0.0, %v1295
        %v1297 = vpop.f32.mrb[0].mxu0
        %1298 = vmatprep.mubr.bf16.mxu0 0
        %1299 = vmatmul.mubr.bf16.gmra.mrb[0].mxu0 %v803
        %v1300 = vpop.f32.mrb[0].mxu0
        %v1301 = vadd.f32 0.0, %v1300
        %v1302 = vpop.f32.mrb[0].mxu0
        %v1303 = vpop.f32.mrb[0].mxu0
        %v1304 = vadd.f32 0.0, %v1303
        %v1305 = vpop.f32.mrb[0].mxu0
        %1306 = vmatprep.mubr.bf16.mxu0 0
        %1307 = vmatmul.mubr.bf16.gmra.mrb[0].mxu0 %v804
        %v1308 = vpop.f32.mrb[0].mxu0
        %v1309 = vadd.f32 0.0, %v1308
        %v1310 = vpop.f32.mrb[0].mxu0
        %v1311 = vpop.f32.mrb[0].mxu0
        %v1312 = vadd.f32 0.0, %v1311
        %v1313 = vpop.f32.mrb[0].mxu0
        %1314 = vmatprep.mubr.bf16.mxu0 0
        %1315 = vmatmul.mubr.bf16.gmra.mrb[0].mxu0 %v805
        %v1316 = vpop.f32.mrb[0].mxu0
        %v1317 = vadd.f32 0.0, %v1316
        %v1318 = vpop.f32.mrb[0].mxu0
        %v1319 = vpop.f32.mrb[0].mxu0
        %v1320 = vadd.f32 0.0, %v1319
        %v1321 = vpop.f32.mrb[0].mxu0
        %1322 = vmatprep.mubr.bf16.mxu0 0
        %1323 = vmatmul.mubr.bf16.gmra.mrb[0].mxu0 %v806
        %v1324 = vpop.f32.mrb[0].mxu0
        %v1325 = vadd.f32 0.0, %v1324
        %v1326 = vpop.f32.mrb[0].mxu0
        %v1327 = vpop.f32.mrb[0].mxu0
        %v1328 = vadd.f32 0.0, %v1327
        %v1329 = vpop.f32.mrb[0].mxu0
        %1330 = vmatprep.mubr.bf16.mxu0 0
        %1331 = vmatmul.mubr.bf16.gmra.mrb[0].mxu0 %v807
        %v1332 = vpop.f32.mrb[0].mxu0
        %v1333 = vadd.f32 0.0, %v1332
        %v1334 = vpop.f32.mrb[0].mxu0
        %v1335 = vpop.f32.mrb[0].mxu0
        %v1336 = vadd.f32 0.0, %v1335
        %v1337 = vpop.f32.mrb[0].mxu0
        %1338 = vmatprep.mubr.bf16.mxu0 0
        %1339 = vmatmul.mubr.bf16.gmra.mrb[0].mxu0 %v808
        %v1340 = vpop.f32.mrb[0].mxu0
        %v1341 = vadd.f32 0.0, %v1340
        %v1342 = vpop.f32.mrb[0].mxu0
        %v1343 = vpop.f32.mrb[0].mxu0
        %v1344 = vadd.f32 0.0, %v1343
        %v1345 = vpop.f32.mrb[0].mxu0
        %1346 = vmatprep.mubr.bf16.mxu0 0
        %1347 = vmatmul.mubr.bf16.gmra.mrb[0].mxu0 %v809
        %v1348 = vpop.f32.mrb[0].mxu0
        %v1349 = vadd.f32 0.0, %v1348
        %v1350 = vpop.f32.mrb[0].mxu0
        %v1351 = vpop.f32.mrb[0].mxu0
        %v1352 = vadd.f32 0.0, %v1351
        %v1353 = vpop.f32.mrb[0].mxu0
        %1354 = vmatprep.mubr.bf16.mxu0 0
        %1355 = vmatmul.mubr.bf16.gmra.mrb[0].mxu0 %v810
        %v1356 = vpop.f32.mrb[0].mxu0
        %v1357 = vadd.f32 0.0, %v1356
        %v1358 = vpop.f32.mrb[0].mxu0
        %v1359 = vpop.f32.mrb[0].mxu0
        %v1360 = vadd.f32 0.0, %v1359
        %v1361 = vpop.f32.mrb[0].mxu0
        %1362 = vmatprep.mubr.bf16.mxu0 0
        %1363 = vmatmul.mubr.bf16.gmra.mrb[0].mxu0 %v811
        %v1364 = vpop.f32.mrb[0].mxu0
        %v1365 = vadd.f32 0.0, %v1364
        %v1366 = vpop.f32.mrb[0].mxu0
        %v1367 = vpop.f32.mrb[0].mxu0
        %v1368 = vadd.f32 0.0, %v1367
        %v1369 = vpop.f32.mrb[0].mxu0
        %1370 = vmatprep.mubr.bf16.mxu0 0
        %1371 = vmatmul.mubr.bf16.gmra.mrb[0].mxu0 %v812
        %v1372 = vpop.f32.mrb[0].mxu0
        %v1373 = vadd.f32 0.0, %v1372
        %v1374 = vpop.f32.mrb[0].mxu0
        %v1375 = vpop.f32.mrb[0].mxu0
        %v1376 = vadd.f32 0.0, %v1375
        %v1377 = vpop.f32.mrb[0].mxu0
        %1378 = vmatprep.mubr.bf16.mxu0 0
        %1379 = vmatmul.mubr.bf16.gmra.mrb[0].mxu0 %v813
        %v1380 = vpop.f32.mrb[0].mxu0
        %v1381 = vadd.f32 0.0, %v1380
        %v1382 = vpop.f32.mrb[0].mxu0
        %v1383 = vpop.f32.mrb[0].mxu0
        %v1384 = vadd.f32 0.0, %v1383
        %v1385 = vpop.f32.mrb[0].mxu0
        %1386 = vmatprep.mubr.bf16.mxu0 0
        %1387 = vmatmul.mubr.bf16.gmra.mrb[0].mxu0 %v814
        %v1388 = vpop.f32.mrb[0].mxu0
        %v1389 = vadd.f32 0.0, %v1388
        %v1390 = vpop.f32.mrb[0].mxu0
        %v1391 = vpop.f32.mrb[0].mxu0
        %v1392 = vadd.f32 0.0, %v1391
        %v1393 = vpop.f32.mrb[0].mxu0
        %1394 = vmatprep.mubr.bf16.mxu0 0
        %1395 = vmatmul.mubr.bf16.gmra.mrb[0].mxu0 %v815
        %v1396 = vpop.f32.mrb[0].mxu0
        %v1397 = vadd.f32 0.0, %v1396
        %v1398 = vpop.f32.mrb[0].mxu0
        %v1399 = vpop.f32.mrb[0].mxu0
        %v1400 = vadd.f32 0.0, %v1399
        %v1401 = vpop.f32.mrb[0].mxu0
        %1402 = vmatprep.mubr.bf16.mxu0 0
        %1403 = vmatmul.mubr.bf16.gmra.mrb[0].mxu0 %v816
        %v1404 = vpop.f32.mrb[0].mxu0
        %v1405 = vadd.f32 0.0, %v1404
        %v1406 = vpop.f32.mrb[0].mxu0
        %v1407 = vpop.f32.mrb[0].mxu0
        %v1408 = vadd.f32 0.0, %v1407
        %v1409 = vpop.f32.mrb[0].mxu0
        %1410 = vmatprep.mubr.bf16.mxu0 0
        %1411 = vmatmul.mubr.bf16.gmra.mrb[0].mxu0 %v817
        %v1412 = vpop.f32.mrb[0].mxu0
        %v1413 = vadd.f32 0.0, %v1412
        %v1414 = vpop.f32.mrb[0].mxu0
        %v1415 = vpop.f32.mrb[0].mxu0
        %v1416 = vadd.f32 0.0, %v1415
        %v1417 = vpop.f32.mrb[0].mxu0
        %1418 = vmatprep.mubr.bf16.mxu0 0
        %1419 = vmatmul.mubr.bf16.gmra.mrb[0].mxu0 %v818
        %v1420 = vpop.f32.mrb[0].mxu0
        %v1421 = vadd.f32 0.0, %v1420
        %v1422 = vpop.f32.mrb[0].mxu0
        %v1423 = vpop.f32.mrb[0].mxu0
        %v1424 = vadd.f32 0.0, %v1423
        %v1425 = vpop.f32.mrb[0].mxu0
        %1426 = vmatprep.mubr.bf16.mxu0 0
        %1427 = vmatmul.mubr.bf16.gmra.mrb[0].mxu0 %v819
        %v1428 = vpop.f32.mrb[0].mxu0
        %v1429 = vadd.f32 0.0, %v1428
        %v1430 = vpop.f32.mrb[0].mxu0
        %v1431 = vpop.f32.mrb[0].mxu0
        %v1432 = vadd.f32 0.0, %v1431
        %v1433 = vpop.f32.mrb[0].mxu0
        %1434 = vmatprep.mubr.bf16.mxu0 0
        %1435 = vmatmul.mubr.bf16.gmra.mrb[0].mxu0 %v820
        %v1436 = vpop.f32.mrb[0].mxu0
        %v1437 = vadd.f32 0.0, %v1436
        %v1438 = vpop.f32.mrb[0].mxu0
        %v1439 = vpop.f32.mrb[0].mxu0
        %v1440 = vadd.f32 0.0, %v1439
        %v1441 = vpop.f32.mrb[0].mxu0
        %1442 = vmatprep.mubr.bf16.mxu0 0
        %1443 = vmatmul.mubr.bf16.gmra.mrb[0].mxu0 %v821
        %v1444 = vpop.f32.mrb[0].mxu0
        %v1445 = vadd.f32 0.0, %v1444
        %v1446 = vpop.f32.mrb[0].mxu0
        %v1447 = vpop.f32.mrb[0].mxu0
        %v1448 = vadd.f32 0.0, %v1447
        %v1449 = vpop.f32.mrb[0].mxu0
        %1450 = vmatprep.mubr.bf16.mxu0 0
        %1451 = vmatmul.mubr.bf16.gmra.mrb[0].mxu0 %v822
        %v1452 = vpop.f32.mrb[0].mxu0
        %v1453 = vadd.f32 0.0, %v1452
        %v1454 = vpop.f32.mrb[0].mxu0
        %v1455 = vpop.f32.mrb[0].mxu0
        %v1456 = vadd.f32 0.0, %v1455
        %v1457 = vpop.f32.mrb[0].mxu0
        %1458 = vmatprep.mubr.bf16.mxu0 0
        %1459 = vmatmul.mubr.bf16.gmra.mrb[0].mxu0 %v823
        %v1460 = vpop.f32.mrb[0].mxu0
        %v1461 = vadd.f32 0.0, %v1460
        %v1462 = vpop.f32.mrb[0].mxu0
        %v1463 = vpop.f32.mrb[0].mxu0
        %v1464 = vadd.f32 0.0, %v1463
        %v1465 = vpop.f32.mrb[0].mxu0
        %1466 = vmatprep.mubr.bf16.mxu0 0
        %1467 = vmatmul.mubr.bf16.gmra.mrb[0].mxu0 %v824
        %v1468 = vpop.f32.mrb[0].mxu0
        %v1469 = vadd.f32 0.0, %v1468
        %v1470 = vpop.f32.mrb[0].mxu0
        %v1471 = vpop.f32.mrb[0].mxu0
        %v1472 = vadd.f32 0.0, %v1471
        %v1473 = vpop.f32.mrb[0].mxu0
        %1474 = vmatprep.mubr.bf16.mxu0 0
        %1475 = vmatmul.mubr.bf16.gmra.mrb[0].mxu0 %v825
        %v1476 = vpop.f32.mrb[0].mxu0
        %v1477 = vadd.f32 0.0, %v1476
        %v1478 = vpop.f32.mrb[0].mxu0
        %v1479 = vpop.f32.mrb[0].mxu0
        %v1480 = vadd.f32 0.0, %v1479
        %v1481 = vpop.f32.mrb[0].mxu0
        %1482 = vdwg.mxu0
        %v1483 = vld [vmem:[%s315] sm:$0xf]
        %v1484 = vld [vmem:[%s3] sm:$0xf]
        %v1485 = vld [vmem:[%s3 + $0x4] sm:$0xf]
        %v1486 = vld [vmem:[%s4] sm:$0x1]
        %v1488 = vlaneseq
        %v1489 = vshrl.u32 %v1488, 7
        %v1490 = vsub.s32 0, %v1489
        %v1491 = vrot.slane %v1486, %v1490
        %v1495 = vunpack.c.l.b16 %v1484
        %v1496 = vunpack.c.l.b16 %v1485
        %v1497 = vpack.c.b16 %v1496, %v1495
        %vm1499 = vcmask 130048
        %v1501 = vsel %vm1499, %v1483, 0
        %1503 = vmatprep.subr.bf16.mxu0 0
        %1504 = vmatpush1.bf16.msra.mxu0 %v1497
        %1505 = vmatprep.subr.bf16.mxu0 0
        %1506 = vmatpush1.bf16.msra.mxu0 0
        %1507 = vmatprep.subr.bf16.mxu0 0
        %1508 = vmatpush1.bf16.msra.mxu0 0
        %1509 = vmatprep.subr.bf16.mxu0 0
        %1510 = vmatpush1.bf16.msra.mxu0 0
        %1511 = vmatprep.subr.bf16.mxu0 0
        %1512 = vmatpush1.bf16.msra.mxu0 0
        %1513 = vmatprep.subr.bf16.mxu0 0
        %1514 = vmatpush1.bf16.msra.mxu0 0
        %1515 = vmatprep.subr.bf16.mxu0 0
        %1516 = vmatpush1.bf16.msra.mxu0 0
        %1517 = vmatprep.subr.bf16.mxu0 0
        %1518 = vmatpush1.bf16.msra.mxu0 0
        %1519 = vmatprep.subr.bf16.mxu0 0
        %1520 = vmatpush1.bf16.msra.mxu0 0
        %1521 = vmatprep.subr.bf16.mxu0 0
        %1522 = vmatpush1.bf16.msra.mxu0 0
        %1523 = vmatprep.subr.bf16.mxu0 0
        %1524 = vmatpush1.bf16.msra.mxu0 0
        %1525 = vmatprep.subr.bf16.mxu0 0
        %1526 = vmatpush1.bf16.msra.mxu0 0
        %1527 = vmatprep.subr.bf16.mxu0 0
        %1528 = vmatpush1.bf16.msra.mxu0 0
        %1529 = vmatprep.subr.bf16.mxu0 0
        %1530 = vmatpush1.bf16.msra.mxu0 0
        %1531 = vmatprep.subr.bf16.mxu0 0
        %1532 = vmatpush1.bf16.msra.mxu0 0
        %1533 = vmatprep.subr.bf16.mxu0 0
        %1534 = vmatpush1.bf16.msra.mxu0 0
        %1535 = vmatprep.mubr.bf16.mxu0 0
        %1536 = vmatmul.mubr.bf16.gmra.mrb[0].mxu0 %v1501
        %v1537 = vpop.f32.mrb[0].mxu0
        %v1538 = vadd.f32 %v1491, %v1537
        %v1539 = vpop.f32.mrb[0].mxu0
        %v1540 = vpop.f32.mrb[0].mxu0
        %v1541 = vpop.f32.mrb[0].mxu0
        %1542 = vdwg.mxu0
        %v1544 = vcombine.high %v1538, %v1538
        %v1546 = vunpack.c.l.s4 1966171168
        %v1547 = vunpack.c.0.s8 %v1546
        %v1548 = vlaneseq
        %v1549 = vshrl.u32 %v1548, 7
        %v1550 = vsub.s32 %v1547, %v1549
        %v1551 = vrot.slane %v1538, %v1550
        %v1553 = vunpack.c.l.s4 1966171168
        %v1554 = vunpack.c.0.s8 %v1553
        %v1555 = vlaneseq
        %v1556 = vshrl.u32 %v1555, 7
        %v1557 = vsub.s32 %v1554, %v1556
        %v1558 = vrot.slane %v1544, %v1557
        %v1559 = vcombine.high %v1551, %v1551
        %v1560 = vcombine.high %v1558, %v1558
        %v1562 = vunpack.c.l.s4 1966171168
        %v1563 = vunpack.c.0.s8 %v1562
        %v1564 = vlaneseq
        %v1565 = vshrl.u32 %v1564, 7
        %v1566 = vsub.s32 %v1563, %v1565
        %v1567 = vrot.slane %v1551, %v1566
        %v1569 = vunpack.c.l.s4 1966171168
        %v1570 = vunpack.c.0.s8 %v1569
        %v1571 = vlaneseq
        %v1572 = vshrl.u32 %v1571, 7
        %v1573 = vsub.s32 %v1570, %v1572
        %v1574 = vrot.slane %v1558, %v1573
        %v1576 = vunpack.c.l.s4 1966171168
        %v1577 = vunpack.c.0.s8 %v1576
        %v1578 = vlaneseq
        %v1579 = vshrl.u32 %v1578, 7
        %v1580 = vsub.s32 %v1577, %v1579
        %v1581 = vrot.slane %v1559, %v1580
        %v1583 = vunpack.c.l.s4 1966171168
        %v1584 = vunpack.c.0.s8 %v1583
        %v1585 = vlaneseq
        %v1586 = vshrl.u32 %v1585, 7
        %v1587 = vsub.s32 %v1584, %v1586
        %v1588 = vrot.slane %v1560, %v1587
        %v1589 = vcombine.high %v1567, %v1567
        %v1590 = vcombine.high %v1574, %v1574
        %v1591 = vcombine.high %v1581, %v1581
        %v1592 = vcombine.high %v1588, %v1588
        %v1593 = vlaneseq
        %v1594 = vshrl.u32 %v1593, 7
        %v1595 = vsub.s32 0, %v1594
        %v1596 = vrot.slane %v1567, %v1595
        %v1597 = vlaneseq
        %v1598 = vshrl.u32 %v1597, 7
        %v1599 = vsub.s32 0, %v1598
        %v1600 = vrot.slane %v1581, %v1599
        %v1601 = vlaneseq
        %v1602 = vshrl.u32 %v1601, 7
        %v1603 = vsub.s32 0, %v1602
        %v1604 = vrot.slane %v1589, %v1603
        %v1605 = vlaneseq
        %v1606 = vshrl.u32 %v1605, 7
        %v1607 = vsub.s32 0, %v1606
        %v1608 = vrot.slane %v1591, %v1607
        %v1609 = vlaneseq
        %v1610 = vshrl.u32 %v1609, 7
        %v1611 = vsub.s32 0, %v1610
        %v1612 = vrot.slane %v1574, %v1611
        %v1613 = vlaneseq
        %v1614 = vshrl.u32 %v1613, 7
        %v1615 = vsub.s32 0, %v1614
        %v1616 = vrot.slane %v1588, %v1615
        %v1617 = vlaneseq
        %v1618 = vshrl.u32 %v1617, 7
        %v1619 = vsub.s32 0, %v1618
        %v1620 = vrot.slane %v1590, %v1619
        %v1621 = vlaneseq
        %v1622 = vshrl.u32 %v1621, 7
        %v1623 = vsub.s32 0, %v1622
        %v1624 = vrot.slane %v1592, %v1623
        %v1633 = vadd.f32 %v973, %v1596
        %v1634 = vadd.f32 %v976, %v1596
        %v1635 = vadd.f32 %v981, %v1596
        %v1636 = vadd.f32 %v984, %v1596
        %v1637 = vadd.f32 %v989, %v1596
        %v1638 = vadd.f32 %v992, %v1596
        %v1639 = vadd.f32 %v997, %v1596
        %v1640 = vadd.f32 %v1000, %v1596
        %v1641 = vadd.f32 %v1005, %v1596
        %v1642 = vadd.f32 %v1008, %v1596
        %v1643 = vadd.f32 %v1013, %v1596
        %v1644 = vadd.f32 %v1016, %v1596
        %v1645 = vadd.f32 %v1021, %v1596
        %v1646 = vadd.f32 %v1024, %v1596
        %v1647 = vadd.f32 %v1029, %v1596
        %v1648 = vadd.f32 %v1032, %v1596
        %v1649 = vadd.f32 %v1037, %v1600
        %v1650 = vadd.f32 %v1040, %v1600
        %v1651 = vadd.f32 %v1045, %v1600
        %v1652 = vadd.f32 %v1048, %v1600
        %v1653 = vadd.f32 %v1053, %v1600
        %v1654 = vadd.f32 %v1056, %v1600
        %v1655 = vadd.f32 %v1061, %v1600
        %v1656 = vadd.f32 %v1064, %v1600
        %v1657 = vadd.f32 %v1069, %v1600
        %v1658 = vadd.f32 %v1072, %v1600
        %v1659 = vadd.f32 %v1077, %v1600
        %v1660 = vadd.f32 %v1080, %v1600
        %v1661 = vadd.f32 %v1085, %v1600
        %v1662 = vadd.f32 %v1088, %v1600
        %v1663 = vadd.f32 %v1093, %v1600
        %v1664 = vadd.f32 %v1096, %v1600
        %v1665 = vadd.f32 %v1101, %v1604
        %v1666 = vadd.f32 %v1104, %v1604
        %v1667 = vadd.f32 %v1109, %v1604
        %v1668 = vadd.f32 %v1112, %v1604
        %v1669 = vadd.f32 %v1117, %v1604
        %v1670 = vadd.f32 %v1120, %v1604
        %v1671 = vadd.f32 %v1125, %v1604
        %v1672 = vadd.f32 %v1128, %v1604
        %v1673 = vadd.f32 %v1133, %v1604
        %v1674 = vadd.f32 %v1136, %v1604
        %v1675 = vadd.f32 %v1141, %v1604
        %v1676 = vadd.f32 %v1144, %v1604
        %v1677 = vadd.f32 %v1149, %v1604
        %v1678 = vadd.f32 %v1152, %v1604
        %v1679 = vadd.f32 %v1157, %v1604
        %v1680 = vadd.f32 %v1160, %v1604
        %v1681 = vadd.f32 %v1165, %v1608
        %v1682 = vadd.f32 %v1168, %v1608
        %v1683 = vadd.f32 %v1173, %v1608
        %v1684 = vadd.f32 %v1176, %v1608
        %v1685 = vadd.f32 %v1181, %v1608
        %v1686 = vadd.f32 %v1184, %v1608
        %v1687 = vadd.f32 %v1189, %v1608
        %v1688 = vadd.f32 %v1192, %v1608
        %v1689 = vadd.f32 %v1197, %v1608
        %v1690 = vadd.f32 %v1200, %v1608
        %v1691 = vadd.f32 %v1205, %v1608
        %v1692 = vadd.f32 %v1208, %v1608
        %v1693 = vadd.f32 %v1213, %v1608
        %v1694 = vadd.f32 %v1216, %v1608
        %v1695 = vadd.f32 %v1221, %v1608
        %v1696 = vadd.f32 %v1224, %v1608
        %v1697 = vadd.f32 %v1229, %v1612
        %v1698 = vadd.f32 %v1232, %v1612
        %v1699 = vadd.f32 %v1237, %v1612
        %v1700 = vadd.f32 %v1240, %v1612
        %v1701 = vadd.f32 %v1245, %v1612
        %v1702 = vadd.f32 %v1248, %v1612
        %v1703 = vadd.f32 %v1253, %v1612
        %v1704 = vadd.f32 %v1256, %v1612
        %v1705 = vadd.f32 %v1261, %v1612
        %v1706 = vadd.f32 %v1264, %v1612
        %v1707 = vadd.f32 %v1269, %v1612
        %v1708 = vadd.f32 %v1272, %v1612
        %v1709 = vadd.f32 %v1277, %v1612
        %v1710 = vadd.f32 %v1280, %v1612
        %v1711 = vadd.f32 %v1285, %v1612
        %v1712 = vadd.f32 %v1288, %v1612
        %v1713 = vadd.f32 %v1293, %v1616
        %v1714 = vadd.f32 %v1296, %v1616
        %v1715 = vadd.f32 %v1301, %v1616
        %v1716 = vadd.f32 %v1304, %v1616
        %v1717 = vadd.f32 %v1309, %v1616
        %v1718 = vadd.f32 %v1312, %v1616
        %v1719 = vadd.f32 %v1317, %v1616
        %v1720 = vadd.f32 %v1320, %v1616
        %v1721 = vadd.f32 %v1325, %v1616
        %v1722 = vadd.f32 %v1328, %v1616
        %v1723 = vadd.f32 %v1333, %v1616
        %v1724 = vadd.f32 %v1336, %v1616
        %v1725 = vadd.f32 %v1341, %v1616
        %v1726 = vadd.f32 %v1344, %v1616
        %v1727 = vadd.f32 %v1349, %v1616
        %v1728 = vadd.f32 %v1352, %v1616
        %v1729 = vadd.f32 %v1357, %v1620
        %v1730 = vadd.f32 %v1360, %v1620
        %v1731 = vadd.f32 %v1365, %v1620
        %v1732 = vadd.f32 %v1368, %v1620
        %v1733 = vadd.f32 %v1373, %v1620
        %v1734 = vadd.f32 %v1376, %v1620
        %v1735 = vadd.f32 %v1381, %v1620
        %v1736 = vadd.f32 %v1384, %v1620
        %v1737 = vadd.f32 %v1389, %v1620
        %v1738 = vadd.f32 %v1392, %v1620
        %v1739 = vadd.f32 %v1397, %v1620
        %v1740 = vadd.f32 %v1400, %v1620
        %v1741 = vadd.f32 %v1405, %v1620
        %v1742 = vadd.f32 %v1408, %v1620
        %v1743 = vadd.f32 %v1413, %v1620
        %v1744 = vadd.f32 %v1416, %v1620
        %v1745 = vadd.f32 %v1421, %v1624
        %v1746 = vadd.f32 %v1424, %v1624
        %v1747 = vadd.f32 %v1429, %v1624
        %v1748 = vadd.f32 %v1432, %v1624
        %v1749 = vadd.f32 %v1437, %v1624
        %v1750 = vadd.f32 %v1440, %v1624
        %v1751 = vadd.f32 %v1445, %v1624
        %v1752 = vadd.f32 %v1448, %v1624
        %v1753 = vadd.f32 %v1453, %v1624
        %v1754 = vadd.f32 %v1456, %v1624
        %v1755 = vadd.f32 %v1461, %v1624
        %v1756 = vadd.f32 %v1464, %v1624
        %v1757 = vadd.f32 %v1469, %v1624
        %v1758 = vadd.f32 %v1472, %v1624
        %v1759 = vadd.f32 %v1477, %v1624
        %v1760 = vadd.f32 %v1480, %v1624
        %v1761 = vtanh.pop %v1633
        %v1762 = vtanh.pop %v1634
        %v1763 = vtanh.pop %v1635
        %v1764 = vtanh.pop %v1636
        %v1765 = vtanh.pop %v1637
        %v1766 = vtanh.pop %v1638
        %v1767 = vtanh.pop %v1639
        %v1768 = vtanh.pop %v1640
        %v1769 = vtanh.pop %v1641
        %v1770 = vtanh.pop %v1642
        %v1771 = vtanh.pop %v1643
        %v1772 = vtanh.pop %v1644
        %v1773 = vtanh.pop %v1645
        %v1774 = vtanh.pop %v1646
        %v1775 = vtanh.pop %v1647
        %v1776 = vtanh.pop %v1648
        %v1777 = vtanh.pop %v1649
        %v1778 = vtanh.pop %v1650
        %v1779 = vtanh.pop %v1651
        %v1780 = vtanh.pop %v1652
        %v1781 = vtanh.pop %v1653
        %v1782 = vtanh.pop %v1654
        %v1783 = vtanh.pop %v1655
        %v1784 = vtanh.pop %v1656
        %v1785 = vtanh.pop %v1657
        %v1786 = vtanh.pop %v1658
        %v1787 = vtanh.pop %v1659
        %v1788 = vtanh.pop %v1660
        %v1789 = vtanh.pop %v1661
        %v1790 = vtanh.pop %v1662
        %v1791 = vtanh.pop %v1663
        %v1792 = vtanh.pop %v1664
        %v1793 = vtanh.pop %v1665
        %v1794 = vtanh.pop %v1666
        %v1795 = vtanh.pop %v1667
        %v1796 = vtanh.pop %v1668
        %v1797 = vtanh.pop %v1669
        %v1798 = vtanh.pop %v1670
        %v1799 = vtanh.pop %v1671
        %v1800 = vtanh.pop %v1672
        %v1801 = vtanh.pop %v1673
        %v1802 = vtanh.pop %v1674
        %v1803 = vtanh.pop %v1675
        %v1804 = vtanh.pop %v1676
        %v1805 = vtanh.pop %v1677
        %v1806 = vtanh.pop %v1678
        %v1807 = vtanh.pop %v1679
        %v1808 = vtanh.pop %v1680
        %v1809 = vtanh.pop %v1681
        %v1810 = vtanh.pop %v1682
        %v1811 = vtanh.pop %v1683
        %v1812 = vtanh.pop %v1684
        %v1813 = vtanh.pop %v1685
        %v1814 = vtanh.pop %v1686
        %v1815 = vtanh.pop %v1687
        %v1816 = vtanh.pop %v1688
        %v1817 = vtanh.pop %v1689
        %v1818 = vtanh.pop %v1690
        %v1819 = vtanh.pop %v1691
        %v1820 = vtanh.pop %v1692
        %v1821 = vtanh.pop %v1693
        %v1822 = vtanh.pop %v1694
        %v1823 = vtanh.pop %v1695
        %v1824 = vtanh.pop %v1696
        %v1825 = vtanh.pop %v1697
        %v1826 = vtanh.pop %v1698
        %v1827 = vtanh.pop %v1699
        %v1828 = vtanh.pop %v1700
        %v1829 = vtanh.pop %v1701
        %v1830 = vtanh.pop %v1702
        %v1831 = vtanh.pop %v1703
        %v1832 = vtanh.pop %v1704
        %v1833 = vtanh.pop %v1705
        %v1834 = vtanh.pop %v1706
        %v1835 = vtanh.pop %v1707
        %v1836 = vtanh.pop %v1708
        %v1837 = vtanh.pop %v1709
        %v1838 = vtanh.pop %v1710
        %v1839 = vtanh.pop %v1711
        %v1840 = vtanh.pop %v1712
        %v1841 = vtanh.pop %v1713
        %v1842 = vtanh.pop %v1714
        %v1843 = vtanh.pop %v1715
        %v1844 = vtanh.pop %v1716
        %v1845 = vtanh.pop %v1717
        %v1846 = vtanh.pop %v1718
        %v1847 = vtanh.pop %v1719
        %v1848 = vtanh.pop %v1720
        %v1849 = vtanh.pop %v1721
        %v1850 = vtanh.pop %v1722
        %v1851 = vtanh.pop %v1723
        %v1852 = vtanh.pop %v1724
        %v1853 = vtanh.pop %v1725
        %v1854 = vtanh.pop %v1726
        %v1855 = vtanh.pop %v1727
        %v1856 = vtanh.pop %v1728
        %v1857 = vtanh.pop %v1729
        %v1858 = vtanh.pop %v1730
        %v1859 = vtanh.pop %v1731
        %v1860 = vtanh.pop %v1732
        %v1861 = vtanh.pop %v1733
        %v1862 = vtanh.pop %v1734
        %v1863 = vtanh.pop %v1735
        %v1864 = vtanh.pop %v1736
        %v1865 = vtanh.pop %v1737
        %v1866 = vtanh.pop %v1738
        %v1867 = vtanh.pop %v1739
        %v1868 = vtanh.pop %v1740
        %v1869 = vtanh.pop %v1741
        %v1870 = vtanh.pop %v1742
        %v1871 = vtanh.pop %v1743
        %v1872 = vtanh.pop %v1744
        %v1873 = vtanh.pop %v1745
        %v1874 = vtanh.pop %v1746
        %v1875 = vtanh.pop %v1747
        %v1876 = vtanh.pop %v1748
        %v1877 = vtanh.pop %v1749
        %v1878 = vtanh.pop %v1750
        %v1879 = vtanh.pop %v1751
        %v1880 = vtanh.pop %v1752
        %v1881 = vtanh.pop %v1753
        %v1882 = vtanh.pop %v1754
        %v1883 = vtanh.pop %v1755
        %v1884 = vtanh.pop %v1756
        %v1885 = vtanh.pop %v1757
        %v1886 = vtanh.pop %v1758
        %v1887 = vtanh.pop %v1759
        %v1888 = vtanh.pop %v1760
        %v1889 = vld [vmem:[%s5] sm:$0x1]
        %v1891 = vlaneseq
        %v1892 = vshrl.u32 %v1891, 7
        %v1893 = vsub.s32 0, %v1892
        %v1894 = vrot.slane %v1889, %v1893
        %v1896 = vmul.f32 %v1761, %v1894
        %v1897 = vmul.f32 %v1762, %v1894
        %v1898 = vmul.f32 %v1763, %v1894
        %v1899 = vmul.f32 %v1764, %v1894
        %v1900 = vmul.f32 %v1765, %v1894
        %v1901 = vmul.f32 %v1766, %v1894
        %v1902 = vmul.f32 %v1767, %v1894
        %v1903 = vmul.f32 %v1768, %v1894
        %v1904 = vmul.f32 %v1769, %v1894
        %v1905 = vmul.f32 %v1770, %v1894
        %v1906 = vmul.f32 %v1771, %v1894
        %v1907 = vmul.f32 %v1772, %v1894
        %v1908 = vmul.f32 %v1773, %v1894
        %v1909 = vmul.f32 %v1774, %v1894
        %v1910 = vmul.f32 %v1775, %v1894
        %v1911 = vmul.f32 %v1776, %v1894
        %v1912 = vmul.f32 %v1777, %v1894
        %v1913 = vmul.f32 %v1778, %v1894
        %v1914 = vmul.f32 %v1779, %v1894
        %v1915 = vmul.f32 %v1780, %v1894
        %v1916 = vmul.f32 %v1781, %v1894
        %v1917 = vmul.f32 %v1782, %v1894
        %v1918 = vmul.f32 %v1783, %v1894
        %v1919 = vmul.f32 %v1784, %v1894
        %v1920 = vmul.f32 %v1785, %v1894
        %v1921 = vmul.f32 %v1786, %v1894
        %v1922 = vmul.f32 %v1787, %v1894
        %v1923 = vmul.f32 %v1788, %v1894
        %v1924 = vmul.f32 %v1789, %v1894
        %v1925 = vmul.f32 %v1790, %v1894
        %v1926 = vmul.f32 %v1791, %v1894
        %v1927 = vmul.f32 %v1792, %v1894
        %v1928 = vmul.f32 %v1793, %v1894
        %v1929 = vmul.f32 %v1794, %v1894
        %v1930 = vmul.f32 %v1795, %v1894
        %v1931 = vmul.f32 %v1796, %v1894
        %v1932 = vmul.f32 %v1797, %v1894
        %v1933 = vmul.f32 %v1798, %v1894
        %v1934 = vmul.f32 %v1799, %v1894
        %v1935 = vmul.f32 %v1800, %v1894
        %v1936 = vmul.f32 %v1801, %v1894
        %v1937 = vmul.f32 %v1802, %v1894
        %v1938 = vmul.f32 %v1803, %v1894
        %v1939 = vmul.f32 %v1804, %v1894
        %v1940 = vmul.f32 %v1805, %v1894
        %v1941 = vmul.f32 %v1806, %v1894
        %v1942 = vmul.f32 %v1807, %v1894
        %v1943 = vmul.f32 %v1808, %v1894
        %v1944 = vmul.f32 %v1809, %v1894
        %v1945 = vmul.f32 %v1810, %v1894
        %v1946 = vmul.f32 %v1811, %v1894
        %v1947 = vmul.f32 %v1812, %v1894
        %v1948 = vmul.f32 %v1813, %v1894
        %v1949 = vmul.f32 %v1814, %v1894
        %v1950 = vmul.f32 %v1815, %v1894
        %v1951 = vmul.f32 %v1816, %v1894
        %v1952 = vmul.f32 %v1817, %v1894
        %v1953 = vmul.f32 %v1818, %v1894
        %v1954 = vmul.f32 %v1819, %v1894
        %v1955 = vmul.f32 %v1820, %v1894
        %v1956 = vmul.f32 %v1821, %v1894
        %v1957 = vmul.f32 %v1822, %v1894
        %v1958 = vmul.f32 %v1823, %v1894
        %v1959 = vmul.f32 %v1824, %v1894
        %v1960 = vmul.f32 %v1825, %v1894
        %v1961 = vmul.f32 %v1826, %v1894
        %v1962 = vmul.f32 %v1827, %v1894
        %v1963 = vmul.f32 %v1828, %v1894
        %v1964 = vmul.f32 %v1829, %v1894
        %v1965 = vmul.f32 %v1830, %v1894
        %v1966 = vmul.f32 %v1831, %v1894
        %v1967 = vmul.f32 %v1832, %v1894
        %v1968 = vmul.f32 %v1833, %v1894
        %v1969 = vmul.f32 %v1834, %v1894
        %v1970 = vmul.f32 %v1835, %v1894
        %v1971 = vmul.f32 %v1836, %v1894
        %v1972 = vmul.f32 %v1837, %v1894
        %v1973 = vmul.f32 %v1838, %v1894
        %v1974 = vmul.f32 %v1839, %v1894
        %v1975 = vmul.f32 %v1840, %v1894
        %v1976 = vmul.f32 %v1841, %v1894
        %v1977 = vmul.f32 %v1842, %v1894
        %v1978 = vmul.f32 %v1843, %v1894
        %v1979 = vmul.f32 %v1844, %v1894
        %v1980 = vmul.f32 %v1845, %v1894
        %v1981 = vmul.f32 %v1846, %v1894
        %v1982 = vmul.f32 %v1847, %v1894
        %v1983 = vmul.f32 %v1848, %v1894
        %v1984 = vmul.f32 %v1849, %v1894
        %v1985 = vmul.f32 %v1850, %v1894
        %v1986 = vmul.f32 %v1851, %v1894
        %v1987 = vmul.f32 %v1852, %v1894
        %v1988 = vmul.f32 %v1853, %v1894
        %v1989 = vmul.f32 %v1854, %v1894
        %v1990 = vmul.f32 %v1855, %v1894
        %v1991 = vmul.f32 %v1856, %v1894
        %v1992 = vmul.f32 %v1857, %v1894
        %v1993 = vmul.f32 %v1858, %v1894
        %v1994 = vmul.f32 %v1859, %v1894
        %v1995 = vmul.f32 %v1860, %v1894
        %v1996 = vmul.f32 %v1861, %v1894
        %v1997 = vmul.f32 %v1862, %v1894
        %v1998 = vmul.f32 %v1863, %v1894
        %v1999 = vmul.f32 %v1864, %v1894
        %v2000 = vmul.f32 %v1865, %v1894
        %v2001 = vmul.f32 %v1866, %v1894
        %v2002 = vmul.f32 %v1867, %v1894
        %v2003 = vmul.f32 %v1868, %v1894
        %v2004 = vmul.f32 %v1869, %v1894
        %v2005 = vmul.f32 %v1870, %v1894
        %v2006 = vmul.f32 %v1871, %v1894
        %v2007 = vmul.f32 %v1872, %v1894
        %v2008 = vmul.f32 %v1873, %v1894
        %v2009 = vmul.f32 %v1874, %v1894
        %v2010 = vmul.f32 %v1875, %v1894
        %v2011 = vmul.f32 %v1876, %v1894
        %v2012 = vmul.f32 %v1877, %v1894
        %v2013 = vmul.f32 %v1878, %v1894
        %v2014 = vmul.f32 %v1879, %v1894
        %v2015 = vmul.f32 %v1880, %v1894
        %v2016 = vmul.f32 %v1881, %v1894
        %v2017 = vmul.f32 %v1882, %v1894
        %v2018 = vmul.f32 %v1883, %v1894
        %v2019 = vmul.f32 %v1884, %v1894
        %v2020 = vmul.f32 %v1885, %v1894
        %v2021 = vmul.f32 %v1886, %v1894
        %v2022 = vmul.f32 %v1887, %v1894
        %v2023 = vmul.f32 %v1888, %v1894
        %2024 = vadd.xlane.f32.xlu0 %v1896
        %v2025 = vpop.xlane.xlu0 %2024
        %2026 = vadd.xlane.f32.xlu0 %v1897
        %v2027 = vpop.xlane.xlu0 %2026
        %2028 = vadd.xlane.f32.xlu0 %v1898
        %v2029 = vpop.xlane.xlu0 %2028
        %2030 = vadd.xlane.f32.xlu0 %v1899
        %v2031 = vpop.xlane.xlu0 %2030
        %2032 = vadd.xlane.f32.xlu0 %v1900
        %v2033 = vpop.xlane.xlu0 %2032
        %2034 = vadd.xlane.f32.xlu0 %v1901
        %v2035 = vpop.xlane.xlu0 %2034
        %2036 = vadd.xlane.f32.xlu0 %v1902
        %v2037 = vpop.xlane.xlu0 %2036
        %2038 = vadd.xlane.f32.xlu0 %v1903
        %v2039 = vpop.xlane.xlu0 %2038
        %2040 = vadd.xlane.f32.xlu0 %v1904
        %v2041 = vpop.xlane.xlu0 %2040
        %2042 = vadd.xlane.f32.xlu0 %v1905
        %v2043 = vpop.xlane.xlu0 %2042
        %2044 = vadd.xlane.f32.xlu0 %v1906
        %v2045 = vpop.xlane.xlu0 %2044
        %2046 = vadd.xlane.f32.xlu0 %v1907
        %v2047 = vpop.xlane.xlu0 %2046
        %2048 = vadd.xlane.f32.xlu0 %v1908
        %v2049 = vpop.xlane.xlu0 %2048
        %2050 = vadd.xlane.f32.xlu0 %v1909
        %v2051 = vpop.xlane.xlu0 %2050
        %2052 = vadd.xlane.f32.xlu0 %v1910
        %v2053 = vpop.xlane.xlu0 %2052
        %2054 = vadd.xlane.f32.xlu0 %v1911
        %v2055 = vpop.xlane.xlu0 %2054
        %2056 = vadd.xlane.f32.xlu0 %v1912
        %v2057 = vpop.xlane.xlu0 %2056
        %2058 = vadd.xlane.f32.xlu0 %v1913
        %v2059 = vpop.xlane.xlu0 %2058
        %2060 = vadd.xlane.f32.xlu0 %v1914
        %v2061 = vpop.xlane.xlu0 %2060
        %2062 = vadd.xlane.f32.xlu0 %v1915
        %v2063 = vpop.xlane.xlu0 %2062
        %2064 = vadd.xlane.f32.xlu0 %v1916
        %v2065 = vpop.xlane.xlu0 %2064
        %2066 = vadd.xlane.f32.xlu0 %v1917
        %v2067 = vpop.xlane.xlu0 %2066
        %2068 = vadd.xlane.f32.xlu0 %v1918
        %v2069 = vpop.xlane.xlu0 %2068
        %2070 = vadd.xlane.f32.xlu0 %v1919
        %v2071 = vpop.xlane.xlu0 %2070
        %2072 = vadd.xlane.f32.xlu0 %v1920
        %v2073 = vpop.xlane.xlu0 %2072
        %2074 = vadd.xlane.f32.xlu0 %v1921
        %v2075 = vpop.xlane.xlu0 %2074
        %2076 = vadd.xlane.f32.xlu0 %v1922
        %v2077 = vpop.xlane.xlu0 %2076
        %2078 = vadd.xlane.f32.xlu0 %v1923
        %v2079 = vpop.xlane.xlu0 %2078
        %2080 = vadd.xlane.f32.xlu0 %v1924
        %v2081 = vpop.xlane.xlu0 %2080
        %2082 = vadd.xlane.f32.xlu0 %v1925
        %v2083 = vpop.xlane.xlu0 %2082
        %2084 = vadd.xlane.f32.xlu0 %v1926
        %v2085 = vpop.xlane.xlu0 %2084
        %2086 = vadd.xlane.f32.xlu0 %v1927
        %v2087 = vpop.xlane.xlu0 %2086
        %2088 = vadd.xlane.f32.xlu0 %v1928
        %v2089 = vpop.xlane.xlu0 %2088
        %2090 = vadd.xlane.f32.xlu0 %v1929
        %v2091 = vpop.xlane.xlu0 %2090
        %2092 = vadd.xlane.f32.xlu0 %v1930
        %v2093 = vpop.xlane.xlu0 %2092
        %2094 = vadd.xlane.f32.xlu0 %v1931
        %v2095 = vpop.xlane.xlu0 %2094
        %2096 = vadd.xlane.f32.xlu0 %v1932
        %v2097 = vpop.xlane.xlu0 %2096
        %2098 = vadd.xlane.f32.xlu0 %v1933
        %v2099 = vpop.xlane.xlu0 %2098
        %2100 = vadd.xlane.f32.xlu0 %v1934
        %v2101 = vpop.xlane.xlu0 %2100
        %2102 = vadd.xlane.f32.xlu0 %v1935
        %v2103 = vpop.xlane.xlu0 %2102
        %2104 = vadd.xlane.f32.xlu0 %v1936
        %v2105 = vpop.xlane.xlu0 %2104
        %2106 = vadd.xlane.f32.xlu0 %v1937
        %v2107 = vpop.xlane.xlu0 %2106
        %2108 = vadd.xlane.f32.xlu0 %v1938
        %v2109 = vpop.xlane.xlu0 %2108
        %2110 = vadd.xlane.f32.xlu0 %v1939
        %v2111 = vpop.xlane.xlu0 %2110
        %2112 = vadd.xlane.f32.xlu0 %v1940
        %v2113 = vpop.xlane.xlu0 %2112
        %2114 = vadd.xlane.f32.xlu0 %v1941
        %v2115 = vpop.xlane.xlu0 %2114
        %2116 = vadd.xlane.f32.xlu0 %v1942
        %v2117 = vpop.xlane.xlu0 %2116
        %2118 = vadd.xlane.f32.xlu0 %v1943
        %v2119 = vpop.xlane.xlu0 %2118
        %2120 = vadd.xlane.f32.xlu0 %v1944
        %v2121 = vpop.xlane.xlu0 %2120
        %2122 = vadd.xlane.f32.xlu0 %v1945
        %v2123 = vpop.xlane.xlu0 %2122
        %2124 = vadd.xlane.f32.xlu0 %v1946
        %v2125 = vpop.xlane.xlu0 %2124
        %2126 = vadd.xlane.f32.xlu0 %v1947
        %v2127 = vpop.xlane.xlu0 %2126
        %2128 = vadd.xlane.f32.xlu0 %v1948
        %v2129 = vpop.xlane.xlu0 %2128
        %2130 = vadd.xlane.f32.xlu0 %v1949
        %v2131 = vpop.xlane.xlu0 %2130
        %2132 = vadd.xlane.f32.xlu0 %v1950
        %v2133 = vpop.xlane.xlu0 %2132
        %2134 = vadd.xlane.f32.xlu0 %v1951
        %v2135 = vpop.xlane.xlu0 %2134
        %2136 = vadd.xlane.f32.xlu0 %v1952
        %v2137 = vpop.xlane.xlu0 %2136
        %2138 = vadd.xlane.f32.xlu0 %v1953
        %v2139 = vpop.xlane.xlu0 %2138
        %2140 = vadd.xlane.f32.xlu0 %v1954
        %v2141 = vpop.xlane.xlu0 %2140
        %2142 = vadd.xlane.f32.xlu0 %v1955
        %v2143 = vpop.xlane.xlu0 %2142
        %2144 = vadd.xlane.f32.xlu0 %v1956
        %v2145 = vpop.xlane.xlu0 %2144
        %2146 = vadd.xlane.f32.xlu0 %v1957
        %v2147 = vpop.xlane.xlu0 %2146
        %2148 = vadd.xlane.f32.xlu0 %v1958
        %v2149 = vpop.xlane.xlu0 %2148
        %2150 = vadd.xlane.f32.xlu0 %v1959
        %v2151 = vpop.xlane.xlu0 %2150
        %2152 = vadd.xlane.f32.xlu0 %v1960
        %v2153 = vpop.xlane.xlu0 %2152
        %2154 = vadd.xlane.f32.xlu0 %v1961
        %v2155 = vpop.xlane.xlu0 %2154
        %2156 = vadd.xlane.f32.xlu0 %v1962
        %v2157 = vpop.xlane.xlu0 %2156
        %2158 = vadd.xlane.f32.xlu0 %v1963
        %v2159 = vpop.xlane.xlu0 %2158
        %2160 = vadd.xlane.f32.xlu0 %v1964
        %v2161 = vpop.xlane.xlu0 %2160
        %2162 = vadd.xlane.f32.xlu0 %v1965
        %v2163 = vpop.xlane.xlu0 %2162
        %2164 = vadd.xlane.f32.xlu0 %v1966
        %v2165 = vpop.xlane.xlu0 %2164
        %2166 = vadd.xlane.f32.xlu0 %v1967
        %v2167 = vpop.xlane.xlu0 %2166
        %2168 = vadd.xlane.f32.xlu0 %v1968
        %v2169 = vpop.xlane.xlu0 %2168
        %2170 = vadd.xlane.f32.xlu0 %v1969
        %v2171 = vpop.xlane.xlu0 %2170
        %2172 = vadd.xlane.f32.xlu0 %v1970
        %v2173 = vpop.xlane.xlu0 %2172
        %2174 = vadd.xlane.f32.xlu0 %v1971
        %v2175 = vpop.xlane.xlu0 %2174
        %2176 = vadd.xlane.f32.xlu0 %v1972
        %v2177 = vpop.xlane.xlu0 %2176
        %2178 = vadd.xlane.f32.xlu0 %v1973
        %v2179 = vpop.xlane.xlu0 %2178
        %2180 = vadd.xlane.f32.xlu0 %v1974
        %v2181 = vpop.xlane.xlu0 %2180
        %2182 = vadd.xlane.f32.xlu0 %v1975
        %v2183 = vpop.xlane.xlu0 %2182
        %2184 = vadd.xlane.f32.xlu0 %v1976
        %v2185 = vpop.xlane.xlu0 %2184
        %2186 = vadd.xlane.f32.xlu0 %v1977
        %v2187 = vpop.xlane.xlu0 %2186
        %2188 = vadd.xlane.f32.xlu0 %v1978
        %v2189 = vpop.xlane.xlu0 %2188
        %2190 = vadd.xlane.f32.xlu0 %v1979
        %v2191 = vpop.xlane.xlu0 %2190
        %2192 = vadd.xlane.f32.xlu0 %v1980
        %v2193 = vpop.xlane.xlu0 %2192
        %2194 = vadd.xlane.f32.xlu0 %v1981
        %v2195 = vpop.xlane.xlu0 %2194
        %2196 = vadd.xlane.f32.xlu0 %v1982
        %v2197 = vpop.xlane.xlu0 %2196
        %2198 = vadd.xlane.f32.xlu0 %v1983
        %v2199 = vpop.xlane.xlu0 %2198
        %2200 = vadd.xlane.f32.xlu0 %v1984
        %v2201 = vpop.xlane.xlu0 %2200
        %2202 = vadd.xlane.f32.xlu0 %v1985
        %v2203 = vpop.xlane.xlu0 %2202
        %2204 = vadd.xlane.f32.xlu0 %v1986
        %v2205 = vpop.xlane.xlu0 %2204
        %2206 = vadd.xlane.f32.xlu0 %v1987
        %v2207 = vpop.xlane.xlu0 %2206
        %2208 = vadd.xlane.f32.xlu0 %v1988
        %v2209 = vpop.xlane.xlu0 %2208
        %2210 = vadd.xlane.f32.xlu0 %v1989
        %v2211 = vpop.xlane.xlu0 %2210
        %2212 = vadd.xlane.f32.xlu0 %v1990
        %v2213 = vpop.xlane.xlu0 %2212
        %2214 = vadd.xlane.f32.xlu0 %v1991
        %v2215 = vpop.xlane.xlu0 %2214
        %2216 = vadd.xlane.f32.xlu0 %v1992
        %v2217 = vpop.xlane.xlu0 %2216
        %2218 = vadd.xlane.f32.xlu0 %v1993
        %v2219 = vpop.xlane.xlu0 %2218
        %2220 = vadd.xlane.f32.xlu0 %v1994
        %v2221 = vpop.xlane.xlu0 %2220
        %2222 = vadd.xlane.f32.xlu0 %v1995
        %v2223 = vpop.xlane.xlu0 %2222
        %2224 = vadd.xlane.f32.xlu0 %v1996
        %v2225 = vpop.xlane.xlu0 %2224
        %2226 = vadd.xlane.f32.xlu0 %v1997
        %v2227 = vpop.xlane.xlu0 %2226
        %2228 = vadd.xlane.f32.xlu0 %v1998
        %v2229 = vpop.xlane.xlu0 %2228
        %2230 = vadd.xlane.f32.xlu0 %v1999
        %v2231 = vpop.xlane.xlu0 %2230
        %2232 = vadd.xlane.f32.xlu0 %v2000
        %v2233 = vpop.xlane.xlu0 %2232
        %2234 = vadd.xlane.f32.xlu0 %v2001
        %v2235 = vpop.xlane.xlu0 %2234
        %2236 = vadd.xlane.f32.xlu0 %v2002
        %v2237 = vpop.xlane.xlu0 %2236
        %2238 = vadd.xlane.f32.xlu0 %v2003
        %v2239 = vpop.xlane.xlu0 %2238
        %2240 = vadd.xlane.f32.xlu0 %v2004
        %v2241 = vpop.xlane.xlu0 %2240
        %2242 = vadd.xlane.f32.xlu0 %v2005
        %v2243 = vpop.xlane.xlu0 %2242
        %2244 = vadd.xlane.f32.xlu0 %v2006
        %v2245 = vpop.xlane.xlu0 %2244
        %2246 = vadd.xlane.f32.xlu0 %v2007
        %v2247 = vpop.xlane.xlu0 %2246
        %2248 = vadd.xlane.f32.xlu0 %v2008
        %v2249 = vpop.xlane.xlu0 %2248
        %2250 = vadd.xlane.f32.xlu0 %v2009
        %v2251 = vpop.xlane.xlu0 %2250
        %2252 = vadd.xlane.f32.xlu0 %v2010
        %v2253 = vpop.xlane.xlu0 %2252
        %2254 = vadd.xlane.f32.xlu0 %v2011
        %v2255 = vpop.xlane.xlu0 %2254
        %2256 = vadd.xlane.f32.xlu0 %v2012
        %v2257 = vpop.xlane.xlu0 %2256
        %2258 = vadd.xlane.f32.xlu0 %v2013
        %v2259 = vpop.xlane.xlu0 %2258
        %2260 = vadd.xlane.f32.xlu0 %v2014
        %v2261 = vpop.xlane.xlu0 %2260
        %2262 = vadd.xlane.f32.xlu0 %v2015
        %v2263 = vpop.xlane.xlu0 %2262
        %2264 = vadd.xlane.f32.xlu0 %v2016
        %v2265 = vpop.xlane.xlu0 %2264
        %2266 = vadd.xlane.f32.xlu0 %v2017
        %v2267 = vpop.xlane.xlu0 %2266
        %2268 = vadd.xlane.f32.xlu0 %v2018
        %v2269 = vpop.xlane.xlu0 %2268
        %2270 = vadd.xlane.f32.xlu0 %v2019
        %v2271 = vpop.xlane.xlu0 %2270
        %2272 = vadd.xlane.f32.xlu0 %v2020
        %v2273 = vpop.xlane.xlu0 %2272
        %2274 = vadd.xlane.f32.xlu0 %v2021
        %v2275 = vpop.xlane.xlu0 %2274
        %2276 = vadd.xlane.f32.xlu0 %v2022
        %v2277 = vpop.xlane.xlu0 %2276
        %2278 = vadd.xlane.f32.xlu0 %v2023
        %v2279 = vpop.xlane.xlu0 %2278
        %v2280 = vlaneseq
        %v2281 = vand.u32 %v2280, 127
        %vm2282 = vcmp.lt.s32.totalorder %v2281, 8
        %v2411 = vlaneseq
        %v2412 = vshrl.u32 %v2411, 7
        %v2413 = vsub.s32 %v2281, %v2412
        %v2414 = vrot.slane %v2025, %v2413
        %v2415 = vadd.s32 %v2281, 4294967288
        %v2416 = vlaneseq
        %v2417 = vshrl.u32 %v2416, 7
        %v2418 = vsub.s32 %v2415, %v2417
        %v2419 = vrot.slane %v2027, %v2418
        %vm2420 = vcmask 130112
        %v2421 = vsel %vm2420, %v2419, %v2414
        %v2422 = vadd.s32 %v2281, 4294967280
        %v2423 = vlaneseq
        %v2424 = vshrl.u32 %v2423, 7
        %v2425 = vsub.s32 %v2422, %v2424
        %v2426 = vrot.slane %v2029, %v2425
        %vm2427 = vcmask 195712
        %v2428 = vsel %vm2427, %v2426, %v2421
        %v2429 = vadd.s32 %v2281, 4294967272
        %v2430 = vlaneseq
        %v2431 = vshrl.u32 %v2430, 7
        %v2432 = vsub.s32 %v2429, %v2431
        %v2433 = vrot.slane %v2031, %v2432
        %vm2434 = vcmask 261312
        %v2435 = vsel %vm2434, %v2433, %v2428
        %v2436 = vadd.s32 %v2281, 4294967264
        %v2437 = vlaneseq
        %v2438 = vshrl.u32 %v2437, 7
        %v2439 = vsub.s32 %v2436, %v2438
        %v2440 = vrot.slane %v2033, %v2439
        %vm2441 = vcmask 326912
        %v2442 = vsel %vm2441, %v2440, %v2435
        %v2443 = vadd.s32 %v2281, 4294967256
        %v2444 = vlaneseq
        %v2445 = vshrl.u32 %v2444, 7
        %v2446 = vsub.s32 %v2443, %v2445
        %v2447 = vrot.slane %v2035, %v2446
        %vm2448 = vcmask 392512
        %v2449 = vsel %vm2448, %v2447, %v2442
        %v2450 = vadd.s32 %v2281, 4294967248
        %v2451 = vlaneseq
        %v2452 = vshrl.u32 %v2451, 7
        %v2453 = vsub.s32 %v2450, %v2452
        %v2454 = vrot.slane %v2037, %v2453
        %vm2455 = vcmask 458112
        %v2456 = vsel %vm2455, %v2454, %v2449
        %v2457 = vadd.s32 %v2281, 4294967240
        %v2458 = vlaneseq
        %v2459 = vshrl.u32 %v2458, 7
        %v2460 = vsub.s32 %v2457, %v2459
        %v2461 = vrot.slane %v2039, %v2460
        %vm2462 = vcmask 523712
        %v2463 = vsel %vm2462, %v2461, %v2456
        %v2464 = vadd.s32 %v2281, 4294967232
        %v2465 = vlaneseq
        %v2466 = vshrl.u32 %v2465, 7
        %v2467 = vsub.s32 %v2464, %v2466
        %v2468 = vrot.slane %v2041, %v2467
        %vm2469 = vcmask 589312
        %v2470 = vsel %vm2469, %v2468, %v2463
        %v2471 = vadd.s32 %v2281, 4294967224
        %v2472 = vlaneseq
        %v2473 = vshrl.u32 %v2472, 7
        %v2474 = vsub.s32 %v2471, %v2473
        %v2475 = vrot.slane %v2043, %v2474
        %vm2476 = vcmask 654912
        %v2477 = vsel %vm2476, %v2475, %v2470
        %v2478 = vadd.s32 %v2281, 4294967216
        %v2479 = vlaneseq
        %v2480 = vshrl.u32 %v2479, 7
        %v2481 = vsub.s32 %v2478, %v2480
        %v2482 = vrot.slane %v2045, %v2481
        %vm2483 = vcmask 720512
        %v2484 = vsel %vm2483, %v2482, %v2477
        %v2485 = vadd.s32 %v2281, 4294967208
        %v2486 = vlaneseq
        %v2487 = vshrl.u32 %v2486, 7
        %v2488 = vsub.s32 %v2485, %v2487
        %v2489 = vrot.slane %v2047, %v2488
        %vm2490 = vcmask 786112
        %v2491 = vsel %vm2490, %v2489, %v2484
        %v2492 = vadd.s32 %v2281, 4294967200
        %v2493 = vlaneseq
        %v2494 = vshrl.u32 %v2493, 7
        %v2495 = vsub.s32 %v2492, %v2494
        %v2496 = vrot.slane %v2049, %v2495
        %vm2497 = vcmask 851712
        %v2498 = vsel %vm2497, %v2496, %v2491
        %v2499 = vadd.s32 %v2281, 4294967192
        %v2500 = vlaneseq
        %v2501 = vshrl.u32 %v2500, 7
        %v2502 = vsub.s32 %v2499, %v2501
        %v2503 = vrot.slane %v2051, %v2502
        %vm2504 = vcmask 917312
        %v2505 = vsel %vm2504, %v2503, %v2498
        %v2506 = vadd.s32 %v2281, 4294967184
        %v2507 = vlaneseq
        %v2508 = vshrl.u32 %v2507, 7
        %v2509 = vsub.s32 %v2506, %v2508
        %v2510 = vrot.slane %v2053, %v2509
        %vm2511 = vcmask 982912
        %v2512 = vsel %vm2511, %v2510, %v2505
        %v2513 = vadd.s32 %v2281, 4294967176
        %v2514 = vlaneseq
        %v2515 = vshrl.u32 %v2514, 7
        %v2516 = vsub.s32 %v2513, %v2515
        %v2517 = vrot.slane %v2055, %v2516
        %vm2518 = vcmask 1048512
        %v2519 = vsel %vm2518, %v2517, %v2512
        %v2520 = vlaneseq
        %v2521 = vshrl.u32 %v2520, 7
        %v2522 = vsub.s32 %v2281, %v2521
        %v2523 = vrot.slane %v2057, %v2522
        %v2524 = vlaneseq
        %v2525 = vshrl.u32 %v2524, 7
        %v2526 = vsub.s32 %v2415, %v2525
        %v2527 = vrot.slane %v2059, %v2526
        %v2528 = vsel %vm2420, %v2527, %v2523
        %v2529 = vlaneseq
        %v2530 = vshrl.u32 %v2529, 7
        %v2531 = vsub.s32 %v2422, %v2530
        %v2532 = vrot.slane %v2061, %v2531
        %v2533 = vsel %vm2427, %v2532, %v2528
        %v2534 = vlaneseq
        %v2535 = vshrl.u32 %v2534, 7
        %v2536 = vsub.s32 %v2429, %v2535
        %v2537 = vrot.slane %v2063, %v2536
        %v2538 = vsel %vm2434, %v2537, %v2533
        %v2539 = vlaneseq
        %v2540 = vshrl.u32 %v2539, 7
        %v2541 = vsub.s32 %v2436, %v2540
        %v2542 = vrot.slane %v2065, %v2541
        %v2543 = vsel %vm2441, %v2542, %v2538
        %v2544 = vlaneseq
        %v2545 = vshrl.u32 %v2544, 7
        %v2546 = vsub.s32 %v2443, %v2545
        %v2547 = vrot.slane %v2067, %v2546
        %v2548 = vsel %vm2448, %v2547, %v2543
        %v2549 = vlaneseq
        %v2550 = vshrl.u32 %v2549, 7
        %v2551 = vsub.s32 %v2450, %v2550
        %v2552 = vrot.slane %v2069, %v2551
        %v2553 = vsel %vm2455, %v2552, %v2548
        %v2554 = vlaneseq
        %v2555 = vshrl.u32 %v2554, 7
        %v2556 = vsub.s32 %v2457, %v2555
        %v2557 = vrot.slane %v2071, %v2556
        %v2558 = vsel %vm2462, %v2557, %v2553
        %v2559 = vlaneseq
        %v2560 = vshrl.u32 %v2559, 7
        %v2561 = vsub.s32 %v2464, %v2560
        %v2562 = vrot.slane %v2073, %v2561
        %v2563 = vsel %vm2469, %v2562, %v2558
        %v2564 = vlaneseq
        %v2565 = vshrl.u32 %v2564, 7
        %v2566 = vsub.s32 %v2471, %v2565
        %v2567 = vrot.slane %v2075, %v2566
        %v2568 = vsel %vm2476, %v2567, %v2563
        %v2569 = vlaneseq
        %v2570 = vshrl.u32 %v2569, 7
        %v2571 = vsub.s32 %v2478, %v2570
        %v2572 = vrot.slane %v2077, %v2571
        %v2573 = vsel %vm2483, %v2572, %v2568
        %v2574 = vlaneseq
        %v2575 = vshrl.u32 %v2574, 7
        %v2576 = vsub.s32 %v2485, %v2575
        %v2577 = vrot.slane %v2079, %v2576
        %v2578 = vsel %vm2490, %v2577, %v2573
        %v2579 = vlaneseq
        %v2580 = vshrl.u32 %v2579, 7
        %v2581 = vsub.s32 %v2492, %v2580
        %v2582 = vrot.slane %v2081, %v2581
        %v2583 = vsel %vm2497, %v2582, %v2578
        %v2584 = vlaneseq
        %v2585 = vshrl.u32 %v2584, 7
        %v2586 = vsub.s32 %v2499, %v2585
        %v2587 = vrot.slane %v2083, %v2586
        %v2588 = vsel %vm2504, %v2587, %v2583
        %v2589 = vlaneseq
        %v2590 = vshrl.u32 %v2589, 7
        %v2591 = vsub.s32 %v2506, %v2590
        %v2592 = vrot.slane %v2085, %v2591
        %v2593 = vsel %vm2511, %v2592, %v2588
        %v2594 = vlaneseq
        %v2595 = vshrl.u32 %v2594, 7
        %v2596 = vsub.s32 %v2513, %v2595
        %v2597 = vrot.slane %v2087, %v2596
        %v2598 = vsel %vm2518, %v2597, %v2593
        %v2599 = vlaneseq
        %v2600 = vshrl.u32 %v2599, 7
        %v2601 = vsub.s32 %v2281, %v2600
        %v2602 = vrot.slane %v2089, %v2601
        %v2603 = vlaneseq
        %v2604 = vshrl.u32 %v2603, 7
        %v2605 = vsub.s32 %v2415, %v2604
        %v2606 = vrot.slane %v2091, %v2605
        %v2607 = vsel %vm2420, %v2606, %v2602
        %v2608 = vlaneseq
        %v2609 = vshrl.u32 %v2608, 7
        %v2610 = vsub.s32 %v2422, %v2609
        %v2611 = vrot.slane %v2093, %v2610
        %v2612 = vsel %vm2427, %v2611, %v2607
        %v2613 = vlaneseq
        %v2614 = vshrl.u32 %v2613, 7
        %v2615 = vsub.s32 %v2429, %v2614
        %v2616 = vrot.slane %v2095, %v2615
        %v2617 = vsel %vm2434, %v2616, %v2612
        %v2618 = vlaneseq
        %v2619 = vshrl.u32 %v2618, 7
        %v2620 = vsub.s32 %v2436, %v2619
        %v2621 = vrot.slane %v2097, %v2620
        %v2622 = vsel %vm2441, %v2621, %v2617
        %v2623 = vlaneseq
        %v2624 = vshrl.u32 %v2623, 7
        %v2625 = vsub.s32 %v2443, %v2624
        %v2626 = vrot.slane %v2099, %v2625
        %v2627 = vsel %vm2448, %v2626, %v2622
        %v2628 = vlaneseq
        %v2629 = vshrl.u32 %v2628, 7
        %v2630 = vsub.s32 %v2450, %v2629
        %v2631 = vrot.slane %v2101, %v2630
        %v2632 = vsel %vm2455, %v2631, %v2627
        %v2633 = vlaneseq
        %v2634 = vshrl.u32 %v2633, 7
        %v2635 = vsub.s32 %v2457, %v2634
        %v2636 = vrot.slane %v2103, %v2635
        %v2637 = vsel %vm2462, %v2636, %v2632
        %v2638 = vlaneseq
        %v2639 = vshrl.u32 %v2638, 7
        %v2640 = vsub.s32 %v2464, %v2639
        %v2641 = vrot.slane %v2105, %v2640
        %v2642 = vsel %vm2469, %v2641, %v2637
        %v2643 = vlaneseq
        %v2644 = vshrl.u32 %v2643, 7
        %v2645 = vsub.s32 %v2471, %v2644
        %v2646 = vrot.slane %v2107, %v2645
        %v2647 = vsel %vm2476, %v2646, %v2642
        %v2648 = vlaneseq
        %v2649 = vshrl.u32 %v2648, 7
        %v2650 = vsub.s32 %v2478, %v2649
        %v2651 = vrot.slane %v2109, %v2650
        %v2652 = vsel %vm2483, %v2651, %v2647
        %v2653 = vlaneseq
        %v2654 = vshrl.u32 %v2653, 7
        %v2655 = vsub.s32 %v2485, %v2654
        %v2656 = vrot.slane %v2111, %v2655
        %v2657 = vsel %vm2490, %v2656, %v2652
        %v2658 = vlaneseq
        %v2659 = vshrl.u32 %v2658, 7
        %v2660 = vsub.s32 %v2492, %v2659
        %v2661 = vrot.slane %v2113, %v2660
        %v2662 = vsel %vm2497, %v2661, %v2657
        %v2663 = vlaneseq
        %v2664 = vshrl.u32 %v2663, 7
        %v2665 = vsub.s32 %v2499, %v2664
        %v2666 = vrot.slane %v2115, %v2665
        %v2667 = vsel %vm2504, %v2666, %v2662
        %v2668 = vlaneseq
        %v2669 = vshrl.u32 %v2668, 7
        %v2670 = vsub.s32 %v2506, %v2669
        %v2671 = vrot.slane %v2117, %v2670
        %v2672 = vsel %vm2511, %v2671, %v2667
        %v2673 = vlaneseq
        %v2674 = vshrl.u32 %v2673, 7
        %v2675 = vsub.s32 %v2513, %v2674
        %v2676 = vrot.slane %v2119, %v2675
        %v2677 = vsel %vm2518, %v2676, %v2672
        %v2678 = vlaneseq
        %v2679 = vshrl.u32 %v2678, 7
        %v2680 = vsub.s32 %v2281, %v2679
        %v2681 = vrot.slane %v2121, %v2680
        %v2682 = vlaneseq
        %v2683 = vshrl.u32 %v2682, 7
        %v2684 = vsub.s32 %v2415, %v2683
        %v2685 = vrot.slane %v2123, %v2684
        %v2686 = vsel %vm2420, %v2685, %v2681
        %v2687 = vlaneseq
        %v2688 = vshrl.u32 %v2687, 7
        %v2689 = vsub.s32 %v2422, %v2688
        %v2690 = vrot.slane %v2125, %v2689
        %v2691 = vsel %vm2427, %v2690, %v2686
        %v2692 = vlaneseq
        %v2693 = vshrl.u32 %v2692, 7
        %v2694 = vsub.s32 %v2429, %v2693
        %v2695 = vrot.slane %v2127, %v2694
        %v2696 = vsel %vm2434, %v2695, %v2691
        %v2697 = vlaneseq
        %v2698 = vshrl.u32 %v2697, 7
        %v2699 = vsub.s32 %v2436, %v2698
        %v2700 = vrot.slane %v2129, %v2699
        %v2701 = vsel %vm2441, %v2700, %v2696
        %v2702 = vlaneseq
        %v2703 = vshrl.u32 %v2702, 7
        %v2704 = vsub.s32 %v2443, %v2703
        %v2705 = vrot.slane %v2131, %v2704
        %v2706 = vsel %vm2448, %v2705, %v2701
        %v2707 = vlaneseq
        %v2708 = vshrl.u32 %v2707, 7
        %v2709 = vsub.s32 %v2450, %v2708
        %v2710 = vrot.slane %v2133, %v2709
        %v2711 = vsel %vm2455, %v2710, %v2706
        %v2712 = vlaneseq
        %v2713 = vshrl.u32 %v2712, 7
        %v2714 = vsub.s32 %v2457, %v2713
        %v2715 = vrot.slane %v2135, %v2714
        %v2716 = vsel %vm2462, %v2715, %v2711
        %v2717 = vlaneseq
        %v2718 = vshrl.u32 %v2717, 7
        %v2719 = vsub.s32 %v2464, %v2718
        %v2720 = vrot.slane %v2137, %v2719
        %v2721 = vsel %vm2469, %v2720, %v2716
        %v2722 = vlaneseq
        %v2723 = vshrl.u32 %v2722, 7
        %v2724 = vsub.s32 %v2471, %v2723
        %v2725 = vrot.slane %v2139, %v2724
        %v2726 = vsel %vm2476, %v2725, %v2721
        %v2727 = vlaneseq
        %v2728 = vshrl.u32 %v2727, 7
        %v2729 = vsub.s32 %v2478, %v2728
        %v2730 = vrot.slane %v2141, %v2729
        %v2731 = vsel %vm2483, %v2730, %v2726
        %v2732 = vlaneseq
        %v2733 = vshrl.u32 %v2732, 7
        %v2734 = vsub.s32 %v2485, %v2733
        %v2735 = vrot.slane %v2143, %v2734
        %v2736 = vsel %vm2490, %v2735, %v2731
        %v2737 = vlaneseq
        %v2738 = vshrl.u32 %v2737, 7
        %v2739 = vsub.s32 %v2492, %v2738
        %v2740 = vrot.slane %v2145, %v2739
        %v2741 = vsel %vm2497, %v2740, %v2736
        %v2742 = vlaneseq
        %v2743 = vshrl.u32 %v2742, 7
        %v2744 = vsub.s32 %v2499, %v2743
        %v2745 = vrot.slane %v2147, %v2744
        %v2746 = vsel %vm2504, %v2745, %v2741
        %v2747 = vlaneseq
        %v2748 = vshrl.u32 %v2747, 7
        %v2749 = vsub.s32 %v2506, %v2748
        %v2750 = vrot.slane %v2149, %v2749
        %v2751 = vsel %vm2511, %v2750, %v2746
        %v2752 = vlaneseq
        %v2753 = vshrl.u32 %v2752, 7
        %v2754 = vsub.s32 %v2513, %v2753
        %v2755 = vrot.slane %v2151, %v2754
        %v2756 = vsel %vm2518, %v2755, %v2751
        %v2757 = vlaneseq
        %v2758 = vshrl.u32 %v2757, 7
        %v2759 = vsub.s32 %v2281, %v2758
        %v2760 = vrot.slane %v2153, %v2759
        %v2761 = vlaneseq
        %v2762 = vshrl.u32 %v2761, 7
        %v2763 = vsub.s32 %v2415, %v2762
        %v2764 = vrot.slane %v2155, %v2763
        %v2765 = vsel %vm2420, %v2764, %v2760
        %v2766 = vlaneseq
        %v2767 = vshrl.u32 %v2766, 7
        %v2768 = vsub.s32 %v2422, %v2767
        %v2769 = vrot.slane %v2157, %v2768
        %v2770 = vsel %vm2427, %v2769, %v2765
        %v2771 = vlaneseq
        %v2772 = vshrl.u32 %v2771, 7
        %v2773 = vsub.s32 %v2429, %v2772
        %v2774 = vrot.slane %v2159, %v2773
        %v2775 = vsel %vm2434, %v2774, %v2770
        %v2776 = vlaneseq
        %v2777 = vshrl.u32 %v2776, 7
        %v2778 = vsub.s32 %v2436, %v2777
        %v2779 = vrot.slane %v2161, %v2778
        %v2780 = vsel %vm2441, %v2779, %v2775
        %v2781 = vlaneseq
        %v2782 = vshrl.u32 %v2781, 7
        %v2783 = vsub.s32 %v2443, %v2782
        %v2784 = vrot.slane %v2163, %v2783
        %v2785 = vsel %vm2448, %v2784, %v2780
        %v2786 = vlaneseq
        %v2787 = vshrl.u32 %v2786, 7
        %v2788 = vsub.s32 %v2450, %v2787
        %v2789 = vrot.slane %v2165, %v2788
        %v2790 = vsel %vm2455, %v2789, %v2785
        %v2791 = vlaneseq
        %v2792 = vshrl.u32 %v2791, 7
        %v2793 = vsub.s32 %v2457, %v2792
        %v2794 = vrot.slane %v2167, %v2793
        %v2795 = vsel %vm2462, %v2794, %v2790
        %v2796 = vlaneseq
        %v2797 = vshrl.u32 %v2796, 7
        %v2798 = vsub.s32 %v2464, %v2797
        %v2799 = vrot.slane %v2169, %v2798
        %v2800 = vsel %vm2469, %v2799, %v2795
        %v2801 = vlaneseq
        %v2802 = vshrl.u32 %v2801, 7
        %v2803 = vsub.s32 %v2471, %v2802
        %v2804 = vrot.slane %v2171, %v2803
        %v2805 = vsel %vm2476, %v2804, %v2800
        %v2806 = vlaneseq
        %v2807 = vshrl.u32 %v2806, 7
        %v2808 = vsub.s32 %v2478, %v2807
        %v2809 = vrot.slane %v2173, %v2808
        %v2810 = vsel %vm2483, %v2809, %v2805
        %v2811 = vlaneseq
        %v2812 = vshrl.u32 %v2811, 7
        %v2813 = vsub.s32 %v2485, %v2812
        %v2814 = vrot.slane %v2175, %v2813
        %v2815 = vsel %vm2490, %v2814, %v2810
        %v2816 = vlaneseq
        %v2817 = vshrl.u32 %v2816, 7
        %v2818 = vsub.s32 %v2492, %v2817
        %v2819 = vrot.slane %v2177, %v2818
        %v2820 = vsel %vm2497, %v2819, %v2815
        %v2821 = vlaneseq
        %v2822 = vshrl.u32 %v2821, 7
        %v2823 = vsub.s32 %v2499, %v2822
        %v2824 = vrot.slane %v2179, %v2823
        %v2825 = vsel %vm2504, %v2824, %v2820
        %v2826 = vlaneseq
        %v2827 = vshrl.u32 %v2826, 7
        %v2828 = vsub.s32 %v2506, %v2827
        %v2829 = vrot.slane %v2181, %v2828
        %v2830 = vsel %vm2511, %v2829, %v2825
        %v2831 = vlaneseq
        %v2832 = vshrl.u32 %v2831, 7
        %v2833 = vsub.s32 %v2513, %v2832
        %v2834 = vrot.slane %v2183, %v2833
        %v2835 = vsel %vm2518, %v2834, %v2830
        %v2836 = vlaneseq
        %v2837 = vshrl.u32 %v2836, 7
        %v2838 = vsub.s32 %v2281, %v2837
        %v2839 = vrot.slane %v2185, %v2838
        %v2840 = vlaneseq
        %v2841 = vshrl.u32 %v2840, 7
        %v2842 = vsub.s32 %v2415, %v2841
        %v2843 = vrot.slane %v2187, %v2842
        %v2844 = vsel %vm2420, %v2843, %v2839
        %v2845 = vlaneseq
        %v2846 = vshrl.u32 %v2845, 7
        %v2847 = vsub.s32 %v2422, %v2846
        %v2848 = vrot.slane %v2189, %v2847
        %v2849 = vsel %vm2427, %v2848, %v2844
        %v2850 = vlaneseq
        %v2851 = vshrl.u32 %v2850, 7
        %v2852 = vsub.s32 %v2429, %v2851
        %v2853 = vrot.slane %v2191, %v2852
        %v2854 = vsel %vm2434, %v2853, %v2849
        %v2855 = vlaneseq
        %v2856 = vshrl.u32 %v2855, 7
        %v2857 = vsub.s32 %v2436, %v2856
        %v2858 = vrot.slane %v2193, %v2857
        %v2859 = vsel %vm2441, %v2858, %v2854
        %v2860 = vlaneseq
        %v2861 = vshrl.u32 %v2860, 7
        %v2862 = vsub.s32 %v2443, %v2861
        %v2863 = vrot.slane %v2195, %v2862
        %v2864 = vsel %vm2448, %v2863, %v2859
        %v2865 = vlaneseq
        %v2866 = vshrl.u32 %v2865, 7
        %v2867 = vsub.s32 %v2450, %v2866
        %v2868 = vrot.slane %v2197, %v2867
        %v2869 = vsel %vm2455, %v2868, %v2864
        %v2870 = vlaneseq
        %v2871 = vshrl.u32 %v2870, 7
        %v2872 = vsub.s32 %v2457, %v2871
        %v2873 = vrot.slane %v2199, %v2872
        %v2874 = vsel %vm2462, %v2873, %v2869
        %v2875 = vlaneseq
        %v2876 = vshrl.u32 %v2875, 7
        %v2877 = vsub.s32 %v2464, %v2876
        %v2878 = vrot.slane %v2201, %v2877
        %v2879 = vsel %vm2469, %v2878, %v2874
        %v2880 = vlaneseq
        %v2881 = vshrl.u32 %v2880, 7
        %v2882 = vsub.s32 %v2471, %v2881
        %v2883 = vrot.slane %v2203, %v2882
        %v2884 = vsel %vm2476, %v2883, %v2879
        %v2885 = vlaneseq
        %v2886 = vshrl.u32 %v2885, 7
        %v2887 = vsub.s32 %v2478, %v2886
        %v2888 = vrot.slane %v2205, %v2887
        %v2889 = vsel %vm2483, %v2888, %v2884
        %v2890 = vlaneseq
        %v2891 = vshrl.u32 %v2890, 7
        %v2892 = vsub.s32 %v2485, %v2891
        %v2893 = vrot.slane %v2207, %v2892
        %v2894 = vsel %vm2490, %v2893, %v2889
        %v2895 = vlaneseq
        %v2896 = vshrl.u32 %v2895, 7
        %v2897 = vsub.s32 %v2492, %v2896
        %v2898 = vrot.slane %v2209, %v2897
        %v2899 = vsel %vm2497, %v2898, %v2894
        %v2900 = vlaneseq
        %v2901 = vshrl.u32 %v2900, 7
        %v2902 = vsub.s32 %v2499, %v2901
        %v2903 = vrot.slane %v2211, %v2902
        %v2904 = vsel %vm2504, %v2903, %v2899
        %v2905 = vlaneseq
        %v2906 = vshrl.u32 %v2905, 7
        %v2907 = vsub.s32 %v2506, %v2906
        %v2908 = vrot.slane %v2213, %v2907
        %v2909 = vsel %vm2511, %v2908, %v2904
        %v2910 = vlaneseq
        %v2911 = vshrl.u32 %v2910, 7
        %v2912 = vsub.s32 %v2513, %v2911
        %v2913 = vrot.slane %v2215, %v2912
        %v2914 = vsel %vm2518, %v2913, %v2909
        %v2915 = vlaneseq
        %v2916 = vshrl.u32 %v2915, 7
        %v2917 = vsub.s32 %v2281, %v2916
        %v2918 = vrot.slane %v2217, %v2917
        %v2919 = vlaneseq
        %v2920 = vshrl.u32 %v2919, 7
        %v2921 = vsub.s32 %v2415, %v2920
        %v2922 = vrot.slane %v2219, %v2921
        %v2923 = vsel %vm2420, %v2922, %v2918
        %v2924 = vlaneseq
        %v2925 = vshrl.u32 %v2924, 7
        %v2926 = vsub.s32 %v2422, %v2925
        %v2927 = vrot.slane %v2221, %v2926
        %v2928 = vsel %vm2427, %v2927, %v2923
        %v2929 = vlaneseq
        %v2930 = vshrl.u32 %v2929, 7
        %v2931 = vsub.s32 %v2429, %v2930
        %v2932 = vrot.slane %v2223, %v2931
        %v2933 = vsel %vm2434, %v2932, %v2928
        %v2934 = vlaneseq
        %v2935 = vshrl.u32 %v2934, 7
        %v2936 = vsub.s32 %v2436, %v2935
        %v2937 = vrot.slane %v2225, %v2936
        %v2938 = vsel %vm2441, %v2937, %v2933
        %v2939 = vlaneseq
        %v2940 = vshrl.u32 %v2939, 7
        %v2941 = vsub.s32 %v2443, %v2940
        %v2942 = vrot.slane %v2227, %v2941
        %v2943 = vsel %vm2448, %v2942, %v2938
        %v2944 = vlaneseq
        %v2945 = vshrl.u32 %v2944, 7
        %v2946 = vsub.s32 %v2450, %v2945
        %v2947 = vrot.slane %v2229, %v2946
        %v2948 = vsel %vm2455, %v2947, %v2943
        %v2949 = vlaneseq
        %v2950 = vshrl.u32 %v2949, 7
        %v2951 = vsub.s32 %v2457, %v2950
        %v2952 = vrot.slane %v2231, %v2951
        %v2953 = vsel %vm2462, %v2952, %v2948
        %v2954 = vlaneseq
        %v2955 = vshrl.u32 %v2954, 7
        %v2956 = vsub.s32 %v2464, %v2955
        %v2957 = vrot.slane %v2233, %v2956
        %v2958 = vsel %vm2469, %v2957, %v2953
        %v2959 = vlaneseq
        %v2960 = vshrl.u32 %v2959, 7
        %v2961 = vsub.s32 %v2471, %v2960
        %v2962 = vrot.slane %v2235, %v2961
        %v2963 = vsel %vm2476, %v2962, %v2958
        %v2964 = vlaneseq
        %v2965 = vshrl.u32 %v2964, 7
        %v2966 = vsub.s32 %v2478, %v2965
        %v2967 = vrot.slane %v2237, %v2966
        %v2968 = vsel %vm2483, %v2967, %v2963
        %v2969 = vlaneseq
        %v2970 = vshrl.u32 %v2969, 7
        %v2971 = vsub.s32 %v2485, %v2970
        %v2972 = vrot.slane %v2239, %v2971
        %v2973 = vsel %vm2490, %v2972, %v2968
        %v2974 = vlaneseq
        %v2975 = vshrl.u32 %v2974, 7
        %v2976 = vsub.s32 %v2492, %v2975
        %v2977 = vrot.slane %v2241, %v2976
        %v2978 = vsel %vm2497, %v2977, %v2973
        %v2979 = vlaneseq
        %v2980 = vshrl.u32 %v2979, 7
        %v2981 = vsub.s32 %v2499, %v2980
        %v2982 = vrot.slane %v2243, %v2981
        %v2983 = vsel %vm2504, %v2982, %v2978
        %v2984 = vlaneseq
        %v2985 = vshrl.u32 %v2984, 7
        %v2986 = vsub.s32 %v2506, %v2985
        %v2987 = vrot.slane %v2245, %v2986
        %v2988 = vsel %vm2511, %v2987, %v2983
        %v2989 = vlaneseq
        %v2990 = vshrl.u32 %v2989, 7
        %v2991 = vsub.s32 %v2513, %v2990
        %v2992 = vrot.slane %v2247, %v2991
        %v2993 = vsel %vm2518, %v2992, %v2988
        %v2994 = vlaneseq
        %v2995 = vshrl.u32 %v2994, 7
        %v2996 = vsub.s32 %v2281, %v2995
        %v2997 = vrot.slane %v2249, %v2996
        %v2998 = vlaneseq
        %v2999 = vshrl.u32 %v2998, 7
        %v3000 = vsub.s32 %v2415, %v2999
        %v3001 = vrot.slane %v2251, %v3000
        %v3002 = vsel %vm2420, %v3001, %v2997
        %v3003 = vlaneseq
        %v3004 = vshrl.u32 %v3003, 7
        %v3005 = vsub.s32 %v2422, %v3004
        %v3006 = vrot.slane %v2253, %v3005
        %v3007 = vsel %vm2427, %v3006, %v3002
        %v3008 = vlaneseq
        %v3009 = vshrl.u32 %v3008, 7
        %v3010 = vsub.s32 %v2429, %v3009
        %v3011 = vrot.slane %v2255, %v3010
        %v3012 = vsel %vm2434, %v3011, %v3007
        %v3013 = vlaneseq
        %v3014 = vshrl.u32 %v3013, 7
        %v3015 = vsub.s32 %v2436, %v3014
        %v3016 = vrot.slane %v2257, %v3015
        %v3017 = vsel %vm2441, %v3016, %v3012
        %v3018 = vlaneseq
        %v3019 = vshrl.u32 %v3018, 7
        %v3020 = vsub.s32 %v2443, %v3019
        %v3021 = vrot.slane %v2259, %v3020
        %v3022 = vsel %vm2448, %v3021, %v3017
        %v3023 = vlaneseq
        %v3024 = vshrl.u32 %v3023, 7
        %v3025 = vsub.s32 %v2450, %v3024
        %v3026 = vrot.slane %v2261, %v3025
        %v3027 = vsel %vm2455, %v3026, %v3022
        %v3028 = vlaneseq
        %v3029 = vshrl.u32 %v3028, 7
        %v3030 = vsub.s32 %v2457, %v3029
        %v3031 = vrot.slane %v2263, %v3030
        %v3032 = vsel %vm2462, %v3031, %v3027
        %v3033 = vlaneseq
        %v3034 = vshrl.u32 %v3033, 7
        %v3035 = vsub.s32 %v2464, %v3034
        %v3036 = vrot.slane %v2265, %v3035
        %v3037 = vsel %vm2469, %v3036, %v3032
        %v3038 = vlaneseq
        %v3039 = vshrl.u32 %v3038, 7
        %v3040 = vsub.s32 %v2471, %v3039
        %v3041 = vrot.slane %v2267, %v3040
        %v3042 = vsel %vm2476, %v3041, %v3037
        %v3043 = vlaneseq
        %v3044 = vshrl.u32 %v3043, 7
        %v3045 = vsub.s32 %v2478, %v3044
        %v3046 = vrot.slane %v2269, %v3045
        %v3047 = vsel %vm2483, %v3046, %v3042
        %v3048 = vlaneseq
        %v3049 = vshrl.u32 %v3048, 7
        %v3050 = vsub.s32 %v2485, %v3049
        %v3051 = vrot.slane %v2271, %v3050
        %v3052 = vsel %vm2490, %v3051, %v3047
        %v3053 = vlaneseq
        %v3054 = vshrl.u32 %v3053, 7
        %v3055 = vsub.s32 %v2492, %v3054
        %v3056 = vrot.slane %v2273, %v3055
        %v3057 = vsel %vm2497, %v3056, %v3052
        %v3058 = vlaneseq
        %v3059 = vshrl.u32 %v3058, 7
        %v3060 = vsub.s32 %v2499, %v3059
        %v3061 = vrot.slane %v2275, %v3060
        %v3062 = vsel %vm2504, %v3061, %v3057
        %v3063 = vlaneseq
        %v3064 = vshrl.u32 %v3063, 7
        %v3065 = vsub.s32 %v2506, %v3064
        %v3066 = vrot.slane %v2277, %v3065
        %v3067 = vsel %vm2511, %v3066, %v3062
        %v3068 = vlaneseq
        %v3069 = vshrl.u32 %v3068, 7
        %v3070 = vsub.s32 %v2513, %v3069
        %v3071 = vrot.slane %v2279, %v3070
        %v3072 = vsel %vm2518, %v3071, %v3067
        %vm3073 = vcmask 1041409
        %v3074 = vsel %vm3073, %v2598, %v2519
        %vm3075 = vcmask 1042434
        %v3076 = vsel %vm3075, %v2677, %v3074
        %vm3077 = vcmask 1043459
        %v3078 = vsel %vm3077, %v2756, %v3076
        %vm3079 = vcmask 1044484
        %v3080 = vsel %vm3079, %v2835, %v3078
        %vm3081 = vcmask 1045509
        %v3082 = vsel %vm3081, %v2914, %v3080
        %vm3083 = vcmask 1046534
        %v3084 = vsel %vm3083, %v2993, %v3082
        %vm3085 = vcmask 1047559
        %v3086 = vsel %vm3085, %v3072, %v3084
        %v3088 = vsel %vm2282, %v3086, -3.4028235e+38
        %3089 = vmax.xlane.f32.xlu0 %v3088
        %v3090 = vpop.xlane.xlu0 %3089
        %v3091 = vsub.f32 %v3088, %v3090
        %v3092 = vmul.f32 %v3091, 1.442695
        %v3093 = vpow.pop %v3092
        %3094 = vadd.xlane.f32.xlu0 %v3093
        %v3095 = vpop.xlane.xlu0 %3094
        %v3096 = vrcp.pop %v3095
        %v3097 = vmul.f32 %v3093, %v3096
        %v3098 = vlaneseq
        %v3099 = vshrl.u32 %v3098, 7
        %v3100 = vsub.s32 0, %v3099
        %v3101 = vrot.slane %v3097, %v3100
        %3103 = vbcast.lane.b32.xlu0 %v3101, 256
        %v3104 = vpop.permute.xlu0 %3103
        %s3106 = sor.u32 256, 8
        %3107 = vbcast.lane.b32.xlu0 %v3101, %s3106
        %v3108 = vpop.permute.xlu0 %3107
        %s3110 = sor.u32 256, 16
        %3111 = vbcast.lane.b32.xlu0 %v3101, %s3110
        %v3112 = vpop.permute.xlu0 %3111
        %s3114 = sor.u32 256, 24
        %3115 = vbcast.lane.b32.xlu0 %v3101, %s3114
        %v3116 = vpop.permute.xlu0 %3115
        %s3118 = sor.u32 256, 32
        %3119 = vbcast.lane.b32.xlu0 %v3101, %s3118
        %v3120 = vpop.permute.xlu0 %3119
        %s3122 = sor.u32 256, 40
        %3123 = vbcast.lane.b32.xlu0 %v3101, %s3122
        %v3124 = vpop.permute.xlu0 %3123
        %s3126 = sor.u32 256, 48
        %3127 = vbcast.lane.b32.xlu0 %v3101, %s3126
        %v3128 = vpop.permute.xlu0 %3127
        %s3130 = sor.u32 256, 56
        %3131 = vbcast.lane.b32.xlu0 %v3101, %s3130
        %v3132 = vpop.permute.xlu0 %3131
        %s3134 = sor.u32 256, 64
        %3135 = vbcast.lane.b32.xlu0 %v3101, %s3134
        %v3136 = vpop.permute.xlu0 %3135
        %s3138 = sor.u32 256, 72
        %3139 = vbcast.lane.b32.xlu0 %v3101, %s3138
        %v3140 = vpop.permute.xlu0 %3139
        %s3142 = sor.u32 256, 80
        %3143 = vbcast.lane.b32.xlu0 %v3101, %s3142
        %v3144 = vpop.permute.xlu0 %3143
        %s3146 = sor.u32 256, 88
        %3147 = vbcast.lane.b32.xlu0 %v3101, %s3146
        %v3148 = vpop.permute.xlu0 %3147
        %s3150 = sor.u32 256, 96
        %3151 = vbcast.lane.b32.xlu0 %v3101, %s3150
        %v3152 = vpop.permute.xlu0 %3151
        %s3154 = sor.u32 256, 104
        %3155 = vbcast.lane.b32.xlu0 %v3101, %s3154
        %v3156 = vpop.permute.xlu0 %3155
        %s3158 = sor.u32 256, 112
        %3159 = vbcast.lane.b32.xlu0 %v3101, %s3158
        %v3160 = vpop.permute.xlu0 %3159
        %s3162 = sor.u32 256, 120
        %3163 = vbcast.lane.b32.xlu0 %v3101, %s3162
        %v3164 = vpop.permute.xlu0 %3163
        %v3165 = vlaneseq
        %v3166 = vshrl.u32 %v3165, 7
        %v3167 = vsub.s32 1, %v3166
        %v3168 = vrot.slane %v3097, %v3167
        %3170 = vbcast.lane.b32.xlu0 %v3168, 256
        %v3171 = vpop.permute.xlu0 %3170
        %s3173 = sor.u32 256, 8
        %3174 = vbcast.lane.b32.xlu0 %v3168, %s3173
        %v3175 = vpop.permute.xlu0 %3174
        %s3177 = sor.u32 256, 16
        %3178 = vbcast.lane.b32.xlu0 %v3168, %s3177
        %v3179 = vpop.permute.xlu0 %3178
        %s3181 = sor.u32 256, 24
        %3182 = vbcast.lane.b32.xlu0 %v3168, %s3181
        %v3183 = vpop.permute.xlu0 %3182
        %s3185 = sor.u32 256, 32
        %3186 = vbcast.lane.b32.xlu0 %v3168, %s3185
        %v3187 = vpop.permute.xlu0 %3186
        %s3189 = sor.u32 256, 40
        %3190 = vbcast.lane.b32.xlu0 %v3168, %s3189
        %v3191 = vpop.permute.xlu0 %3190
        %s3193 = sor.u32 256, 48
        %3194 = vbcast.lane.b32.xlu0 %v3168, %s3193
        %v3195 = vpop.permute.xlu0 %3194
        %s3197 = sor.u32 256, 56
        %3198 = vbcast.lane.b32.xlu0 %v3168, %s3197
        %v3199 = vpop.permute.xlu0 %3198
        %s3201 = sor.u32 256, 64
        %3202 = vbcast.lane.b32.xlu0 %v3168, %s3201
        %v3203 = vpop.permute.xlu0 %3202
        %s3205 = sor.u32 256, 72
        %3206 = vbcast.lane.b32.xlu0 %v3168, %s3205
        %v3207 = vpop.permute.xlu0 %3206
        %s3209 = sor.u32 256, 80
        %3210 = vbcast.lane.b32.xlu0 %v3168, %s3209
        %v3211 = vpop.permute.xlu0 %3210
        %s3213 = sor.u32 256, 88
        %3214 = vbcast.lane.b32.xlu0 %v3168, %s3213
        %v3215 = vpop.permute.xlu0 %3214
        %s3217 = sor.u32 256, 96
        %3218 = vbcast.lane.b32.xlu0 %v3168, %s3217
        %v3219 = vpop.permute.xlu0 %3218
        %s3221 = sor.u32 256, 104
        %3222 = vbcast.lane.b32.xlu0 %v3168, %s3221
        %v3223 = vpop.permute.xlu0 %3222
        %s3225 = sor.u32 256, 112
        %3226 = vbcast.lane.b32.xlu0 %v3168, %s3225
        %v3227 = vpop.permute.xlu0 %3226
        %s3229 = sor.u32 256, 120
        %3230 = vbcast.lane.b32.xlu0 %v3168, %s3229
        %v3231 = vpop.permute.xlu0 %3230
        %v3232 = vlaneseq
        %v3233 = vshrl.u32 %v3232, 7
        %v3234 = vsub.s32 2, %v3233
        %v3235 = vrot.slane %v3097, %v3234
        %3237 = vbcast.lane.b32.xlu0 %v3235, 256
        %v3238 = vpop.permute.xlu0 %3237
        %s3240 = sor.u32 256, 8
        %3241 = vbcast.lane.b32.xlu0 %v3235, %s3240
        %v3242 = vpop.permute.xlu0 %3241
        %s3244 = sor.u32 256, 16
        %3245 = vbcast.lane.b32.xlu0 %v3235, %s3244
        %v3246 = vpop.permute.xlu0 %3245
        %s3248 = sor.u32 256, 24
        %3249 = vbcast.lane.b32.xlu0 %v3235, %s3248
        %v3250 = vpop.permute.xlu0 %3249
        %s3252 = sor.u32 256, 32
        %3253 = vbcast.lane.b32.xlu0 %v3235, %s3252
        %v3254 = vpop.permute.xlu0 %3253
        %s3256 = sor.u32 256, 40
        %3257 = vbcast.lane.b32.xlu0 %v3235, %s3256
        %v3258 = vpop.permute.xlu0 %3257
        %s3260 = sor.u32 256, 48
        %3261 = vbcast.lane.b32.xlu0 %v3235, %s3260
        %v3262 = vpop.permute.xlu0 %3261
        %s3264 = sor.u32 256, 56
        %3265 = vbcast.lane.b32.xlu0 %v3235, %s3264
        %v3266 = vpop.permute.xlu0 %3265
        %s3268 = sor.u32 256, 64
        %3269 = vbcast.lane.b32.xlu0 %v3235, %s3268
        %v3270 = vpop.permute.xlu0 %3269
        %s3272 = sor.u32 256, 72
        %3273 = vbcast.lane.b32.xlu0 %v3235, %s3272
        %v3274 = vpop.permute.xlu0 %3273
        %s3276 = sor.u32 256, 80
        %3277 = vbcast.lane.b32.xlu0 %v3235, %s3276
        %v3278 = vpop.permute.xlu0 %3277
        %s3280 = sor.u32 256, 88
        %3281 = vbcast.lane.b32.xlu0 %v3235, %s3280
        %v3282 = vpop.permute.xlu0 %3281
        %s3284 = sor.u32 256, 96
        %3285 = vbcast.lane.b32.xlu0 %v3235, %s3284
        %v3286 = vpop.permute.xlu0 %3285
        %s3288 = sor.u32 256, 104
        %3289 = vbcast.lane.b32.xlu0 %v3235, %s3288
        %v3290 = vpop.permute.xlu0 %3289
        %s3292 = sor.u32 256, 112
        %3293 = vbcast.lane.b32.xlu0 %v3235, %s3292
        %v3294 = vpop.permute.xlu0 %3293
        %s3296 = sor.u32 256, 120
        %3297 = vbcast.lane.b32.xlu0 %v3235, %s3296
        %v3298 = vpop.permute.xlu0 %3297
        %v3299 = vlaneseq
        %v3300 = vshrl.u32 %v3299, 7
        %v3301 = vsub.s32 3, %v3300
        %v3302 = vrot.slane %v3097, %v3301
        %3304 = vbcast.lane.b32.xlu0 %v3302, 256
        %v3305 = vpop.permute.xlu0 %3304
        %s3307 = sor.u32 256, 8
        %3308 = vbcast.lane.b32.xlu0 %v3302, %s3307
        %v3309 = vpop.permute.xlu0 %3308
        %s3311 = sor.u32 256, 16
        %3312 = vbcast.lane.b32.xlu0 %v3302, %s3311
        %v3313 = vpop.permute.xlu0 %3312
        %s3315 = sor.u32 256, 24
        %3316 = vbcast.lane.b32.xlu0 %v3302, %s3315
        %v3317 = vpop.permute.xlu0 %3316
        %s3319 = sor.u32 256, 32
        %3320 = vbcast.lane.b32.xlu0 %v3302, %s3319
        %v3321 = vpop.permute.xlu0 %3320
        %s3323 = sor.u32 256, 40
        %3324 = vbcast.lane.b32.xlu0 %v3302, %s3323
        %v3325 = vpop.permute.xlu0 %3324
        %s3327 = sor.u32 256, 48
        %3328 = vbcast.lane.b32.xlu0 %v3302, %s3327
        %v3329 = vpop.permute.xlu0 %3328
        %s3331 = sor.u32 256, 56
        %3332 = vbcast.lane.b32.xlu0 %v3302, %s3331
        %v3333 = vpop.permute.xlu0 %3332
        %s3335 = sor.u32 256, 64
        %3336 = vbcast.lane.b32.xlu0 %v3302, %s3335
        %v3337 = vpop.permute.xlu0 %3336
        %s3339 = sor.u32 256, 72
        %3340 = vbcast.lane.b32.xlu0 %v3302, %s3339
        %v3341 = vpop.permute.xlu0 %3340
        %s3343 = sor.u32 256, 80
        %3344 = vbcast.lane.b32.xlu0 %v3302, %s3343
        %v3345 = vpop.permute.xlu0 %3344
        %s3347 = sor.u32 256, 88
        %3348 = vbcast.lane.b32.xlu0 %v3302, %s3347
        %v3349 = vpop.permute.xlu0 %3348
        %s3351 = sor.u32 256, 96
        %3352 = vbcast.lane.b32.xlu0 %v3302, %s3351
        %v3353 = vpop.permute.xlu0 %3352
        %s3355 = sor.u32 256, 104
        %3356 = vbcast.lane.b32.xlu0 %v3302, %s3355
        %v3357 = vpop.permute.xlu0 %3356
        %s3359 = sor.u32 256, 112
        %3360 = vbcast.lane.b32.xlu0 %v3302, %s3359
        %v3361 = vpop.permute.xlu0 %3360
        %s3363 = sor.u32 256, 120
        %3364 = vbcast.lane.b32.xlu0 %v3302, %s3363
        %v3365 = vpop.permute.xlu0 %3364
        %v3366 = vlaneseq
        %v3367 = vshrl.u32 %v3366, 7
        %v3368 = vsub.s32 4, %v3367
        %v3369 = vrot.slane %v3097, %v3368
        %3371 = vbcast.lane.b32.xlu0 %v3369, 256
        %v3372 = vpop.permute.xlu0 %3371
        %s3374 = sor.u32 256, 8
        %3375 = vbcast.lane.b32.xlu0 %v3369, %s3374
        %v3376 = vpop.permute.xlu0 %3375
        %s3378 = sor.u32 256, 16
        %3379 = vbcast.lane.b32.xlu0 %v3369, %s3378
        %v3380 = vpop.permute.xlu0 %3379
        %s3382 = sor.u32 256, 24
        %3383 = vbcast.lane.b32.xlu0 %v3369, %s3382
        %v3384 = vpop.permute.xlu0 %3383
        %s3386 = sor.u32 256, 32
        %3387 = vbcast.lane.b32.xlu0 %v3369, %s3386
        %v3388 = vpop.permute.xlu0 %3387
        %s3390 = sor.u32 256, 40
        %3391 = vbcast.lane.b32.xlu0 %v3369, %s3390
        %v3392 = vpop.permute.xlu0 %3391
        %s3394 = sor.u32 256, 48
        %3395 = vbcast.lane.b32.xlu0 %v3369, %s3394
        %v3396 = vpop.permute.xlu0 %3395
        %s3398 = sor.u32 256, 56
        %3399 = vbcast.lane.b32.xlu0 %v3369, %s3398
        %v3400 = vpop.permute.xlu0 %3399
        %s3402 = sor.u32 256, 64
        %3403 = vbcast.lane.b32.xlu0 %v3369, %s3402
        %v3404 = vpop.permute.xlu0 %3403
        %s3406 = sor.u32 256, 72
        %3407 = vbcast.lane.b32.xlu0 %v3369, %s3406
        %v3408 = vpop.permute.xlu0 %3407
        %s3410 = sor.u32 256, 80
        %3411 = vbcast.lane.b32.xlu0 %v3369, %s3410
        %v3412 = vpop.permute.xlu0 %3411
        %s3414 = sor.u32 256, 88
        %3415 = vbcast.lane.b32.xlu0 %v3369, %s3414
        %v3416 = vpop.permute.xlu0 %3415
        %s3418 = sor.u32 256, 96
        %3419 = vbcast.lane.b32.xlu0 %v3369, %s3418
        %v3420 = vpop.permute.xlu0 %3419
        %s3422 = sor.u32 256, 104
        %3423 = vbcast.lane.b32.xlu0 %v3369, %s3422
        %v3424 = vpop.permute.xlu0 %3423
        %s3426 = sor.u32 256, 112
        %3427 = vbcast.lane.b32.xlu0 %v3369, %s3426
        %v3428 = vpop.permute.xlu0 %3427
        %s3430 = sor.u32 256, 120
        %3431 = vbcast.lane.b32.xlu0 %v3369, %s3430
        %v3432 = vpop.permute.xlu0 %3431
        %v3433 = vlaneseq
        %v3434 = vshrl.u32 %v3433, 7
        %v3435 = vsub.s32 5, %v3434
        %v3436 = vrot.slane %v3097, %v3435
        %3438 = vbcast.lane.b32.xlu0 %v3436, 256
        %v3439 = vpop.permute.xlu0 %3438
        %s3441 = sor.u32 256, 8
        %3442 = vbcast.lane.b32.xlu0 %v3436, %s3441
        %v3443 = vpop.permute.xlu0 %3442
        %s3445 = sor.u32 256, 16
        %3446 = vbcast.lane.b32.xlu0 %v3436, %s3445
        %v3447 = vpop.permute.xlu0 %3446
        %s3449 = sor.u32 256, 24
        %3450 = vbcast.lane.b32.xlu0 %v3436, %s3449
        %v3451 = vpop.permute.xlu0 %3450
        %s3453 = sor.u32 256, 32
        %3454 = vbcast.lane.b32.xlu0 %v3436, %s3453
        %v3455 = vpop.permute.xlu0 %3454
        %s3457 = sor.u32 256, 40
        %3458 = vbcast.lane.b32.xlu0 %v3436, %s3457
        %v3459 = vpop.permute.xlu0 %3458
        %s3461 = sor.u32 256, 48
        %3462 = vbcast.lane.b32.xlu0 %v3436, %s3461
        %v3463 = vpop.permute.xlu0 %3462
        %s3465 = sor.u32 256, 56
        %3466 = vbcast.lane.b32.xlu0 %v3436, %s3465
        %v3467 = vpop.permute.xlu0 %3466
        %s3469 = sor.u32 256, 64
        %3470 = vbcast.lane.b32.xlu0 %v3436, %s3469
        %v3471 = vpop.permute.xlu0 %3470
        %s3473 = sor.u32 256, 72
        %3474 = vbcast.lane.b32.xlu0 %v3436, %s3473
        %v3475 = vpop.permute.xlu0 %3474
        %s3477 = sor.u32 256, 80
        %3478 = vbcast.lane.b32.xlu0 %v3436, %s3477
        %v3479 = vpop.permute.xlu0 %3478
        %s3481 = sor.u32 256, 88
        %3482 = vbcast.lane.b32.xlu0 %v3436, %s3481
        %v3483 = vpop.permute.xlu0 %3482
        %s3485 = sor.u32 256, 96
        %3486 = vbcast.lane.b32.xlu0 %v3436, %s3485
        %v3487 = vpop.permute.xlu0 %3486
        %s3489 = sor.u32 256, 104
        %3490 = vbcast.lane.b32.xlu0 %v3436, %s3489
        %v3491 = vpop.permute.xlu0 %3490
        %s3493 = sor.u32 256, 112
        %3494 = vbcast.lane.b32.xlu0 %v3436, %s3493
        %v3495 = vpop.permute.xlu0 %3494
        %s3497 = sor.u32 256, 120
        %3498 = vbcast.lane.b32.xlu0 %v3436, %s3497
        %v3499 = vpop.permute.xlu0 %3498
        %v3500 = vlaneseq
        %v3501 = vshrl.u32 %v3500, 7
        %v3502 = vsub.s32 6, %v3501
        %v3503 = vrot.slane %v3097, %v3502
        %3505 = vbcast.lane.b32.xlu0 %v3503, 256
        %v3506 = vpop.permute.xlu0 %3505
        %s3508 = sor.u32 256, 8
        %3509 = vbcast.lane.b32.xlu0 %v3503, %s3508
        %v3510 = vpop.permute.xlu0 %3509
        %s3512 = sor.u32 256, 16
        %3513 = vbcast.lane.b32.xlu0 %v3503, %s3512
        %v3514 = vpop.permute.xlu0 %3513
        %s3516 = sor.u32 256, 24
        %3517 = vbcast.lane.b32.xlu0 %v3503, %s3516
        %v3518 = vpop.permute.xlu0 %3517
        %s3520 = sor.u32 256, 32
        %3521 = vbcast.lane.b32.xlu0 %v3503, %s3520
        %v3522 = vpop.permute.xlu0 %3521
        %s3524 = sor.u32 256, 40
        %3525 = vbcast.lane.b32.xlu0 %v3503, %s3524
        %v3526 = vpop.permute.xlu0 %3525
        %s3528 = sor.u32 256, 48
        %3529 = vbcast.lane.b32.xlu0 %v3503, %s3528
        %v3530 = vpop.permute.xlu0 %3529
        %s3532 = sor.u32 256, 56
        %3533 = vbcast.lane.b32.xlu0 %v3503, %s3532
        %v3534 = vpop.permute.xlu0 %3533
        %s3536 = sor.u32 256, 64
        %3537 = vbcast.lane.b32.xlu0 %v3503, %s3536
        %v3538 = vpop.permute.xlu0 %3537
        %s3540 = sor.u32 256, 72
        %3541 = vbcast.lane.b32.xlu0 %v3503, %s3540
        %v3542 = vpop.permute.xlu0 %3541
        %s3544 = sor.u32 256, 80
        %3545 = vbcast.lane.b32.xlu0 %v3503, %s3544
        %v3546 = vpop.permute.xlu0 %3545
        %s3548 = sor.u32 256, 88
        %3549 = vbcast.lane.b32.xlu0 %v3503, %s3548
        %v3550 = vpop.permute.xlu0 %3549
        %s3552 = sor.u32 256, 96
        %3553 = vbcast.lane.b32.xlu0 %v3503, %s3552
        %v3554 = vpop.permute.xlu0 %3553
        %s3556 = sor.u32 256, 104
        %3557 = vbcast.lane.b32.xlu0 %v3503, %s3556
        %v3558 = vpop.permute.xlu0 %3557
        %s3560 = sor.u32 256, 112
        %3561 = vbcast.lane.b32.xlu0 %v3503, %s3560
        %v3562 = vpop.permute.xlu0 %3561
        %s3564 = sor.u32 256, 120
        %3565 = vbcast.lane.b32.xlu0 %v3503, %s3564
        %v3566 = vpop.permute.xlu0 %3565
        %v3567 = vlaneseq
        %v3568 = vshrl.u32 %v3567, 7
        %v3569 = vsub.s32 7, %v3568
        %v3570 = vrot.slane %v3097, %v3569
        %3572 = vbcast.lane.b32.xlu0 %v3570, 256
        %v3573 = vpop.permute.xlu0 %3572
        %s3575 = sor.u32 256, 8
        %3576 = vbcast.lane.b32.xlu0 %v3570, %s3575
        %v3577 = vpop.permute.xlu0 %3576
        %s3579 = sor.u32 256, 16
        %3580 = vbcast.lane.b32.xlu0 %v3570, %s3579
        %v3581 = vpop.permute.xlu0 %3580
        %s3583 = sor.u32 256, 24
        %3584 = vbcast.lane.b32.xlu0 %v3570, %s3583
        %v3585 = vpop.permute.xlu0 %3584
        %s3587 = sor.u32 256, 32
        %3588 = vbcast.lane.b32.xlu0 %v3570, %s3587
        %v3589 = vpop.permute.xlu0 %3588
        %s3591 = sor.u32 256, 40
        %3592 = vbcast.lane.b32.xlu0 %v3570, %s3591
        %v3593 = vpop.permute.xlu0 %3592
        %s3595 = sor.u32 256, 48
        %3596 = vbcast.lane.b32.xlu0 %v3570, %s3595
        %v3597 = vpop.permute.xlu0 %3596
        %s3599 = sor.u32 256, 56
        %3600 = vbcast.lane.b32.xlu0 %v3570, %s3599
        %v3601 = vpop.permute.xlu0 %3600
        %s3603 = sor.u32 256, 64
        %3604 = vbcast.lane.b32.xlu0 %v3570, %s3603
        %v3605 = vpop.permute.xlu0 %3604
        %s3607 = sor.u32 256, 72
        %3608 = vbcast.lane.b32.xlu0 %v3570, %s3607
        %v3609 = vpop.permute.xlu0 %3608
        %s3611 = sor.u32 256, 80
        %3612 = vbcast.lane.b32.xlu0 %v3570, %s3611
        %v3613 = vpop.permute.xlu0 %3612
        %s3615 = sor.u32 256, 88
        %3616 = vbcast.lane.b32.xlu0 %v3570, %s3615
        %v3617 = vpop.permute.xlu0 %3616
        %s3619 = sor.u32 256, 96
        %3620 = vbcast.lane.b32.xlu0 %v3570, %s3619
        %v3621 = vpop.permute.xlu0 %3620
        %s3623 = sor.u32 256, 104
        %3624 = vbcast.lane.b32.xlu0 %v3570, %s3623
        %v3625 = vpop.permute.xlu0 %3624
        %s3627 = sor.u32 256, 112
        %3628 = vbcast.lane.b32.xlu0 %v3570, %s3627
        %v3629 = vpop.permute.xlu0 %3628
        %s3631 = sor.u32 256, 120
        %3632 = vbcast.lane.b32.xlu0 %v3570, %s3631
        %v3633 = vpop.permute.xlu0 %3632
        %v3634 = vunpack.c.l.bf16 %v362
        %v3635 = vunpack.c.l.bf16 %v363
        %v3636 = vunpack.c.l.bf16 %v364
        %v3637 = vunpack.c.l.bf16 %v365
        %v3638 = vunpack.c.l.bf16 %v366
        %v3639 = vunpack.c.l.bf16 %v367
        %v3640 = vunpack.c.l.bf16 %v368
        %v3641 = vunpack.c.l.bf16 %v369
        %v3642 = vunpack.c.l.bf16 %v370
        %v3643 = vunpack.c.l.bf16 %v371
        %v3644 = vunpack.c.l.bf16 %v372
        %v3645 = vunpack.c.l.bf16 %v373
        %v3646 = vunpack.c.l.bf16 %v374
        %v3647 = vunpack.c.l.bf16 %v375
        %v3648 = vunpack.c.l.bf16 %v376
        %v3649 = vunpack.c.l.bf16 %v377
        %v3650 = vunpack.c.l.bf16 %v378
        %v3651 = vunpack.c.l.bf16 %v379
        %v3652 = vunpack.c.l.bf16 %v380
        %v3653 = vunpack.c.l.bf16 %v381
        %v3654 = vunpack.c.l.bf16 %v382
        %v3655 = vunpack.c.l.bf16 %v383
        %v3656 = vunpack.c.l.bf16 %v384
        %v3657 = vunpack.c.l.bf16 %v385
        %v3658 = vunpack.c.l.bf16 %v386
        %v3659 = vunpack.c.l.bf16 %v387
        %v3660 = vunpack.c.l.bf16 %v388
        %v3661 = vunpack.c.l.bf16 %v389
        %v3662 = vunpack.c.l.bf16 %v390
        %v3663 = vunpack.c.l.bf16 %v391
        %v3664 = vunpack.c.l.bf16 %v392
        %v3665 = vunpack.c.l.bf16 %v393
        %v3666 = vunpack.c.l.bf16 %v394
        %v3667 = vunpack.c.l.bf16 %v395
        %v3668 = vunpack.c.l.bf16 %v396
        %v3669 = vunpack.c.l.bf16 %v397
        %v3670 = vunpack.c.l.bf16 %v398
        %v3671 = vunpack.c.l.bf16 %v399
        %v3672 = vunpack.c.l.bf16 %v400
        %v3673 = vunpack.c.l.bf16 %v401
        %v3674 = vunpack.c.l.bf16 %v402
        %v3675 = vunpack.c.l.bf16 %v403
        %v3676 = vunpack.c.l.bf16 %v404
        %v3677 = vunpack.c.l.bf16 %v405
        %v3678 = vunpack.c.l.bf16 %v406
        %v3679 = vunpack.c.l.bf16 %v407
        %v3680 = vunpack.c.l.bf16 %v408
        %v3681 = vunpack.c.l.bf16 %v409
        %v3682 = vunpack.c.l.bf16 %v410
        %v3683 = vunpack.c.l.bf16 %v411
        %v3684 = vunpack.c.l.bf16 %v412
        %v3685 = vunpack.c.l.bf16 %v413
        %v3686 = vunpack.c.l.bf16 %v414
        %v3687 = vunpack.c.l.bf16 %v415
        %v3688 = vunpack.c.l.bf16 %v416
        %v3689 = vunpack.c.l.bf16 %v417
        %v3690 = vunpack.c.l.bf16 %v418
        %v3691 = vunpack.c.l.bf16 %v419
        %v3692 = vunpack.c.l.bf16 %v420
        %v3693 = vunpack.c.l.bf16 %v421
        %v3694 = vunpack.c.l.bf16 %v422
        %v3695 = vunpack.c.l.bf16 %v423
        %v3696 = vunpack.c.l.bf16 %v424
        %v3697 = vunpack.c.l.bf16 %v425
        %v3698 = vunpack.c.l.bf16 %v426
        %v3699 = vunpack.c.l.bf16 %v427
        %v3700 = vunpack.c.l.bf16 %v428
        %v3701 = vunpack.c.l.bf16 %v429
        %v3702 = vunpack.c.l.bf16 %v430
        %v3703 = vunpack.c.l.bf16 %v431
        %v3704 = vunpack.c.l.bf16 %v432
        %v3705 = vunpack.c.l.bf16 %v433
        %v3706 = vunpack.c.l.bf16 %v434
        %v3707 = vunpack.c.l.bf16 %v435
        %v3708 = vunpack.c.l.bf16 %v436
        %v3709 = vunpack.c.l.bf16 %v437
        %v3710 = vunpack.c.l.bf16 %v438
        %v3711 = vunpack.c.l.bf16 %v439
        %v3712 = vunpack.c.l.bf16 %v440
        %v3713 = vunpack.c.l.bf16 %v441
        %v3714 = vunpack.c.l.bf16 %v442
        %v3715 = vunpack.c.l.bf16 %v443
        %v3716 = vunpack.c.l.bf16 %v444
        %v3717 = vunpack.c.l.bf16 %v445
        %v3718 = vunpack.c.l.bf16 %v446
        %v3719 = vunpack.c.l.bf16 %v447
        %v3720 = vunpack.c.l.bf16 %v448
        %v3721 = vunpack.c.l.bf16 %v449
        %v3722 = vunpack.c.l.bf16 %v450
        %v3723 = vunpack.c.l.bf16 %v451
        %v3724 = vunpack.c.l.bf16 %v452
        %v3725 = vunpack.c.l.bf16 %v453
        %v3726 = vunpack.c.l.bf16 %v454
        %v3727 = vunpack.c.l.bf16 %v455
        %v3728 = vunpack.c.l.bf16 %v456
        %v3729 = vunpack.c.l.bf16 %v457
        %v3730 = vunpack.c.l.bf16 %v458
        %v3731 = vunpack.c.l.bf16 %v459
        %v3732 = vunpack.c.l.bf16 %v460
        %v3733 = vunpack.c.l.bf16 %v461
        %v3734 = vunpack.c.l.bf16 %v462
        %v3735 = vunpack.c.l.bf16 %v463
        %v3736 = vunpack.c.l.bf16 %v464
        %v3737 = vunpack.c.l.bf16 %v465
        %v3738 = vunpack.c.l.bf16 %v466
        %v3739 = vunpack.c.l.bf16 %v467
        %v3740 = vunpack.c.l.bf16 %v468
        %v3741 = vunpack.c.l.bf16 %v469
        %v3742 = vunpack.c.l.bf16 %v470
        %v3743 = vunpack.c.l.bf16 %v471
        %v3744 = vunpack.c.l.bf16 %v472
        %v3745 = vunpack.c.l.bf16 %v473
        %v3746 = vunpack.c.l.bf16 %v474
        %v3747 = vunpack.c.l.bf16 %v475
        %v3748 = vunpack.c.l.bf16 %v476
        %v3749 = vunpack.c.l.bf16 %v477
        %v3750 = vunpack.c.l.bf16 %v478
        %v3751 = vunpack.c.l.bf16 %v479
        %v3752 = vunpack.c.l.bf16 %v480
        %v3753 = vunpack.c.l.bf16 %v481
        %v3754 = vunpack.c.l.bf16 %v482
        %v3755 = vunpack.c.l.bf16 %v483
        %v3756 = vunpack.c.l.bf16 %v484
        %v3757 = vunpack.c.l.bf16 %v485
        %v3758 = vunpack.c.l.bf16 %v486
        %v3759 = vunpack.c.l.bf16 %v487
        %v3760 = vunpack.c.l.bf16 %v488
        %v3761 = vunpack.c.l.bf16 %v489
        %v3762 = vmul.f32 %v3104, %v3634
        %v3763 = vmul.f32 %v3108, %v3635
        %v3764 = vmul.f32 %v3112, %v3636
        %v3765 = vmul.f32 %v3116, %v3637
        %v3766 = vmul.f32 %v3120, %v3638
        %v3767 = vmul.f32 %v3124, %v3639
        %v3768 = vmul.f32 %v3128, %v3640
        %v3769 = vmul.f32 %v3132, %v3641
        %v3770 = vmul.f32 %v3136, %v3642
        %v3771 = vmul.f32 %v3140, %v3643
        %v3772 = vmul.f32 %v3144, %v3644
        %v3773 = vmul.f32 %v3148, %v3645
        %v3774 = vmul.f32 %v3152, %v3646
        %v3775 = vmul.f32 %v3156, %v3647
        %v3776 = vmul.f32 %v3160, %v3648
        %v3777 = vmul.f32 %v3164, %v3649
        %v3778 = vmul.f32 %v3171, %v3650
        %v3779 = vmul.f32 %v3175, %v3651
        %v3780 = vmul.f32 %v3179, %v3652
        %v3781 = vmul.f32 %v3183, %v3653
        %v3782 = vmul.f32 %v3187, %v3654
        %v3783 = vmul.f32 %v3191, %v3655
        %v3784 = vmul.f32 %v3195, %v3656
        %v3785 = vmul.f32 %v3199, %v3657
        %v3786 = vmul.f32 %v3203, %v3658
        %v3787 = vmul.f32 %v3207, %v3659
        %v3788 = vmul.f32 %v3211, %v3660
        %v3789 = vmul.f32 %v3215, %v3661
        %v3790 = vmul.f32 %v3219, %v3662
        %v3791 = vmul.f32 %v3223, %v3663
        %v3792 = vmul.f32 %v3227, %v3664
        %v3793 = vmul.f32 %v3231, %v3665
        %v3794 = vmul.f32 %v3238, %v3666
        %v3795 = vmul.f32 %v3242, %v3667
        %v3796 = vmul.f32 %v3246, %v3668
        %v3797 = vmul.f32 %v3250, %v3669
        %v3798 = vmul.f32 %v3254, %v3670
        %v3799 = vmul.f32 %v3258, %v3671
        %v3800 = vmul.f32 %v3262, %v3672
        %v3801 = vmul.f32 %v3266, %v3673
        %v3802 = vmul.f32 %v3270, %v3674
        %v3803 = vmul.f32 %v3274, %v3675
        %v3804 = vmul.f32 %v3278, %v3676
        %v3805 = vmul.f32 %v3282, %v3677
        %v3806 = vmul.f32 %v3286, %v3678
        %v3807 = vmul.f32 %v3290, %v3679
        %v3808 = vmul.f32 %v3294, %v3680
        %v3809 = vmul.f32 %v3298, %v3681
        %v3810 = vmul.f32 %v3305, %v3682
        %v3811 = vmul.f32 %v3309, %v3683
        %v3812 = vmul.f32 %v3313, %v3684
        %v3813 = vmul.f32 %v3317, %v3685
        %v3814 = vmul.f32 %v3321, %v3686
        %v3815 = vmul.f32 %v3325, %v3687
        %v3816 = vmul.f32 %v3329, %v3688
        %v3817 = vmul.f32 %v3333, %v3689
        %v3818 = vmul.f32 %v3337, %v3690
        %v3819 = vmul.f32 %v3341, %v3691
        %v3820 = vmul.f32 %v3345, %v3692
        %v3821 = vmul.f32 %v3349, %v3693
        %v3822 = vmul.f32 %v3353, %v3694
        %v3823 = vmul.f32 %v3357, %v3695
        %v3824 = vmul.f32 %v3361, %v3696
        %v3825 = vmul.f32 %v3365, %v3697
        %v3826 = vmul.f32 %v3372, %v3698
        %v3827 = vmul.f32 %v3376, %v3699
        %v3828 = vmul.f32 %v3380, %v3700
        %v3829 = vmul.f32 %v3384, %v3701
        %v3830 = vmul.f32 %v3388, %v3702
        %v3831 = vmul.f32 %v3392, %v3703
        %v3832 = vmul.f32 %v3396, %v3704
        %v3833 = vmul.f32 %v3400, %v3705
        %v3834 = vmul.f32 %v3404, %v3706
        %v3835 = vmul.f32 %v3408, %v3707
        %v3836 = vmul.f32 %v3412, %v3708
        %v3837 = vmul.f32 %v3416, %v3709
        %v3838 = vmul.f32 %v3420, %v3710
        %v3839 = vmul.f32 %v3424, %v3711
        %v3840 = vmul.f32 %v3428, %v3712
        %v3841 = vmul.f32 %v3432, %v3713
        %v3842 = vmul.f32 %v3439, %v3714
        %v3843 = vmul.f32 %v3443, %v3715
        %v3844 = vmul.f32 %v3447, %v3716
        %v3845 = vmul.f32 %v3451, %v3717
        %v3846 = vmul.f32 %v3455, %v3718
        %v3847 = vmul.f32 %v3459, %v3719
        %v3848 = vmul.f32 %v3463, %v3720
        %v3849 = vmul.f32 %v3467, %v3721
        %v3850 = vmul.f32 %v3471, %v3722
        %v3851 = vmul.f32 %v3475, %v3723
        %v3852 = vmul.f32 %v3479, %v3724
        %v3853 = vmul.f32 %v3483, %v3725
        %v3854 = vmul.f32 %v3487, %v3726
        %v3855 = vmul.f32 %v3491, %v3727
        %v3856 = vmul.f32 %v3495, %v3728
        %v3857 = vmul.f32 %v3499, %v3729
        %v3858 = vmul.f32 %v3506, %v3730
        %v3859 = vmul.f32 %v3510, %v3731
        %v3860 = vmul.f32 %v3514, %v3732
        %v3861 = vmul.f32 %v3518, %v3733
        %v3862 = vmul.f32 %v3522, %v3734
        %v3863 = vmul.f32 %v3526, %v3735
        %v3864 = vmul.f32 %v3530, %v3736
        %v3865 = vmul.f32 %v3534, %v3737
        %v3866 = vmul.f32 %v3538, %v3738
        %v3867 = vmul.f32 %v3542, %v3739
        %v3868 = vmul.f32 %v3546, %v3740
        %v3869 = vmul.f32 %v3550, %v3741
        %v3870 = vmul.f32 %v3554, %v3742
        %v3871 = vmul.f32 %v3558, %v3743
        %v3872 = vmul.f32 %v3562, %v3744
        %v3873 = vmul.f32 %v3566, %v3745
        %v3874 = vmul.f32 %v3573, %v3746
        %v3875 = vmul.f32 %v3577, %v3747
        %v3876 = vmul.f32 %v3581, %v3748
        %v3877 = vmul.f32 %v3585, %v3749
        %v3878 = vmul.f32 %v3589, %v3750
        %v3879 = vmul.f32 %v3593, %v3751
        %v3880 = vmul.f32 %v3597, %v3752
        %v3881 = vmul.f32 %v3601, %v3753
        %v3882 = vmul.f32 %v3605, %v3754
        %v3883 = vmul.f32 %v3609, %v3755
        %v3884 = vmul.f32 %v3613, %v3756
        %v3885 = vmul.f32 %v3617, %v3757
        %v3886 = vmul.f32 %v3621, %v3758
        %v3887 = vmul.f32 %v3625, %v3759
        %v3888 = vmul.f32 %v3629, %v3760
        %v3889 = vmul.f32 %v3633, %v3761
        %v3890 = vadd.f32 %v3762, %v3763
        %v3891 = vadd.f32 %v3890, %v3764
        %v3892 = vadd.f32 %v3891, %v3765
        %v3893 = vadd.f32 %v3892, %v3766
        %v3894 = vadd.f32 %v3893, %v3767
        %v3895 = vadd.f32 %v3894, %v3768
        %v3896 = vadd.f32 %v3895, %v3769
        %v3897 = vadd.f32 %v3896, %v3770
        %v3898 = vadd.f32 %v3897, %v3771
        %v3899 = vadd.f32 %v3898, %v3772
        %v3900 = vadd.f32 %v3899, %v3773
        %v3901 = vadd.f32 %v3900, %v3774
        %v3902 = vadd.f32 %v3901, %v3775
        %v3903 = vadd.f32 %v3902, %v3776
        %v3904 = vadd.f32 %v3903, %v3777
        %v3905 = vrot.slane %v3904, 4
        %v3906 = vadd.f32 %v3904, %v3905
        %v3907 = vrot.slane %v3906, 2
        %v3908 = vadd.f32 %v3906, %v3907
        %v3909 = vrot.slane %v3908, 1
        %v3910 = vadd.f32 %v3908, %v3909
        %v3911 = vadd.f32 %v3778, %v3779
        %v3912 = vadd.f32 %v3911, %v3780
        %v3913 = vadd.f32 %v3912, %v3781
        %v3914 = vadd.f32 %v3913, %v3782
        %v3915 = vadd.f32 %v3914, %v3783
        %v3916 = vadd.f32 %v3915, %v3784
        %v3917 = vadd.f32 %v3916, %v3785
        %v3918 = vadd.f32 %v3917, %v3786
        %v3919 = vadd.f32 %v3918, %v3787
        %v3920 = vadd.f32 %v3919, %v3788
        %v3921 = vadd.f32 %v3920, %v3789
        %v3922 = vadd.f32 %v3921, %v3790
        %v3923 = vadd.f32 %v3922, %v3791
        %v3924 = vadd.f32 %v3923, %v3792
        %v3925 = vadd.f32 %v3924, %v3793
        %v3926 = vrot.slane %v3925, 4
        %v3927 = vadd.f32 %v3925, %v3926
        %v3928 = vrot.slane %v3927, 2
        %v3929 = vadd.f32 %v3927, %v3928
        %v3930 = vrot.slane %v3929, 1
        %v3931 = vadd.f32 %v3929, %v3930
        %v3932 = vadd.f32 %v3794, %v3795
        %v3933 = vadd.f32 %v3932, %v3796
        %v3934 = vadd.f32 %v3933, %v3797
        %v3935 = vadd.f32 %v3934, %v3798
        %v3936 = vadd.f32 %v3935, %v3799
        %v3937 = vadd.f32 %v3936, %v3800
        %v3938 = vadd.f32 %v3937, %v3801
        %v3939 = vadd.f32 %v3938, %v3802
        %v3940 = vadd.f32 %v3939, %v3803
        %v3941 = vadd.f32 %v3940, %v3804
        %v3942 = vadd.f32 %v3941, %v3805
        %v3943 = vadd.f32 %v3942, %v3806
        %v3944 = vadd.f32 %v3943, %v3807
        %v3945 = vadd.f32 %v3944, %v3808
        %v3946 = vadd.f32 %v3945, %v3809
        %v3947 = vrot.slane %v3946, 4
        %v3948 = vadd.f32 %v3946, %v3947
        %v3949 = vrot.slane %v3948, 2
        %v3950 = vadd.f32 %v3948, %v3949
        %v3951 = vrot.slane %v3950, 1
        %v3952 = vadd.f32 %v3950, %v3951
        %v3953 = vadd.f32 %v3810, %v3811
        %v3954 = vadd.f32 %v3953, %v3812
        %v3955 = vadd.f32 %v3954, %v3813
        %v3956 = vadd.f32 %v3955, %v3814
        %v3957 = vadd.f32 %v3956, %v3815
        %v3958 = vadd.f32 %v3957, %v3816
        %v3959 = vadd.f32 %v3958, %v3817
        %v3960 = vadd.f32 %v3959, %v3818
        %v3961 = vadd.f32 %v3960, %v3819
        %v3962 = vadd.f32 %v3961, %v3820
        %v3963 = vadd.f32 %v3962, %v3821
        %v3964 = vadd.f32 %v3963, %v3822
        %v3965 = vadd.f32 %v3964, %v3823
        %v3966 = vadd.f32 %v3965, %v3824
        %v3967 = vadd.f32 %v3966, %v3825
        %v3968 = vrot.slane %v3967, 4
        %v3969 = vadd.f32 %v3967, %v3968
        %v3970 = vrot.slane %v3969, 2
        %v3971 = vadd.f32 %v3969, %v3970
        %v3972 = vrot.slane %v3971, 1
        %v3973 = vadd.f32 %v3971, %v3972
        %v3974 = vadd.f32 %v3826, %v3827
        %v3975 = vadd.f32 %v3974, %v3828
        %v3976 = vadd.f32 %v3975, %v3829
        %v3977 = vadd.f32 %v3976, %v3830
        %v3978 = vadd.f32 %v3977, %v3831
        %v3979 = vadd.f32 %v3978, %v3832
        %v3980 = vadd.f32 %v3979, %v3833
        %v3981 = vadd.f32 %v3980, %v3834
        %v3982 = vadd.f32 %v3981, %v3835
        %v3983 = vadd.f32 %v3982, %v3836
        %v3984 = vadd.f32 %v3983, %v3837
        %v3985 = vadd.f32 %v3984, %v3838
        %v3986 = vadd.f32 %v3985, %v3839
        %v3987 = vadd.f32 %v3986, %v3840
        %v3988 = vadd.f32 %v3987, %v3841
        %v3989 = vrot.slane %v3988, 4
        %v3990 = vadd.f32 %v3988, %v3989
        %v3991 = vrot.slane %v3990, 2
        %v3992 = vadd.f32 %v3990, %v3991
        %v3993 = vrot.slane %v3992, 1
        %v3994 = vadd.f32 %v3992, %v3993
        %v3995 = vadd.f32 %v3842, %v3843
        %v3996 = vadd.f32 %v3995, %v3844
        %v3997 = vadd.f32 %v3996, %v3845
        %v3998 = vadd.f32 %v3997, %v3846
        %v3999 = vadd.f32 %v3998, %v3847
        %v4000 = vadd.f32 %v3999, %v3848
        %v4001 = vadd.f32 %v4000, %v3849
        %v4002 = vadd.f32 %v4001, %v3850
        %v4003 = vadd.f32 %v4002, %v3851
        %v4004 = vadd.f32 %v4003, %v3852
        %v4005 = vadd.f32 %v4004, %v3853
        %v4006 = vadd.f32 %v4005, %v3854
        %v4007 = vadd.f32 %v4006, %v3855
        %v4008 = vadd.f32 %v4007, %v3856
        %v4009 = vadd.f32 %v4008, %v3857
        %v4010 = vrot.slane %v4009, 4
        %v4011 = vadd.f32 %v4009, %v4010
        %v4012 = vrot.slane %v4011, 2
        %v4013 = vadd.f32 %v4011, %v4012
        %v4014 = vrot.slane %v4013, 1
        %v4015 = vadd.f32 %v4013, %v4014
        %v4016 = vadd.f32 %v3858, %v3859
        %v4017 = vadd.f32 %v4016, %v3860
        %v4018 = vadd.f32 %v4017, %v3861
        %v4019 = vadd.f32 %v4018, %v3862
        %v4020 = vadd.f32 %v4019, %v3863
        %v4021 = vadd.f32 %v4020, %v3864
        %v4022 = vadd.f32 %v4021, %v3865
        %v4023 = vadd.f32 %v4022, %v3866
        %v4024 = vadd.f32 %v4023, %v3867
        %v4025 = vadd.f32 %v4024, %v3868
        %v4026 = vadd.f32 %v4025, %v3869
        %v4027 = vadd.f32 %v4026, %v3870
        %v4028 = vadd.f32 %v4027, %v3871
        %v4029 = vadd.f32 %v4028, %v3872
        %v4030 = vadd.f32 %v4029, %v3873
        %v4031 = vrot.slane %v4030, 4
        %v4032 = vadd.f32 %v4030, %v4031
        %v4033 = vrot.slane %v4032, 2
        %v4034 = vadd.f32 %v4032, %v4033
        %v4035 = vrot.slane %v4034, 1
        %v4036 = vadd.f32 %v4034, %v4035
        %v4037 = vadd.f32 %v3874, %v3875
        %v4038 = vadd.f32 %v4037, %v3876
        %v4039 = vadd.f32 %v4038, %v3877
        %v4040 = vadd.f32 %v4039, %v3878
        %v4041 = vadd.f32 %v4040, %v3879
        %v4042 = vadd.f32 %v4041, %v3880
        %v4043 = vadd.f32 %v4042, %v3881
        %v4044 = vadd.f32 %v4043, %v3882
        %v4045 = vadd.f32 %v4044, %v3883
        %v4046 = vadd.f32 %v4045, %v3884
        %v4047 = vadd.f32 %v4046, %v3885
        %v4048 = vadd.f32 %v4047, %v3886
        %v4049 = vadd.f32 %v4048, %v3887
        %v4050 = vadd.f32 %v4049, %v3888
        %v4051 = vadd.f32 %v4050, %v3889
        %v4052 = vrot.slane %v4051, 4
        %v4053 = vadd.f32 %v4051, %v4052
        %v4054 = vrot.slane %v4053, 2
        %v4055 = vadd.f32 %v4053, %v4054
        %v4056 = vrot.slane %v4055, 1
        %v4057 = vadd.f32 %v4055, %v4056
        %4058 = vst [vmem:[%s352] sm:$0xff] %v3097
        %v4067 = vsel %vm3073, %v3931, %v3910
        %v4068 = vsel %vm3075, %v3952, %v4067
        %v4069 = vsel %vm3077, %v3973, %v4068
        %v4070 = vsel %vm3079, %v3994, %v4069
        %v4071 = vsel %vm3081, %v4015, %v4070
        %v4072 = vsel %vm3083, %v4036, %v4071
        %v4073 = vsel %vm3085, %v4057, %v4072
        %4075 = vst [vmem:[%s359] sm:$0xff] %v4073
        %s4076 = sand.u32 %s175, 1
        %s4077 = scalar_lea.sflag [#allocation4], %s4076
        %s4078 = sand.u32 %s175, 1
        %s4079 = smul.addr %s4078, 8
        %s4080 = scalar_lea.vmem [#allocation8], %s4079
        %s4081 = sand.u32 %s201, 1
        %s4082 = scalar_lea.sflag [#allocation10], %s4081
        %s4083 = sand.u32 %s201, 1
        %s4084 = smul.addr %s4083, 8
        %s4085 = scalar_lea.vmem [#allocation9], %s4084
        // Predicated region
        $region57: #{tpu_custom_call.1} parent=43 // pred_check
          %p4086 = pneg %p185
        $region58: #{tpu_custom_call.1} parent=43 // pred_check_branch
          %4088 = sbr.rel (%p4086) target = $region60
        $region59: #{tpu_custom_call.1} parent=43 // pred_region
          %s4090 = ssub.s32 128, 128
          %4091 = vsyncadd %s4077, %s4090
          %s4092 = smul.addr %s31, 128
          %s4093 = scalar_lea.hbm %s6, %s4092
          %s4095 = sshll.u32 %s4080, 4
          %s4096 = int_to_ptr.vmem [resolvable:$true] %s4095
          %4098 = dma.vmem_to_hbm [thread:$0]  %s4096, 128, %s4093, %s4077
        $region60: #{tpu_custom_call.1} parent=43 // pred_fallthru
          _
        // Predicated region
        $region61: #{tpu_custom_call.1} parent=43 // pred_check
          %p4099 = pneg %p211
        $region62: #{tpu_custom_call.1} parent=43 // pred_check_branch
          %4101 = sbr.rel (%p4099) target = $region64
        $region63: #{tpu_custom_call.1} parent=43 // pred_region
          %s4103 = ssub.s32 128, 128
          %4104 = vsyncadd %s4082, %s4103
          %s4105 = smul.addr %s31, 128
          %s4106 = scalar_lea.hbm %s7, %s4105
          %s4108 = sshll.u32 %s4085, 4
          %s4109 = int_to_ptr.vmem [resolvable:$true] %s4108
          %4111 = dma.vmem_to_hbm [thread:$0]  %s4109, 128, %s4106, %s4082
        $region64: #{tpu_custom_call.1} parent=43 // pred_fallthru
          _
      $region44: #{tpu_custom_call.1} parent=5 // pred_fallthru
        _
      %p4112 = scmp.le.s32.totalorder 2, %s26
      // Predicated region
      $region65: #{tpu_custom_call.1} parent=5 // pred_check
        %p4113 = pneg %p4112
      $region66: #{tpu_custom_call.1} parent=5 // pred_check_branch
        %4115 = sbr.rel (%p4113) target = $region68
      $region67: #{tpu_custom_call.1} parent=5 // pred_region
        %s4116 = ssub.s32 %s26, 2
        // Predicated region
        $region69: #{tpu_custom_call.1} parent=67 // pred_check
          %p4117 = pneg %p191
        $region70: #{tpu_custom_call.1} parent=67 // pred_check_branch
          %4119 = sbr.rel (%p4117) target = $region72
        $region71: #{tpu_custom_call.1} parent=67 // pred_region
          %s4120 = sand.u32 %s176, 1
          %s4121 = scalar_lea.sflag [#allocation4], %s4120
          %s4122 = sand.u32 %s176, 1
          %s4123 = smul.addr %s4122, 8
          %s4124 = scalar_lea.vmem [#allocation8], %s4123
          %4125 = dma.done %s4121, 128
        $region72: #{tpu_custom_call.1} parent=67 // pred_fallthru
          _
        // Predicated region
        $region73: #{tpu_custom_call.1} parent=67 // pred_check
          %p4126 = pneg %p217
        $region74: #{tpu_custom_call.1} parent=67 // pred_check_branch
          %4128 = sbr.rel (%p4126) target = $region76
        $region75: #{tpu_custom_call.1} parent=67 // pred_region
          %s4129 = sand.u32 %s202, 1
          %s4130 = scalar_lea.sflag [#allocation10], %s4129
          %s4131 = sand.u32 %s202, 1
          %s4132 = smul.addr %s4131, 8
          %s4133 = scalar_lea.vmem [#allocation9], %s4132
          %4134 = dma.done %s4130, 128
        $region76: #{tpu_custom_call.1} parent=67 // pred_fallthru
          _
      $region68: #{tpu_custom_call.1} parent=5 // pred_fallthru
        _
    $region6: #{tpu_custom_call.1} parent=1 // loop_footer
      %s30 = sadd.s32 1, %s26
    $region7: #{tpu_custom_call.1} parent=1 // loop_footer_branch
      %25 = sbr.rel target = $region3
    $region8: #{tpu_custom_call.1} parent=1 // loop_exit
      _
    %4135 = vsyncpa [#allocation3], 1
    %s4136 = scalar_lea.sflag [#allocation3], 1
    %4137 = vsyncpa %s4136, 1
    %4138 = vsyncpa [#allocation6], 1
    %s4139 = scalar_lea.sflag [#allocation6], 1
    %4140 = vsyncpa %s4139, 1
    %4141 = vsyncpa [#allocation4], 1
    %s4142 = scalar_lea.sflag [#allocation4], 1
    %4143 = vsyncpa %s4142, 1
    %4144 = vsyncpa [#allocation10], 1
    %s4145 = scalar_lea.sflag [#allocation10], 1
    %4146 = vsyncpa %s4145, 1

// kernel: tpu_custom_call.1
$region0: #{tpu_custom_call.1}
  #allocation0 [shape = 'u32[]', space=smem, size = 0x4, offset = 0x4, fixed_abs, tag = 'smem constant byte address 0x4 - core index']
  #allocation1 [shape = 'u32[144,128]{1,0:T(1,128)}', space=vmem, size = 0x12000, scoped, tag = 'internal scratch']
  %s0 = inlined_call_operand.hbm [shape: bf16[16,128,128], index: 0, kind: input, shape index: {}]
  %s1 = inlined_call_operand.hbm [shape: bf16[16,16], index: 1, kind: input, shape index: {}]
  %s2 = inlined_call_operand.hbm [shape: bf16[128,128], index: 2, kind: input, shape index: {}]
  %s3 = inlined_call_operand.vmem [shape: bf16[16,128], index: 3, kind: input, shape index: {}]
  %s4 = inlined_call_operand.vmem [shape: f32[1,128], index: 4, kind: input, shape index: {}]
  %s5 = inlined_call_operand.vmem [shape: f32[1,128], index: 5, kind: input, shape index: {}]
  %s6 = inlined_call_operand.hbm [shape: f32[16,128], index: 6, kind: output, shape index: {0}]
  %s7 = inlined_call_operand.hbm [shape: f32[16,128], index: 7, kind: output, shape index: {1}]
  %8 = xla_tuple %s6, %s7
  %s9 = sld [smem:[#allocation0]]
  $region77: #{tpu_custom_call.1} parent=0
    _
  %s11 = ssub.s32 1, %s9
  %s12 = scalar_select 0, %s11, %s9
  $region1: #{tpu_custom_call.1} parent=0
    #allocation2 [shape = 'u8[524288]{0}', space=vmem, size = 0x80000, scoped, tag = 'input window, operand 0']
    #allocation3 [shape = 's32[2]{0}', space=sflag, size = 0x8, scoped, tag = 'scoped memory for tpu_custom_call.1']
    #allocation4 [shape = 's32[2]{0}', space=sflag, size = 0x8, scoped, tag = 'scoped memory for tpu_custom_call.1']
    #allocation5 [shape = 'u8[4096]{0}', space=vmem, size = 0x1000, scoped, tag = 'input window, operand 1']
    #allocation6 [shape = 's32[2]{0}', space=sflag, size = 0x8, scoped, tag = 'scoped memory for tpu_custom_call.1']
    #allocation7 [shape = 'u8[32768]{0}', space=vmem, size = 0x8000, scoped, tag = 'input window, operand 2, single buffered']
    #allocation8 [shape = 'u8[8192]{0}', space=vmem, size = 0x2000, scoped, tag = 'output window, operand 0']
    #allocation9 [shape = 'u8[8192]{0}', space=vmem, size = 0x2000, scoped, tag = 'output window, operand 1']
    #allocation10 [shape = 's32[2]{0}', space=sflag, size = 0x8, scoped, tag = 'scoped memory for tpu_custom_call.1']
    %13 = vsyncpa [#allocation3], 0
    %s14 = scalar_lea.sflag [#allocation3], 1
    %15 = vsyncpa %s14, 0
    %16 = vsyncpa [#allocation6], 0
    %s17 = scalar_lea.sflag [#allocation6], 1
    %18 = vsyncpa %s17, 0
    %19 = vsyncpa [#allocation4], 0
    %s20 = scalar_lea.sflag [#allocation4], 1
    %21 = vsyncpa %s20, 0
    %22 = vsyncpa [#allocation10], 0
    %s23 = scalar_lea.sflag [#allocation10], 1
    %24 = vsyncpa %s23, 0
    loop: start=0, step=1, limit=4
    $region2: #{tpu_custom_call.1} parent=1 // loop_pre_header
      _
    $region3: #{tpu_custom_call.1} parent=1 // loop_header
      %s26 = sphi 0, %s30
      %p27 = scmp.ge.s32.totalorder %s26, 4
      %s36 = sphi 0, %s38
      %s39 = sphi 0, %s36
      %s40 = sphi 0, %s39
      %s56 = sphi 0, %s40
      %s62 = sphi 0, %s64
      %s65 = sphi 0, %s62
      %s66 = sphi 0, %s65
      %s82 = sphi 0, %s66
      %s86 = sphi 0, %s86
      %s88 = sphi 0, %s86
      %s89 = sphi 0, %s88
      %s103 = sphi 0, %s89
      %s107 = sphi 0, %s107
      %s109 = sphi 0, %s107
      %s110 = sphi 0, %s109
      %s124 = sphi 0, %s110
      %s128 = sphi 0, %s128
      %s130 = sphi 0, %s128
      %s131 = sphi 0, %s130
      %s145 = sphi 0, %s131
      %s149 = sphi 0, %s149
      %s151 = sphi 0, %s149
      %s152 = sphi 0, %s151
      %s166 = sphi 0, %s152
      %s172 = sphi 0, %s174
      %s175 = sphi 0, %s172
      %s176 = sphi 0, %s175
      %s192 = sphi 0, %s176
      %s198 = sphi 0, %s200
      %s201 = sphi 0, %s198
      %s202 = sphi 0, %s201
      %s218 = sphi 0, %s202
    $region4: #{tpu_custom_call.1} parent=1 // loop_header_branch
      %29 = sbr.rel (%p27) target = $region8
    $region5: #{tpu_custom_call.1} parent=1 // loop_body
      %s31 = ssub.s32 %s26, 1
      %s32 = ssub.s32 %s26, 2
      %s33 = sadd.s32 %s26, 1
      %s34 = ssub.s32 %s26, %s33
      %p35 = scmp.eq.s32.totalorder %s34, 0
      %s37 = sadd.s32 %s36, 1
      %s38 = scalar_select %p35, %s36, %s37
      %p41 = pneg %p35
      %p42 = scmp.eq.s32.totalorder %s26, 1
      %p43 = por %p41, %p42
      %p44 = scmp.ne.s32.totalorder %s36, %s39
      %p45 = scmp.eq.s32.totalorder %s26, 0
      %p46 = por %p44, %p45
      %p47 = scmp.ne.s32.totalorder %s36, %s39
      %p48 = scmp.eq.s32.totalorder %s31, 1
      %p49 = por %p47, %p48
      %p50 = scmp.ne.s32.totalorder %s39, %s40
      %p51 = scmp.eq.s32.totalorder %s31, 0
      %p52 = por %p50, %p51
      %p53 = scmp.ne.s32.totalorder %s39, %s40
      %p54 = scmp.eq.s32.totalorder %s32, 1
      %p55 = por %p53, %p54
      %p57 = scmp.ne.s32.totalorder %s40, %s56
      %p58 = scmp.eq.s32.totalorder %s32, 0
      %p59 = por %p57, %p58
      %s60 = ssub.s32 %s26, %s33
      %p61 = scmp.eq.s32.totalorder %s60, 0
      %s63 = sadd.s32 %s62, 1
      %s64 = scalar_select %p61, %s62, %s63
      %p67 = pneg %p61
      %p68 = scmp.eq.s32.totalorder %s26, 1
      %p69 = por %p67, %p68
      %p70 = scmp.ne.s32.totalorder %s62, %s65
      %p71 = scmp.eq.s32.totalorder %s26, 0
      %p72 = por %p70, %p71
      %p73 = scmp.ne.s32.totalorder %s62, %s65
      %p74 = scmp.eq.s32.totalorder %s31, 1
      %p75 = por %p73, %p74
      %p76 = scmp.ne.s32.totalorder %s65, %s66
      %p77 = scmp.eq.s32.totalorder %s31, 0
      %p78 = por %p76, %p77
      %p79 = scmp.ne.s32.totalorder %s65, %s66
      %p80 = scmp.eq.s32.totalorder %s32, 1
      %p81 = por %p79, %p80
      %p83 = scmp.ne.s32.totalorder %s66, %s82
      %p84 = scmp.eq.s32.totalorder %s32, 0
      %p85 = por %p83, %p84
      %s87 = sadd.s32 %s86, 1
      %p90 = scmp.eq.s32.totalorder %s26, 1
      %p91 = scmp.ne.s32.totalorder %s86, %s88
      %p92 = scmp.eq.s32.totalorder %s26, 0
      %p93 = por %p91, %p92
      %p94 = scmp.ne.s32.totalorder %s86, %s88
      %p95 = scmp.eq.s32.totalorder %s31, 1
      %p96 = por %p94, %p95
      %p97 = scmp.ne.s32.totalorder %s88, %s89
      %p98 = scmp.eq.s32.totalorder %s31, 0
      %p99 = por %p97, %p98
      %p100 = scmp.ne.s32.totalorder %s88, %s89
      %p101 = scmp.eq.s32.totalorder %s32, 1
      %p102 = por %p100, %p101
      %p104 = scmp.ne.s32.totalorder %s89, %s103
      %p105 = scmp.eq.s32.totalorder %s32, 0
      %p106 = por %p104, %p105
      %s108 = sadd.s32 %s107, 1
      %p111 = scmp.eq.s32.totalorder %s26, 1
      %p112 = scmp.ne.s32.totalorder %s107, %s109
      %p113 = scmp.eq.s32.totalorder %s26, 0
      %p114 = por %p112, %p113
      %p115 = scmp.ne.s32.totalorder %s107, %s109
      %p116 = scmp.eq.s32.totalorder %s31, 1
      %p117 = por %p115, %p116
      %p118 = scmp.ne.s32.totalorder %s109, %s110
      %p119 = scmp.eq.s32.totalorder %s31, 0
      %p120 = por %p118, %p119
      %p121 = scmp.ne.s32.totalorder %s109, %s110
      %p122 = scmp.eq.s32.totalorder %s32, 1
      %p123 = por %p121, %p122
      %p125 = scmp.ne.s32.totalorder %s110, %s124
      %p126 = scmp.eq.s32.totalorder %s32, 0
      %p127 = por %p125, %p126
      %s129 = sadd.s32 %s128, 1
      %p132 = scmp.eq.s32.totalorder %s26, 1
      %p133 = scmp.ne.s32.totalorder %s128, %s130
      %p134 = scmp.eq.s32.totalorder %s26, 0
      %p135 = por %p133, %p134
      %p136 = scmp.ne.s32.totalorder %s128, %s130
      %p137 = scmp.eq.s32.totalorder %s31, 1
      %p138 = por %p136, %p137
      %p139 = scmp.ne.s32.totalorder %s130, %s131
      %p140 = scmp.eq.s32.totalorder %s31, 0
      %p141 = por %p139, %p140
      %p142 = scmp.ne.s32.totalorder %s130, %s131
      %p143 = scmp.eq.s32.totalorder %s32, 1
      %p144 = por %p142, %p143
      %p146 = scmp.ne.s32.totalorder %s131, %s145
      %p147 = scmp.eq.s32.totalorder %s32, 0
      %p148 = por %p146, %p147
      %s150 = sadd.s32 %s149, 1
      %p153 = scmp.eq.s32.totalorder %s26, 1
      %p154 = scmp.ne.s32.totalorder %s149, %s151
      %p155 = scmp.eq.s32.totalorder %s26, 0
      %p156 = por %p154, %p155
      %p157 = scmp.ne.s32.totalorder %s149, %s151
      %p158 = scmp.eq.s32.totalorder %s31, 1
      %p159 = por %p157, %p158
      %p160 = scmp.ne.s32.totalorder %s151, %s152
      %p161 = scmp.eq.s32.totalorder %s31, 0
      %p162 = por %p160, %p161
      %p163 = scmp.ne.s32.totalorder %s151, %s152
      %p164 = scmp.eq.s32.totalorder %s32, 1
      %p165 = por %p163, %p164
      %p167 = scmp.ne.s32.totalorder %s152, %s166
      %p168 = scmp.eq.s32.totalorder %s32, 0
      %p169 = por %p167, %p168
      %s170 = ssub.s32 %s26, %s33
      %p171 = scmp.eq.s32.totalorder %s170, 0
      %s173 = sadd.s32 %s172, 1
      %s174 = scalar_select %p171, %s172, %s173
      %p177 = pneg %p171
      %p178 = scmp.eq.s32.totalorder %s26, 1
      %p179 = por %p177, %p178
      %p180 = scmp.ne.s32.totalorder %s172, %s175
      %p181 = scmp.eq.s32.totalorder %s26, 0
      %p182 = por %p180, %p181
      %p183 = scmp.ne.s32.totalorder %s172, %s175
      %p184 = scmp.eq.s32.totalorder %s31, 1
      %p185 = por %p183, %p184
      %p186 = scmp.ne.s32.totalorder %s175, %s176
      %p187 = scmp.eq.s32.totalorder %s31, 0
      %p188 = por %p186, %p187
      %p189 = scmp.ne.s32.totalorder %s175, %s176
      %p190 = scmp.eq.s32.totalorder %s32, 1
      %p191 = por %p189, %p190
      %p193 = scmp.ne.s32.totalorder %s176, %s192
      %p194 = scmp.eq.s32.totalorder %s32, 0
      %p195 = por %p193, %p194
      %s196 = ssub.s32 %s26, %s33
      %p197 = scmp.eq.s32.totalorder %s196, 0
      %s199 = sadd.s32 %s198, 1
      %s200 = scalar_select %p197, %s198, %s199
      %p203 = pneg %p197
      %p204 = scmp.eq.s32.totalorder %s26, 1
      %p205 = por %p203, %p204
      %p206 = scmp.ne.s32.totalorder %s198, %s201
      %p207 = scmp.eq.s32.totalorder %s26, 0
      %p208 = por %p206, %p207
      %p209 = scmp.ne.s32.totalorder %s198, %s201
      %p210 = scmp.eq.s32.totalorder %s31, 1
      %p211 = por %p209, %p210
      %p212 = scmp.ne.s32.totalorder %s201, %s202
      %p213 = scmp.eq.s32.totalorder %s31, 0
      %p214 = por %p212, %p213
      %p215 = scmp.ne.s32.totalorder %s201, %s202
      %p216 = scmp.eq.s32.totalorder %s32, 1
      %p217 = por %p215, %p216
      %p219 = scmp.ne.s32.totalorder %s202, %s218
      %p220 = scmp.eq.s32.totalorder %s32, 0
      %p221 = por %p219, %p220
      %p222 = scmp.le.s32.totalorder 1, %s26
      %p223 = scmp.lt.s32.totalorder %s26, 3
      %p224 = pnand %p222, %p223
      %p225 = pneg %p224
      // Predicated region
      $region9: #{tpu_custom_call.1} parent=5 // pred_check
        _
      $region10: #{tpu_custom_call.1} parent=5 // pred_check_branch
        %227 = sbr.rel (%p224) target = $region12
      $region11: #{tpu_custom_call.1} parent=5 // pred_region
        %s228 = ssub.s32 %s26, 1
        // Predicated region
        $region13: #{tpu_custom_call.1} parent=11 // pred_check
          %p229 = pneg %p99
        $region14: #{tpu_custom_call.1} parent=11 // pred_check_branch
          %231 = sbr.rel (%p229) target = $region16
        $region15: #{tpu_custom_call.1} parent=11 // pred_region
          %s233 = ssub.s32 1024, 1024
          %234 = vsyncadd [#allocation6], %s233
          %s235 = sshll.u32 [#allocation7], 4
          %s236 = int_to_ptr.vmem [resolvable:$true] %s235
          %241 = dma.hbm_to_vmem [thread:$0]  %s2, 1024, %s236, [#allocation6], 64, 64, 4
        $region16: #{tpu_custom_call.1} parent=11 // pred_fallthru
          _
        // Predicated region
        $region17: #{tpu_custom_call.1} parent=11 // pred_check
          %p242 = pneg %p120
        $region18: #{tpu_custom_call.1} parent=11 // pred_check_branch
          %244 = sbr.rel (%p242) target = $region20
        $region19: #{tpu_custom_call.1} parent=11 // pred_region
          _
        $region20: #{tpu_custom_call.1} parent=11 // pred_fallthru
          _
        // Predicated region
        $region21: #{tpu_custom_call.1} parent=11 // pred_check
          %p245 = pneg %p141
        $region22: #{tpu_custom_call.1} parent=11 // pred_check_branch
          %247 = sbr.rel (%p245) target = $region24
        $region23: #{tpu_custom_call.1} parent=11 // pred_region
          _
        $region24: #{tpu_custom_call.1} parent=11 // pred_fallthru
          _
        // Predicated region
        $region25: #{tpu_custom_call.1} parent=11 // pred_check
          %p248 = pneg %p162
        $region26: #{tpu_custom_call.1} parent=11 // pred_check_branch
          %250 = sbr.rel (%p248) target = $region28
        $region27: #{tpu_custom_call.1} parent=11 // pred_region
          _
        $region28: #{tpu_custom_call.1} parent=11 // pred_fallthru
          _
      $region12: #{tpu_custom_call.1} parent=5 // pred_fallthru
        _
      %p251 = scmp.lt.s32.totalorder %s26, 2
      // Predicated region
      $region29: #{tpu_custom_call.1} parent=5 // pred_check
        %p252 = pneg %p251
      $region30: #{tpu_custom_call.1} parent=5 // pred_check_branch
        %254 = sbr.rel (%p252) target = $region32
      $region31: #{tpu_custom_call.1} parent=5 // pred_region
        // Predicated region
        $region33: #{tpu_custom_call.1} parent=31 // pred_check
          %p255 = pneg %p46
        $region34: #{tpu_custom_call.1} parent=31 // pred_check_branch
          %257 = sbr.rel (%p255) target = $region36
        $region35: #{tpu_custom_call.1} parent=31 // pred_region
          %s258 = sand.u32 %s36, 1
          %s259 = scalar_lea.sflag [#allocation3], %s258
          %s260 = sand.u32 %s36, 1
          %s261 = smul.addr %s260, 512
          %s262 = scalar_lea.vmem [#allocation2], %s261
          %s263 = smul.u32 8, %s26
          %s265 = ssub.s32 8192, 8192
          %266 = vsyncadd %s259, %s265
          %s267 = smul.addr %s263, 16
          %s268 = smul.addr %s267, 64
          %s269 = scalar_lea.hbm %s0, %s268
          %s270 = sshll.u32 %s262, 4
          %s271 = int_to_ptr.vmem [resolvable:$true] %s270
          %276 = dma.hbm_to_vmem [thread:$0]  %s269, 8192, %s271, %s259, 64, 64, 4
        $region36: #{tpu_custom_call.1} parent=31 // pred_fallthru
          _
        // Predicated region
        $region37: #{tpu_custom_call.1} parent=31 // pred_check
          %p277 = pneg %p72
        $region38: #{tpu_custom_call.1} parent=31 // pred_check_branch
          %279 = sbr.rel (%p277) target = $region40
        $region39: #{tpu_custom_call.1} parent=31 // pred_region
          %s280 = sand.u32 %s26, 1
          %s281 = scalar_lea.sflag [#allocation6], %s280
          %s282 = sand.u32 %s62, 1
          %s283 = smul.addr %s282, 4
          %s284 = scalar_lea.vmem [#allocation5], %s283
          %s286 = ssub.s32 64, 64
          %287 = vsyncadd %s281, %s286
          %s288 = smul.addr %s26, 64
          %s289 = scalar_lea.hbm %s1, %s288
          %s291 = sshll.u32 %s284, 4
          %s292 = int_to_ptr.vmem [resolvable:$true] %s291
          %294 = dma.hbm_to_vmem [thread:$0]  %s289, 64, %s292, %s281
        $region40: #{tpu_custom_call.1} parent=31 // pred_fallthru
          _
      $region32: #{tpu_custom_call.1} parent=5 // pred_fallthru
        _
      %p295 = scmp.le.s32.totalorder 1, %s26
      %p296 = scmp.lt.s32.totalorder %s26, 3
      %p297 = pnand %p295, %p296
      %p298 = pneg %p297
      // Predicated region
      $region41: #{tpu_custom_call.1} parent=5 // pred_check
        _
      $region42: #{tpu_custom_call.1} parent=5 // pred_check_branch
        %300 = sbr.rel (%p297) target = $region44
      $region43: #{tpu_custom_call.1} parent=5 // pred_region
        %s301 = ssub.s32 %s26, 1
        %s302 = sand.u32 %s39, 1
        %s303 = scalar_lea.sflag [#allocation3], %s302
        %s304 = sand.u32 %s39, 1
        %s305 = smul.addr %s304, 512
        %s306 = scalar_lea.vmem [#allocation2], %s305
        // Predicated region
        $region45: #{tpu_custom_call.1} parent=43 // pred_check
          %p307 = pneg %p52
        $region46: #{tpu_custom_call.1} parent=43 // pred_check_branch
          %309 = sbr.rel (%p307) target = $region48
        $region47: #{tpu_custom_call.1} parent=43 // pred_region
          %310 = dma.done %s303, 8192
        $region48: #{tpu_custom_call.1} parent=43 // pred_fallthru
          _
        %s311 = sand.u32 %s31, 1
        %s312 = scalar_lea.sflag [#allocation6], %s311
        %s313 = sand.u32 %s65, 1
        %s314 = smul.addr %s313, 4
        %s315 = scalar_lea.vmem [#allocation5], %s314
        // Predicated region
        $region49: #{tpu_custom_call.1} parent=43 // pred_check
          %p316 = pneg %p78
        $region50: #{tpu_custom_call.1} parent=43 // pred_check_branch
          %318 = sbr.rel (%p316) target = $region52
        $region51: #{tpu_custom_call.1} parent=43 // pred_region
          %319 = dma.done %s312, 64
        $region52: #{tpu_custom_call.1} parent=43 // pred_fallthru
          _
        // Predicated region
        $region53: #{tpu_custom_call.1} parent=43 // pred_check
          %p320 = pneg %p99
        $region54: #{tpu_custom_call.1} parent=43 // pred_check_branch
          %322 = sbr.rel (%p320) target = $region56
        $region55: #{tpu_custom_call.1} parent=43 // pred_region
          %323 = dma.done [#allocation6], 1024
        $region56: #{tpu_custom_call.1} parent=43 // pred_fallthru
          _
        %s324 = sand.u32 %s39, 1
        %s325 = scalar_lea.sflag [#allocation3], %s324
        %s326 = sand.u32 %s39, 1
        %s327 = smul.addr %s326, 512
        %s328 = scalar_lea.vmem [#allocation2], %s327
        %p329 = pneg %p52
        %p330 = pneg %p49
        %s331 = sand.u32 %s31, 1
        %s332 = scalar_lea.sflag [#allocation6], %s331
        %s333 = sand.u32 %s65, 1
        %s334 = smul.addr %s333, 4
        %s335 = scalar_lea.vmem [#allocation5], %s334
        %p336 = pneg %p78
        %p337 = pneg %p75
        %p338 = pneg %p99
        %p339 = pneg %p96
        %p340 = pneg %p120
        %p341 = pneg %p117
        %p342 = pneg %p141
        %p343 = pneg %p138
        %p344 = pneg %p162
        %p345 = pneg %p159
        %p346 = pneg %p188
        %p347 = pneg %p185
        %s348 = sand.u32 %s175, 1
        %s349 = scalar_lea.sflag [#allocation4], %s348
        %s350 = sand.u32 %s175, 1
        %s351 = smul.addr %s350, 8
        %s352 = scalar_lea.vmem [#allocation8], %s351
        %p353 = pneg %p214
        %p354 = pneg %p211
        %s355 = sand.u32 %s201, 1
        %s356 = scalar_lea.sflag [#allocation10], %s355
        %s357 = sand.u32 %s201, 1
        %s358 = smul.addr %s357, 8
        %s359 = scalar_lea.vmem [#allocation9], %s358
        %s360 = smul.u32 8, %s31
        %v362 = vld [vmem:[%s306] sm:$0xf]
        %v363 = vld [vmem:[%s306 + $0x4] sm:$0xf]
        %v364 = vld [vmem:[%s306 + $0x8] sm:$0xf]
        %v365 = vld [vmem:[%s306 + $0xc] sm:$0xf]
        %v366 = vld [vmem:[%s306 + $0x10] sm:$0xf]
        %v367 = vld [vmem:[%s306 + $0x14] sm:$0xf]
        %v368 = vld [vmem:[%s306 + $0x18] sm:$0xf]
        %v369 = vld [vmem:[%s306 + $0x1c] sm:$0xf]
        %v370 = vld [vmem:[%s306 + $0x20] sm:$0xf]
        %v371 = vld [vmem:[%s306 + $0x24] sm:$0xf]
        %v372 = vld [vmem:[%s306 + $0x28] sm:$0xf]
        %v373 = vld [vmem:[%s306 + $0x2c] sm:$0xf]
        %v374 = vld [vmem:[%s306 + $0x30] sm:$0xf]
        %v375 = vld [vmem:[%s306 + $0x34] sm:$0xf]
        %v376 = vld [vmem:[%s306 + $0x38] sm:$0xf]
        %v377 = vld [vmem:[%s306 + $0x3c] sm:$0xf]
        %v378 = vld [vmem:[%s306 + $0x40] sm:$0xf]
        %v379 = vld [vmem:[%s306 + $0x44] sm:$0xf]
        %v380 = vld [vmem:[%s306 + $0x48] sm:$0xf]
        %v381 = vld [vmem:[%s306 + $0x4c] sm:$0xf]
        %v382 = vld [vmem:[%s306 + $0x50] sm:$0xf]
        %v383 = vld [vmem:[%s306 + $0x54] sm:$0xf]
        %v384 = vld [vmem:[%s306 + $0x58] sm:$0xf]
        %v385 = vld [vmem:[%s306 + $0x5c] sm:$0xf]
        %v386 = vld [vmem:[%s306 + $0x60] sm:$0xf]
        %v387 = vld [vmem:[%s306 + $0x64] sm:$0xf]
        %v388 = vld [vmem:[%s306 + $0x68] sm:$0xf]
        %v389 = vld [vmem:[%s306 + $0x6c] sm:$0xf]
        %v390 = vld [vmem:[%s306 + $0x70] sm:$0xf]
        %v391 = vld [vmem:[%s306 + $0x74] sm:$0xf]
        %v392 = vld [vmem:[%s306 + $0x78] sm:$0xf]
        %v393 = vld [vmem:[%s306 + $0x7c] sm:$0xf]
        %v394 = vld [vmem:[%s306 + $0x80] sm:$0xf]
        %v395 = vld [vmem:[%s306 + $0x84] sm:$0xf]
        %v396 = vld [vmem:[%s306 + $0x88] sm:$0xf]
        %v397 = vld [vmem:[%s306 + $0x8c] sm:$0xf]
        %v398 = vld [vmem:[%s306 + $0x90] sm:$0xf]
        %v399 = vld [vmem:[%s306 + $0x94] sm:$0xf]
        %v400 = vld [vmem:[%s306 + $0x98] sm:$0xf]
        %v401 = vld [vmem:[%s306 + $0x9c] sm:$0xf]
        %v402 = vld [vmem:[%s306 + $0xa0] sm:$0xf]
        %v403 = vld [vmem:[%s306 + $0xa4] sm:$0xf]
        %v404 = vld [vmem:[%s306 + $0xa8] sm:$0xf]
        %v405 = vld [vmem:[%s306 + $0xac] sm:$0xf]
        %v406 = vld [vmem:[%s306 + $0xb0] sm:$0xf]
        %v407 = vld [vmem:[%s306 + $0xb4] sm:$0xf]
        %v408 = vld [vmem:[%s306 + $0xb8] sm:$0xf]
        %v409 = vld [vmem:[%s306 + $0xbc] sm:$0xf]
        %v410 = vld [vmem:[%s306 + $0xc0] sm:$0xf]
        %v411 = vld [vmem:[%s306 + $0xc4] sm:$0xf]
        %v412 = vld [vmem:[%s306 + $0xc8] sm:$0xf]
        %v413 = vld [vmem:[%s306 + $0xcc] sm:$0xf]
        %v414 = vld [vmem:[%s306 + $0xd0] sm:$0xf]
        %v415 = vld [vmem:[%s306 + $0xd4] sm:$0xf]
        %v416 = vld [vmem:[%s306 + $0xd8] sm:$0xf]
        %v417 = vld [vmem:[%s306 + $0xdc] sm:$0xf]
        %v418 = vld [vmem:[%s306 + $0xe0] sm:$0xf]
        %v419 = vld [vmem:[%s306 + $0xe4] sm:$0xf]
        %v420 = vld [vmem:[%s306 + $0xe8] sm:$0xf]
        %v421 = vld [vmem:[%s306 + $0xec] sm:$0xf]
        %v422 = vld [vmem:[%s306 + $0xf0] sm:$0xf]
        %v423 = vld [vmem:[%s306 + $0xf4] sm:$0xf]
        %v424 = vld [vmem:[%s306 + $0xf8] sm:$0xf]
        %v425 = vld [vmem:[%s306 + $0xfc] sm:$0xf]
        %v426 = vld [vmem:[%s306 + $0x100] sm:$0xf]
        %v427 = vld [vmem:[%s306 + $0x104] sm:$0xf]
        %v428 = vld [vmem:[%s306 + $0x108] sm:$0xf]
        %v429 = vld [vmem:[%s306 + $0x10c] sm:$0xf]
        %v430 = vld [vmem:[%s306 + $0x110] sm:$0xf]
        %v431 = vld [vmem:[%s306 + $0x114] sm:$0xf]
        %v432 = vld [vmem:[%s306 + $0x118] sm:$0xf]
        %v433 = vld [vmem:[%s306 + $0x11c] sm:$0xf]
        %v434 = vld [vmem:[%s306 + $0x120] sm:$0xf]
        %v435 = vld [vmem:[%s306 + $0x124] sm:$0xf]
        %v436 = vld [vmem:[%s306 + $0x128] sm:$0xf]
        %v437 = vld [vmem:[%s306 + $0x12c] sm:$0xf]
        %v438 = vld [vmem:[%s306 + $0x130] sm:$0xf]
        %v439 = vld [vmem:[%s306 + $0x134] sm:$0xf]
        %v440 = vld [vmem:[%s306 + $0x138] sm:$0xf]
        %v441 = vld [vmem:[%s306 + $0x13c] sm:$0xf]
        %v442 = vld [vmem:[%s306 + $0x140] sm:$0xf]
        %v443 = vld [vmem:[%s306 + $0x144] sm:$0xf]
        %v444 = vld [vmem:[%s306 + $0x148] sm:$0xf]
        %v445 = vld [vmem:[%s306 + $0x14c] sm:$0xf]
        %v446 = vld [vmem:[%s306 + $0x150] sm:$0xf]
        %v447 = vld [vmem:[%s306 + $0x154] sm:$0xf]
        %v448 = vld [vmem:[%s306 + $0x158] sm:$0xf]
        %v449 = vld [vmem:[%s306 + $0x15c] sm:$0xf]
        %v450 = vld [vmem:[%s306 + $0x160] sm:$0xf]
        %v451 = vld [vmem:[%s306 + $0x164] sm:$0xf]
        %v452 = vld [vmem:[%s306 + $0x168] sm:$0xf]
        %v453 = vld [vmem:[%s306 + $0x16c] sm:$0xf]
        %v454 = vld [vmem:[%s306 + $0x170] sm:$0xf]
        %v455 = vld [vmem:[%s306 + $0x174] sm:$0xf]
        %v456 = vld [vmem:[%s306 + $0x178] sm:$0xf]
        %v457 = vld [vmem:[%s306 + $0x17c] sm:$0xf]
        %v458 = vld [vmem:[%s306 + $0x180] sm:$0xf]
        %v459 = vld [vmem:[%s306 + $0x184] sm:$0xf]
        %v460 = vld [vmem:[%s306 + $0x188] sm:$0xf]
        %v461 = vld [vmem:[%s306 + $0x18c] sm:$0xf]
        %v462 = vld [vmem:[%s306 + $0x190] sm:$0xf]
        %v463 = vld [vmem:[%s306 + $0x194] sm:$0xf]
        %v464 = vld [vmem:[%s306 + $0x198] sm:$0xf]
        %v465 = vld [vmem:[%s306 + $0x19c] sm:$0xf]
        %v466 = vld [vmem:[%s306 + $0x1a0] sm:$0xf]
        %v467 = vld [vmem:[%s306 + $0x1a4] sm:$0xf]
        %v468 = vld [vmem:[%s306 + $0x1a8] sm:$0xf]
        %v469 = vld [vmem:[%s306 + $0x1ac] sm:$0xf]
        %v470 = vld [vmem:[%s306 + $0x1b0] sm:$0xf]
        %v471 = vld [vmem:[%s306 + $0x1b4] sm:$0xf]
        %v472 = vld [vmem:[%s306 + $0x1b8] sm:$0xf]
        %v473 = vld [vmem:[%s306 + $0x1bc] sm:$0xf]
        %v474 = vld [vmem:[%s306 + $0x1c0] sm:$0xf]
        %v475 = vld [vmem:[%s306 + $0x1c4] sm:$0xf]
        %v476 = vld [vmem:[%s306 + $0x1c8] sm:$0xf]
        %v477 = vld [vmem:[%s306 + $0x1cc] sm:$0xf]
        %v478 = vld [vmem:[%s306 + $0x1d0] sm:$0xf]
        %v479 = vld [vmem:[%s306 + $0x1d4] sm:$0xf]
        %v480 = vld [vmem:[%s306 + $0x1d8] sm:$0xf]
        %v481 = vld [vmem:[%s306 + $0x1dc] sm:$0xf]
        %v482 = vld [vmem:[%s306 + $0x1e0] sm:$0xf]
        %v483 = vld [vmem:[%s306 + $0x1e4] sm:$0xf]
        %v484 = vld [vmem:[%s306 + $0x1e8] sm:$0xf]
        %v485 = vld [vmem:[%s306 + $0x1ec] sm:$0xf]
        %v486 = vld [vmem:[%s306 + $0x1f0] sm:$0xf]
        %v487 = vld [vmem:[%s306 + $0x1f4] sm:$0xf]
        %v488 = vld [vmem:[%s306 + $0x1f8] sm:$0xf]
        %v489 = vld [vmem:[%s306 + $0x1fc] sm:$0xf]
        %v490 = vld [vmem:[#allocation7] sm:$0xf]
        %v491 = vld [vmem:[#allocation7 + $0x4] sm:$0xf]
        %v492 = vld [vmem:[#allocation7 + $0x8] sm:$0xf]
        %v493 = vld [vmem:[#allocation7 + $0xc] sm:$0xf]
        %v494 = vld [vmem:[#allocation7 + $0x10] sm:$0xf]
        %v495 = vld [vmem:[#allocation7 + $0x14] sm:$0xf]
        %v496 = vld [vmem:[#allocation7 + $0x18] sm:$0xf]
        %v497 = vld [vmem:[#allocation7 + $0x1c] sm:$0xf]
        %v498 = vld [vmem:[#allocation7 + $0x20] sm:$0xf]
        %v499 = vld [vmem:[#allocation7 + $0x24] sm:$0xf]
        %v500 = vld [vmem:[#allocation7 + $0x28] sm:$0xf]
        %v501 = vld [vmem:[#allocation7 + $0x2c] sm:$0xf]
        %v502 = vld [vmem:[#allocation7 + $0x30] sm:$0xf]
        %v503 = vld [vmem:[#allocation7 + $0x34] sm:$0xf]
        %v504 = vld [vmem:[#allocation7 + $0x38] sm:$0xf]
        %v505 = vld [vmem:[#allocation7 + $0x3c] sm:$0xf]
        %v634 = vunpack.c.l.b16 %v362
        %v635 = vunpack.c.l.b16 %v363
        %v636 = vunpack.c.l.b16 %v364
        %v637 = vunpack.c.l.b16 %v365
        %v638 = vunpack.c.l.b16 %v366
        %v639 = vunpack.c.l.b16 %v367
        %v640 = vunpack.c.l.b16 %v368
        %v641 = vunpack.c.l.b16 %v369
        %v642 = vunpack.c.l.b16 %v370
        %v643 = vunpack.c.l.b16 %v371
        %v644 = vunpack.c.l.b16 %v372
        %v645 = vunpack.c.l.b16 %v373
        %v646 = vunpack.c.l.b16 %v374
        %v647 = vunpack.c.l.b16 %v375
        %v648 = vunpack.c.l.b16 %v376
        %v649 = vunpack.c.l.b16 %v377
        %v650 = vunpack.c.l.b16 %v378
        %v651 = vunpack.c.l.b16 %v379
        %v652 = vunpack.c.l.b16 %v380
        %v653 = vunpack.c.l.b16 %v381
        %v654 = vunpack.c.l.b16 %v382
        %v655 = vunpack.c.l.b16 %v383
        %v656 = vunpack.c.l.b16 %v384
        %v657 = vunpack.c.l.b16 %v385
        %v658 = vunpack.c.l.b16 %v386
        %v659 = vunpack.c.l.b16 %v387
        %v660 = vunpack.c.l.b16 %v388
        %v661 = vunpack.c.l.b16 %v389
        %v662 = vunpack.c.l.b16 %v390
        %v663 = vunpack.c.l.b16 %v391
        %v664 = vunpack.c.l.b16 %v392
        %v665 = vunpack.c.l.b16 %v393
        %v666 = vunpack.c.l.b16 %v394
        %v667 = vunpack.c.l.b16 %v395
        %v668 = vunpack.c.l.b16 %v396
        %v669 = vunpack.c.l.b16 %v397
        %v670 = vunpack.c.l.b16 %v398
        %v671 = vunpack.c.l.b16 %v399
        %v672 = vunpack.c.l.b16 %v400
        %v673 = vunpack.c.l.b16 %v401
        %v674 = vunpack.c.l.b16 %v402
        %v675 = vunpack.c.l.b16 %v403
        %v676 = vunpack.c.l.b16 %v404
        %v677 = vunpack.c.l.b16 %v405
        %v678 = vunpack.c.l.b16 %v406
        %v679 = vunpack.c.l.b16 %v407
        %v680 = vunpack.c.l.b16 %v408
        %v681 = vunpack.c.l.b16 %v409
        %v682 = vunpack.c.l.b16 %v410
        %v683 = vunpack.c.l.b16 %v411
        %v684 = vunpack.c.l.b16 %v412
        %v685 = vunpack.c.l.b16 %v413
        %v686 = vunpack.c.l.b16 %v414
        %v687 = vunpack.c.l.b16 %v415
        %v688 = vunpack.c.l.b16 %v416
        %v689 = vunpack.c.l.b16 %v417
        %v690 = vunpack.c.l.b16 %v418
        %v691 = vunpack.c.l.b16 %v419
        %v692 = vunpack.c.l.b16 %v420
        %v693 = vunpack.c.l.b16 %v421
        %v694 = vunpack.c.l.b16 %v422
        %v695 = vunpack.c.l.b16 %v423
        %v696 = vunpack.c.l.b16 %v424
        %v697 = vunpack.c.l.b16 %v425
        %v698 = vunpack.c.l.b16 %v426
        %v699 = vunpack.c.l.b16 %v427
        %v700 = vunpack.c.l.b16 %v428
        %v701 = vunpack.c.l.b16 %v429
        %v702 = vunpack.c.l.b16 %v430
        %v703 = vunpack.c.l.b16 %v431
        %v704 = vunpack.c.l.b16 %v432
        %v705 = vunpack.c.l.b16 %v433
        %v706 = vunpack.c.l.b16 %v434
        %v707 = vunpack.c.l.b16 %v435
        %v708 = vunpack.c.l.b16 %v436
        %v709 = vunpack.c.l.b16 %v437
        %v710 = vunpack.c.l.b16 %v438
        %v711 = vunpack.c.l.b16 %v439
        %v712 = vunpack.c.l.b16 %v440
        %v713 = vunpack.c.l.b16 %v441
        %v714 = vunpack.c.l.b16 %v442
        %v715 = vunpack.c.l.b16 %v443
        %v716 = vunpack.c.l.b16 %v444
        %v717 = vunpack.c.l.b16 %v445
        %v718 = vunpack.c.l.b16 %v446
        %v719 = vunpack.c.l.b16 %v447
        %v720 = vunpack.c.l.b16 %v448
        %v721 = vunpack.c.l.b16 %v449
        %v722 = vunpack.c.l.b16 %v450
        %v723 = vunpack.c.l.b16 %v451
        %v724 = vunpack.c.l.b16 %v452
        %v725 = vunpack.c.l.b16 %v453
        %v726 = vunpack.c.l.b16 %v454
        %v727 = vunpack.c.l.b16 %v455
        %v728 = vunpack.c.l.b16 %v456
        %v729 = vunpack.c.l.b16 %v457
        %v730 = vunpack.c.l.b16 %v458
        %v731 = vunpack.c.l.b16 %v459
        %v732 = vunpack.c.l.b16 %v460
        %v733 = vunpack.c.l.b16 %v461
        %v734 = vunpack.c.l.b16 %v462
        %v735 = vunpack.c.l.b16 %v463
        %v736 = vunpack.c.l.b16 %v464
        %v737 = vunpack.c.l.b16 %v465
        %v738 = vunpack.c.l.b16 %v466
        %v739 = vunpack.c.l.b16 %v467
        %v740 = vunpack.c.l.b16 %v468
        %v741 = vunpack.c.l.b16 %v469
        %v742 = vunpack.c.l.b16 %v470
        %v743 = vunpack.c.l.b16 %v471
        %v744 = vunpack.c.l.b16 %v472
        %v745 = vunpack.c.l.b16 %v473
        %v746 = vunpack.c.l.b16 %v474
        %v747 = vunpack.c.l.b16 %v475
        %v748 = vunpack.c.l.b16 %v476
        %v749 = vunpack.c.l.b16 %v477
        %v750 = vunpack.c.l.b16 %v478
        %v751 = vunpack.c.l.b16 %v479
        %v752 = vunpack.c.l.b16 %v480
        %v753 = vunpack.c.l.b16 %v481
        %v754 = vunpack.c.l.b16 %v482
        %v755 = vunpack.c.l.b16 %v483
        %v756 = vunpack.c.l.b16 %v484
        %v757 = vunpack.c.l.b16 %v485
        %v758 = vunpack.c.l.b16 %v486
        %v759 = vunpack.c.l.b16 %v487
        %v760 = vunpack.c.l.b16 %v488
        %v761 = vunpack.c.l.b16 %v489
        %v762 = vpack.c.b16 %v635, %v634
        %v763 = vpack.c.b16 %v637, %v636
        %v764 = vpack.c.b16 %v639, %v638
        %v765 = vpack.c.b16 %v641, %v640
        %v766 = vpack.c.b16 %v643, %v642
        %v767 = vpack.c.b16 %v645, %v644
        %v768 = vpack.c.b16 %v647, %v646
        %v769 = vpack.c.b16 %v649, %v648
        %v770 = vpack.c.b16 %v651, %v650
        %v771 = vpack.c.b16 %v653, %v652
        %v772 = vpack.c.b16 %v655, %v654
        %v773 = vpack.c.b16 %v657, %v656
        %v774 = vpack.c.b16 %v659, %v658
        %v775 = vpack.c.b16 %v661, %v660
        %v776 = vpack.c.b16 %v663, %v662
        %v777 = vpack.c.b16 %v665, %v664
        %v778 = vpack.c.b16 %v667, %v666
        %v779 = vpack.c.b16 %v669, %v668
        %v780 = vpack.c.b16 %v671, %v670
        %v781 = vpack.c.b16 %v673, %v672
        %v782 = vpack.c.b16 %v675, %v674
        %v783 = vpack.c.b16 %v677, %v676
        %v784 = vpack.c.b16 %v679, %v678
        %v785 = vpack.c.b16 %v681, %v680
        %v786 = vpack.c.b16 %v683, %v682
        %v787 = vpack.c.b16 %v685, %v684
        %v788 = vpack.c.b16 %v687, %v686
        %v789 = vpack.c.b16 %v689, %v688
        %v790 = vpack.c.b16 %v691, %v690
        %v791 = vpack.c.b16 %v693, %v692
        %v792 = vpack.c.b16 %v695, %v694
        %v793 = vpack.c.b16 %v697, %v696
        %v794 = vpack.c.b16 %v699, %v698
        %v795 = vpack.c.b16 %v701, %v700
        %v796 = vpack.c.b16 %v703, %v702
        %v797 = vpack.c.b16 %v705, %v704
        %v798 = vpack.c.b16 %v707, %v706
        %v799 = vpack.c.b16 %v709, %v708
        %v800 = vpack.c.b16 %v711, %v710
        %v801 = vpack.c.b16 %v713, %v712
        %v802 = vpack.c.b16 %v715, %v714
        %v803 = vpack.c.b16 %v717, %v716
        %v804 = vpack.c.b16 %v719, %v718
        %v805 = vpack.c.b16 %v721, %v720
        %v806 = vpack.c.b16 %v723, %v722
        %v807 = vpack.c.b16 %v725, %v724
        %v808 = vpack.c.b16 %v727, %v726
        %v809 = vpack.c.b16 %v729, %v728
        %v810 = vpack.c.b16 %v731, %v730
        %v811 = vpack.c.b16 %v733, %v732
        %v812 = vpack.c.b16 %v735, %v734
        %v813 = vpack.c.b16 %v737, %v736
        %v814 = vpack.c.b16 %v739, %v738
        %v815 = vpack.c.b16 %v741, %v740
        %v816 = vpack.c.b16 %v743, %v742
        %v817 = vpack.c.b16 %v745, %v744
        %v818 = vpack.c.b16 %v747, %v746
        %v819 = vpack.c.b16 %v749, %v748
        %v820 = vpack.c.b16 %v751, %v750
        %v821 = vpack.c.b16 %v753, %v752
        %v822 = vpack.c.b16 %v755, %v754
        %v823 = vpack.c.b16 %v757, %v756
        %v824 = vpack.c.b16 %v759, %v758
        %v825 = vpack.c.b16 %v761, %v760
        %v906 = vunpack.c.l.b16 %v490
        %v907 = vunpack.c.l.b16 %v491
        %v908 = vunpack.c.l.b16 %v492
        %v909 = vunpack.c.l.b16 %v493
        %v910 = vunpack.c.l.b16 %v494
        %v911 = vunpack.c.l.b16 %v495
        %v912 = vunpack.c.l.b16 %v496
        %v913 = vunpack.c.l.b16 %v497
        %v914 = vunpack.c.l.b16 %v498
        %v915 = vunpack.c.l.b16 %v499
        %v916 = vunpack.c.l.b16 %v500
        %v917 = vunpack.c.l.b16 %v501
        %v918 = vunpack.c.l.b16 %v502
        %v919 = vunpack.c.l.b16 %v503
        %v920 = vunpack.c.l.b16 %v504
        %v921 = vunpack.c.l.b16 %v505
        %v922 = vpack.c.b16 %v907, %v906
        %v923 = vpack.c.b16 %v909, %v908
        %v924 = vpack.c.b16 %v911, %v910
        %v925 = vpack.c.b16 %v913, %v912
        %v926 = vpack.c.b16 %v915, %v914
        %v927 = vpack.c.b16 %v917, %v916
        %v928 = vpack.c.b16 %v919, %v918
        %v929 = vpack.c.b16 %v921, %v920
        %938 = vmatprep.subr.bf16.mxu0 0
        %939 = vmatpush1.bf16.msra.mxu0 %v922
        %940 = vmatprep.subr.bf16.mxu0 0
        %941 = vmatpush1.bf16.msra.mxu0 %v923
        %942 = vmatprep.subr.bf16.mxu0 0
        %943 = vmatpush1.bf16.msra.mxu0 %v924
        %944 = vmatprep.subr.bf16.mxu0 0
        %945 = vmatpush1.bf16.msra.mxu0 %v925
        %946 = vmatprep.subr.bf16.mxu0 0
        %947 = vmatpush1.bf16.msra.mxu0 %v926
        %948 = vmatprep.subr.bf16.mxu0 0
        %949 = vmatpush1.bf16.msra.mxu0 %v927
        %950 = vmatprep.subr.bf16.mxu0 0
        %951 = vmatpush1.bf16.msra.mxu0 %v928
        %952 = vmatprep.subr.bf16.mxu0 0
        %953 = vmatpush1.bf16.msra.mxu0 %v929
        %954 = vmatprep.subr.bf16.mxu0 0
        %955 = vmatpush1.bf16.msra.mxu0 0
        %956 = vmatprep.subr.bf16.mxu0 0
        %957 = vmatpush1.bf16.msra.mxu0 0
        %958 = vmatprep.subr.bf16.mxu0 0
        %959 = vmatpush1.bf16.msra.mxu0 0
        %960 = vmatprep.subr.bf16.mxu0 0
        %961 = vmatpush1.bf16.msra.mxu0 0
        %962 = vmatprep.subr.bf16.mxu0 0
        %963 = vmatpush1.bf16.msra.mxu0 0
        %964 = vmatprep.subr.bf16.mxu0 0
        %965 = vmatpush1.bf16.msra.mxu0 0
        %966 = vmatprep.subr.bf16.mxu0 0
        %967 = vmatpush1.bf16.msra.mxu0 0
        %968 = vmatprep.subr.bf16.mxu0 0
        %969 = vmatpush1.bf16.msra.mxu0 0
        %970 = vmatprep.mubr.bf16.mxu0 0
        %971 = vmatmul.mubr.bf16.gmra.mrb[0].mxu0 %v762
        %v972 = vpop.f32.mrb[0].mxu0
        %v973 = vadd.f32 0.0, %v972
        %v974 = vpop.f32.mrb[0].mxu0
        %v975 = vpop.f32.mrb[0].mxu0
        %v976 = vadd.f32 0.0, %v975
        %v977 = vpop.f32.mrb[0].mxu0
        %978 = vmatprep.mubr.bf16.mxu0 0
        %979 = vmatmul.mubr.bf16.gmra.mrb[0].mxu0 %v763
        %v980 = vpop.f32.mrb[0].mxu0
        %v981 = vadd.f32 0.0, %v980
        %v982 = vpop.f32.mrb[0].mxu0
        %v983 = vpop.f32.mrb[0].mxu0
        %v984 = vadd.f32 0.0, %v983
        %v985 = vpop.f32.mrb[0].mxu0
        %986 = vmatprep.mubr.bf16.mxu0 0
        %987 = vmatmul.mubr.bf16.gmra.mrb[0].mxu0 %v764
        %v988 = vpop.f32.mrb[0].mxu0
        %v989 = vadd.f32 0.0, %v988
        %v990 = vpop.f32.mrb[0].mxu0
        %v991 = vpop.f32.mrb[0].mxu0
        %v992 = vadd.f32 0.0, %v991
        %v993 = vpop.f32.mrb[0].mxu0
        %994 = vmatprep.mubr.bf16.mxu0 0
        %995 = vmatmul.mubr.bf16.gmra.mrb[0].mxu0 %v765
        %v996 = vpop.f32.mrb[0].mxu0
        %v997 = vadd.f32 0.0, %v996
        %v998 = vpop.f32.mrb[0].mxu0
        %v999 = vpop.f32.mrb[0].mxu0
        %v1000 = vadd.f32 0.0, %v999
        %v1001 = vpop.f32.mrb[0].mxu0
        %1002 = vmatprep.mubr.bf16.mxu0 0
        %1003 = vmatmul.mubr.bf16.gmra.mrb[0].mxu0 %v766
        %v1004 = vpop.f32.mrb[0].mxu0
        %v1005 = vadd.f32 0.0, %v1004
        %v1006 = vpop.f32.mrb[0].mxu0
        %v1007 = vpop.f32.mrb[0].mxu0
        %v1008 = vadd.f32 0.0, %v1007
        %v1009 = vpop.f32.mrb[0].mxu0
        %1010 = vmatprep.mubr.bf16.mxu0 0
        %1011 = vmatmul.mubr.bf16.gmra.mrb[0].mxu0 %v767
        %v1012 = vpop.f32.mrb[0].mxu0
        %v1013 = vadd.f32 0.0, %v1012
        %v1014 = vpop.f32.mrb[0].mxu0
        %v1015 = vpop.f32.mrb[0].mxu0
        %v1016 = vadd.f32 0.0, %v1015
        %v1017 = vpop.f32.mrb[0].mxu0
        %1018 = vmatprep.mubr.bf16.mxu0 0
        %1019 = vmatmul.mubr.bf16.gmra.mrb[0].mxu0 %v768
        %v1020 = vpop.f32.mrb[0].mxu0
        %v1021 = vadd.f32 0.0, %v1020
        %v1022 = vpop.f32.mrb[0].mxu0
        %v1023 = vpop.f32.mrb[0].mxu0
        %v1024 = vadd.f32 0.0, %v1023
        %v1025 = vpop.f32.mrb[0].mxu0
        %1026 = vmatprep.mubr.bf16.mxu0 0
        %1027 = vmatmul.mubr.bf16.gmra.mrb[0].mxu0 %v769
        %v1028 = vpop.f32.mrb[0].mxu0
        %v1029 = vadd.f32 0.0, %v1028
        %v1030 = vpop.f32.mrb[0].mxu0
        %v1031 = vpop.f32.mrb[0].mxu0
        %v1032 = vadd.f32 0.0, %v1031
        %v1033 = vpop.f32.mrb[0].mxu0
        %1034 = vmatprep.mubr.bf16.mxu0 0
        %1035 = vmatmul.mubr.bf16.gmra.mrb[0].mxu0 %v770
        %v1036 = vpop.f32.mrb[0].mxu0
        %v1037 = vadd.f32 0.0, %v1036
        %v1038 = vpop.f32.mrb[0].mxu0
        %v1039 = vpop.f32.mrb[0].mxu0
        %v1040 = vadd.f32 0.0, %v1039
        %v1041 = vpop.f32.mrb[0].mxu0
        %1042 = vmatprep.mubr.bf16.mxu0 0
        %1043 = vmatmul.mubr.bf16.gmra.mrb[0].mxu0 %v771
        %v1044 = vpop.f32.mrb[0].mxu0
        %v1045 = vadd.f32 0.0, %v1044
        %v1046 = vpop.f32.mrb[0].mxu0
        %v1047 = vpop.f32.mrb[0].mxu0
        %v1048 = vadd.f32 0.0, %v1047
        %v1049 = vpop.f32.mrb[0].mxu0
        %1050 = vmatprep.mubr.bf16.mxu0 0
        %1051 = vmatmul.mubr.bf16.gmra.mrb[0].mxu0 %v772
        %v1052 = vpop.f32.mrb[0].mxu0
        %v1053 = vadd.f32 0.0, %v1052
        %v1054 = vpop.f32.mrb[0].mxu0
        %v1055 = vpop.f32.mrb[0].mxu0
        %v1056 = vadd.f32 0.0, %v1055
        %v1057 = vpop.f32.mrb[0].mxu0
        %1058 = vmatprep.mubr.bf16.mxu0 0
        %1059 = vmatmul.mubr.bf16.gmra.mrb[0].mxu0 %v773
        %v1060 = vpop.f32.mrb[0].mxu0
        %v1061 = vadd.f32 0.0, %v1060
        %v1062 = vpop.f32.mrb[0].mxu0
        %v1063 = vpop.f32.mrb[0].mxu0
        %v1064 = vadd.f32 0.0, %v1063
        %v1065 = vpop.f32.mrb[0].mxu0
        %1066 = vmatprep.mubr.bf16.mxu0 0
        %1067 = vmatmul.mubr.bf16.gmra.mrb[0].mxu0 %v774
        %v1068 = vpop.f32.mrb[0].mxu0
        %v1069 = vadd.f32 0.0, %v1068
        %v1070 = vpop.f32.mrb[0].mxu0
        %v1071 = vpop.f32.mrb[0].mxu0
        %v1072 = vadd.f32 0.0, %v1071
        %v1073 = vpop.f32.mrb[0].mxu0
        %1074 = vmatprep.mubr.bf16.mxu0 0
        %1075 = vmatmul.mubr.bf16.gmra.mrb[0].mxu0 %v775
        %v1076 = vpop.f32.mrb[0].mxu0
        %v1077 = vadd.f32 0.0, %v1076
        %v1078 = vpop.f32.mrb[0].mxu0
        %v1079 = vpop.f32.mrb[0].mxu0
        %v1080 = vadd.f32 0.0, %v1079
        %v1081 = vpop.f32.mrb[0].mxu0
        %1082 = vmatprep.mubr.bf16.mxu0 0
        %1083 = vmatmul.mubr.bf16.gmra.mrb[0].mxu0 %v776
        %v1084 = vpop.f32.mrb[0].mxu0
        %v1085 = vadd.f32 0.0, %v1084
        %v1086 = vpop.f32.mrb[0].mxu0
        %v1087 = vpop.f32.mrb[0].mxu0
        %v1088 = vadd.f32 0.0, %v1087
        %v1089 = vpop.f32.mrb[0].mxu0
        %1090 = vmatprep.mubr.bf16.mxu0 0
        %1091 = vmatmul.mubr.bf16.gmra.mrb[0].mxu0 %v777
        %v1092 = vpop.f32.mrb[0].mxu0
        %v1093 = vadd.f32 0.0, %v1092
        %v1094 = vpop.f32.mrb[0].mxu0
        %v1095 = vpop.f32.mrb[0].mxu0
        %v1096 = vadd.f32 0.0, %v1095
        %v1097 = vpop.f32.mrb[0].mxu0
        %1098 = vmatprep.mubr.bf16.mxu0 0
        %1099 = vmatmul.mubr.bf16.gmra.mrb[0].mxu0 %v778
        %v1100 = vpop.f32.mrb[0].mxu0
        %v1101 = vadd.f32 0.0, %v1100
        %v1102 = vpop.f32.mrb[0].mxu0
        %v1103 = vpop.f32.mrb[0].mxu0
        %v1104 = vadd.f32 0.0, %v1103
        %v1105 = vpop.f32.mrb[0].mxu0
        %1106 = vmatprep.mubr.bf16.mxu0 0
        %1107 = vmatmul.mubr.bf16.gmra.mrb[0].mxu0 %v779
        %v1108 = vpop.f32.mrb[0].mxu0
        %v1109 = vadd.f32 0.0, %v1108
        %v1110 = vpop.f32.mrb[0].mxu0
        %v1111 = vpop.f32.mrb[0].mxu0
        %v1112 = vadd.f32 0.0, %v1111
        %v1113 = vpop.f32.mrb[0].mxu0
        %1114 = vmatprep.mubr.bf16.mxu0 0
        %1115 = vmatmul.mubr.bf16.gmra.mrb[0].mxu0 %v780
        %v1116 = vpop.f32.mrb[0].mxu0
        %v1117 = vadd.f32 0.0, %v1116
        %v1118 = vpop.f32.mrb[0].mxu0
        %v1119 = vpop.f32.mrb[0].mxu0
        %v1120 = vadd.f32 0.0, %v1119
        %v1121 = vpop.f32.mrb[0].mxu0
        %1122 = vmatprep.mubr.bf16.mxu0 0
        %1123 = vmatmul.mubr.bf16.gmra.mrb[0].mxu0 %v781
        %v1124 = vpop.f32.mrb[0].mxu0
        %v1125 = vadd.f32 0.0, %v1124
        %v1126 = vpop.f32.mrb[0].mxu0
        %v1127 = vpop.f32.mrb[0].mxu0
        %v1128 = vadd.f32 0.0, %v1127
        %v1129 = vpop.f32.mrb[0].mxu0
        %1130 = vmatprep.mubr.bf16.mxu0 0
        %1131 = vmatmul.mubr.bf16.gmra.mrb[0].mxu0 %v782
        %v1132 = vpop.f32.mrb[0].mxu0
        %v1133 = vadd.f32 0.0, %v1132
        %v1134 = vpop.f32.mrb[0].mxu0
        %v1135 = vpop.f32.mrb[0].mxu0
        %v1136 = vadd.f32 0.0, %v1135
        %v1137 = vpop.f32.mrb[0].mxu0
        %1138 = vmatprep.mubr.bf16.mxu0 0
        %1139 = vmatmul.mubr.bf16.gmra.mrb[0].mxu0 %v783
        %v1140 = vpop.f32.mrb[0].mxu0
        %v1141 = vadd.f32 0.0, %v1140
        %v1142 = vpop.f32.mrb[0].mxu0
        %v1143 = vpop.f32.mrb[0].mxu0
        %v1144 = vadd.f32 0.0, %v1143
        %v1145 = vpop.f32.mrb[0].mxu0
        %1146 = vmatprep.mubr.bf16.mxu0 0
        %1147 = vmatmul.mubr.bf16.gmra.mrb[0].mxu0 %v784
        %v1148 = vpop.f32.mrb[0].mxu0
        %v1149 = vadd.f32 0.0, %v1148
        %v1150 = vpop.f32.mrb[0].mxu0
        %v1151 = vpop.f32.mrb[0].mxu0
        %v1152 = vadd.f32 0.0, %v1151
        %v1153 = vpop.f32.mrb[0].mxu0
        %1154 = vmatprep.mubr.bf16.mxu0 0
        %1155 = vmatmul.mubr.bf16.gmra.mrb[0].mxu0 %v785
        %v1156 = vpop.f32.mrb[0].mxu0
        %v1157 = vadd.f32 0.0, %v1156
        %v1158 = vpop.f32.mrb[0].mxu0
        %v1159 = vpop.f32.mrb[0].mxu0
        %v1160 = vadd.f32 0.0, %v1159
        %v1161 = vpop.f32.mrb[0].mxu0
        %1162 = vmatprep.mubr.bf16.mxu0 0
        %1163 = vmatmul.mubr.bf16.gmra.mrb[0].mxu0 %v786
        %v1164 = vpop.f32.mrb[0].mxu0
        %v1165 = vadd.f32 0.0, %v1164
        %v1166 = vpop.f32.mrb[0].mxu0
        %v1167 = vpop.f32.mrb[0].mxu0
        %v1168 = vadd.f32 0.0, %v1167
        %v1169 = vpop.f32.mrb[0].mxu0
        %1170 = vmatprep.mubr.bf16.mxu0 0
        %1171 = vmatmul.mubr.bf16.gmra.mrb[0].mxu0 %v787
        %v1172 = vpop.f32.mrb[0].mxu0
        %v1173 = vadd.f32 0.0, %v1172
        %v1174 = vpop.f32.mrb[0].mxu0
        %v1175 = vpop.f32.mrb[0].mxu0
        %v1176 = vadd.f32 0.0, %v1175
        %v1177 = vpop.f32.mrb[0].mxu0
        %1178 = vmatprep.mubr.bf16.mxu0 0
        %1179 = vmatmul.mubr.bf16.gmra.mrb[0].mxu0 %v788
        %v1180 = vpop.f32.mrb[0].mxu0
        %v1181 = vadd.f32 0.0, %v1180
        %v1182 = vpop.f32.mrb[0].mxu0
        %v1183 = vpop.f32.mrb[0].mxu0
        %v1184 = vadd.f32 0.0, %v1183
        %v1185 = vpop.f32.mrb[0].mxu0
        %1186 = vmatprep.mubr.bf16.mxu0 0
        %1187 = vmatmul.mubr.bf16.gmra.mrb[0].mxu0 %v789
        %v1188 = vpop.f32.mrb[0].mxu0
        %v1189 = vadd.f32 0.0, %v1188
        %v1190 = vpop.f32.mrb[0].mxu0
        %v1191 = vpop.f32.mrb[0].mxu0
        %v1192 = vadd.f32 0.0, %v1191
        %v1193 = vpop.f32.mrb[0].mxu0
        %1194 = vmatprep.mubr.bf16.mxu0 0
        %1195 = vmatmul.mubr.bf16.gmra.mrb[0].mxu0 %v790
        %v1196 = vpop.f32.mrb[0].mxu0
        %v1197 = vadd.f32 0.0, %v1196
        %v1198 = vpop.f32.mrb[0].mxu0
        %v1199 = vpop.f32.mrb[0].mxu0
        %v1200 = vadd.f32 0.0, %v1199
        %v1201 = vpop.f32.mrb[0].mxu0
        %1202 = vmatprep.mubr.bf16.mxu0 0
        %1203 = vmatmul.mubr.bf16.gmra.mrb[0].mxu0 %v791
        %v1204 = vpop.f32.mrb[0].mxu0
        %v1205 = vadd.f32 0.0, %v1204
        %v1206 = vpop.f32.mrb[0].mxu0
        %v1207 = vpop.f32.mrb[0].mxu0
        %v1208 = vadd.f32 0.0, %v1207
        %v1209 = vpop.f32.mrb[0].mxu0
        %1210 = vmatprep.mubr.bf16.mxu0 0
        %1211 = vmatmul.mubr.bf16.gmra.mrb[0].mxu0 %v792
        %v1212 = vpop.f32.mrb[0].mxu0
        %v1213 = vadd.f32 0.0, %v1212
        %v1214 = vpop.f32.mrb[0].mxu0
        %v1215 = vpop.f32.mrb[0].mxu0
        %v1216 = vadd.f32 0.0, %v1215
        %v1217 = vpop.f32.mrb[0].mxu0
        %1218 = vmatprep.mubr.bf16.mxu0 0
        %1219 = vmatmul.mubr.bf16.gmra.mrb[0].mxu0 %v793
        %v1220 = vpop.f32.mrb[0].mxu0
        %v1221 = vadd.f32 0.0, %v1220
        %v1222 = vpop.f32.mrb[0].mxu0
        %v1223 = vpop.f32.mrb[0].mxu0
        %v1224 = vadd.f32 0.0, %v1223
        %v1225 = vpop.f32.mrb[0].mxu0
        %1226 = vmatprep.mubr.bf16.mxu0 0
        %1227 = vmatmul.mubr.bf16.gmra.mrb[0].mxu0 %v794
        %v1228 = vpop.f32.mrb[0].mxu0
        %v1229 = vadd.f32 0.0, %v1228
        %v1230 = vpop.f32.mrb[0].mxu0
        %v1231 = vpop.f32.mrb[0].mxu0
        %v1232 = vadd.f32 0.0, %v1231
        %v1233 = vpop.f32.mrb[0].mxu0
        %1234 = vmatprep.mubr.bf16.mxu0 0
        %1235 = vmatmul.mubr.bf16.gmra.mrb[0].mxu0 %v795
        %v1236 = vpop.f32.mrb[0].mxu0
        %v1237 = vadd.f32 0.0, %v1236
        %v1238 = vpop.f32.mrb[0].mxu0
        %v1239 = vpop.f32.mrb[0].mxu0
        %v1240 = vadd.f32 0.0, %v1239
        %v1241 = vpop.f32.mrb[0].mxu0
        %1242 = vmatprep.mubr.bf16.mxu0 0
        %1243 = vmatmul.mubr.bf16.gmra.mrb[0].mxu0 %v796
        %v1244 = vpop.f32.mrb[0].mxu0
        %v1245 = vadd.f32 0.0, %v1244
        %v1246 = vpop.f32.mrb[0].mxu0
        %v1247 = vpop.f32.mrb[0].mxu0
        %v1248 = vadd.f32 0.0, %v1247
        %v1249 = vpop.f32.mrb[0].mxu0
        %1250 = vmatprep.mubr.bf16.mxu0 0
        %1251 = vmatmul.mubr.bf16.gmra.mrb[0].mxu0 %v797
        %v1252 = vpop.f32.mrb[0].mxu0
        %v1253 = vadd.f32 0.0, %v1252
        %v1254 = vpop.f32.mrb[0].mxu0
        %v1255 = vpop.f32.mrb[0].mxu0
        %v1256 = vadd.f32 0.0, %v1255
        %v1257 = vpop.f32.mrb[0].mxu0
        %1258 = vmatprep.mubr.bf16.mxu0 0
        %1259 = vmatmul.mubr.bf16.gmra.mrb[0].mxu0 %v798
        %v1260 = vpop.f32.mrb[0].mxu0
        %v1261 = vadd.f32 0.0, %v1260
        %v1262 = vpop.f32.mrb[0].mxu0
        %v1263 = vpop.f32.mrb[0].mxu0
        %v1264 = vadd.f32 0.0, %v1263
        %v1265 = vpop.f32.mrb[0].mxu0
        %1266 = vmatprep.mubr.bf16.mxu0 0
        %1267 = vmatmul.mubr.bf16.gmra.mrb[0].mxu0 %v799
        %v1268 = vpop.f32.mrb[0].mxu0
        %v1269 = vadd.f32 0.0, %v1268
        %v1270 = vpop.f32.mrb[0].mxu0
        %v1271 = vpop.f32.mrb[0].mxu0
        %v1272 = vadd.f32 0.0, %v1271
        %v1273 = vpop.f32.mrb[0].mxu0
        %1274 = vmatprep.mubr.bf16.mxu0 0
        %1275 = vmatmul.mubr.bf16.gmra.mrb[0].mxu0 %v800
        %v1276 = vpop.f32.mrb[0].mxu0
        %v1277 = vadd.f32 0.0, %v1276
        %v1278 = vpop.f32.mrb[0].mxu0
        %v1279 = vpop.f32.mrb[0].mxu0
        %v1280 = vadd.f32 0.0, %v1279
        %v1281 = vpop.f32.mrb[0].mxu0
        %1282 = vmatprep.mubr.bf16.mxu0 0
        %1283 = vmatmul.mubr.bf16.gmra.mrb[0].mxu0 %v801
        %v1284 = vpop.f32.mrb[0].mxu0
        %v1285 = vadd.f32 0.0, %v1284
        %v1286 = vpop.f32.mrb[0].mxu0
        %v1287 = vpop.f32.mrb[0].mxu0
        %v1288 = vadd.f32 0.0, %v1287
        %v1289 = vpop.f32.mrb[0].mxu0
        %1290 = vmatprep.mubr.bf16.mxu0 0
        %1291 = vmatmul.mubr.bf16.gmra.mrb[0].mxu0 %v802
        %v1292 = vpop.f32.mrb[0].mxu0
        %v1293 = vadd.f32 0.0, %v1292
        %v1294 = vpop.f32.mrb[0].mxu0
        %v1295 = vpop.f32.mrb[0].mxu0
        %v1296 = vadd.f32 0.0, %v1295
        %v1297 = vpop.f32.mrb[0].mxu0
        %1298 = vmatprep.mubr.bf16.mxu0 0
        %1299 = vmatmul.mubr.bf16.gmra.mrb[0].mxu0 %v803
        %v1300 = vpop.f32.mrb[0].mxu0
        %v1301 = vadd.f32 0.0, %v1300
        %v1302 = vpop.f32.mrb[0].mxu0
        %v1303 = vpop.f32.mrb[0].mxu0
        %v1304 = vadd.f32 0.0, %v1303
        %v1305 = vpop.f32.mrb[0].mxu0
        %1306 = vmatprep.mubr.bf16.mxu0 0
        %1307 = vmatmul.mubr.bf16.gmra.mrb[0].mxu0 %v804
        %v1308 = vpop.f32.mrb[0].mxu0
        %v1309 = vadd.f32 0.0, %v1308
        %v1310 = vpop.f32.mrb[0].mxu0
        %v1311 = vpop.f32.mrb[0].mxu0
        %v1312 = vadd.f32 0.0, %v1311
        %v1313 = vpop.f32.mrb[0].mxu0
        %1314 = vmatprep.mubr.bf16.mxu0 0
        %1315 = vmatmul.mubr.bf16.gmra.mrb[0].mxu0 %v805
        %v1316 = vpop.f32.mrb[0].mxu0
        %v1317 = vadd.f32 0.0, %v1316
        %v1318 = vpop.f32.mrb[0].mxu0
        %v1319 = vpop.f32.mrb[0].mxu0
        %v1320 = vadd.f32 0.0, %v1319
        %v1321 = vpop.f32.mrb[0].mxu0
        %1322 = vmatprep.mubr.bf16.mxu0 0
        %1323 = vmatmul.mubr.bf16.gmra.mrb[0].mxu0 %v806
        %v1324 = vpop.f32.mrb[0].mxu0
        %v1325 = vadd.f32 0.0, %v1324
        %v1326 = vpop.f32.mrb[0].mxu0
        %v1327 = vpop.f32.mrb[0].mxu0
        %v1328 = vadd.f32 0.0, %v1327
        %v1329 = vpop.f32.mrb[0].mxu0
        %1330 = vmatprep.mubr.bf16.mxu0 0
        %1331 = vmatmul.mubr.bf16.gmra.mrb[0].mxu0 %v807
        %v1332 = vpop.f32.mrb[0].mxu0
        %v1333 = vadd.f32 0.0, %v1332
        %v1334 = vpop.f32.mrb[0].mxu0
        %v1335 = vpop.f32.mrb[0].mxu0
        %v1336 = vadd.f32 0.0, %v1335
        %v1337 = vpop.f32.mrb[0].mxu0
        %1338 = vmatprep.mubr.bf16.mxu0 0
        %1339 = vmatmul.mubr.bf16.gmra.mrb[0].mxu0 %v808
        %v1340 = vpop.f32.mrb[0].mxu0
        %v1341 = vadd.f32 0.0, %v1340
        %v1342 = vpop.f32.mrb[0].mxu0
        %v1343 = vpop.f32.mrb[0].mxu0
        %v1344 = vadd.f32 0.0, %v1343
        %v1345 = vpop.f32.mrb[0].mxu0
        %1346 = vmatprep.mubr.bf16.mxu0 0
        %1347 = vmatmul.mubr.bf16.gmra.mrb[0].mxu0 %v809
        %v1348 = vpop.f32.mrb[0].mxu0
        %v1349 = vadd.f32 0.0, %v1348
        %v1350 = vpop.f32.mrb[0].mxu0
        %v1351 = vpop.f32.mrb[0].mxu0
        %v1352 = vadd.f32 0.0, %v1351
        %v1353 = vpop.f32.mrb[0].mxu0
        %1354 = vmatprep.mubr.bf16.mxu0 0
        %1355 = vmatmul.mubr.bf16.gmra.mrb[0].mxu0 %v810
        %v1356 = vpop.f32.mrb[0].mxu0
        %v1357 = vadd.f32 0.0, %v1356
        %v1358 = vpop.f32.mrb[0].mxu0
        %v1359 = vpop.f32.mrb[0].mxu0
        %v1360 = vadd.f32 0.0, %v1359
        %v1361 = vpop.f32.mrb[0].mxu0
        %1362 = vmatprep.mubr.bf16.mxu0 0
        %1363 = vmatmul.mubr.bf16.gmra.mrb[0].mxu0 %v811
        %v1364 = vpop.f32.mrb[0].mxu0
        %v1365 = vadd.f32 0.0, %v1364
        %v1366 = vpop.f32.mrb[0].mxu0
        %v1367 = vpop.f32.mrb[0].mxu0
        %v1368 = vadd.f32 0.0, %v1367
        %v1369 = vpop.f32.mrb[0].mxu0
        %1370 = vmatprep.mubr.bf16.mxu0 0
        %1371 = vmatmul.mubr.bf16.gmra.mrb[0].mxu0 %v812
        %v1372 = vpop.f32.mrb[0].mxu0
        %v1373 = vadd.f32 0.0, %v1372
        %v1374 = vpop.f32.mrb[0].mxu0
        %v1375 = vpop.f32.mrb[0].mxu0
        %v1376 = vadd.f32 0.0, %v1375
        %v1377 = vpop.f32.mrb[0].mxu0
        %1378 = vmatprep.mubr.bf16.mxu0 0
        %1379 = vmatmul.mubr.bf16.gmra.mrb[0].mxu0 %v813
        %v1380 = vpop.f32.mrb[0].mxu0
        %v1381 = vadd.f32 0.0, %v1380
        %v1382 = vpop.f32.mrb[0].mxu0
        %v1383 = vpop.f32.mrb[0].mxu0
        %v1384 = vadd.f32 0.0, %v1383
        %v1385 = vpop.f32.mrb[0].mxu0
        %1386 = vmatprep.mubr.bf16.mxu0 0
        %1387 = vmatmul.mubr.bf16.gmra.mrb[0].mxu0 %v814
        %v1388 = vpop.f32.mrb[0].mxu0
        %v1389 = vadd.f32 0.0, %v1388
        %v1390 = vpop.f32.mrb[0].mxu0
        %v1391 = vpop.f32.mrb[0].mxu0
        %v1392 = vadd.f32 0.0, %v1391
        %v1393 = vpop.f32.mrb[0].mxu0
        %1394 = vmatprep.mubr.bf16.mxu0 0
        %1395 = vmatmul.mubr.bf16.gmra.mrb[0].mxu0 %v815
        %v1396 = vpop.f32.mrb[0].mxu0
        %v1397 = vadd.f32 0.0, %v1396
        %v1398 = vpop.f32.mrb[0].mxu0
        %v1399 = vpop.f32.mrb[0].mxu0
        %v1400 = vadd.f32 0.0, %v1399
        %v1401 = vpop.f32.mrb[0].mxu0
        %1402 = vmatprep.mubr.bf16.mxu0 0
        %1403 = vmatmul.mubr.bf16.gmra.mrb[0].mxu0 %v816
        %v1404 = vpop.f32.mrb[0].mxu0
        %v1405 = vadd.f32 0.0, %v1404
        %v1406 = vpop.f32.mrb[0].mxu0
        %v1407 = vpop.f32.mrb[0].mxu0
        %v1408 = vadd.f32 0.0, %v1407
        %v1409 = vpop.f32.mrb[0].mxu0
        %1410 = vmatprep.mubr.bf16.mxu0 0
        %1411 = vmatmul.mubr.bf16.gmra.mrb[0].mxu0 %v817
        %v1412 = vpop.f32.mrb[0].mxu0
        %v1413 = vadd.f32 0.0, %v1412
        %v1414 = vpop.f32.mrb[0].mxu0
        %v1415 = vpop.f32.mrb[0].mxu0
        %v1416 = vadd.f32 0.0, %v1415
        %v1417 = vpop.f32.mrb[0].mxu0
        %1418 = vmatprep.mubr.bf16.mxu0 0
        %1419 = vmatmul.mubr.bf16.gmra.mrb[0].mxu0 %v818
        %v1420 = vpop.f32.mrb[0].mxu0
        %v1421 = vadd.f32 0.0, %v1420
        %v1422 = vpop.f32.mrb[0].mxu0
        %v1423 = vpop.f32.mrb[0].mxu0
        %v1424 = vadd.f32 0.0, %v1423
        %v1425 = vpop.f32.mrb[0].mxu0
        %1426 = vmatprep.mubr.bf16.mxu0 0
        %1427 = vmatmul.mubr.bf16.gmra.mrb[0].mxu0 %v819
        %v1428 = vpop.f32.mrb[0].mxu0
        %v1429 = vadd.f32 0.0, %v1428
        %v1430 = vpop.f32.mrb[0].mxu0
        %v1431 = vpop.f32.mrb[0].mxu0
        %v1432 = vadd.f32 0.0, %v1431
        %v1433 = vpop.f32.mrb[0].mxu0
        %1434 = vmatprep.mubr.bf16.mxu0 0
        %1435 = vmatmul.mubr.bf16.gmra.mrb[0].mxu0 %v820
        %v1436 = vpop.f32.mrb[0].mxu0
        %v1437 = vadd.f32 0.0, %v1436
        %v1438 = vpop.f32.mrb[0].mxu0
        %v1439 = vpop.f32.mrb[0].mxu0
        %v1440 = vadd.f32 0.0, %v1439
        %v1441 = vpop.f32.mrb[0].mxu0
        %1442 = vmatprep.mubr.bf16.mxu0 0
        %1443 = vmatmul.mubr.bf16.gmra.mrb[0].mxu0 %v821
        %v1444 = vpop.f32.mrb[0].mxu0
        %v1445 = vadd.f32 0.0, %v1444
        %v1446 = vpop.f32.mrb[0].mxu0
        %v1447 = vpop.f32.mrb[0].mxu0
        %v1448 = vadd.f32 0.0, %v1447
        %v1449 = vpop.f32.mrb[0].mxu0
        %1450 = vmatprep.mubr.bf16.mxu0 0
        %1451 = vmatmul.mubr.bf16.gmra.mrb[0].mxu0 %v822
        %v1452 = vpop.f32.mrb[0].mxu0
        %v1453 = vadd.f32 0.0, %v1452
        %v1454 = vpop.f32.mrb[0].mxu0
        %v1455 = vpop.f32.mrb[0].mxu0
        %v1456 = vadd.f32 0.0, %v1455
        %v1457 = vpop.f32.mrb[0].mxu0
        %1458 = vmatprep.mubr.bf16.mxu0 0
        %1459 = vmatmul.mubr.bf16.gmra.mrb[0].mxu0 %v823
        %v1460 = vpop.f32.mrb[0].mxu0
        %v1461 = vadd.f32 0.0, %v1460
        %v1462 = vpop.f32.mrb[0].mxu0
        %v1463 = vpop.f32.mrb[0].mxu0
        %v1464 = vadd.f32 0.0, %v1463
        %v1465 = vpop.f32.mrb[0].mxu0
        %1466 = vmatprep.mubr.bf16.mxu0 0
        %1467 = vmatmul.mubr.bf16.gmra.mrb[0].mxu0 %v824
        %v1468 = vpop.f32.mrb[0].mxu0
        %v1469 = vadd.f32 0.0, %v1468
        %v1470 = vpop.f32.mrb[0].mxu0
        %v1471 = vpop.f32.mrb[0].mxu0
        %v1472 = vadd.f32 0.0, %v1471
        %v1473 = vpop.f32.mrb[0].mxu0
        %1474 = vmatprep.mubr.bf16.mxu0 0
        %1475 = vmatmul.mubr.bf16.gmra.mrb[0].mxu0 %v825
        %v1476 = vpop.f32.mrb[0].mxu0
        %v1477 = vadd.f32 0.0, %v1476
        %v1478 = vpop.f32.mrb[0].mxu0
        %v1479 = vpop.f32.mrb[0].mxu0
        %v1480 = vadd.f32 0.0, %v1479
        %v1481 = vpop.f32.mrb[0].mxu0
        %1482 = vdwg.mxu0
        %v1483 = vld [vmem:[%s315] sm:$0xf]
        %v1484 = vld [vmem:[%s3] sm:$0xf]
        %v1485 = vld [vmem:[%s3 + $0x4] sm:$0xf]
        %v1486 = vld [vmem:[%s4] sm:$0x1]
        %v1488 = vlaneseq
        %v1489 = vshrl.u32 %v1488, 7
        %v1490 = vsub.s32 0, %v1489
        %v1491 = vrot.slane %v1486, %v1490
        %v1495 = vunpack.c.l.b16 %v1484
        %v1496 = vunpack.c.l.b16 %v1485
        %v1497 = vpack.c.b16 %v1496, %v1495
        %vm1499 = vcmask 130048
        %v1501 = vsel %vm1499, %v1483, 0
        %1503 = vmatprep.subr.bf16.mxu0 0
        %1504 = vmatpush1.bf16.msra.mxu0 %v1497
        %1505 = vmatprep.subr.bf16.mxu0 0
        %1506 = vmatpush1.bf16.msra.mxu0 0
        %1507 = vmatprep.subr.bf16.mxu0 0
        %1508 = vmatpush1.bf16.msra.mxu0 0
        %1509 = vmatprep.subr.bf16.mxu0 0
        %1510 = vmatpush1.bf16.msra.mxu0 0
        %1511 = vmatprep.subr.bf16.mxu0 0
        %1512 = vmatpush1.bf16.msra.mxu0 0
        %1513 = vmatprep.subr.bf16.mxu0 0
        %1514 = vmatpush1.bf16.msra.mxu0 0
        %1515 = vmatprep.subr.bf16.mxu0 0
        %1516 = vmatpush1.bf16.msra.mxu0 0
        %1517 = vmatprep.subr.bf16.mxu0 0
        %1518 = vmatpush1.bf16.msra.mxu0 0
        %1519 = vmatprep.subr.bf16.mxu0 0
        %1520 = vmatpush1.bf16.msra.mxu0 0
        %1521 = vmatprep.subr.bf16.mxu0 0
        %1522 = vmatpush1.bf16.msra.mxu0 0
        %1523 = vmatprep.subr.bf16.mxu0 0
        %1524 = vmatpush1.bf16.msra.mxu0 0
        %1525 = vmatprep.subr.bf16.mxu0 0
        %1526 = vmatpush1.bf16.msra.mxu0 0
        %1527 = vmatprep.subr.bf16.mxu0 0
        %1528 = vmatpush1.bf16.msra.mxu0 0
        %1529 = vmatprep.subr.bf16.mxu0 0
        %1530 = vmatpush1.bf16.msra.mxu0 0
        %1531 = vmatprep.subr.bf16.mxu0 0
        %1532 = vmatpush1.bf16.msra.mxu0 0
        %1533 = vmatprep.subr.bf16.mxu0 0
        %1534 = vmatpush1.bf16.msra.mxu0 0
        %1535 = vmatprep.mubr.bf16.mxu0 0
        %1536 = vmatmul.mubr.bf16.gmra.mrb[0].mxu0 %v1501
        %v1537 = vpop.f32.mrb[0].mxu0
        %v1538 = vadd.f32 %v1491, %v1537
        %v1539 = vpop.f32.mrb[0].mxu0
        %v1540 = vpop.f32.mrb[0].mxu0
        %v1541 = vpop.f32.mrb[0].mxu0
        %1542 = vdwg.mxu0
        %v1544 = vcombine.high %v1538, %v1538
        %v1546 = vunpack.c.l.s4 1966171168
        %v1547 = vunpack.c.0.s8 %v1546
        %v1548 = vlaneseq
        %v1549 = vshrl.u32 %v1548, 7
        %v1550 = vsub.s32 %v1547, %v1549
        %v1551 = vrot.slane %v1538, %v1550
        %v1553 = vunpack.c.l.s4 1966171168
        %v1554 = vunpack.c.0.s8 %v1553
        %v1555 = vlaneseq
        %v1556 = vshrl.u32 %v1555, 7
        %v1557 = vsub.s32 %v1554, %v1556
        %v1558 = vrot.slane %v1544, %v1557
        %v1559 = vcombine.high %v1551, %v1551
        %v1560 = vcombine.high %v1558, %v1558
        %v1562 = vunpack.c.l.s4 1966171168
        %v1563 = vunpack.c.0.s8 %v1562
        %v1564 = vlaneseq
        %v1565 = vshrl.u32 %v1564, 7
        %v1566 = vsub.s32 %v1563, %v1565
        %v1567 = vrot.slane %v1551, %v1566
        %v1569 = vunpack.c.l.s4 1966171168
        %v1570 = vunpack.c.0.s8 %v1569
        %v1571 = vlaneseq
        %v1572 = vshrl.u32 %v1571, 7
        %v1573 = vsub.s32 %v1570, %v1572
        %v1574 = vrot.slane %v1558, %v1573
        %v1576 = vunpack.c.l.s4 1966171168
        %v1577 = vunpack.c.0.s8 %v1576
        %v1578 = vlaneseq
        %v1579 = vshrl.u32 %v1578, 7
        %v1580 = vsub.s32 %v1577, %v1579
        %v1581 = vrot.slane %v1559, %v1580
        %v1583 = vunpack.c.l.s4 1966171168
        %v1584 = vunpack.c.0.s8 %v1583
        %v1585 = vlaneseq
        %v1586 = vshrl.u32 %v1585, 7
        %v1587 = vsub.s32 %v1584, %v1586
        %v1588 = vrot.slane %v1560, %v1587
        %v1589 = vcombine.high %v1567, %v1567
        %v1590 = vcombine.high %v1574, %v1574
        %v1591 = vcombine.high %v1581, %v1581
        %v1592 = vcombine.high %v1588, %v1588
        %v1593 = vlaneseq
        %v1594 = vshrl.u32 %v1593, 7
        %v1595 = vsub.s32 0, %v1594
        %v1596 = vrot.slane %v1567, %v1595
        %v1597 = vlaneseq
        %v1598 = vshrl.u32 %v1597, 7
        %v1599 = vsub.s32 0, %v1598
        %v1600 = vrot.slane %v1581, %v1599
        %v1601 = vlaneseq
        %v1602 = vshrl.u32 %v1601, 7
        %v1603 = vsub.s32 0, %v1602
        %v1604 = vrot.slane %v1589, %v1603
        %v1605 = vlaneseq
        %v1606 = vshrl.u32 %v1605, 7
        %v1607 = vsub.s32 0, %v1606
        %v1608 = vrot.slane %v1591, %v1607
        %v1609 = vlaneseq
        %v1610 = vshrl.u32 %v1609, 7
        %v1611 = vsub.s32 0, %v1610
        %v1612 = vrot.slane %v1574, %v1611
        %v1613 = vlaneseq
        %v1614 = vshrl.u32 %v1613, 7
        %v1615 = vsub.s32 0, %v1614
        %v1616 = vrot.slane %v1588, %v1615
        %v1617 = vlaneseq
        %v1618 = vshrl.u32 %v1617, 7
        %v1619 = vsub.s32 0, %v1618
        %v1620 = vrot.slane %v1590, %v1619
        %v1621 = vlaneseq
        %v1622 = vshrl.u32 %v1621, 7
        %v1623 = vsub.s32 0, %v1622
        %v1624 = vrot.slane %v1592, %v1623
        %v1633 = vadd.f32 %v973, %v1596
        %v1634 = vadd.f32 %v976, %v1596
        %v1635 = vadd.f32 %v981, %v1596
        %v1636 = vadd.f32 %v984, %v1596
        %v1637 = vadd.f32 %v989, %v1596
        %v1638 = vadd.f32 %v992, %v1596
        %v1639 = vadd.f32 %v997, %v1596
        %v1640 = vadd.f32 %v1000, %v1596
        %v1641 = vadd.f32 %v1005, %v1596
        %v1642 = vadd.f32 %v1008, %v1596
        %v1643 = vadd.f32 %v1013, %v1596
        %v1644 = vadd.f32 %v1016, %v1596
        %v1645 = vadd.f32 %v1021, %v1596
        %v1646 = vadd.f32 %v1024, %v1596
        %v1647 = vadd.f32 %v1029, %v1596
        %v1648 = vadd.f32 %v1032, %v1596
        %v1649 = vadd.f32 %v1037, %v1600
        %v1650 = vadd.f32 %v1040, %v1600
        %v1651 = vadd.f32 %v1045, %v1600
        %v1652 = vadd.f32 %v1048, %v1600
        %v1653 = vadd.f32 %v1053, %v1600
        %v1654 = vadd.f32 %v1056, %v1600
        %v1655 = vadd.f32 %v1061, %v1600
        %v1656 = vadd.f32 %v1064, %v1600
        %v1657 = vadd.f32 %v1069, %v1600
        %v1658 = vadd.f32 %v1072, %v1600
        %v1659 = vadd.f32 %v1077, %v1600
        %v1660 = vadd.f32 %v1080, %v1600
        %v1661 = vadd.f32 %v1085, %v1600
        %v1662 = vadd.f32 %v1088, %v1600
        %v1663 = vadd.f32 %v1093, %v1600
        %v1664 = vadd.f32 %v1096, %v1600
        %v1665 = vadd.f32 %v1101, %v1604
        %v1666 = vadd.f32 %v1104, %v1604
        %v1667 = vadd.f32 %v1109, %v1604
        %v1668 = vadd.f32 %v1112, %v1604
        %v1669 = vadd.f32 %v1117, %v1604
        %v1670 = vadd.f32 %v1120, %v1604
        %v1671 = vadd.f32 %v1125, %v1604
        %v1672 = vadd.f32 %v1128, %v1604
        %v1673 = vadd.f32 %v1133, %v1604
        %v1674 = vadd.f32 %v1136, %v1604
        %v1675 = vadd.f32 %v1141, %v1604
        %v1676 = vadd.f32 %v1144, %v1604
        %v1677 = vadd.f32 %v1149, %v1604
        %v1678 = vadd.f32 %v1152, %v1604
        %v1679 = vadd.f32 %v1157, %v1604
        %v1680 = vadd.f32 %v1160, %v1604
        %v1681 = vadd.f32 %v1165, %v1608
        %v1682 = vadd.f32 %v1168, %v1608
        %v1683 = vadd.f32 %v1173, %v1608
        %v1684 = vadd.f32 %v1176, %v1608
        %v1685 = vadd.f32 %v1181, %v1608
        %v1686 = vadd.f32 %v1184, %v1608
        %v1687 = vadd.f32 %v1189, %v1608
        %v1688 = vadd.f32 %v1192, %v1608
        %v1689 = vadd.f32 %v1197, %v1608
        %v1690 = vadd.f32 %v1200, %v1608
        %v1691 = vadd.f32 %v1205, %v1608
        %v1692 = vadd.f32 %v1208, %v1608
        %v1693 = vadd.f32 %v1213, %v1608
        %v1694 = vadd.f32 %v1216, %v1608
        %v1695 = vadd.f32 %v1221, %v1608
        %v1696 = vadd.f32 %v1224, %v1608
        %v1697 = vadd.f32 %v1229, %v1612
        %v1698 = vadd.f32 %v1232, %v1612
        %v1699 = vadd.f32 %v1237, %v1612
        %v1700 = vadd.f32 %v1240, %v1612
        %v1701 = vadd.f32 %v1245, %v1612
        %v1702 = vadd.f32 %v1248, %v1612
        %v1703 = vadd.f32 %v1253, %v1612
        %v1704 = vadd.f32 %v1256, %v1612
        %v1705 = vadd.f32 %v1261, %v1612
        %v1706 = vadd.f32 %v1264, %v1612
        %v1707 = vadd.f32 %v1269, %v1612
        %v1708 = vadd.f32 %v1272, %v1612
        %v1709 = vadd.f32 %v1277, %v1612
        %v1710 = vadd.f32 %v1280, %v1612
        %v1711 = vadd.f32 %v1285, %v1612
        %v1712 = vadd.f32 %v1288, %v1612
        %v1713 = vadd.f32 %v1293, %v1616
        %v1714 = vadd.f32 %v1296, %v1616
        %v1715 = vadd.f32 %v1301, %v1616
        %v1716 = vadd.f32 %v1304, %v1616
        %v1717 = vadd.f32 %v1309, %v1616
        %v1718 = vadd.f32 %v1312, %v1616
        %v1719 = vadd.f32 %v1317, %v1616
        %v1720 = vadd.f32 %v1320, %v1616
        %v1721 = vadd.f32 %v1325, %v1616
        %v1722 = vadd.f32 %v1328, %v1616
        %v1723 = vadd.f32 %v1333, %v1616
        %v1724 = vadd.f32 %v1336, %v1616
        %v1725 = vadd.f32 %v1341, %v1616
        %v1726 = vadd.f32 %v1344, %v1616
        %v1727 = vadd.f32 %v1349, %v1616
        %v1728 = vadd.f32 %v1352, %v1616
        %v1729 = vadd.f32 %v1357, %v1620
        %v1730 = vadd.f32 %v1360, %v1620
        %v1731 = vadd.f32 %v1365, %v1620
        %v1732 = vadd.f32 %v1368, %v1620
        %v1733 = vadd.f32 %v1373, %v1620
        %v1734 = vadd.f32 %v1376, %v1620
        %v1735 = vadd.f32 %v1381, %v1620
        %v1736 = vadd.f32 %v1384, %v1620
        %v1737 = vadd.f32 %v1389, %v1620
        %v1738 = vadd.f32 %v1392, %v1620
        %v1739 = vadd.f32 %v1397, %v1620
        %v1740 = vadd.f32 %v1400, %v1620
        %v1741 = vadd.f32 %v1405, %v1620
        %v1742 = vadd.f32 %v1408, %v1620
        %v1743 = vadd.f32 %v1413, %v1620
        %v1744 = vadd.f32 %v1416, %v1620
        %v1745 = vadd.f32 %v1421, %v1624
        %v1746 = vadd.f32 %v1424, %v1624
        %v1747 = vadd.f32 %v1429, %v1624
        %v1748 = vadd.f32 %v1432, %v1624
        %v1749 = vadd.f32 %v1437, %v1624
        %v1750 = vadd.f32 %v1440, %v1624
        %v1751 = vadd.f32 %v1445, %v1624
        %v1752 = vadd.f32 %v1448, %v1624
        %v1753 = vadd.f32 %v1453, %v1624
        %v1754 = vadd.f32 %v1456, %v1624
        %v1755 = vadd.f32 %v1461, %v1624
        %v1756 = vadd.f32 %v1464, %v1624
        %v1757 = vadd.f32 %v1469, %v1624
        %v1758 = vadd.f32 %v1472, %v1624
        %v1759 = vadd.f32 %v1477, %v1624
        %v1760 = vadd.f32 %v1480, %v1624
        %v1761 = vtanh.pop %v1633
        %v1762 = vtanh.pop %v1634
        %v1763 = vtanh.pop %v1635
        %v1764 = vtanh.pop %v1636
        %v1765 = vtanh.pop %v1637
        %v1766 = vtanh.pop %v1638
        %v1767 = vtanh.pop %v1639
        %v1768 = vtanh.pop %v1640
        %v1769 = vtanh.pop %v1641
        %v1770 = vtanh.pop %v1642
        %v1771 = vtanh.pop %v1643
        %v1772 = vtanh.pop %v1644
        %v1773 = vtanh.pop %v1645
        %v1774 = vtanh.pop %v1646
        %v1775 = vtanh.pop %v1647
        %v1776 = vtanh.pop %v1648
        %v1777 = vtanh.pop %v1649
        %v1778 = vtanh.pop %v1650
        %v1779 = vtanh.pop %v1651
        %v1780 = vtanh.pop %v1652
        %v1781 = vtanh.pop %v1653
        %v1782 = vtanh.pop %v1654
        %v1783 = vtanh.pop %v1655
        %v1784 = vtanh.pop %v1656
        %v1785 = vtanh.pop %v1657
        %v1786 = vtanh.pop %v1658
        %v1787 = vtanh.pop %v1659
        %v1788 = vtanh.pop %v1660
        %v1789 = vtanh.pop %v1661
        %v1790 = vtanh.pop %v1662
        %v1791 = vtanh.pop %v1663
        %v1792 = vtanh.pop %v1664
        %v1793 = vtanh.pop %v1665
        %v1794 = vtanh.pop %v1666
        %v1795 = vtanh.pop %v1667
        %v1796 = vtanh.pop %v1668
        %v1797 = vtanh.pop %v1669
        %v1798 = vtanh.pop %v1670
        %v1799 = vtanh.pop %v1671
        %v1800 = vtanh.pop %v1672
        %v1801 = vtanh.pop %v1673
        %v1802 = vtanh.pop %v1674
        %v1803 = vtanh.pop %v1675
        %v1804 = vtanh.pop %v1676
        %v1805 = vtanh.pop %v1677
        %v1806 = vtanh.pop %v1678
        %v1807 = vtanh.pop %v1679
        %v1808 = vtanh.pop %v1680
        %v1809 = vtanh.pop %v1681
        %v1810 = vtanh.pop %v1682
        %v1811 = vtanh.pop %v1683
        %v1812 = vtanh.pop %v1684
        %v1813 = vtanh.pop %v1685
        %v1814 = vtanh.pop %v1686
        %v1815 = vtanh.pop %v1687
        %v1816 = vtanh.pop %v1688
        %v1817 = vtanh.pop %v1689
        %v1818 = vtanh.pop %v1690
        %v1819 = vtanh.pop %v1691
        %v1820 = vtanh.pop %v1692
        %v1821 = vtanh.pop %v1693
        %v1822 = vtanh.pop %v1694
        %v1823 = vtanh.pop %v1695
        %v1824 = vtanh.pop %v1696
        %v1825 = vtanh.pop %v1697
        %v1826 = vtanh.pop %v1698
        %v1827 = vtanh.pop %v1699
        %v1828 = vtanh.pop %v1700
        %v1829 = vtanh.pop %v1701
        %v1830 = vtanh.pop %v1702
        %v1831 = vtanh.pop %v1703
        %v1832 = vtanh.pop %v1704
        %v1833 = vtanh.pop %v1705
        %v1834 = vtanh.pop %v1706
        %v1835 = vtanh.pop %v1707
        %v1836 = vtanh.pop %v1708
        %v1837 = vtanh.pop %v1709
        %v1838 = vtanh.pop %v1710
        %v1839 = vtanh.pop %v1711
        %v1840 = vtanh.pop %v1712
        %v1841 = vtanh.pop %v1713
        %v1842 = vtanh.pop %v1714
        %v1843 = vtanh.pop %v1715
        %v1844 = vtanh.pop %v1716
        %v1845 = vtanh.pop %v1717
        %v1846 = vtanh.pop %v1718
        %v1847 = vtanh.pop %v1719
        %v1848 = vtanh.pop %v1720
        %v1849 = vtanh.pop %v1721
        %v1850 = vtanh.pop %v1722
        %v1851 = vtanh.pop %v1723
        %v1852 = vtanh.pop %v1724
        %v1853 = vtanh.pop %v1725
        %v1854 = vtanh.pop %v1726
        %v1855 = vtanh.pop %v1727
        %v1856 = vtanh.pop %v1728
        %v1857 = vtanh.pop %v1729
        %v1858 = vtanh.pop %v1730
        %v1859 = vtanh.pop %v1731
        %v1860 = vtanh.pop %v1732
        %v1861 = vtanh.pop %v1733
        %v1862 = vtanh.pop %v1734
        %v1863 = vtanh.pop %v1735
        %v1864 = vtanh.pop %v1736
        %v1865 = vtanh.pop %v1737
        %v1866 = vtanh.pop %v1738
        %v1867 = vtanh.pop %v1739
        %v1868 = vtanh.pop %v1740
        %v1869 = vtanh.pop %v1741
        %v1870 = vtanh.pop %v1742
        %v1871 = vtanh.pop %v1743
        %v1872 = vtanh.pop %v1744
        %v1873 = vtanh.pop %v1745
        %v1874 = vtanh.pop %v1746
        %v1875 = vtanh.pop %v1747
        %v1876 = vtanh.pop %v1748
        %v1877 = vtanh.pop %v1749
        %v1878 = vtanh.pop %v1750
        %v1879 = vtanh.pop %v1751
        %v1880 = vtanh.pop %v1752
        %v1881 = vtanh.pop %v1753
        %v1882 = vtanh.pop %v1754
        %v1883 = vtanh.pop %v1755
        %v1884 = vtanh.pop %v1756
        %v1885 = vtanh.pop %v1757
        %v1886 = vtanh.pop %v1758
        %v1887 = vtanh.pop %v1759
        %v1888 = vtanh.pop %v1760
        %v1889 = vld [vmem:[%s5] sm:$0x1]
        %v1891 = vlaneseq
        %v1892 = vshrl.u32 %v1891, 7
        %v1893 = vsub.s32 0, %v1892
        %v1894 = vrot.slane %v1889, %v1893
        %v1896 = vmul.f32 %v1761, %v1894
        %v1897 = vmul.f32 %v1762, %v1894
        %v1898 = vmul.f32 %v1763, %v1894
        %v1899 = vmul.f32 %v1764, %v1894
        %v1900 = vmul.f32 %v1765, %v1894
        %v1901 = vmul.f32 %v1766, %v1894
        %v1902 = vmul.f32 %v1767, %v1894
        %v1903 = vmul.f32 %v1768, %v1894
        %v1904 = vmul.f32 %v1769, %v1894
        %v1905 = vmul.f32 %v1770, %v1894
        %v1906 = vmul.f32 %v1771, %v1894
        %v1907 = vmul.f32 %v1772, %v1894
        %v1908 = vmul.f32 %v1773, %v1894
        %v1909 = vmul.f32 %v1774, %v1894
        %v1910 = vmul.f32 %v1775, %v1894
        %v1911 = vmul.f32 %v1776, %v1894
        %v1912 = vmul.f32 %v1777, %v1894
        %v1913 = vmul.f32 %v1778, %v1894
        %v1914 = vmul.f32 %v1779, %v1894
        %v1915 = vmul.f32 %v1780, %v1894
        %v1916 = vmul.f32 %v1781, %v1894
        %v1917 = vmul.f32 %v1782, %v1894
        %v1918 = vmul.f32 %v1783, %v1894
        %v1919 = vmul.f32 %v1784, %v1894
        %v1920 = vmul.f32 %v1785, %v1894
        %v1921 = vmul.f32 %v1786, %v1894
        %v1922 = vmul.f32 %v1787, %v1894
        %v1923 = vmul.f32 %v1788, %v1894
        %v1924 = vmul.f32 %v1789, %v1894
        %v1925 = vmul.f32 %v1790, %v1894
        %v1926 = vmul.f32 %v1791, %v1894
        %v1927 = vmul.f32 %v1792, %v1894
        %v1928 = vmul.f32 %v1793, %v1894
        %v1929 = vmul.f32 %v1794, %v1894
        %v1930 = vmul.f32 %v1795, %v1894
        %v1931 = vmul.f32 %v1796, %v1894
        %v1932 = vmul.f32 %v1797, %v1894
        %v1933 = vmul.f32 %v1798, %v1894
        %v1934 = vmul.f32 %v1799, %v1894
        %v1935 = vmul.f32 %v1800, %v1894
        %v1936 = vmul.f32 %v1801, %v1894
        %v1937 = vmul.f32 %v1802, %v1894
        %v1938 = vmul.f32 %v1803, %v1894
        %v1939 = vmul.f32 %v1804, %v1894
        %v1940 = vmul.f32 %v1805, %v1894
        %v1941 = vmul.f32 %v1806, %v1894
        %v1942 = vmul.f32 %v1807, %v1894
        %v1943 = vmul.f32 %v1808, %v1894
        %v1944 = vmul.f32 %v1809, %v1894
        %v1945 = vmul.f32 %v1810, %v1894
        %v1946 = vmul.f32 %v1811, %v1894
        %v1947 = vmul.f32 %v1812, %v1894
        %v1948 = vmul.f32 %v1813, %v1894
        %v1949 = vmul.f32 %v1814, %v1894
        %v1950 = vmul.f32 %v1815, %v1894
        %v1951 = vmul.f32 %v1816, %v1894
        %v1952 = vmul.f32 %v1817, %v1894
        %v1953 = vmul.f32 %v1818, %v1894
        %v1954 = vmul.f32 %v1819, %v1894
        %v1955 = vmul.f32 %v1820, %v1894
        %v1956 = vmul.f32 %v1821, %v1894
        %v1957 = vmul.f32 %v1822, %v1894
        %v1958 = vmul.f32 %v1823, %v1894
        %v1959 = vmul.f32 %v1824, %v1894
        %v1960 = vmul.f32 %v1825, %v1894
        %v1961 = vmul.f32 %v1826, %v1894
        %v1962 = vmul.f32 %v1827, %v1894
        %v1963 = vmul.f32 %v1828, %v1894
        %v1964 = vmul.f32 %v1829, %v1894
        %v1965 = vmul.f32 %v1830, %v1894
        %v1966 = vmul.f32 %v1831, %v1894
        %v1967 = vmul.f32 %v1832, %v1894
        %v1968 = vmul.f32 %v1833, %v1894
        %v1969 = vmul.f32 %v1834, %v1894
        %v1970 = vmul.f32 %v1835, %v1894
        %v1971 = vmul.f32 %v1836, %v1894
        %v1972 = vmul.f32 %v1837, %v1894
        %v1973 = vmul.f32 %v1838, %v1894
        %v1974 = vmul.f32 %v1839, %v1894
        %v1975 = vmul.f32 %v1840, %v1894
        %v1976 = vmul.f32 %v1841, %v1894
        %v1977 = vmul.f32 %v1842, %v1894
        %v1978 = vmul.f32 %v1843, %v1894
        %v1979 = vmul.f32 %v1844, %v1894
        %v1980 = vmul.f32 %v1845, %v1894
        %v1981 = vmul.f32 %v1846, %v1894
        %v1982 = vmul.f32 %v1847, %v1894
        %v1983 = vmul.f32 %v1848, %v1894
        %v1984 = vmul.f32 %v1849, %v1894
        %v1985 = vmul.f32 %v1850, %v1894
        %v1986 = vmul.f32 %v1851, %v1894
        %v1987 = vmul.f32 %v1852, %v1894
        %v1988 = vmul.f32 %v1853, %v1894
        %v1989 = vmul.f32 %v1854, %v1894
        %v1990 = vmul.f32 %v1855, %v1894
        %v1991 = vmul.f32 %v1856, %v1894
        %v1992 = vmul.f32 %v1857, %v1894
        %v1993 = vmul.f32 %v1858, %v1894
        %v1994 = vmul.f32 %v1859, %v1894
        %v1995 = vmul.f32 %v1860, %v1894
        %v1996 = vmul.f32 %v1861, %v1894
        %v1997 = vmul.f32 %v1862, %v1894
        %v1998 = vmul.f32 %v1863, %v1894
        %v1999 = vmul.f32 %v1864, %v1894
        %v2000 = vmul.f32 %v1865, %v1894
        %v2001 = vmul.f32 %v1866, %v1894
        %v2002 = vmul.f32 %v1867, %v1894
        %v2003 = vmul.f32 %v1868, %v1894
        %v2004 = vmul.f32 %v1869, %v1894
        %v2005 = vmul.f32 %v1870, %v1894
        %v2006 = vmul.f32 %v1871, %v1894
        %v2007 = vmul.f32 %v1872, %v1894
        %v2008 = vmul.f32 %v1873, %v1894
        %v2009 = vmul.f32 %v1874, %v1894
        %v2010 = vmul.f32 %v1875, %v1894
        %v2011 = vmul.f32 %v1876, %v1894
        %v2012 = vmul.f32 %v1877, %v1894
        %v2013 = vmul.f32 %v1878, %v1894
        %v2014 = vmul.f32 %v1879, %v1894
        %v2015 = vmul.f32 %v1880, %v1894
        %v2016 = vmul.f32 %v1881, %v1894
        %v2017 = vmul.f32 %v1882, %v1894
        %v2018 = vmul.f32 %v1883, %v1894
        %v2019 = vmul.f32 %v1884, %v1894
        %v2020 = vmul.f32 %v1885, %v1894
        %v2021 = vmul.f32 %v1886, %v1894
        %v2022 = vmul.f32 %v1887, %v1894
        %v2023 = vmul.f32 %v1888, %v1894
        %2024 = vadd.xlane.f32.xlu0 %v1896
        %v2025 = vpop.xlane.xlu0 %2024
        %2026 = vadd.xlane.f32.xlu0 %v1897
        %v2027 = vpop.xlane.xlu0 %2026
        %2028 = vadd.xlane.f32.xlu0 %v1898
        %v2029 = vpop.xlane.xlu0 %2028
        %2030 = vadd.xlane.f32.xlu0 %v1899
        %v2031 = vpop.xlane.xlu0 %2030
        %2032 = vadd.xlane.f32.xlu0 %v1900
        %v2033 = vpop.xlane.xlu0 %2032
        %2034 = vadd.xlane.f32.xlu0 %v1901
        %v2035 = vpop.xlane.xlu0 %2034
        %2036 = vadd.xlane.f32.xlu0 %v1902
        %v2037 = vpop.xlane.xlu0 %2036
        %2038 = vadd.xlane.f32.xlu0 %v1903
        %v2039 = vpop.xlane.xlu0 %2038
        %2040 = vadd.xlane.f32.xlu0 %v1904
        %v2041 = vpop.xlane.xlu0 %2040
        %2042 = vadd.xlane.f32.xlu0 %v1905
        %v2043 = vpop.xlane.xlu0 %2042
        %2044 = vadd.xlane.f32.xlu0 %v1906
        %v2045 = vpop.xlane.xlu0 %2044
        %2046 = vadd.xlane.f32.xlu0 %v1907
        %v2047 = vpop.xlane.xlu0 %2046
        %2048 = vadd.xlane.f32.xlu0 %v1908
        %v2049 = vpop.xlane.xlu0 %2048
        %2050 = vadd.xlane.f32.xlu0 %v1909
        %v2051 = vpop.xlane.xlu0 %2050
        %2052 = vadd.xlane.f32.xlu0 %v1910
        %v2053 = vpop.xlane.xlu0 %2052
        %2054 = vadd.xlane.f32.xlu0 %v1911
        %v2055 = vpop.xlane.xlu0 %2054
        %2056 = vadd.xlane.f32.xlu0 %v1912
        %v2057 = vpop.xlane.xlu0 %2056
        %2058 = vadd.xlane.f32.xlu0 %v1913
        %v2059 = vpop.xlane.xlu0 %2058
        %2060 = vadd.xlane.f32.xlu0 %v1914
        %v2061 = vpop.xlane.xlu0 %2060
        %2062 = vadd.xlane.f32.xlu0 %v1915
        %v2063 = vpop.xlane.xlu0 %2062
        %2064 = vadd.xlane.f32.xlu0 %v1916
        %v2065 = vpop.xlane.xlu0 %2064
        %2066 = vadd.xlane.f32.xlu0 %v1917
        %v2067 = vpop.xlane.xlu0 %2066
        %2068 = vadd.xlane.f32.xlu0 %v1918
        %v2069 = vpop.xlane.xlu0 %2068
        %2070 = vadd.xlane.f32.xlu0 %v1919
        %v2071 = vpop.xlane.xlu0 %2070
        %2072 = vadd.xlane.f32.xlu0 %v1920
        %v2073 = vpop.xlane.xlu0 %2072
        %2074 = vadd.xlane.f32.xlu0 %v1921
        %v2075 = vpop.xlane.xlu0 %2074
        %2076 = vadd.xlane.f32.xlu0 %v1922
        %v2077 = vpop.xlane.xlu0 %2076
        %2078 = vadd.xlane.f32.xlu0 %v1923
        %v2079 = vpop.xlane.xlu0 %2078
        %2080 = vadd.xlane.f32.xlu0 %v1924
        %v2081 = vpop.xlane.xlu0 %2080
        %2082 = vadd.xlane.f32.xlu0 %v1925
        %v2083 = vpop.xlane.xlu0 %2082
        %2084 = vadd.xlane.f32.xlu0 %v1926
        %v2085 = vpop.xlane.xlu0 %2084
        %2086 = vadd.xlane.f32.xlu0 %v1927
        %v2087 = vpop.xlane.xlu0 %2086
        %2088 = vadd.xlane.f32.xlu0 %v1928
        %v2089 = vpop.xlane.xlu0 %2088
        %2090 = vadd.xlane.f32.xlu0 %v1929
        %v2091 = vpop.xlane.xlu0 %2090
        %2092 = vadd.xlane.f32.xlu0 %v1930
        %v2093 = vpop.xlane.xlu0 %2092
        %2094 = vadd.xlane.f32.xlu0 %v1931
        %v2095 = vpop.xlane.xlu0 %2094
        %2096 = vadd.xlane.f32.xlu0 %v1932
        %v2097 = vpop.xlane.xlu0 %2096
        %2098 = vadd.xlane.f32.xlu0 %v1933
        %v2099 = vpop.xlane.xlu0 %2098
        %2100 = vadd.xlane.f32.xlu0 %v1934
        %v2101 = vpop.xlane.xlu0 %2100
        %2102 = vadd.xlane.f32.xlu0 %v1935
        %v2103 = vpop.xlane.xlu0 %2102
        %2104 = vadd.xlane.f32.xlu0 %v1936
        %v2105 = vpop.xlane.xlu0 %2104
        %2106 = vadd.xlane.f32.xlu0 %v1937
        %v2107 = vpop.xlane.xlu0 %2106
        %2108 = vadd.xlane.f32.xlu0 %v1938
        %v2109 = vpop.xlane.xlu0 %2108
        %2110 = vadd.xlane.f32.xlu0 %v1939
        %v2111 = vpop.xlane.xlu0 %2110
        %2112 = vadd.xlane.f32.xlu0 %v1940
        %v2113 = vpop.xlane.xlu0 %2112
        %2114 = vadd.xlane.f32.xlu0 %v1941
        %v2115 = vpop.xlane.xlu0 %2114
        %2116 = vadd.xlane.f32.xlu0 %v1942
        %v2117 = vpop.xlane.xlu0 %2116
        %2118 = vadd.xlane.f32.xlu0 %v1943
        %v2119 = vpop.xlane.xlu0 %2118
        %2120 = vadd.xlane.f32.xlu0 %v1944
        %v2121 = vpop.xlane.xlu0 %2120
        %2122 = vadd.xlane.f32.xlu0 %v1945
        %v2123 = vpop.xlane.xlu0 %2122
        %2124 = vadd.xlane.f32.xlu0 %v1946
        %v2125 = vpop.xlane.xlu0 %2124
        %2126 = vadd.xlane.f32.xlu0 %v1947
        %v2127 = vpop.xlane.xlu0 %2126
        %2128 = vadd.xlane.f32.xlu0 %v1948
        %v2129 = vpop.xlane.xlu0 %2128
        %2130 = vadd.xlane.f32.xlu0 %v1949
        %v2131 = vpop.xlane.xlu0 %2130
        %2132 = vadd.xlane.f32.xlu0 %v1950
        %v2133 = vpop.xlane.xlu0 %2132
        %2134 = vadd.xlane.f32.xlu0 %v1951
        %v2135 = vpop.xlane.xlu0 %2134
        %2136 = vadd.xlane.f32.xlu0 %v1952
        %v2137 = vpop.xlane.xlu0 %2136
        %2138 = vadd.xlane.f32.xlu0 %v1953
        %v2139 = vpop.xlane.xlu0 %2138
        %2140 = vadd.xlane.f32.xlu0 %v1954
        %v2141 = vpop.xlane.xlu0 %2140
        %2142 = vadd.xlane.f32.xlu0 %v1955
        %v2143 = vpop.xlane.xlu0 %2142
        %2144 = vadd.xlane.f32.xlu0 %v1956
        %v2145 = vpop.xlane.xlu0 %2144
        %2146 = vadd.xlane.f32.xlu0 %v1957
        %v2147 = vpop.xlane.xlu0 %2146
        %2148 = vadd.xlane.f32.xlu0 %v1958
        %v2149 = vpop.xlane.xlu0 %2148
        %2150 = vadd.xlane.f32.xlu0 %v1959
        %v2151 = vpop.xlane.xlu0 %2150
        %2152 = vadd.xlane.f32.xlu0 %v1960
        %v2153 = vpop.xlane.xlu0 %2152
        %2154 = vadd.xlane.f32.xlu0 %v1961
        %v2155 = vpop.xlane.xlu0 %2154
        %2156 = vadd.xlane.f32.xlu0 %v1962
        %v2157 = vpop.xlane.xlu0 %2156
        %2158 = vadd.xlane.f32.xlu0 %v1963
        %v2159 = vpop.xlane.xlu0 %2158
        %2160 = vadd.xlane.f32.xlu0 %v1964
        %v2161 = vpop.xlane.xlu0 %2160
        %2162 = vadd.xlane.f32.xlu0 %v1965
        %v2163 = vpop.xlane.xlu0 %2162
        %2164 = vadd.xlane.f32.xlu0 %v1966
        %v2165 = vpop.xlane.xlu0 %2164
        %2166 = vadd.xlane.f32.xlu0 %v1967
        %v2167 = vpop.xlane.xlu0 %2166
        %2168 = vadd.xlane.f32.xlu0 %v1968
        %v2169 = vpop.xlane.xlu0 %2168
        %2170 = vadd.xlane.f32.xlu0 %v1969
        %v2171 = vpop.xlane.xlu0 %2170
        %2172 = vadd.xlane.f32.xlu0 %v1970
        %v2173 = vpop.xlane.xlu0 %2172
        %2174 = vadd.xlane.f32.xlu0 %v1971
        %v2175 = vpop.xlane.xlu0 %2174
        %2176 = vadd.xlane.f32.xlu0 %v1972
        %v2177 = vpop.xlane.xlu0 %2176
        %2178 = vadd.xlane.f32.xlu0 %v1973
        %v2179 = vpop.xlane.xlu0 %2178
        %2180 = vadd.xlane.f32.xlu0 %v1974
        %v2181 = vpop.xlane.xlu0 %2180
        %2182 = vadd.xlane.f32.xlu0 %v1975
        %v2183 = vpop.xlane.xlu0 %2182
        %2184 = vadd.xlane.f32.xlu0 %v1976
        %v2185 = vpop.xlane.xlu0 %2184
        %2186 = vadd.xlane.f32.xlu0 %v1977
        %v2187 = vpop.xlane.xlu0 %2186
        %2188 = vadd.xlane.f32.xlu0 %v1978
        %v2189 = vpop.xlane.xlu0 %2188
        %2190 = vadd.xlane.f32.xlu0 %v1979
        %v2191 = vpop.xlane.xlu0 %2190
        %2192 = vadd.xlane.f32.xlu0 %v1980
        %v2193 = vpop.xlane.xlu0 %2192
        %2194 = vadd.xlane.f32.xlu0 %v1981
        %v2195 = vpop.xlane.xlu0 %2194
        %2196 = vadd.xlane.f32.xlu0 %v1982
        %v2197 = vpop.xlane.xlu0 %2196
        %2198 = vadd.xlane.f32.xlu0 %v1983
        %v2199 = vpop.xlane.xlu0 %2198
        %2200 = vadd.xlane.f32.xlu0 %v1984
        %v2201 = vpop.xlane.xlu0 %2200
        %2202 = vadd.xlane.f32.xlu0 %v1985
        %v2203 = vpop.xlane.xlu0 %2202
        %2204 = vadd.xlane.f32.xlu0 %v1986
        %v2205 = vpop.xlane.xlu0 %2204
        %2206 = vadd.xlane.f32.xlu0 %v1987
        %v2207 = vpop.xlane.xlu0 %2206
        %2208 = vadd.xlane.f32.xlu0 %v1988
        %v2209 = vpop.xlane.xlu0 %2208
        %2210 = vadd.xlane.f32.xlu0 %v1989
        %v2211 = vpop.xlane.xlu0 %2210
        %2212 = vadd.xlane.f32.xlu0 %v1990
        %v2213 = vpop.xlane.xlu0 %2212
        %2214 = vadd.xlane.f32.xlu0 %v1991
        %v2215 = vpop.xlane.xlu0 %2214
        %2216 = vadd.xlane.f32.xlu0 %v1992
        %v2217 = vpop.xlane.xlu0 %2216
        %2218 = vadd.xlane.f32.xlu0 %v1993
        %v2219 = vpop.xlane.xlu0 %2218
        %2220 = vadd.xlane.f32.xlu0 %v1994
        %v2221 = vpop.xlane.xlu0 %2220
        %2222 = vadd.xlane.f32.xlu0 %v1995
        %v2223 = vpop.xlane.xlu0 %2222
        %2224 = vadd.xlane.f32.xlu0 %v1996
        %v2225 = vpop.xlane.xlu0 %2224
        %2226 = vadd.xlane.f32.xlu0 %v1997
        %v2227 = vpop.xlane.xlu0 %2226
        %2228 = vadd.xlane.f32.xlu0 %v1998
        %v2229 = vpop.xlane.xlu0 %2228
        %2230 = vadd.xlane.f32.xlu0 %v1999
        %v2231 = vpop.xlane.xlu0 %2230
        %2232 = vadd.xlane.f32.xlu0 %v2000
        %v2233 = vpop.xlane.xlu0 %2232
        %2234 = vadd.xlane.f32.xlu0 %v2001
        %v2235 = vpop.xlane.xlu0 %2234
        %2236 = vadd.xlane.f32.xlu0 %v2002
        %v2237 = vpop.xlane.xlu0 %2236
        %2238 = vadd.xlane.f32.xlu0 %v2003
        %v2239 = vpop.xlane.xlu0 %2238
        %2240 = vadd.xlane.f32.xlu0 %v2004
        %v2241 = vpop.xlane.xlu0 %2240
        %2242 = vadd.xlane.f32.xlu0 %v2005
        %v2243 = vpop.xlane.xlu0 %2242
        %2244 = vadd.xlane.f32.xlu0 %v2006
        %v2245 = vpop.xlane.xlu0 %2244
        %2246 = vadd.xlane.f32.xlu0 %v2007
        %v2247 = vpop.xlane.xlu0 %2246
        %2248 = vadd.xlane.f32.xlu0 %v2008
        %v2249 = vpop.xlane.xlu0 %2248
        %2250 = vadd.xlane.f32.xlu0 %v2009
        %v2251 = vpop.xlane.xlu0 %2250
        %2252 = vadd.xlane.f32.xlu0 %v2010
        %v2253 = vpop.xlane.xlu0 %2252
        %2254 = vadd.xlane.f32.xlu0 %v2011
        %v2255 = vpop.xlane.xlu0 %2254
        %2256 = vadd.xlane.f32.xlu0 %v2012
        %v2257 = vpop.xlane.xlu0 %2256
        %2258 = vadd.xlane.f32.xlu0 %v2013
        %v2259 = vpop.xlane.xlu0 %2258
        %2260 = vadd.xlane.f32.xlu0 %v2014
        %v2261 = vpop.xlane.xlu0 %2260
        %2262 = vadd.xlane.f32.xlu0 %v2015
        %v2263 = vpop.xlane.xlu0 %2262
        %2264 = vadd.xlane.f32.xlu0 %v2016
        %v2265 = vpop.xlane.xlu0 %2264
        %2266 = vadd.xlane.f32.xlu0 %v2017
        %v2267 = vpop.xlane.xlu0 %2266
        %2268 = vadd.xlane.f32.xlu0 %v2018
        %v2269 = vpop.xlane.xlu0 %2268
        %2270 = vadd.xlane.f32.xlu0 %v2019
        %v2271 = vpop.xlane.xlu0 %2270
        %2272 = vadd.xlane.f32.xlu0 %v2020
        %v2273 = vpop.xlane.xlu0 %2272
        %2274 = vadd.xlane.f32.xlu0 %v2021
        %v2275 = vpop.xlane.xlu0 %2274
        %2276 = vadd.xlane.f32.xlu0 %v2022
        %v2277 = vpop.xlane.xlu0 %2276
        %2278 = vadd.xlane.f32.xlu0 %v2023
        %v2279 = vpop.xlane.xlu0 %2278
        %v2280 = vlaneseq
        %v2281 = vand.u32 %v2280, 127
        %vm2282 = vcmp.lt.s32.totalorder %v2281, 8
        %v2411 = vlaneseq
        %v2412 = vshrl.u32 %v2411, 7
        %v2413 = vsub.s32 %v2281, %v2412
        %v2414 = vrot.slane %v2025, %v2413
        %v2415 = vadd.s32 %v2281, 4294967288
        %v2416 = vlaneseq
        %v2417 = vshrl.u32 %v2416, 7
        %v2418 = vsub.s32 %v2415, %v2417
        %v2419 = vrot.slane %v2027, %v2418
        %vm2420 = vcmask 130112
        %v2421 = vsel %vm2420, %v2419, %v2414
        %v2422 = vadd.s32 %v2281, 4294967280
        %v2423 = vlaneseq
        %v2424 = vshrl.u32 %v2423, 7
        %v2425 = vsub.s32 %v2422, %v2424
        %v2426 = vrot.slane %v2029, %v2425
        %vm2427 = vcmask 195712
        %v2428 = vsel %vm2427, %v2426, %v2421
        %v2429 = vadd.s32 %v2281, 4294967272
        %v2430 = vlaneseq
        %v2431 = vshrl.u32 %v2430, 7
        %v2432 = vsub.s32 %v2429, %v2431
        %v2433 = vrot.slane %v2031, %v2432
        %vm2434 = vcmask 261312
        %v2435 = vsel %vm2434, %v2433, %v2428
        %v2436 = vadd.s32 %v2281, 4294967264
        %v2437 = vlaneseq
        %v2438 = vshrl.u32 %v2437, 7
        %v2439 = vsub.s32 %v2436, %v2438
        %v2440 = vrot.slane %v2033, %v2439
        %vm2441 = vcmask 326912
        %v2442 = vsel %vm2441, %v2440, %v2435
        %v2443 = vadd.s32 %v2281, 4294967256
        %v2444 = vlaneseq
        %v2445 = vshrl.u32 %v2444, 7
        %v2446 = vsub.s32 %v2443, %v2445
        %v2447 = vrot.slane %v2035, %v2446
        %vm2448 = vcmask 392512
        %v2449 = vsel %vm2448, %v2447, %v2442
        %v2450 = vadd.s32 %v2281, 4294967248
        %v2451 = vlaneseq
        %v2452 = vshrl.u32 %v2451, 7
        %v2453 = vsub.s32 %v2450, %v2452
        %v2454 = vrot.slane %v2037, %v2453
        %vm2455 = vcmask 458112
        %v2456 = vsel %vm2455, %v2454, %v2449
        %v2457 = vadd.s32 %v2281, 4294967240
        %v2458 = vlaneseq
        %v2459 = vshrl.u32 %v2458, 7
        %v2460 = vsub.s32 %v2457, %v2459
        %v2461 = vrot.slane %v2039, %v2460
        %vm2462 = vcmask 523712
        %v2463 = vsel %vm2462, %v2461, %v2456
        %v2464 = vadd.s32 %v2281, 4294967232
        %v2465 = vlaneseq
        %v2466 = vshrl.u32 %v2465, 7
        %v2467 = vsub.s32 %v2464, %v2466
        %v2468 = vrot.slane %v2041, %v2467
        %vm2469 = vcmask 589312
        %v2470 = vsel %vm2469, %v2468, %v2463
        %v2471 = vadd.s32 %v2281, 4294967224
        %v2472 = vlaneseq
        %v2473 = vshrl.u32 %v2472, 7
        %v2474 = vsub.s32 %v2471, %v2473
        %v2475 = vrot.slane %v2043, %v2474
        %vm2476 = vcmask 654912
        %v2477 = vsel %vm2476, %v2475, %v2470
        %v2478 = vadd.s32 %v2281, 4294967216
        %v2479 = vlaneseq
        %v2480 = vshrl.u32 %v2479, 7
        %v2481 = vsub.s32 %v2478, %v2480
        %v2482 = vrot.slane %v2045, %v2481
        %vm2483 = vcmask 720512
        %v2484 = vsel %vm2483, %v2482, %v2477
        %v2485 = vadd.s32 %v2281, 4294967208
        %v2486 = vlaneseq
        %v2487 = vshrl.u32 %v2486, 7
        %v2488 = vsub.s32 %v2485, %v2487
        %v2489 = vrot.slane %v2047, %v2488
        %vm2490 = vcmask 786112
        %v2491 = vsel %vm2490, %v2489, %v2484
        %v2492 = vadd.s32 %v2281, 4294967200
        %v2493 = vlaneseq
        %v2494 = vshrl.u32 %v2493, 7
        %v2495 = vsub.s32 %v2492, %v2494
        %v2496 = vrot.slane %v2049, %v2495
        %vm2497 = vcmask 851712
        %v2498 = vsel %vm2497, %v2496, %v2491
        %v2499 = vadd.s32 %v2281, 4294967192
        %v2500 = vlaneseq
        %v2501 = vshrl.u32 %v2500, 7
        %v2502 = vsub.s32 %v2499, %v2501
        %v2503 = vrot.slane %v2051, %v2502
        %vm2504 = vcmask 917312
        %v2505 = vsel %vm2504, %v2503, %v2498
        %v2506 = vadd.s32 %v2281, 4294967184
        %v2507 = vlaneseq
        %v2508 = vshrl.u32 %v2507, 7
        %v2509 = vsub.s32 %v2506, %v2508
        %v2510 = vrot.slane %v2053, %v2509
        %vm2511 = vcmask 982912
        %v2512 = vsel %vm2511, %v2510, %v2505
        %v2513 = vadd.s32 %v2281, 4294967176
        %v2514 = vlaneseq
        %v2515 = vshrl.u32 %v2514, 7
        %v2516 = vsub.s32 %v2513, %v2515
        %v2517 = vrot.slane %v2055, %v2516
        %vm2518 = vcmask 1048512
        %v2519 = vsel %vm2518, %v2517, %v2512
        %v2520 = vlaneseq
        %v2521 = vshrl.u32 %v2520, 7
        %v2522 = vsub.s32 %v2281, %v2521
        %v2523 = vrot.slane %v2057, %v2522
        %v2524 = vlaneseq
        %v2525 = vshrl.u32 %v2524, 7
        %v2526 = vsub.s32 %v2415, %v2525
        %v2527 = vrot.slane %v2059, %v2526
        %v2528 = vsel %vm2420, %v2527, %v2523
        %v2529 = vlaneseq
        %v2530 = vshrl.u32 %v2529, 7
        %v2531 = vsub.s32 %v2422, %v2530
        %v2532 = vrot.slane %v2061, %v2531
        %v2533 = vsel %vm2427, %v2532, %v2528
        %v2534 = vlaneseq
        %v2535 = vshrl.u32 %v2534, 7
        %v2536 = vsub.s32 %v2429, %v2535
        %v2537 = vrot.slane %v2063, %v2536
        %v2538 = vsel %vm2434, %v2537, %v2533
        %v2539 = vlaneseq
        %v2540 = vshrl.u32 %v2539, 7
        %v2541 = vsub.s32 %v2436, %v2540
        %v2542 = vrot.slane %v2065, %v2541
        %v2543 = vsel %vm2441, %v2542, %v2538
        %v2544 = vlaneseq
        %v2545 = vshrl.u32 %v2544, 7
        %v2546 = vsub.s32 %v2443, %v2545
        %v2547 = vrot.slane %v2067, %v2546
        %v2548 = vsel %vm2448, %v2547, %v2543
        %v2549 = vlaneseq
        %v2550 = vshrl.u32 %v2549, 7
        %v2551 = vsub.s32 %v2450, %v2550
        %v2552 = vrot.slane %v2069, %v2551
        %v2553 = vsel %vm2455, %v2552, %v2548
        %v2554 = vlaneseq
        %v2555 = vshrl.u32 %v2554, 7
        %v2556 = vsub.s32 %v2457, %v2555
        %v2557 = vrot.slane %v2071, %v2556
        %v2558 = vsel %vm2462, %v2557, %v2553
        %v2559 = vlaneseq
        %v2560 = vshrl.u32 %v2559, 7
        %v2561 = vsub.s32 %v2464, %v2560
        %v2562 = vrot.slane %v2073, %v2561
        %v2563 = vsel %vm2469, %v2562, %v2558
        %v2564 = vlaneseq
        %v2565 = vshrl.u32 %v2564, 7
        %v2566 = vsub.s32 %v2471, %v2565
        %v2567 = vrot.slane %v2075, %v2566
        %v2568 = vsel %vm2476, %v2567, %v2563
        %v2569 = vlaneseq
        %v2570 = vshrl.u32 %v2569, 7
        %v2571 = vsub.s32 %v2478, %v2570
        %v2572 = vrot.slane %v2077, %v2571
        %v2573 = vsel %vm2483, %v2572, %v2568
        %v2574 = vlaneseq
        %v2575 = vshrl.u32 %v2574, 7
        %v2576 = vsub.s32 %v2485, %v2575
        %v2577 = vrot.slane %v2079, %v2576
        %v2578 = vsel %vm2490, %v2577, %v2573
        %v2579 = vlaneseq
        %v2580 = vshrl.u32 %v2579, 7
        %v2581 = vsub.s32 %v2492, %v2580
        %v2582 = vrot.slane %v2081, %v2581
        %v2583 = vsel %vm2497, %v2582, %v2578
        %v2584 = vlaneseq
        %v2585 = vshrl.u32 %v2584, 7
        %v2586 = vsub.s32 %v2499, %v2585
        %v2587 = vrot.slane %v2083, %v2586
        %v2588 = vsel %vm2504, %v2587, %v2583
        %v2589 = vlaneseq
        %v2590 = vshrl.u32 %v2589, 7
        %v2591 = vsub.s32 %v2506, %v2590
        %v2592 = vrot.slane %v2085, %v2591
        %v2593 = vsel %vm2511, %v2592, %v2588
        %v2594 = vlaneseq
        %v2595 = vshrl.u32 %v2594, 7
        %v2596 = vsub.s32 %v2513, %v2595
        %v2597 = vrot.slane %v2087, %v2596
        %v2598 = vsel %vm2518, %v2597, %v2593
        %v2599 = vlaneseq
        %v2600 = vshrl.u32 %v2599, 7
        %v2601 = vsub.s32 %v2281, %v2600
        %v2602 = vrot.slane %v2089, %v2601
        %v2603 = vlaneseq
        %v2604 = vshrl.u32 %v2603, 7
        %v2605 = vsub.s32 %v2415, %v2604
        %v2606 = vrot.slane %v2091, %v2605
        %v2607 = vsel %vm2420, %v2606, %v2602
        %v2608 = vlaneseq
        %v2609 = vshrl.u32 %v2608, 7
        %v2610 = vsub.s32 %v2422, %v2609
        %v2611 = vrot.slane %v2093, %v2610
        %v2612 = vsel %vm2427, %v2611, %v2607
        %v2613 = vlaneseq
        %v2614 = vshrl.u32 %v2613, 7
        %v2615 = vsub.s32 %v2429, %v2614
        %v2616 = vrot.slane %v2095, %v2615
        %v2617 = vsel %vm2434, %v2616, %v2612
        %v2618 = vlaneseq
        %v2619 = vshrl.u32 %v2618, 7
        %v2620 = vsub.s32 %v2436, %v2619
        %v2621 = vrot.slane %v2097, %v2620
        %v2622 = vsel %vm2441, %v2621, %v2617
        %v2623 = vlaneseq
        %v2624 = vshrl.u32 %v2623, 7
        %v2625 = vsub.s32 %v2443, %v2624
        %v2626 = vrot.slane %v2099, %v2625
        %v2627 = vsel %vm2448, %v2626, %v2622
        %v2628 = vlaneseq
        %v2629 = vshrl.u32 %v2628, 7
        %v2630 = vsub.s32 %v2450, %v2629
        %v2631 = vrot.slane %v2101, %v2630
        %v2632 = vsel %vm2455, %v2631, %v2627
        %v2633 = vlaneseq
        %v2634 = vshrl.u32 %v2633, 7
        %v2635 = vsub.s32 %v2457, %v2634
        %v2636 = vrot.slane %v2103, %v2635
        %v2637 = vsel %vm2462, %v2636, %v2632
        %v2638 = vlaneseq
        %v2639 = vshrl.u32 %v2638, 7
        %v2640 = vsub.s32 %v2464, %v2639
        %v2641 = vrot.slane %v2105, %v2640
        %v2642 = vsel %vm2469, %v2641, %v2637
        %v2643 = vlaneseq
        %v2644 = vshrl.u32 %v2643, 7
        %v2645 = vsub.s32 %v2471, %v2644
        %v2646 = vrot.slane %v2107, %v2645
        %v2647 = vsel %vm2476, %v2646, %v2642
        %v2648 = vlaneseq
        %v2649 = vshrl.u32 %v2648, 7
        %v2650 = vsub.s32 %v2478, %v2649
        %v2651 = vrot.slane %v2109, %v2650
        %v2652 = vsel %vm2483, %v2651, %v2647
        %v2653 = vlaneseq
        %v2654 = vshrl.u32 %v2653, 7
        %v2655 = vsub.s32 %v2485, %v2654
        %v2656 = vrot.slane %v2111, %v2655
        %v2657 = vsel %vm2490, %v2656, %v2652
        %v2658 = vlaneseq
        %v2659 = vshrl.u32 %v2658, 7
        %v2660 = vsub.s32 %v2492, %v2659
        %v2661 = vrot.slane %v2113, %v2660
        %v2662 = vsel %vm2497, %v2661, %v2657
        %v2663 = vlaneseq
        %v2664 = vshrl.u32 %v2663, 7
        %v2665 = vsub.s32 %v2499, %v2664
        %v2666 = vrot.slane %v2115, %v2665
        %v2667 = vsel %vm2504, %v2666, %v2662
        %v2668 = vlaneseq
        %v2669 = vshrl.u32 %v2668, 7
        %v2670 = vsub.s32 %v2506, %v2669
        %v2671 = vrot.slane %v2117, %v2670
        %v2672 = vsel %vm2511, %v2671, %v2667
        %v2673 = vlaneseq
        %v2674 = vshrl.u32 %v2673, 7
        %v2675 = vsub.s32 %v2513, %v2674
        %v2676 = vrot.slane %v2119, %v2675
        %v2677 = vsel %vm2518, %v2676, %v2672
        %v2678 = vlaneseq
        %v2679 = vshrl.u32 %v2678, 7
        %v2680 = vsub.s32 %v2281, %v2679
        %v2681 = vrot.slane %v2121, %v2680
        %v2682 = vlaneseq
        %v2683 = vshrl.u32 %v2682, 7
        %v2684 = vsub.s32 %v2415, %v2683
        %v2685 = vrot.slane %v2123, %v2684
        %v2686 = vsel %vm2420, %v2685, %v2681
        %v2687 = vlaneseq
        %v2688 = vshrl.u32 %v2687, 7
        %v2689 = vsub.s32 %v2422, %v2688
        %v2690 = vrot.slane %v2125, %v2689
        %v2691 = vsel %vm2427, %v2690, %v2686
        %v2692 = vlaneseq
        %v2693 = vshrl.u32 %v2692, 7
        %v2694 = vsub.s32 %v2429, %v2693
        %v2695 = vrot.slane %v2127, %v2694
        %v2696 = vsel %vm2434, %v2695, %v2691
        %v2697 = vlaneseq
        %v2698 = vshrl.u32 %v2697, 7
        %v2699 = vsub.s32 %v2436, %v2698
        %v2700 = vrot.slane %v2129, %v2699
        %v2701 = vsel %vm2441, %v2700, %v2696
        %v2702 = vlaneseq
        %v2703 = vshrl.u32 %v2702, 7
        %v2704 = vsub.s32 %v2443, %v2703
        %v2705 = vrot.slane %v2131, %v2704
        %v2706 = vsel %vm2448, %v2705, %v2701
        %v2707 = vlaneseq
        %v2708 = vshrl.u32 %v2707, 7
        %v2709 = vsub.s32 %v2450, %v2708
        %v2710 = vrot.slane %v2133, %v2709
        %v2711 = vsel %vm2455, %v2710, %v2706
        %v2712 = vlaneseq
        %v2713 = vshrl.u32 %v2712, 7
        %v2714 = vsub.s32 %v2457, %v2713
        %v2715 = vrot.slane %v2135, %v2714
        %v2716 = vsel %vm2462, %v2715, %v2711
        %v2717 = vlaneseq
        %v2718 = vshrl.u32 %v2717, 7
        %v2719 = vsub.s32 %v2464, %v2718
        %v2720 = vrot.slane %v2137, %v2719
        %v2721 = vsel %vm2469, %v2720, %v2716
        %v2722 = vlaneseq
        %v2723 = vshrl.u32 %v2722, 7
        %v2724 = vsub.s32 %v2471, %v2723
        %v2725 = vrot.slane %v2139, %v2724
        %v2726 = vsel %vm2476, %v2725, %v2721
        %v2727 = vlaneseq
        %v2728 = vshrl.u32 %v2727, 7
        %v2729 = vsub.s32 %v2478, %v2728
        %v2730 = vrot.slane %v2141, %v2729
        %v2731 = vsel %vm2483, %v2730, %v2726
        %v2732 = vlaneseq
        %v2733 = vshrl.u32 %v2732, 7
        %v2734 = vsub.s32 %v2485, %v2733
        %v2735 = vrot.slane %v2143, %v2734
        %v2736 = vsel %vm2490, %v2735, %v2731
        %v2737 = vlaneseq
        %v2738 = vshrl.u32 %v2737, 7
        %v2739 = vsub.s32 %v2492, %v2738
        %v2740 = vrot.slane %v2145, %v2739
        %v2741 = vsel %vm2497, %v2740, %v2736
        %v2742 = vlaneseq
        %v2743 = vshrl.u32 %v2742, 7
        %v2744 = vsub.s32 %v2499, %v2743
        %v2745 = vrot.slane %v2147, %v2744
        %v2746 = vsel %vm2504, %v2745, %v2741
        %v2747 = vlaneseq
        %v2748 = vshrl.u32 %v2747, 7
        %v2749 = vsub.s32 %v2506, %v2748
        %v2750 = vrot.slane %v2149, %v2749
        %v2751 = vsel %vm2511, %v2750, %v2746
        %v2752 = vlaneseq
        %v2753 = vshrl.u32 %v2752, 7
        %v2754 = vsub.s32 %v2513, %v2753
        %v2755 = vrot.slane %v2151, %v2754
        %v2756 = vsel %vm2518, %v2755, %v2751
        %v2757 = vlaneseq
        %v2758 = vshrl.u32 %v2757, 7
        %v2759 = vsub.s32 %v2281, %v2758
        %v2760 = vrot.slane %v2153, %v2759
        %v2761 = vlaneseq
        %v2762 = vshrl.u32 %v2761, 7
        %v2763 = vsub.s32 %v2415, %v2762
        %v2764 = vrot.slane %v2155, %v2763
        %v2765 = vsel %vm2420, %v2764, %v2760
        %v2766 = vlaneseq
        %v2767 = vshrl.u32 %v2766, 7
        %v2768 = vsub.s32 %v2422, %v2767
        %v2769 = vrot.slane %v2157, %v2768
        %v2770 = vsel %vm2427, %v2769, %v2765
        %v2771 = vlaneseq
        %v2772 = vshrl.u32 %v2771, 7
        %v2773 = vsub.s32 %v2429, %v2772
        %v2774 = vrot.slane %v2159, %v2773
        %v2775 = vsel %vm2434, %v2774, %v2770
        %v2776 = vlaneseq
        %v2777 = vshrl.u32 %v2776, 7
        %v2778 = vsub.s32 %v2436, %v2777
        %v2779 = vrot.slane %v2161, %v2778
        %v2780 = vsel %vm2441, %v2779, %v2775
        %v2781 = vlaneseq
        %v2782 = vshrl.u32 %v2781, 7
        %v2783 = vsub.s32 %v2443, %v2782
        %v2784 = vrot.slane %v2163, %v2783
        %v2785 = vsel %vm2448, %v2784, %v2780
        %v2786 = vlaneseq
        %v2787 = vshrl.u32 %v2786, 7
        %v2788 = vsub.s32 %v2450, %v2787
        %v2789 = vrot.slane %v2165, %v2788
        %v2790 = vsel %vm2455, %v2789, %v2785
        %v2791 = vlaneseq
        %v2792 = vshrl.u32 %v2791, 7
        %v2793 = vsub.s32 %v2457, %v2792
        %v2794 = vrot.slane %v2167, %v2793
        %v2795 = vsel %vm2462, %v2794, %v2790
        %v2796 = vlaneseq
        %v2797 = vshrl.u32 %v2796, 7
        %v2798 = vsub.s32 %v2464, %v2797
        %v2799 = vrot.slane %v2169, %v2798
        %v2800 = vsel %vm2469, %v2799, %v2795
        %v2801 = vlaneseq
        %v2802 = vshrl.u32 %v2801, 7
        %v2803 = vsub.s32 %v2471, %v2802
        %v2804 = vrot.slane %v2171, %v2803
        %v2805 = vsel %vm2476, %v2804, %v2800
        %v2806 = vlaneseq
        %v2807 = vshrl.u32 %v2806, 7
        %v2808 = vsub.s32 %v2478, %v2807
        %v2809 = vrot.slane %v2173, %v2808
        %v2810 = vsel %vm2483, %v2809, %v2805
        %v2811 = vlaneseq
        %v2812 = vshrl.u32 %v2811, 7
        %v2813 = vsub.s32 %v2485, %v2812
        %v2814 = vrot.slane %v2175, %v2813
        %v2815 = vsel %vm2490, %v2814, %v2810
        %v2816 = vlaneseq
        %v2817 = vshrl.u32 %v2816, 7
        %v2818 = vsub.s32 %v2492, %v2817
        %v2819 = vrot.slane %v2177, %v2818
        %v2820 = vsel %vm2497, %v2819, %v2815
        %v2821 = vlaneseq
        %v2822 = vshrl.u32 %v2821, 7
        %v2823 = vsub.s32 %v2499, %v2822
        %v2824 = vrot.slane %v2179, %v2823
        %v2825 = vsel %vm2504, %v2824, %v2820
        %v2826 = vlaneseq
        %v2827 = vshrl.u32 %v2826, 7
        %v2828 = vsub.s32 %v2506, %v2827
        %v2829 = vrot.slane %v2181, %v2828
        %v2830 = vsel %vm2511, %v2829, %v2825
        %v2831 = vlaneseq
        %v2832 = vshrl.u32 %v2831, 7
        %v2833 = vsub.s32 %v2513, %v2832
        %v2834 = vrot.slane %v2183, %v2833
        %v2835 = vsel %vm2518, %v2834, %v2830
        %v2836 = vlaneseq
        %v2837 = vshrl.u32 %v2836, 7
        %v2838 = vsub.s32 %v2281, %v2837
        %v2839 = vrot.slane %v2185, %v2838
        %v2840 = vlaneseq
        %v2841 = vshrl.u32 %v2840, 7
        %v2842 = vsub.s32 %v2415, %v2841
        %v2843 = vrot.slane %v2187, %v2842
        %v2844 = vsel %vm2420, %v2843, %v2839
        %v2845 = vlaneseq
        %v2846 = vshrl.u32 %v2845, 7
        %v2847 = vsub.s32 %v2422, %v2846
        %v2848 = vrot.slane %v2189, %v2847
        %v2849 = vsel %vm2427, %v2848, %v2844
        %v2850 = vlaneseq
        %v2851 = vshrl.u32 %v2850, 7
        %v2852 = vsub.s32 %v2429, %v2851
        %v2853 = vrot.slane %v2191, %v2852
        %v2854 = vsel %vm2434, %v2853, %v2849
        %v2855 = vlaneseq
        %v2856 = vshrl.u32 %v2855, 7
        %v2857 = vsub.s32 %v2436, %v2856
        %v2858 = vrot.slane %v2193, %v2857
        %v2859 = vsel %vm2441, %v2858, %v2854
        %v2860 = vlaneseq
        %v2861 = vshrl.u32 %v2860, 7
        %v2862 = vsub.s32 %v2443, %v2861
        %v2863 = vrot.slane %v2195, %v2862
        %v2864 = vsel %vm2448, %v2863, %v2859
        %v2865 = vlaneseq
        %v2866 = vshrl.u32 %v2865, 7
        %v2867 = vsub.s32 %v2450, %v2866
        %v2868 = vrot.slane %v2197, %v2867
        %v2869 = vsel %vm2455, %v2868, %v2864
        %v2870 = vlaneseq
        %v2871 = vshrl.u32 %v2870, 7
        %v2872 = vsub.s32 %v2457, %v2871
        %v2873 = vrot.slane %v2199, %v2872
        %v2874 = vsel %vm2462, %v2873, %v2869
        %v2875 = vlaneseq
        %v2876 = vshrl.u32 %v2875, 7
        %v2877 = vsub.s32 %v2464, %v2876
        %v2878 = vrot.slane %v2201, %v2877
        %v2879 = vsel %vm2469, %v2878, %v2874
        %v2880 = vlaneseq
        %v2881 = vshrl.u32 %v2880, 7
        %v2882 = vsub.s32 %v2471, %v2881
        %v2883 = vrot.slane %v2203, %v2882
        %v2884 = vsel %vm2476, %v2883, %v2879
        %v2885 = vlaneseq
        %v2886 = vshrl.u32 %v2885, 7
        %v2887 = vsub.s32 %v2478, %v2886
        %v2888 = vrot.slane %v2205, %v2887
        %v2889 = vsel %vm2483, %v2888, %v2884
        %v2890 = vlaneseq
        %v2891 = vshrl.u32 %v2890, 7
        %v2892 = vsub.s32 %v2485, %v2891
        %v2893 = vrot.slane %v2207, %v2892
        %v2894 = vsel %vm2490, %v2893, %v2889
        %v2895 = vlaneseq
        %v2896 = vshrl.u32 %v2895, 7
        %v2897 = vsub.s32 %v2492, %v2896
        %v2898 = vrot.slane %v2209, %v2897
        %v2899 = vsel %vm2497, %v2898, %v2894
        %v2900 = vlaneseq
        %v2901 = vshrl.u32 %v2900, 7
        %v2902 = vsub.s32 %v2499, %v2901
        %v2903 = vrot.slane %v2211, %v2902
        %v2904 = vsel %vm2504, %v2903, %v2899
        %v2905 = vlaneseq
        %v2906 = vshrl.u32 %v2905, 7
        %v2907 = vsub.s32 %v2506, %v2906
        %v2908 = vrot.slane %v2213, %v2907
        %v2909 = vsel %vm2511, %v2908, %v2904
        %v2910 = vlaneseq
        %v2911 = vshrl.u32 %v2910, 7
        %v2912 = vsub.s32 %v2513, %v2911
        %v2913 = vrot.slane %v2215, %v2912
        %v2914 = vsel %vm2518, %v2913, %v2909
        %v2915 = vlaneseq
        %v2916 = vshrl.u32 %v2915, 7
        %v2917 = vsub.s32 %v2281, %v2916
        %v2918 = vrot.slane %v2217, %v2917
        %v2919 = vlaneseq
        %v2920 = vshrl.u32 %v2919, 7
        %v2921 = vsub.s32 %v2415, %v2920
        %v2922 = vrot.slane %v2219, %v2921
        %v2923 = vsel %vm2420, %v2922, %v2918
        %v2924 = vlaneseq
        %v2925 = vshrl.u32 %v2924, 7
        %v2926 = vsub.s32 %v2422, %v2925
        %v2927 = vrot.slane %v2221, %v2926
        %v2928 = vsel %vm2427, %v2927, %v2923
        %v2929 = vlaneseq
        %v2930 = vshrl.u32 %v2929, 7
        %v2931 = vsub.s32 %v2429, %v2930
        %v2932 = vrot.slane %v2223, %v2931
        %v2933 = vsel %vm2434, %v2932, %v2928
        %v2934 = vlaneseq
        %v2935 = vshrl.u32 %v2934, 7
        %v2936 = vsub.s32 %v2436, %v2935
        %v2937 = vrot.slane %v2225, %v2936
        %v2938 = vsel %vm2441, %v2937, %v2933
        %v2939 = vlaneseq
        %v2940 = vshrl.u32 %v2939, 7
        %v2941 = vsub.s32 %v2443, %v2940
        %v2942 = vrot.slane %v2227, %v2941
        %v2943 = vsel %vm2448, %v2942, %v2938
        %v2944 = vlaneseq
        %v2945 = vshrl.u32 %v2944, 7
        %v2946 = vsub.s32 %v2450, %v2945
        %v2947 = vrot.slane %v2229, %v2946
        %v2948 = vsel %vm2455, %v2947, %v2943
        %v2949 = vlaneseq
        %v2950 = vshrl.u32 %v2949, 7
        %v2951 = vsub.s32 %v2457, %v2950
        %v2952 = vrot.slane %v2231, %v2951
        %v2953 = vsel %vm2462, %v2952, %v2948
        %v2954 = vlaneseq
        %v2955 = vshrl.u32 %v2954, 7
        %v2956 = vsub.s32 %v2464, %v2955
        %v2957 = vrot.slane %v2233, %v2956
        %v2958 = vsel %vm2469, %v2957, %v2953
        %v2959 = vlaneseq
        %v2960 = vshrl.u32 %v2959, 7
        %v2961 = vsub.s32 %v2471, %v2960
        %v2962 = vrot.slane %v2235, %v2961
        %v2963 = vsel %vm2476, %v2962, %v2958
        %v2964 = vlaneseq
        %v2965 = vshrl.u32 %v2964, 7
        %v2966 = vsub.s32 %v2478, %v2965
        %v2967 = vrot.slane %v2237, %v2966
        %v2968 = vsel %vm2483, %v2967, %v2963
        %v2969 = vlaneseq
        %v2970 = vshrl.u32 %v2969, 7
        %v2971 = vsub.s32 %v2485, %v2970
        %v2972 = vrot.slane %v2239, %v2971
        %v2973 = vsel %vm2490, %v2972, %v2968
        %v2974 = vlaneseq
        %v2975 = vshrl.u32 %v2974, 7
        %v2976 = vsub.s32 %v2492, %v2975
        %v2977 = vrot.slane %v2241, %v2976
        %v2978 = vsel %vm2497, %v2977, %v2973
        %v2979 = vlaneseq
        %v2980 = vshrl.u32 %v2979, 7
        %v2981 = vsub.s32 %v2499, %v2980
        %v2982 = vrot.slane %v2243, %v2981
        %v2983 = vsel %vm2504, %v2982, %v2978
        %v2984 = vlaneseq
        %v2985 = vshrl.u32 %v2984, 7
        %v2986 = vsub.s32 %v2506, %v2985
        %v2987 = vrot.slane %v2245, %v2986
        %v2988 = vsel %vm2511, %v2987, %v2983
        %v2989 = vlaneseq
        %v2990 = vshrl.u32 %v2989, 7
        %v2991 = vsub.s32 %v2513, %v2990
        %v2992 = vrot.slane %v2247, %v2991
        %v2993 = vsel %vm2518, %v2992, %v2988
        %v2994 = vlaneseq
        %v2995 = vshrl.u32 %v2994, 7
        %v2996 = vsub.s32 %v2281, %v2995
        %v2997 = vrot.slane %v2249, %v2996
        %v2998 = vlaneseq
        %v2999 = vshrl.u32 %v2998, 7
        %v3000 = vsub.s32 %v2415, %v2999
        %v3001 = vrot.slane %v2251, %v3000
        %v3002 = vsel %vm2420, %v3001, %v2997
        %v3003 = vlaneseq
        %v3004 = vshrl.u32 %v3003, 7
        %v3005 = vsub.s32 %v2422, %v3004
        %v3006 = vrot.slane %v2253, %v3005
        %v3007 = vsel %vm2427, %v3006, %v3002
        %v3008 = vlaneseq
        %v3009 = vshrl.u32 %v3008, 7
        %v3010 = vsub.s32 %v2429, %v3009
        %v3011 = vrot.slane %v2255, %v3010
        %v3012 = vsel %vm2434, %v3011, %v3007
        %v3013 = vlaneseq
        %v3014 = vshrl.u32 %v3013, 7
        %v3015 = vsub.s32 %v2436, %v3014
        %v3016 = vrot.slane %v2257, %v3015
        %v3017 = vsel %vm2441, %v3016, %v3012
        %v3018 = vlaneseq
        %v3019 = vshrl.u32 %v3018, 7
        %v3020 = vsub.s32 %v2443, %v3019
        %v3021 = vrot.slane %v2259, %v3020
        %v3022 = vsel %vm2448, %v3021, %v3017
        %v3023 = vlaneseq
        %v3024 = vshrl.u32 %v3023, 7
        %v3025 = vsub.s32 %v2450, %v3024
        %v3026 = vrot.slane %v2261, %v3025
        %v3027 = vsel %vm2455, %v3026, %v3022
        %v3028 = vlaneseq
        %v3029 = vshrl.u32 %v3028, 7
        %v3030 = vsub.s32 %v2457, %v3029
        %v3031 = vrot.slane %v2263, %v3030
        %v3032 = vsel %vm2462, %v3031, %v3027
        %v3033 = vlaneseq
        %v3034 = vshrl.u32 %v3033, 7
        %v3035 = vsub.s32 %v2464, %v3034
        %v3036 = vrot.slane %v2265, %v3035
        %v3037 = vsel %vm2469, %v3036, %v3032
        %v3038 = vlaneseq
        %v3039 = vshrl.u32 %v3038, 7
        %v3040 = vsub.s32 %v2471, %v3039
        %v3041 = vrot.slane %v2267, %v3040
        %v3042 = vsel %vm2476, %v3041, %v3037
        %v3043 = vlaneseq
        %v3044 = vshrl.u32 %v3043, 7
        %v3045 = vsub.s32 %v2478, %v3044
        %v3046 = vrot.slane %v2269, %v3045
        %v3047 = vsel %vm2483, %v3046, %v3042
        %v3048 = vlaneseq
        %v3049 = vshrl.u32 %v3048, 7
        %v3050 = vsub.s32 %v2485, %v3049
        %v3051 = vrot.slane %v2271, %v3050
        %v3052 = vsel %vm2490, %v3051, %v3047
        %v3053 = vlaneseq
        %v3054 = vshrl.u32 %v3053, 7
        %v3055 = vsub.s32 %v2492, %v3054
        %v3056 = vrot.slane %v2273, %v3055
        %v3057 = vsel %vm2497, %v3056, %v3052
        %v3058 = vlaneseq
        %v3059 = vshrl.u32 %v3058, 7
        %v3060 = vsub.s32 %v2499, %v3059
        %v3061 = vrot.slane %v2275, %v3060
        %v3062 = vsel %vm2504, %v3061, %v3057
        %v3063 = vlaneseq
        %v3064 = vshrl.u32 %v3063, 7
        %v3065 = vsub.s32 %v2506, %v3064
        %v3066 = vrot.slane %v2277, %v3065
        %v3067 = vsel %vm2511, %v3066, %v3062
        %v3068 = vlaneseq
        %v3069 = vshrl.u32 %v3068, 7
        %v3070 = vsub.s32 %v2513, %v3069
        %v3071 = vrot.slane %v2279, %v3070
        %v3072 = vsel %vm2518, %v3071, %v3067
        %vm3073 = vcmask 1041409
        %v3074 = vsel %vm3073, %v2598, %v2519
        %vm3075 = vcmask 1042434
        %v3076 = vsel %vm3075, %v2677, %v3074
        %vm3077 = vcmask 1043459
        %v3078 = vsel %vm3077, %v2756, %v3076
        %vm3079 = vcmask 1044484
        %v3080 = vsel %vm3079, %v2835, %v3078
        %vm3081 = vcmask 1045509
        %v3082 = vsel %vm3081, %v2914, %v3080
        %vm3083 = vcmask 1046534
        %v3084 = vsel %vm3083, %v2993, %v3082
        %vm3085 = vcmask 1047559
        %v3086 = vsel %vm3085, %v3072, %v3084
        %v3088 = vsel %vm2282, %v3086, -3.4028235e+38
        %3089 = vmax.xlane.f32.xlu0 %v3088
        %v3090 = vpop.xlane.xlu0 %3089
        %v3091 = vsub.f32 %v3088, %v3090
        %v3092 = vmul.f32 %v3091, 1.442695
        %v3093 = vpow.pop %v3092
        %3094 = vadd.xlane.f32.xlu0 %v3093
        %v3095 = vpop.xlane.xlu0 %3094
        %v3096 = vrcp.pop %v3095
        %v3097 = vmul.f32 %v3093, %v3096
        %v3098 = vlaneseq
        %v3099 = vshrl.u32 %v3098, 7
        %v3100 = vsub.s32 0, %v3099
        %v3101 = vrot.slane %v3097, %v3100
        %3103 = vbcast.lane.b32.xlu0 %v3101, 256
        %v3104 = vpop.permute.xlu0 %3103
        %s3106 = sor.u32 256, 8
        %3107 = vbcast.lane.b32.xlu0 %v3101, %s3106
        %v3108 = vpop.permute.xlu0 %3107
        %s3110 = sor.u32 256, 16
        %3111 = vbcast.lane.b32.xlu0 %v3101, %s3110
        %v3112 = vpop.permute.xlu0 %3111
        %s3114 = sor.u32 256, 24
        %3115 = vbcast.lane.b32.xlu0 %v3101, %s3114
        %v3116 = vpop.permute.xlu0 %3115
        %s3118 = sor.u32 256, 32
        %3119 = vbcast.lane.b32.xlu0 %v3101, %s3118
        %v3120 = vpop.permute.xlu0 %3119
        %s3122 = sor.u32 256, 40
        %3123 = vbcast.lane.b32.xlu0 %v3101, %s3122
        %v3124 = vpop.permute.xlu0 %3123
        %s3126 = sor.u32 256, 48
        %3127 = vbcast.lane.b32.xlu0 %v3101, %s3126
        %v3128 = vpop.permute.xlu0 %3127
        %s3130 = sor.u32 256, 56
        %3131 = vbcast.lane.b32.xlu0 %v3101, %s3130
        %v3132 = vpop.permute.xlu0 %3131
        %s3134 = sor.u32 256, 64
        %3135 = vbcast.lane.b32.xlu0 %v3101, %s3134
        %v3136 = vpop.permute.xlu0 %3135
        %s3138 = sor.u32 256, 72
        %3139 = vbcast.lane.b32.xlu0 %v3101, %s3138
        %v3140 = vpop.permute.xlu0 %3139
        %s3142 = sor.u32 256, 80
        %3143 = vbcast.lane.b32.xlu0 %v3101, %s3142
        %v3144 = vpop.permute.xlu0 %3143
        %s3146 = sor.u32 256, 88
        %3147 = vbcast.lane.b32.xlu0 %v3101, %s3146
        %v3148 = vpop.permute.xlu0 %3147
        %s3150 = sor.u32 256, 96
        %3151 = vbcast.lane.b32.xlu0 %v3101, %s3150
        %v3152 = vpop.permute.xlu0 %3151
        %s3154 = sor.u32 256, 104
        %3155 = vbcast.lane.b32.xlu0 %v3101, %s3154
        %v3156 = vpop.permute.xlu0 %3155
        %s3158 = sor.u32 256, 112
        %3159 = vbcast.lane.b32.xlu0 %v3101, %s3158
        %v3160 = vpop.permute.xlu0 %3159
        %s3162 = sor.u32 256, 120
        %3163 = vbcast.lane.b32.xlu0 %v3101, %s3162
        %v3164 = vpop.permute.xlu0 %3163
        %v3165 = vlaneseq
        %v3166 = vshrl.u32 %v3165, 7
        %v3167 = vsub.s32 1, %v3166
        %v3168 = vrot.slane %v3097, %v3167
        %3170 = vbcast.lane.b32.xlu0 %v3168, 256
        %v3171 = vpop.permute.xlu0 %3170
        %s3173 = sor.u32 256, 8
        %3174 = vbcast.lane.b32.xlu0 %v3168, %s3173
        %v3175 = vpop.permute.xlu0 %3174
        %s3177 = sor.u32 256, 16
        %3178 = vbcast.lane.b32.xlu0 %v3168, %s3177
        %v3179 = vpop.permute.xlu0 %3178
        %s3181 = sor.u32 256, 24
        %3182 = vbcast.lane.b32.xlu0 %v3168, %s3181
        %v3183 = vpop.permute.xlu0 %3182
        %s3185 = sor.u32 256, 32
        %3186 = vbcast.lane.b32.xlu0 %v3168, %s3185
        %v3187 = vpop.permute.xlu0 %3186
        %s3189 = sor.u32 256, 40
        %3190 = vbcast.lane.b32.xlu0 %v3168, %s3189
        %v3191 = vpop.permute.xlu0 %3190
        %s3193 = sor.u32 256, 48
        %3194 = vbcast.lane.b32.xlu0 %v3168, %s3193
        %v3195 = vpop.permute.xlu0 %3194
        %s3197 = sor.u32 256, 56
        %3198 = vbcast.lane.b32.xlu0 %v3168, %s3197
        %v3199 = vpop.permute.xlu0 %3198
        %s3201 = sor.u32 256, 64
        %3202 = vbcast.lane.b32.xlu0 %v3168, %s3201
        %v3203 = vpop.permute.xlu0 %3202
        %s3205 = sor.u32 256, 72
        %3206 = vbcast.lane.b32.xlu0 %v3168, %s3205
        %v3207 = vpop.permute.xlu0 %3206
        %s3209 = sor.u32 256, 80
        %3210 = vbcast.lane.b32.xlu0 %v3168, %s3209
        %v3211 = vpop.permute.xlu0 %3210
        %s3213 = sor.u32 256, 88
        %3214 = vbcast.lane.b32.xlu0 %v3168, %s3213
        %v3215 = vpop.permute.xlu0 %3214
        %s3217 = sor.u32 256, 96
        %3218 = vbcast.lane.b32.xlu0 %v3168, %s3217
        %v3219 = vpop.permute.xlu0 %3218
        %s3221 = sor.u32 256, 104
        %3222 = vbcast.lane.b32.xlu0 %v3168, %s3221
        %v3223 = vpop.permute.xlu0 %3222
        %s3225 = sor.u32 256, 112
        %3226 = vbcast.lane.b32.xlu0 %v3168, %s3225
        %v3227 = vpop.permute.xlu0 %3226
        %s3229 = sor.u32 256, 120
        %3230 = vbcast.lane.b32.xlu0 %v3168, %s3229
        %v3231 = vpop.permute.xlu0 %3230
        %v3232 = vlaneseq
        %v3233 = vshrl.u32 %v3232, 7
        %v3234 = vsub.s32 2, %v3233
        %v3235 = vrot.slane %v3097, %v3234
        %3237 = vbcast.lane.b32.xlu0 %v3235, 256
        %v3238 = vpop.permute.xlu0 %3237
        %s3240 = sor.u32 256, 8
        %3241 = vbcast.lane.b32.xlu0 %v3235, %s3240
        %v3242 = vpop.permute.xlu0 %3241
        %s3244 = sor.u32 256, 16
        %3245 = vbcast.lane.b32.xlu0 %v3235, %s3244
        %v3246 = vpop.permute.xlu0 %3245
        %s3248 = sor.u32 256, 24
        %3249 = vbcast.lane.b32.xlu0 %v3235, %s3248
        %v3250 = vpop.permute.xlu0 %3249
        %s3252 = sor.u32 256, 32
        %3253 = vbcast.lane.b32.xlu0 %v3235, %s3252
        %v3254 = vpop.permute.xlu0 %3253
        %s3256 = sor.u32 256, 40
        %3257 = vbcast.lane.b32.xlu0 %v3235, %s3256
        %v3258 = vpop.permute.xlu0 %3257
        %s3260 = sor.u32 256, 48
        %3261 = vbcast.lane.b32.xlu0 %v3235, %s3260
        %v3262 = vpop.permute.xlu0 %3261
        %s3264 = sor.u32 256, 56
        %3265 = vbcast.lane.b32.xlu0 %v3235, %s3264
        %v3266 = vpop.permute.xlu0 %3265
        %s3268 = sor.u32 256, 64
        %3269 = vbcast.lane.b32.xlu0 %v3235, %s3268
        %v3270 = vpop.permute.xlu0 %3269
        %s3272 = sor.u32 256, 72
        %3273 = vbcast.lane.b32.xlu0 %v3235, %s3272
        %v3274 = vpop.permute.xlu0 %3273
        %s3276 = sor.u32 256, 80
        %3277 = vbcast.lane.b32.xlu0 %v3235, %s3276
        %v3278 = vpop.permute.xlu0 %3277
        %s3280 = sor.u32 256, 88
        %3281 = vbcast.lane.b32.xlu0 %v3235, %s3280
        %v3282 = vpop.permute.xlu0 %3281
        %s3284 = sor.u32 256, 96
        %3285 = vbcast.lane.b32.xlu0 %v3235, %s3284
        %v3286 = vpop.permute.xlu0 %3285
        %s3288 = sor.u32 256, 104
        %3289 = vbcast.lane.b32.xlu0 %v3235, %s3288
        %v3290 = vpop.permute.xlu0 %3289
        %s3292 = sor.u32 256, 112
        %3293 = vbcast.lane.b32.xlu0 %v3235, %s3292
        %v3294 = vpop.permute.xlu0 %3293
        %s3296 = sor.u32 256, 120
        %3297 = vbcast.lane.b32.xlu0 %v3235, %s3296
        %v3298 = vpop.permute.xlu0 %3297
        %v3299 = vlaneseq
        %v3300 = vshrl.u32 %v3299, 7
        %v3301 = vsub.s32 3, %v3300
        %v3302 = vrot.slane %v3097, %v3301
        %3304 = vbcast.lane.b32.xlu0 %v3302, 256
        %v3305 = vpop.permute.xlu0 %3304
        %s3307 = sor.u32 256, 8
        %3308 = vbcast.lane.b32.xlu0 %v3302, %s3307
        %v3309 = vpop.permute.xlu0 %3308
        %s3311 = sor.u32 256, 16
        %3312 = vbcast.lane.b32.xlu0 %v3302, %s3311
        %v3313 = vpop.permute.xlu0 %3312
        %s3315 = sor.u32 256, 24
        %3316 = vbcast.lane.b32.xlu0 %v3302, %s3315
        %v3317 = vpop.permute.xlu0 %3316
        %s3319 = sor.u32 256, 32
        %3320 = vbcast.lane.b32.xlu0 %v3302, %s3319
        %v3321 = vpop.permute.xlu0 %3320
        %s3323 = sor.u32 256, 40
        %3324 = vbcast.lane.b32.xlu0 %v3302, %s3323
        %v3325 = vpop.permute.xlu0 %3324
        %s3327 = sor.u32 256, 48
        %3328 = vbcast.lane.b32.xlu0 %v3302, %s3327
        %v3329 = vpop.permute.xlu0 %3328
        %s3331 = sor.u32 256, 56
        %3332 = vbcast.lane.b32.xlu0 %v3302, %s3331
        %v3333 = vpop.permute.xlu0 %3332
        %s3335 = sor.u32 256, 64
        %3336 = vbcast.lane.b32.xlu0 %v3302, %s3335
        %v3337 = vpop.permute.xlu0 %3336
        %s3339 = sor.u32 256, 72
        %3340 = vbcast.lane.b32.xlu0 %v3302, %s3339
        %v3341 = vpop.permute.xlu0 %3340
        %s3343 = sor.u32 256, 80
        %3344 = vbcast.lane.b32.xlu0 %v3302, %s3343
        %v3345 = vpop.permute.xlu0 %3344
        %s3347 = sor.u32 256, 88
        %3348 = vbcast.lane.b32.xlu0 %v3302, %s3347
        %v3349 = vpop.permute.xlu0 %3348
        %s3351 = sor.u32 256, 96
        %3352 = vbcast.lane.b32.xlu0 %v3302, %s3351
        %v3353 = vpop.permute.xlu0 %3352
        %s3355 = sor.u32 256, 104
        %3356 = vbcast.lane.b32.xlu0 %v3302, %s3355
        %v3357 = vpop.permute.xlu0 %3356
        %s3359 = sor.u32 256, 112
        %3360 = vbcast.lane.b32.xlu0 %v3302, %s3359
        %v3361 = vpop.permute.xlu0 %3360
        %s3363 = sor.u32 256, 120
        %3364 = vbcast.lane.b32.xlu0 %v3302, %s3363
        %v3365 = vpop.permute.xlu0 %3364
        %v3366 = vlaneseq
        %v3367 = vshrl.u32 %v3366, 7
        %v3368 = vsub.s32 4, %v3367
        %v3369 = vrot.slane %v3097, %v3368
        %3371 = vbcast.lane.b32.xlu0 %v3369, 256
        %v3372 = vpop.permute.xlu0 %3371
        %s3374 = sor.u32 256, 8
        %3375 = vbcast.lane.b32.xlu0 %v3369, %s3374
        %v3376 = vpop.permute.xlu0 %3375
        %s3378 = sor.u32 256, 16
        %3379 = vbcast.lane.b32.xlu0 %v3369, %s3378
        %v3380 = vpop.permute.xlu0 %3379
        %s3382 = sor.u32 256, 24
        %3383 = vbcast.lane.b32.xlu0 %v3369, %s3382
        %v3384 = vpop.permute.xlu0 %3383
        %s3386 = sor.u32 256, 32
        %3387 = vbcast.lane.b32.xlu0 %v3369, %s3386
        %v3388 = vpop.permute.xlu0 %3387
        %s3390 = sor.u32 256, 40
        %3391 = vbcast.lane.b32.xlu0 %v3369, %s3390
        %v3392 = vpop.permute.xlu0 %3391
        %s3394 = sor.u32 256, 48
        %3395 = vbcast.lane.b32.xlu0 %v3369, %s3394
        %v3396 = vpop.permute.xlu0 %3395
        %s3398 = sor.u32 256, 56
        %3399 = vbcast.lane.b32.xlu0 %v3369, %s3398
        %v3400 = vpop.permute.xlu0 %3399
        %s3402 = sor.u32 256, 64
        %3403 = vbcast.lane.b32.xlu0 %v3369, %s3402
        %v3404 = vpop.permute.xlu0 %3403
        %s3406 = sor.u32 256, 72
        %3407 = vbcast.lane.b32.xlu0 %v3369, %s3406
        %v3408 = vpop.permute.xlu0 %3407
        %s3410 = sor.u32 256, 80
        %3411 = vbcast.lane.b32.xlu0 %v3369, %s3410
        %v3412 = vpop.permute.xlu0 %3411
        %s3414 = sor.u32 256, 88
        %3415 = vbcast.lane.b32.xlu0 %v3369, %s3414
        %v3416 = vpop.permute.xlu0 %3415
        %s3418 = sor.u32 256, 96
        %3419 = vbcast.lane.b32.xlu0 %v3369, %s3418
        %v3420 = vpop.permute.xlu0 %3419
        %s3422 = sor.u32 256, 104
        %3423 = vbcast.lane.b32.xlu0 %v3369, %s3422
        %v3424 = vpop.permute.xlu0 %3423
        %s3426 = sor.u32 256, 112
        %3427 = vbcast.lane.b32.xlu0 %v3369, %s3426
        %v3428 = vpop.permute.xlu0 %3427
        %s3430 = sor.u32 256, 120
        %3431 = vbcast.lane.b32.xlu0 %v3369, %s3430
        %v3432 = vpop.permute.xlu0 %3431
        %v3433 = vlaneseq
        %v3434 = vshrl.u32 %v3433, 7
        %v3435 = vsub.s32 5, %v3434
        %v3436 = vrot.slane %v3097, %v3435
        %3438 = vbcast.lane.b32.xlu0 %v3436, 256
        %v3439 = vpop.permute.xlu0 %3438
        %s3441 = sor.u32 256, 8
        %3442 = vbcast.lane.b32.xlu0 %v3436, %s3441
        %v3443 = vpop.permute.xlu0 %3442
        %s3445 = sor.u32 256, 16
        %3446 = vbcast.lane.b32.xlu0 %v3436, %s3445
        %v3447 = vpop.permute.xlu0 %3446
        %s3449 = sor.u32 256, 24
        %3450 = vbcast.lane.b32.xlu0 %v3436, %s3449
        %v3451 = vpop.permute.xlu0 %3450
        %s3453 = sor.u32 256, 32
        %3454 = vbcast.lane.b32.xlu0 %v3436, %s3453
        %v3455 = vpop.permute.xlu0 %3454
        %s3457 = sor.u32 256, 40
        %3458 = vbcast.lane.b32.xlu0 %v3436, %s3457
        %v3459 = vpop.permute.xlu0 %3458
        %s3461 = sor.u32 256, 48
        %3462 = vbcast.lane.b32.xlu0 %v3436, %s3461
        %v3463 = vpop.permute.xlu0 %3462
        %s3465 = sor.u32 256, 56
        %3466 = vbcast.lane.b32.xlu0 %v3436, %s3465
        %v3467 = vpop.permute.xlu0 %3466
        %s3469 = sor.u32 256, 64
        %3470 = vbcast.lane.b32.xlu0 %v3436, %s3469
        %v3471 = vpop.permute.xlu0 %3470
        %s3473 = sor.u32 256, 72
        %3474 = vbcast.lane.b32.xlu0 %v3436, %s3473
        %v3475 = vpop.permute.xlu0 %3474
        %s3477 = sor.u32 256, 80
        %3478 = vbcast.lane.b32.xlu0 %v3436, %s3477
        %v3479 = vpop.permute.xlu0 %3478
        %s3481 = sor.u32 256, 88
        %3482 = vbcast.lane.b32.xlu0 %v3436, %s3481
        %v3483 = vpop.permute.xlu0 %3482
        %s3485 = sor.u32 256, 96
        %3486 = vbcast.lane.b32.xlu0 %v3436, %s3485
        %v3487 = vpop.permute.xlu0 %3486
        %s3489 = sor.u32 256, 104
        %3490 = vbcast.lane.b32.xlu0 %v3436, %s3489
        %v3491 = vpop.permute.xlu0 %3490
        %s3493 = sor.u32 256, 112
        %3494 = vbcast.lane.b32.xlu0 %v3436, %s3493
        %v3495 = vpop.permute.xlu0 %3494
        %s3497 = sor.u32 256, 120
        %3498 = vbcast.lane.b32.xlu0 %v3436, %s3497
        %v3499 = vpop.permute.xlu0 %3498
        %v3500 = vlaneseq
        %v3501 = vshrl.u32 %v3500, 7
        %v3502 = vsub.s32 6, %v3501
        %v3503 = vrot.slane %v3097, %v3502
        %3505 = vbcast.lane.b32.xlu0 %v3503, 256
        %v3506 = vpop.permute.xlu0 %3505
        %s3508 = sor.u32 256, 8
        %3509 = vbcast.lane.b32.xlu0 %v3503, %s3508
        %v3510 = vpop.permute.xlu0 %3509
        %s3512 = sor.u32 256, 16
        %3513 = vbcast.lane.b32.xlu0 %v3503, %s3512
        %v3514 = vpop.permute.xlu0 %3513
        %s3516 = sor.u32 256, 24
        %3517 = vbcast.lane.b32.xlu0 %v3503, %s3516
        %v3518 = vpop.permute.xlu0 %3517
        %s3520 = sor.u32 256, 32
        %3521 = vbcast.lane.b32.xlu0 %v3503, %s3520
        %v3522 = vpop.permute.xlu0 %3521
        %s3524 = sor.u32 256, 40
        %3525 = vbcast.lane.b32.xlu0 %v3503, %s3524
        %v3526 = vpop.permute.xlu0 %3525
        %s3528 = sor.u32 256, 48
        %3529 = vbcast.lane.b32.xlu0 %v3503, %s3528
        %v3530 = vpop.permute.xlu0 %3529
        %s3532 = sor.u32 256, 56
        %3533 = vbcast.lane.b32.xlu0 %v3503, %s3532
        %v3534 = vpop.permute.xlu0 %3533
        %s3536 = sor.u32 256, 64
        %3537 = vbcast.lane.b32.xlu0 %v3503, %s3536
        %v3538 = vpop.permute.xlu0 %3537
        %s3540 = sor.u32 256, 72
        %3541 = vbcast.lane.b32.xlu0 %v3503, %s3540
        %v3542 = vpop.permute.xlu0 %3541
        %s3544 = sor.u32 256, 80
        %3545 = vbcast.lane.b32.xlu0 %v3503, %s3544
        %v3546 = vpop.permute.xlu0 %3545
        %s3548 = sor.u32 256, 88
        %3549 = vbcast.lane.b32.xlu0 %v3503, %s3548
        %v3550 = vpop.permute.xlu0 %3549
        %s3552 = sor.u32 256, 96
        %3553 = vbcast.lane.b32.xlu0 %v3503, %s3552
        %v3554 = vpop.permute.xlu0 %3553
        %s3556 = sor.u32 256, 104
        %3557 = vbcast.lane.b32.xlu0 %v3503, %s3556
        %v3558 = vpop.permute.xlu0 %3557
        %s3560 = sor.u32 256, 112
        %3561 = vbcast.lane.b32.xlu0 %v3503, %s3560
        %v3562 = vpop.permute.xlu0 %3561
        %s3564 = sor.u32 256, 120
        %3565 = vbcast.lane.b32.xlu0 %v3503, %s3564
        %v3566 = vpop.permute.xlu0 %3565
        %v3567 = vlaneseq
        %v3568 = vshrl.u32 %v3567, 7
        %v3569 = vsub.s32 7, %v3568
        %v3570 = vrot.slane %v3097, %v3569
        %3572 = vbcast.lane.b32.xlu0 %v3570, 256
        %v3573 = vpop.permute.xlu0 %3572
        %s3575 = sor.u32 256, 8
        %3576 = vbcast.lane.b32.xlu0 %v3570, %s3575
        %v3577 = vpop.permute.xlu0 %3576
        %s3579 = sor.u32 256, 16
        %3580 = vbcast.lane.b32.xlu0 %v3570, %s3579
        %v3581 = vpop.permute.xlu0 %3580
        %s3583 = sor.u32 256, 24
        %3584 = vbcast.lane.b32.xlu0 %v3570, %s3583
        %v3585 = vpop.permute.xlu0 %3584
        %s3587 = sor.u32 256, 32
        %3588 = vbcast.lane.b32.xlu0 %v3570, %s3587
        %v3589 = vpop.permute.xlu0 %3588
        %s3591 = sor.u32 256, 40
        %3592 = vbcast.lane.b32.xlu0 %v3570, %s3591
        %v3593 = vpop.permute.xlu0 %3592
        %s3595 = sor.u32 256, 48
        %3596 = vbcast.lane.b32.xlu0 %v3570, %s3595
        %v3597 = vpop.permute.xlu0 %3596
        %s3599 = sor.u32 256, 56
        %3600 = vbcast.lane.b32.xlu0 %v3570, %s3599
        %v3601 = vpop.permute.xlu0 %3600
        %s3603 = sor.u32 256, 64
        %3604 = vbcast.lane.b32.xlu0 %v3570, %s3603
        %v3605 = vpop.permute.xlu0 %3604
        %s3607 = sor.u32 256, 72
        %3608 = vbcast.lane.b32.xlu0 %v3570, %s3607
        %v3609 = vpop.permute.xlu0 %3608
        %s3611 = sor.u32 256, 80
        %3612 = vbcast.lane.b32.xlu0 %v3570, %s3611
        %v3613 = vpop.permute.xlu0 %3612
        %s3615 = sor.u32 256, 88
        %3616 = vbcast.lane.b32.xlu0 %v3570, %s3615
        %v3617 = vpop.permute.xlu0 %3616
        %s3619 = sor.u32 256, 96
        %3620 = vbcast.lane.b32.xlu0 %v3570, %s3619
        %v3621 = vpop.permute.xlu0 %3620
        %s3623 = sor.u32 256, 104
        %3624 = vbcast.lane.b32.xlu0 %v3570, %s3623
        %v3625 = vpop.permute.xlu0 %3624
        %s3627 = sor.u32 256, 112
        %3628 = vbcast.lane.b32.xlu0 %v3570, %s3627
        %v3629 = vpop.permute.xlu0 %3628
        %s3631 = sor.u32 256, 120
        %3632 = vbcast.lane.b32.xlu0 %v3570, %s3631
        %v3633 = vpop.permute.xlu0 %3632
        %v3634 = vunpack.c.l.bf16 %v362
        %v3635 = vunpack.c.l.bf16 %v363
        %v3636 = vunpack.c.l.bf16 %v364
        %v3637 = vunpack.c.l.bf16 %v365
        %v3638 = vunpack.c.l.bf16 %v366
        %v3639 = vunpack.c.l.bf16 %v367
        %v3640 = vunpack.c.l.bf16 %v368
        %v3641 = vunpack.c.l.bf16 %v369
        %v3642 = vunpack.c.l.bf16 %v370
        %v3643 = vunpack.c.l.bf16 %v371
        %v3644 = vunpack.c.l.bf16 %v372
        %v3645 = vunpack.c.l.bf16 %v373
        %v3646 = vunpack.c.l.bf16 %v374
        %v3647 = vunpack.c.l.bf16 %v375
        %v3648 = vunpack.c.l.bf16 %v376
        %v3649 = vunpack.c.l.bf16 %v377
        %v3650 = vunpack.c.l.bf16 %v378
        %v3651 = vunpack.c.l.bf16 %v379
        %v3652 = vunpack.c.l.bf16 %v380
        %v3653 = vunpack.c.l.bf16 %v381
        %v3654 = vunpack.c.l.bf16 %v382
        %v3655 = vunpack.c.l.bf16 %v383
        %v3656 = vunpack.c.l.bf16 %v384
        %v3657 = vunpack.c.l.bf16 %v385
        %v3658 = vunpack.c.l.bf16 %v386
        %v3659 = vunpack.c.l.bf16 %v387
        %v3660 = vunpack.c.l.bf16 %v388
        %v3661 = vunpack.c.l.bf16 %v389
        %v3662 = vunpack.c.l.bf16 %v390
        %v3663 = vunpack.c.l.bf16 %v391
        %v3664 = vunpack.c.l.bf16 %v392
        %v3665 = vunpack.c.l.bf16 %v393
        %v3666 = vunpack.c.l.bf16 %v394
        %v3667 = vunpack.c.l.bf16 %v395
        %v3668 = vunpack.c.l.bf16 %v396
        %v3669 = vunpack.c.l.bf16 %v397
        %v3670 = vunpack.c.l.bf16 %v398
        %v3671 = vunpack.c.l.bf16 %v399
        %v3672 = vunpack.c.l.bf16 %v400
        %v3673 = vunpack.c.l.bf16 %v401
        %v3674 = vunpack.c.l.bf16 %v402
        %v3675 = vunpack.c.l.bf16 %v403
        %v3676 = vunpack.c.l.bf16 %v404
        %v3677 = vunpack.c.l.bf16 %v405
        %v3678 = vunpack.c.l.bf16 %v406
        %v3679 = vunpack.c.l.bf16 %v407
        %v3680 = vunpack.c.l.bf16 %v408
        %v3681 = vunpack.c.l.bf16 %v409
        %v3682 = vunpack.c.l.bf16 %v410
        %v3683 = vunpack.c.l.bf16 %v411
        %v3684 = vunpack.c.l.bf16 %v412
        %v3685 = vunpack.c.l.bf16 %v413
        %v3686 = vunpack.c.l.bf16 %v414
        %v3687 = vunpack.c.l.bf16 %v415
        %v3688 = vunpack.c.l.bf16 %v416
        %v3689 = vunpack.c.l.bf16 %v417
        %v3690 = vunpack.c.l.bf16 %v418
        %v3691 = vunpack.c.l.bf16 %v419
        %v3692 = vunpack.c.l.bf16 %v420
        %v3693 = vunpack.c.l.bf16 %v421
        %v3694 = vunpack.c.l.bf16 %v422
        %v3695 = vunpack.c.l.bf16 %v423
        %v3696 = vunpack.c.l.bf16 %v424
        %v3697 = vunpack.c.l.bf16 %v425
        %v3698 = vunpack.c.l.bf16 %v426
        %v3699 = vunpack.c.l.bf16 %v427
        %v3700 = vunpack.c.l.bf16 %v428
        %v3701 = vunpack.c.l.bf16 %v429
        %v3702 = vunpack.c.l.bf16 %v430
        %v3703 = vunpack.c.l.bf16 %v431
        %v3704 = vunpack.c.l.bf16 %v432
        %v3705 = vunpack.c.l.bf16 %v433
        %v3706 = vunpack.c.l.bf16 %v434
        %v3707 = vunpack.c.l.bf16 %v435
        %v3708 = vunpack.c.l.bf16 %v436
        %v3709 = vunpack.c.l.bf16 %v437
        %v3710 = vunpack.c.l.bf16 %v438
        %v3711 = vunpack.c.l.bf16 %v439
        %v3712 = vunpack.c.l.bf16 %v440
        %v3713 = vunpack.c.l.bf16 %v441
        %v3714 = vunpack.c.l.bf16 %v442
        %v3715 = vunpack.c.l.bf16 %v443
        %v3716 = vunpack.c.l.bf16 %v444
        %v3717 = vunpack.c.l.bf16 %v445
        %v3718 = vunpack.c.l.bf16 %v446
        %v3719 = vunpack.c.l.bf16 %v447
        %v3720 = vunpack.c.l.bf16 %v448
        %v3721 = vunpack.c.l.bf16 %v449
        %v3722 = vunpack.c.l.bf16 %v450
        %v3723 = vunpack.c.l.bf16 %v451
        %v3724 = vunpack.c.l.bf16 %v452
        %v3725 = vunpack.c.l.bf16 %v453
        %v3726 = vunpack.c.l.bf16 %v454
        %v3727 = vunpack.c.l.bf16 %v455
        %v3728 = vunpack.c.l.bf16 %v456
        %v3729 = vunpack.c.l.bf16 %v457
        %v3730 = vunpack.c.l.bf16 %v458
        %v3731 = vunpack.c.l.bf16 %v459
        %v3732 = vunpack.c.l.bf16 %v460
        %v3733 = vunpack.c.l.bf16 %v461
        %v3734 = vunpack.c.l.bf16 %v462
        %v3735 = vunpack.c.l.bf16 %v463
        %v3736 = vunpack.c.l.bf16 %v464
        %v3737 = vunpack.c.l.bf16 %v465
        %v3738 = vunpack.c.l.bf16 %v466
        %v3739 = vunpack.c.l.bf16 %v467
        %v3740 = vunpack.c.l.bf16 %v468
        %v3741 = vunpack.c.l.bf16 %v469
        %v3742 = vunpack.c.l.bf16 %v470
        %v3743 = vunpack.c.l.bf16 %v471
        %v3744 = vunpack.c.l.bf16 %v472
        %v3745 = vunpack.c.l.bf16 %v473
        %v3746 = vunpack.c.l.bf16 %v474
        %v3747 = vunpack.c.l.bf16 %v475
        %v3748 = vunpack.c.l.bf16 %v476
        %v3749 = vunpack.c.l.bf16 %v477
        %v3750 = vunpack.c.l.bf16 %v478
        %v3751 = vunpack.c.l.bf16 %v479
        %v3752 = vunpack.c.l.bf16 %v480
        %v3753 = vunpack.c.l.bf16 %v481
        %v3754 = vunpack.c.l.bf16 %v482
        %v3755 = vunpack.c.l.bf16 %v483
        %v3756 = vunpack.c.l.bf16 %v484
        %v3757 = vunpack.c.l.bf16 %v485
        %v3758 = vunpack.c.l.bf16 %v486
        %v3759 = vunpack.c.l.bf16 %v487
        %v3760 = vunpack.c.l.bf16 %v488
        %v3761 = vunpack.c.l.bf16 %v489
        %v3762 = vmul.f32 %v3104, %v3634
        %v3763 = vmul.f32 %v3108, %v3635
        %v3764 = vmul.f32 %v3112, %v3636
        %v3765 = vmul.f32 %v3116, %v3637
        %v3766 = vmul.f32 %v3120, %v3638
        %v3767 = vmul.f32 %v3124, %v3639
        %v3768 = vmul.f32 %v3128, %v3640
        %v3769 = vmul.f32 %v3132, %v3641
        %v3770 = vmul.f32 %v3136, %v3642
        %v3771 = vmul.f32 %v3140, %v3643
        %v3772 = vmul.f32 %v3144, %v3644
        %v3773 = vmul.f32 %v3148, %v3645
        %v3774 = vmul.f32 %v3152, %v3646
        %v3775 = vmul.f32 %v3156, %v3647
        %v3776 = vmul.f32 %v3160, %v3648
        %v3777 = vmul.f32 %v3164, %v3649
        %v3778 = vmul.f32 %v3171, %v3650
        %v3779 = vmul.f32 %v3175, %v3651
        %v3780 = vmul.f32 %v3179, %v3652
        %v3781 = vmul.f32 %v3183, %v3653
        %v3782 = vmul.f32 %v3187, %v3654
        %v3783 = vmul.f32 %v3191, %v3655
        %v3784 = vmul.f32 %v3195, %v3656
        %v3785 = vmul.f32 %v3199, %v3657
        %v3786 = vmul.f32 %v3203, %v3658
        %v3787 = vmul.f32 %v3207, %v3659
        %v3788 = vmul.f32 %v3211, %v3660
        %v3789 = vmul.f32 %v3215, %v3661
        %v3790 = vmul.f32 %v3219, %v3662
        %v3791 = vmul.f32 %v3223, %v3663
        %v3792 = vmul.f32 %v3227, %v3664
        %v3793 = vmul.f32 %v3231, %v3665
        %v3794 = vmul.f32 %v3238, %v3666
        %v3795 = vmul.f32 %v3242, %v3667
        %v3796 = vmul.f32 %v3246, %v3668
        %v3797 = vmul.f32 %v3250, %v3669
        %v3798 = vmul.f32 %v3254, %v3670
        %v3799 = vmul.f32 %v3258, %v3671
        %v3800 = vmul.f32 %v3262, %v3672
        %v3801 = vmul.f32 %v3266, %v3673
        %v3802 = vmul.f32 %v3270, %v3674
        %v3803 = vmul.f32 %v3274, %v3675
        %v3804 = vmul.f32 %v3278, %v3676
        %v3805 = vmul.f32 %v3282, %v3677
        %v3806 = vmul.f32 %v3286, %v3678
        %v3807 = vmul.f32 %v3290, %v3679
        %v3808 = vmul.f32 %v3294, %v3680
        %v3809 = vmul.f32 %v3298, %v3681
        %v3810 = vmul.f32 %v3305, %v3682
        %v3811 = vmul.f32 %v3309, %v3683
        %v3812 = vmul.f32 %v3313, %v3684
        %v3813 = vmul.f32 %v3317, %v3685
        %v3814 = vmul.f32 %v3321, %v3686
        %v3815 = vmul.f32 %v3325, %v3687
        %v3816 = vmul.f32 %v3329, %v3688
        %v3817 = vmul.f32 %v3333, %v3689
        %v3818 = vmul.f32 %v3337, %v3690
        %v3819 = vmul.f32 %v3341, %v3691
        %v3820 = vmul.f32 %v3345, %v3692
        %v3821 = vmul.f32 %v3349, %v3693
        %v3822 = vmul.f32 %v3353, %v3694
        %v3823 = vmul.f32 %v3357, %v3695
        %v3824 = vmul.f32 %v3361, %v3696
        %v3825 = vmul.f32 %v3365, %v3697
        %v3826 = vmul.f32 %v3372, %v3698
        %v3827 = vmul.f32 %v3376, %v3699
        %v3828 = vmul.f32 %v3380, %v3700
        %v3829 = vmul.f32 %v3384, %v3701
        %v3830 = vmul.f32 %v3388, %v3702
        %v3831 = vmul.f32 %v3392, %v3703
        %v3832 = vmul.f32 %v3396, %v3704
        %v3833 = vmul.f32 %v3400, %v3705
        %v3834 = vmul.f32 %v3404, %v3706
        %v3835 = vmul.f32 %v3408, %v3707
        %v3836 = vmul.f32 %v3412, %v3708
        %v3837 = vmul.f32 %v3416, %v3709
        %v3838 = vmul.f32 %v3420, %v3710
        %v3839 = vmul.f32 %v3424, %v3711
        %v3840 = vmul.f32 %v3428, %v3712
        %v3841 = vmul.f32 %v3432, %v3713
        %v3842 = vmul.f32 %v3439, %v3714
        %v3843 = vmul.f32 %v3443, %v3715
        %v3844 = vmul.f32 %v3447, %v3716
        %v3845 = vmul.f32 %v3451, %v3717
        %v3846 = vmul.f32 %v3455, %v3718
        %v3847 = vmul.f32 %v3459, %v3719
        %v3848 = vmul.f32 %v3463, %v3720
        %v3849 = vmul.f32 %v3467, %v3721
        %v3850 = vmul.f32 %v3471, %v3722
        %v3851 = vmul.f32 %v3475, %v3723
        %v3852 = vmul.f32 %v3479, %v3724
        %v3853 = vmul.f32 %v3483, %v3725
        %v3854 = vmul.f32 %v3487, %v3726
        %v3855 = vmul.f32 %v3491, %v3727
        %v3856 = vmul.f32 %v3495, %v3728
        %v3857 = vmul.f32 %v3499, %v3729
        %v3858 = vmul.f32 %v3506, %v3730
        %v3859 = vmul.f32 %v3510, %v3731
        %v3860 = vmul.f32 %v3514, %v3732
        %v3861 = vmul.f32 %v3518, %v3733
        %v3862 = vmul.f32 %v3522, %v3734
        %v3863 = vmul.f32 %v3526, %v3735
        %v3864 = vmul.f32 %v3530, %v3736
        %v3865 = vmul.f32 %v3534, %v3737
        %v3866 = vmul.f32 %v3538, %v3738
        %v3867 = vmul.f32 %v3542, %v3739
        %v3868 = vmul.f32 %v3546, %v3740
        %v3869 = vmul.f32 %v3550, %v3741
        %v3870 = vmul.f32 %v3554, %v3742
        %v3871 = vmul.f32 %v3558, %v3743
        %v3872 = vmul.f32 %v3562, %v3744
        %v3873 = vmul.f32 %v3566, %v3745
        %v3874 = vmul.f32 %v3573, %v3746
        %v3875 = vmul.f32 %v3577, %v3747
        %v3876 = vmul.f32 %v3581, %v3748
        %v3877 = vmul.f32 %v3585, %v3749
        %v3878 = vmul.f32 %v3589, %v3750
        %v3879 = vmul.f32 %v3593, %v3751
        %v3880 = vmul.f32 %v3597, %v3752
        %v3881 = vmul.f32 %v3601, %v3753
        %v3882 = vmul.f32 %v3605, %v3754
        %v3883 = vmul.f32 %v3609, %v3755
        %v3884 = vmul.f32 %v3613, %v3756
        %v3885 = vmul.f32 %v3617, %v3757
        %v3886 = vmul.f32 %v3621, %v3758
        %v3887 = vmul.f32 %v3625, %v3759
        %v3888 = vmul.f32 %v3629, %v3760
        %v3889 = vmul.f32 %v3633, %v3761
        %v3890 = vadd.f32 %v3762, %v3763
        %v3891 = vadd.f32 %v3890, %v3764
        %v3892 = vadd.f32 %v3891, %v3765
        %v3893 = vadd.f32 %v3892, %v3766
        %v3894 = vadd.f32 %v3893, %v3767
        %v3895 = vadd.f32 %v3894, %v3768
        %v3896 = vadd.f32 %v3895, %v3769
        %v3897 = vadd.f32 %v3896, %v3770
        %v3898 = vadd.f32 %v3897, %v3771
        %v3899 = vadd.f32 %v3898, %v3772
        %v3900 = vadd.f32 %v3899, %v3773
        %v3901 = vadd.f32 %v3900, %v3774
        %v3902 = vadd.f32 %v3901, %v3775
        %v3903 = vadd.f32 %v3902, %v3776
        %v3904 = vadd.f32 %v3903, %v3777
        %v3905 = vrot.slane %v3904, 4
        %v3906 = vadd.f32 %v3904, %v3905
        %v3907 = vrot.slane %v3906, 2
        %v3908 = vadd.f32 %v3906, %v3907
        %v3909 = vrot.slane %v3908, 1
        %v3910 = vadd.f32 %v3908, %v3909
        %v3911 = vadd.f32 %v3778, %v3779
        %v3912 = vadd.f32 %v3911, %v3780
        %v3913 = vadd.f32 %v3912, %v3781
        %v3914 = vadd.f32 %v3913, %v3782
        %v3915 = vadd.f32 %v3914, %v3783
        %v3916 = vadd.f32 %v3915, %v3784
        %v3917 = vadd.f32 %v3916, %v3785
        %v3918 = vadd.f32 %v3917, %v3786
        %v3919 = vadd.f32 %v3918, %v3787
        %v3920 = vadd.f32 %v3919, %v3788
        %v3921 = vadd.f32 %v3920, %v3789
        %v3922 = vadd.f32 %v3921, %v3790
        %v3923 = vadd.f32 %v3922, %v3791
        %v3924 = vadd.f32 %v3923, %v3792
        %v3925 = vadd.f32 %v3924, %v3793
        %v3926 = vrot.slane %v3925, 4
        %v3927 = vadd.f32 %v3925, %v3926
        %v3928 = vrot.slane %v3927, 2
        %v3929 = vadd.f32 %v3927, %v3928
        %v3930 = vrot.slane %v3929, 1
        %v3931 = vadd.f32 %v3929, %v3930
        %v3932 = vadd.f32 %v3794, %v3795
        %v3933 = vadd.f32 %v3932, %v3796
        %v3934 = vadd.f32 %v3933, %v3797
        %v3935 = vadd.f32 %v3934, %v3798
        %v3936 = vadd.f32 %v3935, %v3799
        %v3937 = vadd.f32 %v3936, %v3800
        %v3938 = vadd.f32 %v3937, %v3801
        %v3939 = vadd.f32 %v3938, %v3802
        %v3940 = vadd.f32 %v3939, %v3803
        %v3941 = vadd.f32 %v3940, %v3804
        %v3942 = vadd.f32 %v3941, %v3805
        %v3943 = vadd.f32 %v3942, %v3806
        %v3944 = vadd.f32 %v3943, %v3807
        %v3945 = vadd.f32 %v3944, %v3808
        %v3946 = vadd.f32 %v3945, %v3809
        %v3947 = vrot.slane %v3946, 4
        %v3948 = vadd.f32 %v3946, %v3947
        %v3949 = vrot.slane %v3948, 2
        %v3950 = vadd.f32 %v3948, %v3949
        %v3951 = vrot.slane %v3950, 1
        %v3952 = vadd.f32 %v3950, %v3951
        %v3953 = vadd.f32 %v3810, %v3811
        %v3954 = vadd.f32 %v3953, %v3812
        %v3955 = vadd.f32 %v3954, %v3813
        %v3956 = vadd.f32 %v3955, %v3814
        %v3957 = vadd.f32 %v3956, %v3815
        %v3958 = vadd.f32 %v3957, %v3816
        %v3959 = vadd.f32 %v3958, %v3817
        %v3960 = vadd.f32 %v3959, %v3818
        %v3961 = vadd.f32 %v3960, %v3819
        %v3962 = vadd.f32 %v3961, %v3820
        %v3963 = vadd.f32 %v3962, %v3821
        %v3964 = vadd.f32 %v3963, %v3822
        %v3965 = vadd.f32 %v3964, %v3823
        %v3966 = vadd.f32 %v3965, %v3824
        %v3967 = vadd.f32 %v3966, %v3825
        %v3968 = vrot.slane %v3967, 4
        %v3969 = vadd.f32 %v3967, %v3968
        %v3970 = vrot.slane %v3969, 2
        %v3971 = vadd.f32 %v3969, %v3970
        %v3972 = vrot.slane %v3971, 1
        %v3973 = vadd.f32 %v3971, %v3972
        %v3974 = vadd.f32 %v3826, %v3827
        %v3975 = vadd.f32 %v3974, %v3828
        %v3976 = vadd.f32 %v3975, %v3829
        %v3977 = vadd.f32 %v3976, %v3830
        %v3978 = vadd.f32 %v3977, %v3831
        %v3979 = vadd.f32 %v3978, %v3832
        %v3980 = vadd.f32 %v3979, %v3833
        %v3981 = vadd.f32 %v3980, %v3834
        %v3982 = vadd.f32 %v3981, %v3835
        %v3983 = vadd.f32 %v3982, %v3836
        %v3984 = vadd.f32 %v3983, %v3837
        %v3985 = vadd.f32 %v3984, %v3838
        %v3986 = vadd.f32 %v3985, %v3839
        %v3987 = vadd.f32 %v3986, %v3840
        %v3988 = vadd.f32 %v3987, %v3841
        %v3989 = vrot.slane %v3988, 4
        %v3990 = vadd.f32 %v3988, %v3989
        %v3991 = vrot.slane %v3990, 2
        %v3992 = vadd.f32 %v3990, %v3991
        %v3993 = vrot.slane %v3992, 1
        %v3994 = vadd.f32 %v3992, %v3993
        %v3995 = vadd.f32 %v3842, %v3843
        %v3996 = vadd.f32 %v3995, %v3844
        %v3997 = vadd.f32 %v3996, %v3845
        %v3998 = vadd.f32 %v3997, %v3846
        %v3999 = vadd.f32 %v3998, %v3847
        %v4000 = vadd.f32 %v3999, %v3848
        %v4001 = vadd.f32 %v4000, %v3849
        %v4002 = vadd.f32 %v4001, %v3850
        %v4003 = vadd.f32 %v4002, %v3851
        %v4004 = vadd.f32 %v4003, %v3852
        %v4005 = vadd.f32 %v4004, %v3853
        %v4006 = vadd.f32 %v4005, %v3854
        %v4007 = vadd.f32 %v4006, %v3855
        %v4008 = vadd.f32 %v4007, %v3856
        %v4009 = vadd.f32 %v4008, %v3857
        %v4010 = vrot.slane %v4009, 4
        %v4011 = vadd.f32 %v4009, %v4010
        %v4012 = vrot.slane %v4011, 2
        %v4013 = vadd.f32 %v4011, %v4012
        %v4014 = vrot.slane %v4013, 1
        %v4015 = vadd.f32 %v4013, %v4014
        %v4016 = vadd.f32 %v3858, %v3859
        %v4017 = vadd.f32 %v4016, %v3860
        %v4018 = vadd.f32 %v4017, %v3861
        %v4019 = vadd.f32 %v4018, %v3862
        %v4020 = vadd.f32 %v4019, %v3863
        %v4021 = vadd.f32 %v4020, %v3864
        %v4022 = vadd.f32 %v4021, %v3865
        %v4023 = vadd.f32 %v4022, %v3866
        %v4024 = vadd.f32 %v4023, %v3867
        %v4025 = vadd.f32 %v4024, %v3868
        %v4026 = vadd.f32 %v4025, %v3869
        %v4027 = vadd.f32 %v4026, %v3870
        %v4028 = vadd.f32 %v4027, %v3871
        %v4029 = vadd.f32 %v4028, %v3872
        %v4030 = vadd.f32 %v4029, %v3873
        %v4031 = vrot.slane %v4030, 4
        %v4032 = vadd.f32 %v4030, %v4031
        %v4033 = vrot.slane %v4032, 2
        %v4034 = vadd.f32 %v4032, %v4033
        %v4035 = vrot.slane %v4034, 1
        %v4036 = vadd.f32 %v4034, %v4035
        %v4037 = vadd.f32 %v3874, %v3875
        %v4038 = vadd.f32 %v4037, %v3876
        %v4039 = vadd.f32 %v4038, %v3877
        %v4040 = vadd.f32 %v4039, %v3878
        %v4041 = vadd.f32 %v4040, %v3879
        %v4042 = vadd.f32 %v4041, %v3880
        %v4043 = vadd.f32 %v4042, %v3881
        %v4044 = vadd.f32 %v4043, %v3882
        %v4045 = vadd.f32 %v4044, %v3883
        %v4046 = vadd.f32 %v4045, %v3884
        %v4047 = vadd.f32 %v4046, %v3885
        %v4048 = vadd.f32 %v4047, %v3886
        %v4049 = vadd.f32 %v4048, %v3887
        %v4050 = vadd.f32 %v4049, %v3888
        %v4051 = vadd.f32 %v4050, %v3889
        %v4052 = vrot.slane %v4051, 4
        %v4053 = vadd.f32 %v4051, %v4052
        %v4054 = vrot.slane %v4053, 2
        %v4055 = vadd.f32 %v4053, %v4054
        %v4056 = vrot.slane %v4055, 1
        %v4057 = vadd.f32 %v4055, %v4056
        %4058 = vst [vmem:[%s352] sm:$0xff] %v3097
        %v4067 = vsel %vm3073, %v3931, %v3910
        %v4068 = vsel %vm3075, %v3952, %v4067
        %v4069 = vsel %vm3077, %v3973, %v4068
        %v4070 = vsel %vm3079, %v3994, %v4069
        %v4071 = vsel %vm3081, %v4015, %v4070
        %v4072 = vsel %vm3083, %v4036, %v4071
        %v4073 = vsel %vm3085, %v4057, %v4072
        %4075 = vst [vmem:[%s359] sm:$0xff] %v4073
        %s4076 = sand.u32 %s175, 1
        %s4077 = scalar_lea.sflag [#allocation4], %s4076
        %s4078 = sand.u32 %s175, 1
        %s4079 = smul.addr %s4078, 8
        %s4080 = scalar_lea.vmem [#allocation8], %s4079
        %s4081 = sand.u32 %s201, 1
        %s4082 = scalar_lea.sflag [#allocation10], %s4081
        %s4083 = sand.u32 %s201, 1
        %s4084 = smul.addr %s4083, 8
        %s4085 = scalar_lea.vmem [#allocation9], %s4084
        // Predicated region
        $region57: #{tpu_custom_call.1} parent=43 // pred_check
          %p4086 = pneg %p185
        $region58: #{tpu_custom_call.1} parent=43 // pred_check_branch
          %4088 = sbr.rel (%p4086) target = $region60
        $region59: #{tpu_custom_call.1} parent=43 // pred_region
          %s4090 = ssub.s32 128, 128
          %4091 = vsyncadd %s4077, %s4090
          %s4092 = smul.addr %s31, 128
          %s4093 = scalar_lea.hbm %s6, %s4092
          %s4095 = sshll.u32 %s4080, 4
          %s4096 = int_to_ptr.vmem [resolvable:$true] %s4095
          %4098 = dma.vmem_to_hbm [thread:$0]  %s4096, 128, %s4093, %s4077
        $region60: #{tpu_custom_call.1} parent=43 // pred_fallthru
          _
        // Predicated region
        $region61: #{tpu_custom_call.1} parent=43 // pred_check
          %p4099 = pneg %p211
        $region62: #{tpu_custom_call.1} parent=43 // pred_check_branch
          %4101 = sbr.rel (%p4099) target = $region64
        $region63: #{tpu_custom_call.1} parent=43 // pred_region
          %s4103 = ssub.s32 128, 128
          %4104 = vsyncadd %s4082, %s4103
          %s4105 = smul.addr %s31, 128
          %s4106 = scalar_lea.hbm %s7, %s4105
          %s4108 = sshll.u32 %s4085, 4
          %s4109 = int_to_ptr.vmem [resolvable:$true] %s4108
          %4111 = dma.vmem_to_hbm [thread:$0]  %s4109, 128, %s4106, %s4082
        $region64: #{tpu_custom_call.1} parent=43 // pred_fallthru
          _
      $region44: #{tpu_custom_call.1} parent=5 // pred_fallthru
        _
      %p4112 = scmp.le.s32.totalorder 2, %s26
      // Predicated region
      $region65: #{tpu_custom_call.1} parent=5 // pred_check
        %p4113 = pneg %p4112
      $region66: #{tpu_custom_call.1} parent=5 // pred_check_branch
        %4115 = sbr.rel (%p4113) target = $region68
      $region67: #{tpu_custom_call.1} parent=5 // pred_region
        %s4116 = ssub.s32 %s26, 2
        // Predicated region
        $region69: #{tpu_custom_call.1} parent=67 // pred_check
          %p4117 = pneg %p191
        $region70: #{tpu_custom_call.1} parent=67 // pred_check_branch
          %4119 = sbr.rel (%p4117) target = $region72
        $region71: #{tpu_custom_call.1} parent=67 // pred_region
          %s4120 = sand.u32 %s176, 1
          %s4121 = scalar_lea.sflag [#allocation4], %s4120
          %s4122 = sand.u32 %s176, 1
          %s4123 = smul.addr %s4122, 8
          %s4124 = scalar_lea.vmem [#allocation8], %s4123
          %4125 = dma.done %s4121, 128
        $region72: #{tpu_custom_call.1} parent=67 // pred_fallthru
          _
        // Predicated region
        $region73: #{tpu_custom_call.1} parent=67 // pred_check
          %p4126 = pneg %p217
        $region74: #{tpu_custom_call.1} parent=67 // pred_check_branch
          %4128 = sbr.rel (%p4126) target = $region76
        $region75: #{tpu_custom_call.1} parent=67 // pred_region
          %s4129 = sand.u32 %s202, 1
          %s4130 = scalar_lea.sflag [#allocation10], %s4129
          %s4131 = sand.u32 %s202, 1
          %s4132 = smul.addr %s4131, 8
          %s4133 = scalar_lea.vmem [#allocation9], %s4132
          %4134 = dma.done %s4130, 128
        $region76: #{tpu_custom_call.1} parent=67 // pred_fallthru
          _
      $region68: #{tpu_custom_call.1} parent=5 // pred_fallthru
        _
    $region6: #{tpu_custom_call.1} parent=1 // loop_footer
      %s30 = sadd.s32 1, %s26
    $region7: #{tpu_custom_call.1} parent=1 // loop_footer_branch
      %25 = sbr.rel target = $region3
    $region8: #{tpu_custom_call.1} parent=1 // loop_exit
      _
    %4135 = vsyncpa [#allocation3], 1
    %s4136 = scalar_lea.sflag [#allocation3], 1
    %4137 = vsyncpa %s4136, 1
    %4138 = vsyncpa [#allocation6], 1
    %s4139 = scalar_lea.sflag [#allocation6], 1
    %4140 = vsyncpa %s4139, 1
    %4141 = vsyncpa [#allocation4], 1
    %s4142 = scalar_lea.sflag [#allocation4], 1
    %4143 = vsyncpa %s4142, 1
    %4144 = vsyncpa [#allocation10], 1
    %s4145 = scalar_lea.sflag [#allocation10], 1
    %4146 = vsyncpa %s4145, 1

</llo_original>
